<compile_context>
chip_gen: v6e
topology: v6e:2x2x1
jax: 0.10.0
libtpu: 0.0.40
codegen_flags: <defaults>
</compile_context>

<pallas_src>
import math

import jax
import jax.numpy as jnp
import numpy as np
from jax.experimental import pallas as pl
from jax.experimental.pallas import tpu as pltpu

MAX_STEPS = 1000
FEATURES = 32
PERIODS = 10000


def _tables(d, features, max_steps, periods, group):
    """Constant scatter matrix S [G*D, G*D*F] and phase row [1, G*D*F] (f32).

    S[g*D + c, (g*D + c)*F + f] = max_steps / periods**(2*(f//2)/F), zeros
    elsewhere, so x_grouped @ S yields every point's flat, lane-contiguous
    angle row.  Odd columns carry a +pi/2 phase so a single sin() produces the
    sin/cos interleave of the reference.
    """
    j = np.arange(features, dtype=np.float64)
    freq = np.exp(-((j - (j % 2)) / features) * np.log(periods))    # [F]
    sfreq = max_steps * freq                                        # [F]
    phase = (j % 2) * (np.pi / 2.0)                                 # [F]

    s_point = np.zeros((d, d * features), np.float64)
    for c in range(d):
        s_point[c, c * features:(c + 1) * features] = sfreq
    s = np.kron(np.eye(group), s_point)                             # [G*D, G*D*F]
    ph = np.tile(phase, group * d)[None, :]                         # [1, G*D*F]
    return (jnp.asarray(s.astype(np.float32)),
            jnp.asarray(ph.astype(np.float32)))


def _pe_kernel(x_ref, s_ref, p_ref, o_ref):
    # x_ref: [tile_g, G*D]      f32  (G points packed per row)
    # s_ref: [G*D, G*D*F]       f32  (constant scatter matrix, VMEM-resident)
    # p_ref: [1, G*D*F]         f32  (0 / pi/2 phase per column)
    # o_ref: [tile_g, G*D*F]    f32  (lane-dense: G*D*F is a multiple of 128)
    ang = jax.lax.dot_general(
        x_ref[...], s_ref[...],
        dimension_numbers=(((1,), (0,)), ((), ())),
        preferred_element_type=jnp.float32,
        precision=jax.lax.Precision.HIGHEST,  # f32 MXU; bf16 default would be O(1) wrong
    )
    o_ref[...] = jnp.sin(ang + p_ref[...])


def positional_encoding(x, *, max_steps=MAX_STEPS, features=FEATURES,
                        periods=PERIODS, tile_points=8192):
    """Pallas equivalent of PositionalEncoding().forward(x); x is [N, D]."""
    assert x.ndim == 2, "expected [N, D] point coordinates"
    n, d = x.shape
    x = x.astype(jnp.float32)            # force f32 math even for bf16 inputs

    # Pack G points per output row so the output last dim is a lane-dense
    # multiple of 128 (unmasked full-width stores).  D=3, F=32 -> G=4 (384).
    width = d * features
    group = 128 // math.gcd(width, 128)
    gw = group * width                   # grouped output row width

    n_groups = -(-n // group)            # grouped output rows (exact out_shape)

    # Grouped-row tile: multiple of 8; default 8192 points (~8 MiB of
    # double-buffered VMEM incl. the lane-padded x block -> fits v5e's 16 MiB
    # default scoped limit); clamp so we get >= 2 grid steps when possible so
    # v7x's second TensorCore is used on the "parallel" axis.
    tile_g = max(8, (tile_points // group // 8) * 8)
    half = max(8, ((-(-n_groups // 2) + 7) // 8) * 8)
    tile_g = min(tile_g, half)

    grid = -(-n_groups // tile_g)
    n_rows_pad = grid * tile_g * group   # pad only the tiny input (12 B/point)
    if n_rows_pad != n:
        x = jnp.pad(x, ((0, n_rows_pad - n), (0, 0)))
    x_grouped = x.reshape(grid * tile_g, group * d)

    s, ph = _tables(d, features, max_steps, periods, group)

    out = pl.pallas_call(
        _pe_kernel,
        out_shape=jax.ShapeDtypeStruct((n_groups, gw), jnp.float32),
        grid_spec=pltpu.PrefetchScalarGridSpec(
            num_scalar_prefetch=0,
            grid=(grid,),
            in_specs=[
                pl.BlockSpec((tile_g, group * d), lambda i: (i, 0)),
                pl.BlockSpec((group * d, gw), lambda i: (0, 0)),
                pl.BlockSpec((1, gw), lambda i: (0, 0)),
            ],
            # Exact-sized output: Pallas masks the ragged last block's writes,
            # so no pad-to-tile + full-output slice pass is needed.
            out_specs=pl.BlockSpec((tile_g, gw), lambda i: (i, 0)),
        ),
        compiler_params=pltpu.CompilerParams(
            dimension_semantics=("parallel",)),
    )(x_grouped, s, ph)

    out = out.reshape(n_groups * group, width)   # free: identical row-major bytes
    # Slice only when N is not group-aligned (rare; small extra pass then).
    return out[:n] if n_groups * group != n else out


def _reference(x, max_steps=MAX_STEPS, features=FEATURES, periods=PERIODS):
    """float64 numpy reference mirroring point_position_encoding semantics."""
    x = np.asarray(x, np.float64)
    pos = x * max_steps                                        # [N, D]
    i = np.arange(0, features, 2, dtype=np.float64)
    div = np.exp(-(i / features) * np.log(periods))            # [F/2]
    ang = pos[..., None] * div                                 # [N, D, F/2]
    pe = np.zeros(pos.shape + (features,), np.float64)
    pe[..., 0::2] = np.sin(ang)
    pe[..., 1::2] = np.cos(ang)
    return pe.reshape(pos.shape[0], -1).astype(np.float32)     # [N, D*F]


if __name__ == "__main__":
    key = jax.random.PRNGKey(0)
    # N=1000, D=3: grouped rows = 250, tile = 128 -> 2 grid steps with a ragged
    # last output block (exercises the masked-write path); N is group-aligned
    # so no trailing slice.
    N, D = 1000, 3
    x = jax.random.uniform(key, (N, D), dtype=jnp.float32)

    out = jax.block_until_ready(positional_encoding(x))
    assert out.shape == (N, D * FEATURES), out.shape

    ref = _reference(np.asarray(x))
    # f32 angles reach ~1000 rad: ulp(1000) ~ 6e-5 per add, HIGHEST-precision
    # MXU ~2e-7 relative (~2e-4 abs here), plus f32 sin range reduction.  Any
    # float32 implementation (incl. torch) carries O(1e-4) absolute error vs
    # this float64 reference, so compare with a 1e-3 absolute tolerance.
    np.testing.assert_allclose(np.asarray(out), ref, rtol=0.0, atol=1e-3)

    print("KERNEL_OK")
</pallas_src>

<mosaic_0001>
module attributes {stable_mosaic.version = 11 : i64} {
  func.func @_pe_kernel(%arg0: i32, %arg1: memref<128x12xf32, #tpu.memory_space<vmem>>, %arg2: memref<12x384xf32, #tpu.memory_space<vmem>>, %arg3: memref<1x384xf32, #tpu.memory_space<vmem>>, %arg4: memref<128x384xf32, #tpu.memory_space<vmem>>) attributes {dimension_semantics = [#tpu.dimension_semantics<parallel>], iteration_bounds = array<i64: 2>, scalar_prefetch = 0 : i64, scratch_operands = 0 : i64, tpu.core_type = #tpu.core_type<tc>, window_params = [{transform_indices = @transform_0, window_bounds = array<i64: 128, 12>}, {pipeline_mode = #tpu.pipeline_mode<synchronous>, transform_indices = @transform_1, window_bounds = array<i64: 12, 384>}, {pipeline_mode = #tpu.pipeline_mode<synchronous>, transform_indices = @transform_2, window_bounds = array<i64: 1, 384>}, {transform_indices = @transform_3, window_bounds = array<i64: 128, 384>}]} {
    %c0 = arith.constant 0 : index
    %c0_0 = arith.constant 0 : index
    %0 = vector.load %arg1[%c0, %c0_0] : memref<128x12xf32, #tpu.memory_space<vmem>>, vector<128x12xf32>
    %c0_1 = arith.constant 0 : index
    %c0_2 = arith.constant 0 : index
    %1 = vector.load %arg2[%c0_1, %c0_2] : memref<12x384xf32, #tpu.memory_space<vmem>>, vector<12x384xf32>
    %cst = arith.constant dense<0.000000e+00> : vector<128x384xf32>
    %2 = tpu.matmul %0, %1, %cst {dimension_numbers = #tpu.dot_dimension_numbers<[1], [0], [0], [1], [0, 0, 1, 1], [], []>, precision = #tpu.contract_precision<fp32>} : vector<128x12xf32>, vector<12x384xf32>, vector<128x384xf32> -> vector<128x384xf32>
    %c0_3 = arith.constant 0 : index
    %c0_4 = arith.constant 0 : index
    %3 = vector.load %arg3[%c0_3, %c0_4] : memref<1x384xf32, #tpu.memory_space<vmem>>, vector<1x384xf32>
    %4 = vector.broadcast %3 : vector<1x384xf32> to vector<128x384xf32>
    %5 = arith.addf %2, %4 : vector<128x384xf32>
    %6 = math.sin %5 : vector<128x384xf32>
    %c0_5 = arith.constant 0 : index
    %c0_6 = arith.constant 0 : index
    %7 = vector.load %arg4[%c0_5, %c0_6] : memref<128x384xf32, #tpu.memory_space<vmem>>, vector<128x384xf32>
    tpu.vector_store %arg4[%c0_5, %c0_6], %6 {strides = array<i32>} : memref<128x384xf32, #tpu.memory_space<vmem>>, vector<128x384xf32>,
    return
  }
  func.func @transform_0(%arg0: i32) -> (i32, i32) {
    %c0_i32 = arith.constant 0 : i32
    %c0_i32_0 = arith.constant 0 : i32
    return %arg0, %c0_i32 : i32, i32
  }
  func.func @transform_1(%arg0: i32) -> (i32, i32) {
    %c0_i32 = arith.constant 0 : i32
    %c0_i32_0 = arith.constant 0 : i32
    %c0_i32_1 = arith.constant 0 : i32
    return %c0_i32, %c0_i32_0 : i32, i32
  }
  func.func @transform_2(%arg0: i32) -> (i32, i32) {
    %c0_i32 = arith.constant 0 : i32
    %c0_i32_0 = arith.constant 0 : i32
    %c0_i32_1 = arith.constant 0 : i32
    return %c0_i32, %c0_i32_0 : i32, i32
  }
  func.func @transform_3(%arg0: i32) -> (i32, i32) {
    %c0_i32 = arith.constant 0 : i32
    %c0_i32_0 = arith.constant 0 : i32
    return %arg0, %c0_i32 : i32, i32
  }
}

</mosaic_0001>

<llo_original>
// kernel: tpu_custom_call.1
$region0: #{tpu_custom_call.1}
  #allocation0 [shape = 'u32[]', space=smem, size = 0x4, offset = 0x4, fixed_abs, tag = 'smem constant byte address 0x4 - core index']
  #allocation1 [shape = 'u32[144,128]{1,0:T(1,128)}', space=vmem, size = 0x12000, scoped, tag = 'internal scratch']
  %s0 = inlined_call_operand.vmem [shape: f32[256,12], index: 0, kind: input, shape index: {}]
  %s1 = inlined_call_operand.vmem [shape: f32[12,384], index: 1, kind: input, shape index: {}]
  %s2 = inlined_call_operand.vmem [shape: f32[1,384], index: 2, kind: input, shape index: {}]
  %s3 = inlined_call_operand.hbm [shape: f32[250,384], index: 3, kind: output, shape index: {}]
  %s4 = sld [smem:[#allocation0]]
  $region45: #{tpu_custom_call.1} parent=0
    _
  %s6 = ssub.s32 1, %s4
  %s7 = scalar_select 0, %s6, %s4
  $region1: #{tpu_custom_call.1} parent=0
    #allocation2 [shape = 'u8[393216]{0}', space=vmem, size = 0x60000, scoped, tag = 'output window, operand 0']
    #allocation3 [shape = 's32[2]{0}', space=sflag, size = 0x8, scoped, tag = 'scoped memory for tpu_custom_call.1']
    %8 = vsyncpa [#allocation3], 0
    %s9 = scalar_lea.sflag [#allocation3], 1
    %10 = vsyncpa %s9, 0
    loop: start=0, step=1, limit=4
    $region2: #{tpu_custom_call.1} parent=1 // loop_pre_header
      _
    $region3: #{tpu_custom_call.1} parent=1 // loop_header
      %s12 = sphi 0, %s16
      %p13 = scmp.ge.s32.totalorder %s12, 4
      %s22 = sphi 0, %s24
      %s25 = sphi 0, %s22
      %s26 = sphi 0, %s25
      %s42 = sphi 0, %s26
      %s46 = sphi 0, %s46
      %s48 = sphi 0, %s46
      %s49 = sphi 0, %s48
      %s63 = sphi 0, %s49
      %s67 = sphi 0, %s67
      %s69 = sphi 0, %s67
      %s70 = sphi 0, %s69
      %s84 = sphi 0, %s70
      %s90 = sphi 0, %s92
      %s93 = sphi 0, %s90
      %s94 = sphi 0, %s93
      %s110 = sphi 0, %s94
    $region4: #{tpu_custom_call.1} parent=1 // loop_header_branch
      %15 = sbr.rel (%p13) target = $region8
    $region5: #{tpu_custom_call.1} parent=1 // loop_body
      %s17 = ssub.s32 %s12, 1
      %s18 = ssub.s32 %s12, 2
      %s19 = sadd.s32 %s12, 1
      %s20 = ssub.s32 %s12, %s19
      %p21 = scmp.eq.s32.totalorder %s20, 0
      %s23 = sadd.s32 %s22, 1
      %s24 = scalar_select %p21, %s22, %s23
      %p27 = pneg %p21
      %p28 = scmp.eq.s32.totalorder %s12, 1
      %p29 = por %p27, %p28
      %p30 = scmp.ne.s32.totalorder %s22, %s25
      %p31 = scmp.eq.s32.totalorder %s12, 0
      %p32 = por %p30, %p31
      %p33 = scmp.ne.s32.totalorder %s22, %s25
      %p34 = scmp.eq.s32.totalorder %s17, 1
      %p35 = por %p33, %p34
      %p36 = scmp.ne.s32.totalorder %s25, %s26
      %p37 = scmp.eq.s32.totalorder %s17, 0
      %p38 = por %p36, %p37
      %p39 = scmp.ne.s32.totalorder %s25, %s26
      %p40 = scmp.eq.s32.totalorder %s18, 1
      %p41 = por %p39, %p40
      %p43 = scmp.ne.s32.totalorder %s26, %s42
      %p44 = scmp.eq.s32.totalorder %s18, 0
      %p45 = por %p43, %p44
      %s47 = sadd.s32 %s46, 1
      %p50 = scmp.eq.s32.totalorder %s12, 1
      %p51 = scmp.ne.s32.totalorder %s46, %s48
      %p52 = scmp.eq.s32.totalorder %s12, 0
      %p53 = por %p51, %p52
      %p54 = scmp.ne.s32.totalorder %s46, %s48
      %p55 = scmp.eq.s32.totalorder %s17, 1
      %p56 = por %p54, %p55
      %p57 = scmp.ne.s32.totalorder %s48, %s49
      %p58 = scmp.eq.s32.totalorder %s17, 0
      %p59 = por %p57, %p58
      %p60 = scmp.ne.s32.totalorder %s48, %s49
      %p61 = scmp.eq.s32.totalorder %s18, 1
      %p62 = por %p60, %p61
      %p64 = scmp.ne.s32.totalorder %s49, %s63
      %p65 = scmp.eq.s32.totalorder %s18, 0
      %p66 = por %p64, %p65
      %s68 = sadd.s32 %s67, 1
      %p71 = scmp.eq.s32.totalorder %s12, 1
      %p72 = scmp.ne.s32.totalorder %s67, %s69
      %p73 = scmp.eq.s32.totalorder %s12, 0
      %p74 = por %p72, %p73
      %p75 = scmp.ne.s32.totalorder %s67, %s69
      %p76 = scmp.eq.s32.totalorder %s17, 1
      %p77 = por %p75, %p76
      %p78 = scmp.ne.s32.totalorder %s69, %s70
      %p79 = scmp.eq.s32.totalorder %s17, 0
      %p80 = por %p78, %p79
      %p81 = scmp.ne.s32.totalorder %s69, %s70
      %p82 = scmp.eq.s32.totalorder %s18, 1
      %p83 = por %p81, %p82
      %p85 = scmp.ne.s32.totalorder %s70, %s84
      %p86 = scmp.eq.s32.totalorder %s18, 0
      %p87 = por %p85, %p86
      %s88 = ssub.s32 %s12, %s19
      %p89 = scmp.eq.s32.totalorder %s88, 0
      %s91 = sadd.s32 %s90, 1
      %s92 = scalar_select %p89, %s90, %s91
      %p95 = pneg %p89
      %p96 = scmp.eq.s32.totalorder %s12, 1
      %p97 = por %p95, %p96
      %p98 = scmp.ne.s32.totalorder %s90, %s93
      %p99 = scmp.eq.s32.totalorder %s12, 0
      %p100 = por %p98, %p99
      %p101 = scmp.ne.s32.totalorder %s90, %s93
      %p102 = scmp.eq.s32.totalorder %s17, 1
      %p103 = por %p101, %p102
      %p104 = scmp.ne.s32.totalorder %s93, %s94
      %p105 = scmp.eq.s32.totalorder %s17, 0
      %p106 = por %p104, %p105
      %p107 = scmp.ne.s32.totalorder %s93, %s94
      %p108 = scmp.eq.s32.totalorder %s18, 1
      %p109 = por %p107, %p108
      %p111 = scmp.ne.s32.totalorder %s94, %s110
      %p112 = scmp.eq.s32.totalorder %s18, 0
      %p113 = por %p111, %p112
      %p114 = scmp.le.s32.totalorder 1, %s12
      %p115 = scmp.lt.s32.totalorder %s12, 3
      %p116 = pnand %p114, %p115
      %p117 = pneg %p116
      // Predicated region
      $region9: #{tpu_custom_call.1} parent=5 // pred_check
        _
      $region10: #{tpu_custom_call.1} parent=5 // pred_check_branch
        %119 = sbr.rel (%p116) target = $region12
      $region11: #{tpu_custom_call.1} parent=5 // pred_region
        %s120 = ssub.s32 %s12, 1
        // Predicated region
        $region13: #{tpu_custom_call.1} parent=11 // pred_check
          %p121 = pneg %p59
        $region14: #{tpu_custom_call.1} parent=11 // pred_check_branch
          %123 = sbr.rel (%p121) target = $region16
        $region15: #{tpu_custom_call.1} parent=11 // pred_region
          _
        $region16: #{tpu_custom_call.1} parent=11 // pred_fallthru
          _
        // Predicated region
        $region17: #{tpu_custom_call.1} parent=11 // pred_check
          %p124 = pneg %p80
        $region18: #{tpu_custom_call.1} parent=11 // pred_check_branch
          %126 = sbr.rel (%p124) target = $region20
        $region19: #{tpu_custom_call.1} parent=11 // pred_region
          _
        $region20: #{tpu_custom_call.1} parent=11 // pred_fallthru
          _
      $region12: #{tpu_custom_call.1} parent=5 // pred_fallthru
        _
      %p127 = scmp.lt.s32.totalorder %s12, 2
      // Predicated region
      $region21: #{tpu_custom_call.1} parent=5 // pred_check
        %p128 = pneg %p127
      $region22: #{tpu_custom_call.1} parent=5 // pred_check_branch
        %130 = sbr.rel (%p128) target = $region24
      $region23: #{tpu_custom_call.1} parent=5 // pred_region
        // Predicated region
        $region25: #{tpu_custom_call.1} parent=23 // pred_check
          %p131 = pneg %p32
        $region26: #{tpu_custom_call.1} parent=23 // pred_check_branch
          %133 = sbr.rel (%p131) target = $region28
        $region27: #{tpu_custom_call.1} parent=23 // pred_region
          %s134 = smul.u32 16, %s12
          %p135 = scmp.lt.s32.totalorder %s134, 31
          %s136 = scalar_select %p135, %s134, 31
          %s137 = smul.addr %s136, 8
          %s138 = scalar_lea.vmem %s0, %s137
          %s139 = smul.u32 16, %s12
        $region28: #{tpu_custom_call.1} parent=23 // pred_fallthru
          _
      $region24: #{tpu_custom_call.1} parent=5 // pred_fallthru
        _
      %p140 = scmp.le.s32.totalorder 1, %s12
      %p141 = scmp.lt.s32.totalorder %s12, 3
      %p142 = pnand %p140, %p141
      %p143 = pneg %p142
      // Predicated region
      $region29: #{tpu_custom_call.1} parent=5 // pred_check
        _
      $region30: #{tpu_custom_call.1} parent=5 // pred_check_branch
        %145 = sbr.rel (%p142) target = $region32
      $region31: #{tpu_custom_call.1} parent=5 // pred_region
        %s146 = ssub.s32 %s12, 1
        %s147 = smul.u32 16, %s17
        %p148 = scmp.lt.s32.totalorder %s147, 31
        %s149 = scalar_select %p148, %s147, 31
        %s150 = smul.addr %s149, 8
        %s151 = scalar_lea.vmem %s0, %s150
        %p152 = pneg %p38
        %p153 = pneg %p35
        %p154 = pneg %p59
        %p155 = pneg %p56
        %p156 = pneg %p80
        %p157 = pneg %p77
        %p158 = pneg %p106
        %p159 = pneg %p103
        %s160 = sand.u32 %s93, 1
        %s161 = scalar_lea.sflag [#allocation3], %s160
        %s162 = sand.u32 %s93, 1
        %s163 = smul.addr %s162, 384
        %s164 = scalar_lea.vmem [#allocation2], %s163
        %s165 = smul.u32 16, %s17
        %p166 = scmp.lt.s32.totalorder %s165, 31
        %s167 = scalar_select %p166, %s165, 31
        %s168 = smul.addr %s167, 8
        %s169 = scalar_lea.vmem %s0, %s168
        %s170 = smul.u32 16, %s17
        %s171 = smul.u32 16, %s17
        %v172 = vld [vmem:[%s169] sm:$0xff]
        %v173 = vld [vmem:[%s169 + $0x8] sm:$0xff]
        %v174 = vld [vmem:[%s169 + $0x10] sm:$0xff]
        %v175 = vld [vmem:[%s169 + $0x18] sm:$0xff]
        %v176 = vld [vmem:[%s169 + $0x20] sm:$0xff]
        %v177 = vld [vmem:[%s169 + $0x28] sm:$0xff]
        %v178 = vld [vmem:[%s169 + $0x30] sm:$0xff]
        %v179 = vld [vmem:[%s169 + $0x38] sm:$0xff]
        %v180 = vld [vmem:[%s169 + $0x40] sm:$0xff]
        %v181 = vld [vmem:[%s169 + $0x48] sm:$0xff]
        %v182 = vld [vmem:[%s169 + $0x50] sm:$0xff]
        %v183 = vld [vmem:[%s169 + $0x58] sm:$0xff]
        %v184 = vld [vmem:[%s169 + $0x60] sm:$0xff]
        %v185 = vld [vmem:[%s169 + $0x68] sm:$0xff]
        %v186 = vld [vmem:[%s169 + $0x70] sm:$0xff]
        %v187 = vld [vmem:[%s169 + $0x78] sm:$0xff]
        %v188 = vld [vmem:[%s1] sm:$0xff]
        %v189 = vld [vmem:[%s1 + $0x8] sm:$0xff]
        %v190 = vld [vmem:[%s1 + $0x10] sm:$0xff]
        %v191 = vld [vmem:[%s1 + $0x18] sm:$0xf]
        %v192 = vld [vmem:[%s1 + $0x20] sm:$0xf]
        %v193 = vld [vmem:[%s1 + $0x28] sm:$0xf]
        %v194 = vld [vmem:[%s2] sm:$0x7]
        %v196 = vlaneseq
        %v197 = vshrl.u32 %v196, 7
        %v198 = vsub.s32 0, %v197
        %v199 = vrot.slane %v194, %v198
        %v200 = vlaneseq
        %v201 = vshrl.u32 %v200, 7
        %v202 = vsub.s32 1, %v201
        %v203 = vrot.slane %v194, %v202
        %v204 = vlaneseq
        %v205 = vshrl.u32 %v204, 7
        %v206 = vsub.s32 2, %v205
        %v207 = vrot.slane %v194, %v206
        %vm211 = vcmask 97280
        %v213 = vsel %vm211, %v172, 0
        %v216 = vsel %vm211, %v173, 0
        %v219 = vsel %vm211, %v174, 0
        %v222 = vsel %vm211, %v175, 0
        %v225 = vsel %vm211, %v176, 0
        %v228 = vsel %vm211, %v177, 0
        %v231 = vsel %vm211, %v178, 0
        %v234 = vsel %vm211, %v179, 0
        %v237 = vsel %vm211, %v180, 0
        %v240 = vsel %vm211, %v181, 0
        %v243 = vsel %vm211, %v182, 0
        %v246 = vsel %vm211, %v183, 0
        %v249 = vsel %vm211, %v184, 0
        %v252 = vsel %vm211, %v185, 0
        %v255 = vsel %vm211, %v186, 0
        %v258 = vsel %vm211, %v187, 0
        %vm260 = vcmask 1043456
        %v262 = vsel %vm260, %v191, 0
        %v265 = vsel %vm260, %v192, 0
        %v268 = vsel %vm260, %v193, 0
        %270 = vmatprep.subr.mxu0 0.0
        %271 = vmatpush1.msra.mxu0 0.0
        %272 = vmatprep.subr.mxu0 0.0
        %273 = vmatpush1.msra.mxu0 0.0
        %274 = vmatprep.subr.mxu0 0.0
        %275 = vmatpush1.msra.mxu0 0.0
        %276 = vmatprep.subr.mxu0 0.0
        %277 = vmatpush1.msra.mxu0 0.0
        %278 = vmatprep.subr.mxu0 0.0
        %279 = vmatpush1.msra.mxu0 0.0
        %280 = vmatprep.subr.mxu0 0.0
        %281 = vmatpush1.msra.mxu0 0.0
        %282 = vmatprep.subr.mxu0 0.0
        %283 = vmatpush1.msra.mxu0 0.0
        %284 = vmatprep.subr.mxu0 0.0
        %285 = vmatpush1.msra.mxu0 0.0
        %286 = vmatprep.subr.mxu0 0.0
        %287 = vmatpush1.msra.mxu0 0.0
        %288 = vmatprep.subr.mxu0 0.0
        %289 = vmatpush1.msra.mxu0 0.0
        %290 = vmatprep.subr.mxu0 0.0
        %291 = vmatpush1.msra.mxu0 0.0
        %292 = vmatprep.subr.mxu0 0.0
        %293 = vmatpush1.msra.mxu0 0.0
        %294 = vmatprep.subr.mxu0 0.0
        %295 = vmatpush1.msra.mxu0 0.0
        %296 = vmatprep.subr.mxu0 0.0
        %297 = vmatpush1.msra.mxu0 0.0
        %v298 = vand.u32 %v265, 4294901760
        %299 = vmatprep.subr.mxu0 %v298
        %v300 = vand.u32 %v262, 4294901760
        %301 = vmatpush1.msra.mxu0 %v300
        %v302 = vand.u32 %v189, 4294901760
        %303 = vmatprep.subr.mxu0 %v302
        %v304 = vand.u32 %v188, 4294901760
        %305 = vmatpush1.msra.mxu0 %v304
        %306 = vmatprep.subr.mxu0 0.0
        %307 = vmatpush2.msra.mxu0 0.0
        %308 = vmatprep.subr.mxu0 0.0
        %309 = vmatpush2.msra.mxu0 0.0
        %310 = vmatprep.subr.mxu0 0.0
        %311 = vmatpush2.msra.mxu0 0.0
        %312 = vmatprep.subr.mxu0 0.0
        %313 = vmatpush2.msra.mxu0 0.0
        %314 = vmatprep.subr.mxu0 0.0
        %315 = vmatpush2.msra.mxu0 0.0
        %316 = vmatprep.subr.mxu0 0.0
        %317 = vmatpush2.msra.mxu0 0.0
        %318 = vmatprep.subr.mxu0 0.0
        %319 = vmatpush2.msra.mxu0 0.0
        %320 = vmatprep.subr.mxu0 0.0
        %321 = vmatpush2.msra.mxu0 0.0
        %322 = vmatprep.subr.mxu0 0.0
        %323 = vmatpush2.msra.mxu0 0.0
        %324 = vmatprep.subr.mxu0 0.0
        %325 = vmatpush2.msra.mxu0 0.0
        %326 = vmatprep.subr.mxu0 0.0
        %327 = vmatpush2.msra.mxu0 0.0
        %328 = vmatprep.subr.mxu0 0.0
        %329 = vmatpush2.msra.mxu0 0.0
        %330 = vmatprep.subr.mxu0 0.0
        %331 = vmatpush2.msra.mxu0 0.0
        %332 = vmatprep.subr.mxu0 0.0
        %333 = vmatpush2.msra.mxu0 0.0
        %334 = vmatprep.subr.mxu0 0.0
        %335 = vmatpush2.msra.mxu0 0.0
        %336 = vmatprep.subr.mxu0 0.0
        %337 = vmatpush2.msra.mxu0 0.0
        %338 = vmatprep.mubr.f32.mxu0 0.0
        %v339 = vand.u32 %v213, 4294901760
        %v340 = vsub.f32 %v213, %v339
        %v341 = vand.u32 %v340, 4294901760
        %v342 = vsub.f32 %v340, %v341
        %v343 = vand.u32 %v342, 4294901760
        %344 = vmatmul.mubr.f32.gmra.mxu0 %v343
        %v345 = vpop.f32.mrf.mxu0
        %v346 = vadd.f32 %v199, %v345
        %v347 = vpop.f32.mrf.mxu0
        %v348 = vadd.f32 %v203, %v347
        %349 = vmatprep.mubr.f32.mxu0 0.0
        %v350 = vand.u32 %v216, 4294901760
        %v351 = vsub.f32 %v216, %v350
        %v352 = vand.u32 %v351, 4294901760
        %v353 = vsub.f32 %v351, %v352
        %v354 = vand.u32 %v353, 4294901760
        %355 = vmatmul.mubr.f32.gmra.mxu0 %v354
        %v356 = vpop.f32.mrf.mxu0
        %v357 = vadd.f32 %v199, %v356
        %v358 = vpop.f32.mrf.mxu0
        %v359 = vadd.f32 %v203, %v358
        %360 = vmatprep.mubr.f32.mxu0 0.0
        %v361 = vand.u32 %v219, 4294901760
        %v362 = vsub.f32 %v219, %v361
        %v363 = vand.u32 %v362, 4294901760
        %v364 = vsub.f32 %v362, %v363
        %v365 = vand.u32 %v364, 4294901760
        %366 = vmatmul.mubr.f32.gmra.mxu0 %v365
        %v367 = vpop.f32.mrf.mxu0
        %v368 = vadd.f32 %v199, %v367
        %v369 = vpop.f32.mrf.mxu0
        %v370 = vadd.f32 %v203, %v369
        %371 = vmatprep.mubr.f32.mxu0 0.0
        %v372 = vand.u32 %v222, 4294901760
        %v373 = vsub.f32 %v222, %v372
        %v374 = vand.u32 %v373, 4294901760
        %v375 = vsub.f32 %v373, %v374
        %v376 = vand.u32 %v375, 4294901760
        %377 = vmatmul.mubr.f32.gmra.mxu0 %v376
        %v378 = vpop.f32.mrf.mxu0
        %v379 = vadd.f32 %v199, %v378
        %v380 = vpop.f32.mrf.mxu0
        %v381 = vadd.f32 %v203, %v380
        %382 = vmatprep.mubr.f32.mxu0 0.0
        %v383 = vand.u32 %v225, 4294901760
        %v384 = vsub.f32 %v225, %v383
        %v385 = vand.u32 %v384, 4294901760
        %v386 = vsub.f32 %v384, %v385
        %v387 = vand.u32 %v386, 4294901760
        %388 = vmatmul.mubr.f32.gmra.mxu0 %v387
        %v389 = vpop.f32.mrf.mxu0
        %v390 = vadd.f32 %v199, %v389
        %v391 = vpop.f32.mrf.mxu0
        %v392 = vadd.f32 %v203, %v391
        %393 = vmatprep.mubr.f32.mxu0 0.0
        %v394 = vand.u32 %v228, 4294901760
        %v395 = vsub.f32 %v228, %v394
        %v396 = vand.u32 %v395, 4294901760
        %v397 = vsub.f32 %v395, %v396
        %v398 = vand.u32 %v397, 4294901760
        %399 = vmatmul.mubr.f32.gmra.mxu0 %v398
        %v400 = vpop.f32.mrf.mxu0
        %v401 = vadd.f32 %v199, %v400
        %v402 = vpop.f32.mrf.mxu0
        %v403 = vadd.f32 %v203, %v402
        %404 = vmatprep.mubr.f32.mxu0 0.0
        %v405 = vand.u32 %v231, 4294901760
        %v406 = vsub.f32 %v231, %v405
        %v407 = vand.u32 %v406, 4294901760
        %v408 = vsub.f32 %v406, %v407
        %v409 = vand.u32 %v408, 4294901760
        %410 = vmatmul.mubr.f32.gmra.mxu0 %v409
        %v411 = vpop.f32.mrf.mxu0
        %v412 = vadd.f32 %v199, %v411
        %v413 = vpop.f32.mrf.mxu0
        %v414 = vadd.f32 %v203, %v413
        %415 = vmatprep.mubr.f32.mxu0 0.0
        %v416 = vand.u32 %v234, 4294901760
        %v417 = vsub.f32 %v234, %v416
        %v418 = vand.u32 %v417, 4294901760
        %v419 = vsub.f32 %v417, %v418
        %v420 = vand.u32 %v419, 4294901760
        %421 = vmatmul.mubr.f32.gmra.mxu0 %v420
        %v422 = vpop.f32.mrf.mxu0
        %v423 = vadd.f32 %v199, %v422
        %v424 = vpop.f32.mrf.mxu0
        %v425 = vadd.f32 %v203, %v424
        %426 = vmatprep.mubr.f32.mxu0 0.0
        %v427 = vand.u32 %v237, 4294901760
        %v428 = vsub.f32 %v237, %v427
        %v429 = vand.u32 %v428, 4294901760
        %v430 = vsub.f32 %v428, %v429
        %v431 = vand.u32 %v430, 4294901760
        %432 = vmatmul.mubr.f32.gmra.mxu0 %v431
        %v433 = vpop.f32.mrf.mxu0
        %v434 = vadd.f32 %v199, %v433
        %v435 = vpop.f32.mrf.mxu0
        %v436 = vadd.f32 %v203, %v435
        %437 = vmatprep.mubr.f32.mxu0 0.0
        %v438 = vand.u32 %v240, 4294901760
        %v439 = vsub.f32 %v240, %v438
        %v440 = vand.u32 %v439, 4294901760
        %v441 = vsub.f32 %v439, %v440
        %v442 = vand.u32 %v441, 4294901760
        %443 = vmatmul.mubr.f32.gmra.mxu0 %v442
        %v444 = vpop.f32.mrf.mxu0
        %v445 = vadd.f32 %v199, %v444
        %v446 = vpop.f32.mrf.mxu0
        %v447 = vadd.f32 %v203, %v446
        %448 = vmatprep.mubr.f32.mxu0 0.0
        %v449 = vand.u32 %v243, 4294901760
        %v450 = vsub.f32 %v243, %v449
        %v451 = vand.u32 %v450, 4294901760
        %v452 = vsub.f32 %v450, %v451
        %v453 = vand.u32 %v452, 4294901760
        %454 = vmatmul.mubr.f32.gmra.mxu0 %v453
        %v455 = vpop.f32.mrf.mxu0
        %v456 = vadd.f32 %v199, %v455
        %v457 = vpop.f32.mrf.mxu0
        %v458 = vadd.f32 %v203, %v457
        %459 = vmatprep.mubr.f32.mxu0 0.0
        %v460 = vand.u32 %v246, 4294901760
        %v461 = vsub.f32 %v246, %v460
        %v462 = vand.u32 %v461, 4294901760
        %v463 = vsub.f32 %v461, %v462
        %v464 = vand.u32 %v463, 4294901760
        %465 = vmatmul.mubr.f32.gmra.mxu0 %v464
        %v466 = vpop.f32.mrf.mxu0
        %v467 = vadd.f32 %v199, %v466
        %v468 = vpop.f32.mrf.mxu0
        %v469 = vadd.f32 %v203, %v468
        %470 = vmatprep.mubr.f32.mxu0 0.0
        %v471 = vand.u32 %v249, 4294901760
        %v472 = vsub.f32 %v249, %v471
        %v473 = vand.u32 %v472, 4294901760
        %v474 = vsub.f32 %v472, %v473
        %v475 = vand.u32 %v474, 4294901760
        %476 = vmatmul.mubr.f32.gmra.mxu0 %v475
        %v477 = vpop.f32.mrf.mxu0
        %v478 = vadd.f32 %v199, %v477
        %v479 = vpop.f32.mrf.mxu0
        %v480 = vadd.f32 %v203, %v479
        %481 = vmatprep.mubr.f32.mxu0 0.0
        %v482 = vand.u32 %v252, 4294901760
        %v483 = vsub.f32 %v252, %v482
        %v484 = vand.u32 %v483, 4294901760
        %v485 = vsub.f32 %v483, %v484
        %v486 = vand.u32 %v485, 4294901760
        %487 = vmatmul.mubr.f32.gmra.mxu0 %v486
        %v488 = vpop.f32.mrf.mxu0
        %v489 = vadd.f32 %v199, %v488
        %v490 = vpop.f32.mrf.mxu0
        %v491 = vadd.f32 %v203, %v490
        %492 = vmatprep.mubr.f32.mxu0 0.0
        %v493 = vand.u32 %v255, 4294901760
        %v494 = vsub.f32 %v255, %v493
        %v495 = vand.u32 %v494, 4294901760
        %v496 = vsub.f32 %v494, %v495
        %v497 = vand.u32 %v496, 4294901760
        %498 = vmatmul.mubr.f32.gmra.mxu0 %v497
        %v499 = vpop.f32.mrf.mxu0
        %v500 = vadd.f32 %v199, %v499
        %v501 = vpop.f32.mrf.mxu0
        %v502 = vadd.f32 %v203, %v501
        %503 = vmatprep.mubr.f32.mxu0 0.0
        %v504 = vand.u32 %v258, 4294901760
        %v505 = vsub.f32 %v258, %v504
        %v506 = vand.u32 %v505, 4294901760
        %v507 = vsub.f32 %v505, %v506
        %v508 = vand.u32 %v507, 4294901760
        %509 = vmatmul.mubr.f32.gmra.mxu0 %v508
        %v510 = vpop.f32.mrf.mxu0
        %v511 = vadd.f32 %v199, %v510
        %v512 = vpop.f32.mrf.mxu0
        %v513 = vadd.f32 %v203, %v512
        %514 = vdwg.mxu0
        %515 = vmatprep.subr.mxu0 0.0
        %516 = vmatpush1.msra.mxu0 0.0
        %517 = vmatprep.subr.mxu0 0.0
        %518 = vmatpush1.msra.mxu0 0.0
        %519 = vmatprep.subr.mxu0 0.0
        %520 = vmatpush1.msra.mxu0 0.0
        %521 = vmatprep.subr.mxu0 0.0
        %522 = vmatpush1.msra.mxu0 0.0
        %523 = vmatprep.subr.mxu0 0.0
        %524 = vmatpush1.msra.mxu0 0.0
        %525 = vmatprep.subr.mxu0 0.0
        %526 = vmatpush1.msra.mxu0 0.0
        %527 = vmatprep.subr.mxu0 0.0
        %528 = vmatpush1.msra.mxu0 0.0
        %529 = vmatprep.subr.mxu0 0.0
        %530 = vmatpush1.msra.mxu0 0.0
        %531 = vmatprep.subr.mxu0 0.0
        %532 = vmatpush1.msra.mxu0 0.0
        %533 = vmatprep.subr.mxu0 0.0
        %534 = vmatpush1.msra.mxu0 0.0
        %535 = vmatprep.subr.mxu0 0.0
        %536 = vmatpush1.msra.mxu0 0.0
        %537 = vmatprep.subr.mxu0 0.0
        %538 = vmatpush1.msra.mxu0 0.0
        %539 = vmatprep.subr.mxu0 0.0
        %540 = vmatpush1.msra.mxu0 0.0
        %541 = vmatprep.subr.mxu0 0.0
        %542 = vmatpush1.msra.mxu0 0.0
        %v543 = vand.u32 %v265, 4294901760
        %v544 = vsub.f32 %v265, %v543
        %v545 = vand.u32 %v544, 4294901760
        %v546 = vsub.f32 %v544, %v545
        %v547 = vand.u32 %v546, 4294901760
        %548 = vmatprep.subr.mxu0 %v547
        %v549 = vand.u32 %v262, 4294901760
        %v550 = vsub.f32 %v262, %v549
        %v551 = vand.u32 %v550, 4294901760
        %v552 = vsub.f32 %v550, %v551
        %v553 = vand.u32 %v552, 4294901760
        %554 = vmatpush1.msra.mxu0 %v553
        %v555 = vand.u32 %v189, 4294901760
        %v556 = vsub.f32 %v189, %v555
        %v557 = vand.u32 %v556, 4294901760
        %v558 = vsub.f32 %v556, %v557
        %v559 = vand.u32 %v558, 4294901760
        %560 = vmatprep.subr.mxu0 %v559
        %v561 = vand.u32 %v188, 4294901760
        %v562 = vsub.f32 %v188, %v561
        %v563 = vand.u32 %v562, 4294901760
        %v564 = vsub.f32 %v562, %v563
        %v565 = vand.u32 %v564, 4294901760
        %566 = vmatpush1.msra.mxu0 %v565
        %567 = vmatprep.subr.mxu0 0.0
        %568 = vmatpush2.msra.mxu0 0.0
        %569 = vmatprep.subr.mxu0 0.0
        %570 = vmatpush2.msra.mxu0 0.0
        %571 = vmatprep.subr.mxu0 0.0
        %572 = vmatpush2.msra.mxu0 0.0
        %573 = vmatprep.subr.mxu0 0.0
        %574 = vmatpush2.msra.mxu0 0.0
        %575 = vmatprep.subr.mxu0 0.0
        %576 = vmatpush2.msra.mxu0 0.0
        %577 = vmatprep.subr.mxu0 0.0
        %578 = vmatpush2.msra.mxu0 0.0
        %579 = vmatprep.subr.mxu0 0.0
        %580 = vmatpush2.msra.mxu0 0.0
        %581 = vmatprep.subr.mxu0 0.0
        %582 = vmatpush2.msra.mxu0 0.0
        %583 = vmatprep.subr.mxu0 0.0
        %584 = vmatpush2.msra.mxu0 0.0
        %585 = vmatprep.subr.mxu0 0.0
        %586 = vmatpush2.msra.mxu0 0.0
        %587 = vmatprep.subr.mxu0 0.0
        %588 = vmatpush2.msra.mxu0 0.0
        %589 = vmatprep.subr.mxu0 0.0
        %590 = vmatpush2.msra.mxu0 0.0
        %591 = vmatprep.subr.mxu0 0.0
        %592 = vmatpush2.msra.mxu0 0.0
        %593 = vmatprep.subr.mxu0 0.0
        %594 = vmatpush2.msra.mxu0 0.0
        %595 = vmatprep.subr.mxu0 0.0
        %596 = vmatpush2.msra.mxu0 0.0
        %597 = vmatprep.subr.mxu0 0.0
        %598 = vmatpush2.msra.mxu0 0.0
        %599 = vmatprep.mubr.f32.mxu0 0.0
        %v600 = vand.u32 %v213, 4294901760
        %601 = vmatmul.mubr.f32.gmra.mxu0 %v600
        %v602 = vpop.f32.mrf.mxu0
        %v603 = vadd.f32 %v346, %v602
        %v604 = vpop.f32.mrf.mxu0
        %v605 = vadd.f32 %v348, %v604
        %606 = vmatprep.mubr.f32.mxu0 0.0
        %v607 = vand.u32 %v216, 4294901760
        %608 = vmatmul.mubr.f32.gmra.mxu0 %v607
        %v609 = vpop.f32.mrf.mxu0
        %v610 = vadd.f32 %v357, %v609
        %v611 = vpop.f32.mrf.mxu0
        %v612 = vadd.f32 %v359, %v611
        %613 = vmatprep.mubr.f32.mxu0 0.0
        %v614 = vand.u32 %v219, 4294901760
        %615 = vmatmul.mubr.f32.gmra.mxu0 %v614
        %v616 = vpop.f32.mrf.mxu0
        %v617 = vadd.f32 %v368, %v616
        %v618 = vpop.f32.mrf.mxu0
        %v619 = vadd.f32 %v370, %v618
        %620 = vmatprep.mubr.f32.mxu0 0.0
        %v621 = vand.u32 %v222, 4294901760
        %622 = vmatmul.mubr.f32.gmra.mxu0 %v621
        %v623 = vpop.f32.mrf.mxu0
        %v624 = vadd.f32 %v379, %v623
        %v625 = vpop.f32.mrf.mxu0
        %v626 = vadd.f32 %v381, %v625
        %627 = vmatprep.mubr.f32.mxu0 0.0
        %v628 = vand.u32 %v225, 4294901760
        %629 = vmatmul.mubr.f32.gmra.mxu0 %v628
        %v630 = vpop.f32.mrf.mxu0
        %v631 = vadd.f32 %v390, %v630
        %v632 = vpop.f32.mrf.mxu0
        %v633 = vadd.f32 %v392, %v632
        %634 = vmatprep.mubr.f32.mxu0 0.0
        %v635 = vand.u32 %v228, 4294901760
        %636 = vmatmul.mubr.f32.gmra.mxu0 %v635
        %v637 = vpop.f32.mrf.mxu0
        %v638 = vadd.f32 %v401, %v637
        %v639 = vpop.f32.mrf.mxu0
        %v640 = vadd.f32 %v403, %v639
        %641 = vmatprep.mubr.f32.mxu0 0.0
        %v642 = vand.u32 %v231, 4294901760
        %643 = vmatmul.mubr.f32.gmra.mxu0 %v642
        %v644 = vpop.f32.mrf.mxu0
        %v645 = vadd.f32 %v412, %v644
        %v646 = vpop.f32.mrf.mxu0
        %v647 = vadd.f32 %v414, %v646
        %648 = vmatprep.mubr.f32.mxu0 0.0
        %v649 = vand.u32 %v234, 4294901760
        %650 = vmatmul.mubr.f32.gmra.mxu0 %v649
        %v651 = vpop.f32.mrf.mxu0
        %v652 = vadd.f32 %v423, %v651
        %v653 = vpop.f32.mrf.mxu0
        %v654 = vadd.f32 %v425, %v653
        %655 = vmatprep.mubr.f32.mxu0 0.0
        %v656 = vand.u32 %v237, 4294901760
        %657 = vmatmul.mubr.f32.gmra.mxu0 %v656
        %v658 = vpop.f32.mrf.mxu0
        %v659 = vadd.f32 %v434, %v658
        %v660 = vpop.f32.mrf.mxu0
        %v661 = vadd.f32 %v436, %v660
        %662 = vmatprep.mubr.f32.mxu0 0.0
        %v663 = vand.u32 %v240, 4294901760
        %664 = vmatmul.mubr.f32.gmra.mxu0 %v663
        %v665 = vpop.f32.mrf.mxu0
        %v666 = vadd.f32 %v445, %v665
        %v667 = vpop.f32.mrf.mxu0
        %v668 = vadd.f32 %v447, %v667
        %669 = vmatprep.mubr.f32.mxu0 0.0
        %v670 = vand.u32 %v243, 4294901760
        %671 = vmatmul.mubr.f32.gmra.mxu0 %v670
        %v672 = vpop.f32.mrf.mxu0
        %v673 = vadd.f32 %v456, %v672
        %v674 = vpop.f32.mrf.mxu0
        %v675 = vadd.f32 %v458, %v674
        %676 = vmatprep.mubr.f32.mxu0 0.0
        %v677 = vand.u32 %v246, 4294901760
        %678 = vmatmul.mubr.f32.gmra.mxu0 %v677
        %v679 = vpop.f32.mrf.mxu0
        %v680 = vadd.f32 %v467, %v679
        %v681 = vpop.f32.mrf.mxu0
        %v682 = vadd.f32 %v469, %v681
        %683 = vmatprep.mubr.f32.mxu0 0.0
        %v684 = vand.u32 %v249, 4294901760
        %685 = vmatmul.mubr.f32.gmra.mxu0 %v684
        %v686 = vpop.f32.mrf.mxu0
        %v687 = vadd.f32 %v478, %v686
        %v688 = vpop.f32.mrf.mxu0
        %v689 = vadd.f32 %v480, %v688
        %690 = vmatprep.mubr.f32.mxu0 0.0
        %v691 = vand.u32 %v252, 4294901760
        %692 = vmatmul.mubr.f32.gmra.mxu0 %v691
        %v693 = vpop.f32.mrf.mxu0
        %v694 = vadd.f32 %v489, %v693
        %v695 = vpop.f32.mrf.mxu0
        %v696 = vadd.f32 %v491, %v695
        %697 = vmatprep.mubr.f32.mxu0 0.0
        %v698 = vand.u32 %v255, 4294901760
        %699 = vmatmul.mubr.f32.gmra.mxu0 %v698
        %v700 = vpop.f32.mrf.mxu0
        %v701 = vadd.f32 %v500, %v700
        %v702 = vpop.f32.mrf.mxu0
        %v703 = vadd.f32 %v502, %v702
        %704 = vmatprep.mubr.f32.mxu0 0.0
        %v705 = vand.u32 %v258, 4294901760
        %706 = vmatmul.mubr.f32.gmra.mxu0 %v705
        %v707 = vpop.f32.mrf.mxu0
        %v708 = vadd.f32 %v511, %v707
        %v709 = vpop.f32.mrf.mxu0
        %v710 = vadd.f32 %v513, %v709
        %711 = vdwg.mxu0
        %712 = vmatprep.subr.mxu0 0.0
        %713 = vmatpush1.msra.mxu0 0.0
        %714 = vmatprep.subr.mxu0 0.0
        %715 = vmatpush1.msra.mxu0 0.0
        %716 = vmatprep.subr.mxu0 0.0
        %717 = vmatpush1.msra.mxu0 0.0
        %718 = vmatprep.subr.mxu0 0.0
        %719 = vmatpush1.msra.mxu0 0.0
        %720 = vmatprep.subr.mxu0 0.0
        %721 = vmatpush1.msra.mxu0 0.0
        %722 = vmatprep.subr.mxu0 0.0
        %723 = vmatpush1.msra.mxu0 0.0
        %724 = vmatprep.subr.mxu0 0.0
        %725 = vmatpush1.msra.mxu0 0.0
        %726 = vmatprep.subr.mxu0 0.0
        %727 = vmatpush1.msra.mxu0 0.0
        %728 = vmatprep.subr.mxu0 0.0
        %729 = vmatpush1.msra.mxu0 0.0
        %730 = vmatprep.subr.mxu0 0.0
        %731 = vmatpush1.msra.mxu0 0.0
        %732 = vmatprep.subr.mxu0 0.0
        %733 = vmatpush1.msra.mxu0 0.0
        %734 = vmatprep.subr.mxu0 0.0
        %735 = vmatpush1.msra.mxu0 0.0
        %736 = vmatprep.subr.mxu0 0.0
        %737 = vmatpush1.msra.mxu0 0.0
        %738 = vmatprep.subr.mxu0 0.0
        %739 = vmatpush1.msra.mxu0 0.0
        %v740 = vand.u32 %v265, 4294901760
        %v741 = vsub.f32 %v265, %v740
        %742 = vmatprep.subr.mxu0 %v741
        %v743 = vand.u32 %v262, 4294901760
        %v744 = vsub.f32 %v262, %v743
        %745 = vmatpush1.msra.mxu0 %v744
        %v746 = vand.u32 %v189, 4294901760
        %v747 = vsub.f32 %v189, %v746
        %748 = vmatprep.subr.mxu0 %v747
        %v749 = vand.u32 %v188, 4294901760
        %v750 = vsub.f32 %v188, %v749
        %751 = vmatpush1.msra.mxu0 %v750
        %752 = vmatprep.subr.mxu0 0.0
        %753 = vmatpush2.msra.mxu0 0.0
        %754 = vmatprep.subr.mxu0 0.0
        %755 = vmatpush2.msra.mxu0 0.0
        %756 = vmatprep.subr.mxu0 0.0
        %757 = vmatpush2.msra.mxu0 0.0
        %758 = vmatprep.subr.mxu0 0.0
        %759 = vmatpush2.msra.mxu0 0.0
        %760 = vmatprep.subr.mxu0 0.0
        %761 = vmatpush2.msra.mxu0 0.0
        %762 = vmatprep.subr.mxu0 0.0
        %763 = vmatpush2.msra.mxu0 0.0
        %764 = vmatprep.subr.mxu0 0.0
        %765 = vmatpush2.msra.mxu0 0.0
        %766 = vmatprep.subr.mxu0 0.0
        %767 = vmatpush2.msra.mxu0 0.0
        %768 = vmatprep.subr.mxu0 0.0
        %769 = vmatpush2.msra.mxu0 0.0
        %770 = vmatprep.subr.mxu0 0.0
        %771 = vmatpush2.msra.mxu0 0.0
        %772 = vmatprep.subr.mxu0 0.0
        %773 = vmatpush2.msra.mxu0 0.0
        %774 = vmatprep.subr.mxu0 0.0
        %775 = vmatpush2.msra.mxu0 0.0
        %776 = vmatprep.subr.mxu0 0.0
        %777 = vmatpush2.msra.mxu0 0.0
        %778 = vmatprep.subr.mxu0 0.0
        %779 = vmatpush2.msra.mxu0 0.0
        %780 = vmatprep.subr.mxu0 0.0
        %781 = vmatpush2.msra.mxu0 0.0
        %782 = vmatprep.subr.mxu0 0.0
        %783 = vmatpush2.msra.mxu0 0.0
        %784 = vmatprep.mubr.f32.mxu0 0.0
        %v785 = vand.u32 %v213, 4294901760
        %v786 = vsub.f32 %v213, %v785
        %787 = vmatmul.mubr.f32.gmra.mxu0 %v786
        %v788 = vpop.f32.mrf.mxu0
        %v789 = vadd.f32 %v603, %v788
        %v790 = vpop.f32.mrf.mxu0
        %v791 = vadd.f32 %v605, %v790
        %792 = vmatprep.mubr.f32.mxu0 0.0
        %v793 = vand.u32 %v216, 4294901760
        %v794 = vsub.f32 %v216, %v793
        %795 = vmatmul.mubr.f32.gmra.mxu0 %v794
        %v796 = vpop.f32.mrf.mxu0
        %v797 = vadd.f32 %v610, %v796
        %v798 = vpop.f32.mrf.mxu0
        %v799 = vadd.f32 %v612, %v798
        %800 = vmatprep.mubr.f32.mxu0 0.0
        %v801 = vand.u32 %v219, 4294901760
        %v802 = vsub.f32 %v219, %v801
        %803 = vmatmul.mubr.f32.gmra.mxu0 %v802
        %v804 = vpop.f32.mrf.mxu0
        %v805 = vadd.f32 %v617, %v804
        %v806 = vpop.f32.mrf.mxu0
        %v807 = vadd.f32 %v619, %v806
        %808 = vmatprep.mubr.f32.mxu0 0.0
        %v809 = vand.u32 %v222, 4294901760
        %v810 = vsub.f32 %v222, %v809
        %811 = vmatmul.mubr.f32.gmra.mxu0 %v810
        %v812 = vpop.f32.mrf.mxu0
        %v813 = vadd.f32 %v624, %v812
        %v814 = vpop.f32.mrf.mxu0
        %v815 = vadd.f32 %v626, %v814
        %816 = vmatprep.mubr.f32.mxu0 0.0
        %v817 = vand.u32 %v225, 4294901760
        %v818 = vsub.f32 %v225, %v817
        %819 = vmatmul.mubr.f32.gmra.mxu0 %v818
        %v820 = vpop.f32.mrf.mxu0
        %v821 = vadd.f32 %v631, %v820
        %v822 = vpop.f32.mrf.mxu0
        %v823 = vadd.f32 %v633, %v822
        %824 = vmatprep.mubr.f32.mxu0 0.0
        %v825 = vand.u32 %v228, 4294901760
        %v826 = vsub.f32 %v228, %v825
        %827 = vmatmul.mubr.f32.gmra.mxu0 %v826
        %v828 = vpop.f32.mrf.mxu0
        %v829 = vadd.f32 %v638, %v828
        %v830 = vpop.f32.mrf.mxu0
        %v831 = vadd.f32 %v640, %v830
        %832 = vmatprep.mubr.f32.mxu0 0.0
        %v833 = vand.u32 %v231, 4294901760
        %v834 = vsub.f32 %v231, %v833
        %835 = vmatmul.mubr.f32.gmra.mxu0 %v834
        %v836 = vpop.f32.mrf.mxu0
        %v837 = vadd.f32 %v645, %v836
        %v838 = vpop.f32.mrf.mxu0
        %v839 = vadd.f32 %v647, %v838
        %840 = vmatprep.mubr.f32.mxu0 0.0
        %v841 = vand.u32 %v234, 4294901760
        %v842 = vsub.f32 %v234, %v841
        %843 = vmatmul.mubr.f32.gmra.mxu0 %v842
        %v844 = vpop.f32.mrf.mxu0
        %v845 = vadd.f32 %v652, %v844
        %v846 = vpop.f32.mrf.mxu0
        %v847 = vadd.f32 %v654, %v846
        %848 = vmatprep.mubr.f32.mxu0 0.0
        %v849 = vand.u32 %v237, 4294901760
        %v850 = vsub.f32 %v237, %v849
        %851 = vmatmul.mubr.f32.gmra.mxu0 %v850
        %v852 = vpop.f32.mrf.mxu0
        %v853 = vadd.f32 %v659, %v852
        %v854 = vpop.f32.mrf.mxu0
        %v855 = vadd.f32 %v661, %v854
        %856 = vmatprep.mubr.f32.mxu0 0.0
        %v857 = vand.u32 %v240, 4294901760
        %v858 = vsub.f32 %v240, %v857
        %859 = vmatmul.mubr.f32.gmra.mxu0 %v858
        %v860 = vpop.f32.mrf.mxu0
        %v861 = vadd.f32 %v666, %v860
        %v862 = vpop.f32.mrf.mxu0
        %v863 = vadd.f32 %v668, %v862
        %864 = vmatprep.mubr.f32.mxu0 0.0
        %v865 = vand.u32 %v243, 4294901760
        %v866 = vsub.f32 %v243, %v865
        %867 = vmatmul.mubr.f32.gmra.mxu0 %v866
        %v868 = vpop.f32.mrf.mxu0
        %v869 = vadd.f32 %v673, %v868
        %v870 = vpop.f32.mrf.mxu0
        %v871 = vadd.f32 %v675, %v870
        %872 = vmatprep.mubr.f32.mxu0 0.0
        %v873 = vand.u32 %v246, 4294901760
        %v874 = vsub.f32 %v246, %v873
        %875 = vmatmul.mubr.f32.gmra.mxu0 %v874
        %v876 = vpop.f32.mrf.mxu0
        %v877 = vadd.f32 %v680, %v876
        %v878 = vpop.f32.mrf.mxu0
        %v879 = vadd.f32 %v682, %v878
        %880 = vmatprep.mubr.f32.mxu0 0.0
        %v881 = vand.u32 %v249, 4294901760
        %v882 = vsub.f32 %v249, %v881
        %883 = vmatmul.mubr.f32.gmra.mxu0 %v882
        %v884 = vpop.f32.mrf.mxu0
        %v885 = vadd.f32 %v687, %v884
        %v886 = vpop.f32.mrf.mxu0
        %v887 = vadd.f32 %v689, %v886
        %888 = vmatprep.mubr.f32.mxu0 0.0
        %v889 = vand.u32 %v252, 4294901760
        %v890 = vsub.f32 %v252, %v889
        %891 = vmatmul.mubr.f32.gmra.mxu0 %v890
        %v892 = vpop.f32.mrf.mxu0
        %v893 = vadd.f32 %v694, %v892
        %v894 = vpop.f32.mrf.mxu0
        %v895 = vadd.f32 %v696, %v894
        %896 = vmatprep.mubr.f32.mxu0 0.0
        %v897 = vand.u32 %v255, 4294901760
        %v898 = vsub.f32 %v255, %v897
        %899 = vmatmul.mubr.f32.gmra.mxu0 %v898
        %v900 = vpop.f32.mrf.mxu0
        %v901 = vadd.f32 %v701, %v900
        %v902 = vpop.f32.mrf.mxu0
        %v903 = vadd.f32 %v703, %v902
        %904 = vmatprep.mubr.f32.mxu0 0.0
        %v905 = vand.u32 %v258, 4294901760
        %v906 = vsub.f32 %v258, %v905
        %907 = vmatmul.mubr.f32.gmra.mxu0 %v906
        %v908 = vpop.f32.mrf.mxu0
        %v909 = vadd.f32 %v708, %v908
        %v910 = vpop.f32.mrf.mxu0
        %v911 = vadd.f32 %v710, %v910
        %912 = vdwg.mxu0
        %913 = vmatprep.subr.mxu0 0.0
        %914 = vmatpush1.msra.mxu0 0.0
        %915 = vmatprep.subr.mxu0 0.0
        %916 = vmatpush1.msra.mxu0 0.0
        %917 = vmatprep.subr.mxu0 0.0
        %918 = vmatpush1.msra.mxu0 0.0
        %919 = vmatprep.subr.mxu0 0.0
        %920 = vmatpush1.msra.mxu0 0.0
        %921 = vmatprep.subr.mxu0 0.0
        %922 = vmatpush1.msra.mxu0 0.0
        %923 = vmatprep.subr.mxu0 0.0
        %924 = vmatpush1.msra.mxu0 0.0
        %925 = vmatprep.subr.mxu0 0.0
        %926 = vmatpush1.msra.mxu0 0.0
        %927 = vmatprep.subr.mxu0 0.0
        %928 = vmatpush1.msra.mxu0 0.0
        %929 = vmatprep.subr.mxu0 0.0
        %930 = vmatpush1.msra.mxu0 0.0
        %931 = vmatprep.subr.mxu0 0.0
        %932 = vmatpush1.msra.mxu0 0.0
        %933 = vmatprep.subr.mxu0 0.0
        %934 = vmatpush1.msra.mxu0 0.0
        %935 = vmatprep.subr.mxu0 0.0
        %936 = vmatpush1.msra.mxu0 0.0
        %937 = vmatprep.subr.mxu0 0.0
        %938 = vmatpush1.msra.mxu0 0.0
        %939 = vmatprep.subr.mxu0 0.0
        %940 = vmatpush1.msra.mxu0 0.0
        %v941 = vand.u32 %v265, 4294901760
        %942 = vmatprep.subr.mxu0 %v941
        %v943 = vand.u32 %v262, 4294901760
        %944 = vmatpush1.msra.mxu0 %v943
        %v945 = vand.u32 %v189, 4294901760
        %946 = vmatprep.subr.mxu0 %v945
        %v947 = vand.u32 %v188, 4294901760
        %948 = vmatpush1.msra.mxu0 %v947
        %949 = vmatprep.subr.mxu0 0.0
        %950 = vmatpush2.msra.mxu0 0.0
        %951 = vmatprep.subr.mxu0 0.0
        %952 = vmatpush2.msra.mxu0 0.0
        %953 = vmatprep.subr.mxu0 0.0
        %954 = vmatpush2.msra.mxu0 0.0
        %955 = vmatprep.subr.mxu0 0.0
        %956 = vmatpush2.msra.mxu0 0.0
        %957 = vmatprep.subr.mxu0 0.0
        %958 = vmatpush2.msra.mxu0 0.0
        %959 = vmatprep.subr.mxu0 0.0
        %960 = vmatpush2.msra.mxu0 0.0
        %961 = vmatprep.subr.mxu0 0.0
        %962 = vmatpush2.msra.mxu0 0.0
        %963 = vmatprep.subr.mxu0 0.0
        %964 = vmatpush2.msra.mxu0 0.0
        %965 = vmatprep.subr.mxu0 0.0
        %966 = vmatpush2.msra.mxu0 0.0
        %967 = vmatprep.subr.mxu0 0.0
        %968 = vmatpush2.msra.mxu0 0.0
        %969 = vmatprep.subr.mxu0 0.0
        %970 = vmatpush2.msra.mxu0 0.0
        %971 = vmatprep.subr.mxu0 0.0
        %972 = vmatpush2.msra.mxu0 0.0
        %973 = vmatprep.subr.mxu0 0.0
        %974 = vmatpush2.msra.mxu0 0.0
        %975 = vmatprep.subr.mxu0 0.0
        %976 = vmatpush2.msra.mxu0 0.0
        %977 = vmatprep.subr.mxu0 0.0
        %978 = vmatpush2.msra.mxu0 0.0
        %979 = vmatprep.subr.mxu0 0.0
        %980 = vmatpush2.msra.mxu0 0.0
        %981 = vmatprep.mubr.f32.mxu0 0.0
        %v982 = vand.u32 %v213, 4294901760
        %v983 = vsub.f32 %v213, %v982
        %v984 = vand.u32 %v983, 4294901760
        %985 = vmatmul.mubr.f32.gmra.mxu0 %v984
        %v986 = vpop.f32.mrf.mxu0
        %v987 = vadd.f32 %v789, %v986
        %v988 = vpop.f32.mrf.mxu0
        %v989 = vadd.f32 %v791, %v988
        %990 = vmatprep.mubr.f32.mxu0 0.0
        %v991 = vand.u32 %v216, 4294901760
        %v992 = vsub.f32 %v216, %v991
        %v993 = vand.u32 %v992, 4294901760
        %994 = vmatmul.mubr.f32.gmra.mxu0 %v993
        %v995 = vpop.f32.mrf.mxu0
        %v996 = vadd.f32 %v797, %v995
        %v997 = vpop.f32.mrf.mxu0
        %v998 = vadd.f32 %v799, %v997
        %999 = vmatprep.mubr.f32.mxu0 0.0
        %v1000 = vand.u32 %v219, 4294901760
        %v1001 = vsub.f32 %v219, %v1000
        %v1002 = vand.u32 %v1001, 4294901760
        %1003 = vmatmul.mubr.f32.gmra.mxu0 %v1002
        %v1004 = vpop.f32.mrf.mxu0
        %v1005 = vadd.f32 %v805, %v1004
        %v1006 = vpop.f32.mrf.mxu0
        %v1007 = vadd.f32 %v807, %v1006
        %1008 = vmatprep.mubr.f32.mxu0 0.0
        %v1009 = vand.u32 %v222, 4294901760
        %v1010 = vsub.f32 %v222, %v1009
        %v1011 = vand.u32 %v1010, 4294901760
        %1012 = vmatmul.mubr.f32.gmra.mxu0 %v1011
        %v1013 = vpop.f32.mrf.mxu0
        %v1014 = vadd.f32 %v813, %v1013
        %v1015 = vpop.f32.mrf.mxu0
        %v1016 = vadd.f32 %v815, %v1015
        %1017 = vmatprep.mubr.f32.mxu0 0.0
        %v1018 = vand.u32 %v225, 4294901760
        %v1019 = vsub.f32 %v225, %v1018
        %v1020 = vand.u32 %v1019, 4294901760
        %1021 = vmatmul.mubr.f32.gmra.mxu0 %v1020
        %v1022 = vpop.f32.mrf.mxu0
        %v1023 = vadd.f32 %v821, %v1022
        %v1024 = vpop.f32.mrf.mxu0
        %v1025 = vadd.f32 %v823, %v1024
        %1026 = vmatprep.mubr.f32.mxu0 0.0
        %v1027 = vand.u32 %v228, 4294901760
        %v1028 = vsub.f32 %v228, %v1027
        %v1029 = vand.u32 %v1028, 4294901760
        %1030 = vmatmul.mubr.f32.gmra.mxu0 %v1029
        %v1031 = vpop.f32.mrf.mxu0
        %v1032 = vadd.f32 %v829, %v1031
        %v1033 = vpop.f32.mrf.mxu0
        %v1034 = vadd.f32 %v831, %v1033
        %1035 = vmatprep.mubr.f32.mxu0 0.0
        %v1036 = vand.u32 %v231, 4294901760
        %v1037 = vsub.f32 %v231, %v1036
        %v1038 = vand.u32 %v1037, 4294901760
        %1039 = vmatmul.mubr.f32.gmra.mxu0 %v1038
        %v1040 = vpop.f32.mrf.mxu0
        %v1041 = vadd.f32 %v837, %v1040
        %v1042 = vpop.f32.mrf.mxu0
        %v1043 = vadd.f32 %v839, %v1042
        %1044 = vmatprep.mubr.f32.mxu0 0.0
        %v1045 = vand.u32 %v234, 4294901760
        %v1046 = vsub.f32 %v234, %v1045
        %v1047 = vand.u32 %v1046, 4294901760
        %1048 = vmatmul.mubr.f32.gmra.mxu0 %v1047
        %v1049 = vpop.f32.mrf.mxu0
        %v1050 = vadd.f32 %v845, %v1049
        %v1051 = vpop.f32.mrf.mxu0
        %v1052 = vadd.f32 %v847, %v1051
        %1053 = vmatprep.mubr.f32.mxu0 0.0
        %v1054 = vand.u32 %v237, 4294901760
        %v1055 = vsub.f32 %v237, %v1054
        %v1056 = vand.u32 %v1055, 4294901760
        %1057 = vmatmul.mubr.f32.gmra.mxu0 %v1056
        %v1058 = vpop.f32.mrf.mxu0
        %v1059 = vadd.f32 %v853, %v1058
        %v1060 = vpop.f32.mrf.mxu0
        %v1061 = vadd.f32 %v855, %v1060
        %1062 = vmatprep.mubr.f32.mxu0 0.0
        %v1063 = vand.u32 %v240, 4294901760
        %v1064 = vsub.f32 %v240, %v1063
        %v1065 = vand.u32 %v1064, 4294901760
        %1066 = vmatmul.mubr.f32.gmra.mxu0 %v1065
        %v1067 = vpop.f32.mrf.mxu0
        %v1068 = vadd.f32 %v861, %v1067
        %v1069 = vpop.f32.mrf.mxu0
        %v1070 = vadd.f32 %v863, %v1069
        %1071 = vmatprep.mubr.f32.mxu0 0.0
        %v1072 = vand.u32 %v243, 4294901760
        %v1073 = vsub.f32 %v243, %v1072
        %v1074 = vand.u32 %v1073, 4294901760
        %1075 = vmatmul.mubr.f32.gmra.mxu0 %v1074
        %v1076 = vpop.f32.mrf.mxu0
        %v1077 = vadd.f32 %v869, %v1076
        %v1078 = vpop.f32.mrf.mxu0
        %v1079 = vadd.f32 %v871, %v1078
        %1080 = vmatprep.mubr.f32.mxu0 0.0
        %v1081 = vand.u32 %v246, 4294901760
        %v1082 = vsub.f32 %v246, %v1081
        %v1083 = vand.u32 %v1082, 4294901760
        %1084 = vmatmul.mubr.f32.gmra.mxu0 %v1083
        %v1085 = vpop.f32.mrf.mxu0
        %v1086 = vadd.f32 %v877, %v1085
        %v1087 = vpop.f32.mrf.mxu0
        %v1088 = vadd.f32 %v879, %v1087
        %1089 = vmatprep.mubr.f32.mxu0 0.0
        %v1090 = vand.u32 %v249, 4294901760
        %v1091 = vsub.f32 %v249, %v1090
        %v1092 = vand.u32 %v1091, 4294901760
        %1093 = vmatmul.mubr.f32.gmra.mxu0 %v1092
        %v1094 = vpop.f32.mrf.mxu0
        %v1095 = vadd.f32 %v885, %v1094
        %v1096 = vpop.f32.mrf.mxu0
        %v1097 = vadd.f32 %v887, %v1096
        %1098 = vmatprep.mubr.f32.mxu0 0.0
        %v1099 = vand.u32 %v252, 4294901760
        %v1100 = vsub.f32 %v252, %v1099
        %v1101 = vand.u32 %v1100, 4294901760
        %1102 = vmatmul.mubr.f32.gmra.mxu0 %v1101
        %v1103 = vpop.f32.mrf.mxu0
        %v1104 = vadd.f32 %v893, %v1103
        %v1105 = vpop.f32.mrf.mxu0
        %v1106 = vadd.f32 %v895, %v1105
        %1107 = vmatprep.mubr.f32.mxu0 0.0
        %v1108 = vand.u32 %v255, 4294901760
        %v1109 = vsub.f32 %v255, %v1108
        %v1110 = vand.u32 %v1109, 4294901760
        %1111 = vmatmul.mubr.f32.gmra.mxu0 %v1110
        %v1112 = vpop.f32.mrf.mxu0
        %v1113 = vadd.f32 %v901, %v1112
        %v1114 = vpop.f32.mrf.mxu0
        %v1115 = vadd.f32 %v903, %v1114
        %1116 = vmatprep.mubr.f32.mxu0 0.0
        %v1117 = vand.u32 %v258, 4294901760
        %v1118 = vsub.f32 %v258, %v1117
        %v1119 = vand.u32 %v1118, 4294901760
        %1120 = vmatmul.mubr.f32.gmra.mxu0 %v1119
        %v1121 = vpop.f32.mrf.mxu0
        %v1122 = vadd.f32 %v909, %v1121
        %v1123 = vpop.f32.mrf.mxu0
        %v1124 = vadd.f32 %v911, %v1123
        %1125 = vdwg.mxu0
        %1126 = vmatprep.subr.mxu0 0.0
        %1127 = vmatpush1.msra.mxu0 0.0
        %1128 = vmatprep.subr.mxu0 0.0
        %1129 = vmatpush1.msra.mxu0 0.0
        %1130 = vmatprep.subr.mxu0 0.0
        %1131 = vmatpush1.msra.mxu0 0.0
        %1132 = vmatprep.subr.mxu0 0.0
        %1133 = vmatpush1.msra.mxu0 0.0
        %1134 = vmatprep.subr.mxu0 0.0
        %1135 = vmatpush1.msra.mxu0 0.0
        %1136 = vmatprep.subr.mxu0 0.0
        %1137 = vmatpush1.msra.mxu0 0.0
        %1138 = vmatprep.subr.mxu0 0.0
        %1139 = vmatpush1.msra.mxu0 0.0
        %1140 = vmatprep.subr.mxu0 0.0
        %1141 = vmatpush1.msra.mxu0 0.0
        %1142 = vmatprep.subr.mxu0 0.0
        %1143 = vmatpush1.msra.mxu0 0.0
        %1144 = vmatprep.subr.mxu0 0.0
        %1145 = vmatpush1.msra.mxu0 0.0
        %1146 = vmatprep.subr.mxu0 0.0
        %1147 = vmatpush1.msra.mxu0 0.0
        %1148 = vmatprep.subr.mxu0 0.0
        %1149 = vmatpush1.msra.mxu0 0.0
        %1150 = vmatprep.subr.mxu0 0.0
        %1151 = vmatpush1.msra.mxu0 0.0
        %1152 = vmatprep.subr.mxu0 0.0
        %1153 = vmatpush1.msra.mxu0 0.0
        %v1154 = vand.u32 %v265, 4294901760
        %v1155 = vsub.f32 %v265, %v1154
        %v1156 = vand.u32 %v1155, 4294901760
        %1157 = vmatprep.subr.mxu0 %v1156
        %v1158 = vand.u32 %v262, 4294901760
        %v1159 = vsub.f32 %v262, %v1158
        %v1160 = vand.u32 %v1159, 4294901760
        %1161 = vmatpush1.msra.mxu0 %v1160
        %v1162 = vand.u32 %v189, 4294901760
        %v1163 = vsub.f32 %v189, %v1162
        %v1164 = vand.u32 %v1163, 4294901760
        %1165 = vmatprep.subr.mxu0 %v1164
        %v1166 = vand.u32 %v188, 4294901760
        %v1167 = vsub.f32 %v188, %v1166
        %v1168 = vand.u32 %v1167, 4294901760
        %1169 = vmatpush1.msra.mxu0 %v1168
        %1170 = vmatprep.subr.mxu0 0.0
        %1171 = vmatpush2.msra.mxu0 0.0
        %1172 = vmatprep.subr.mxu0 0.0
        %1173 = vmatpush2.msra.mxu0 0.0
        %1174 = vmatprep.subr.mxu0 0.0
        %1175 = vmatpush2.msra.mxu0 0.0
        %1176 = vmatprep.subr.mxu0 0.0
        %1177 = vmatpush2.msra.mxu0 0.0
        %1178 = vmatprep.subr.mxu0 0.0
        %1179 = vmatpush2.msra.mxu0 0.0
        %1180 = vmatprep.subr.mxu0 0.0
        %1181 = vmatpush2.msra.mxu0 0.0
        %1182 = vmatprep.subr.mxu0 0.0
        %1183 = vmatpush2.msra.mxu0 0.0
        %1184 = vmatprep.subr.mxu0 0.0
        %1185 = vmatpush2.msra.mxu0 0.0
        %1186 = vmatprep.subr.mxu0 0.0
        %1187 = vmatpush2.msra.mxu0 0.0
        %1188 = vmatprep.subr.mxu0 0.0
        %1189 = vmatpush2.msra.mxu0 0.0
        %1190 = vmatprep.subr.mxu0 0.0
        %1191 = vmatpush2.msra.mxu0 0.0
        %1192 = vmatprep.subr.mxu0 0.0
        %1193 = vmatpush2.msra.mxu0 0.0
        %1194 = vmatprep.subr.mxu0 0.0
        %1195 = vmatpush2.msra.mxu0 0.0
        %1196 = vmatprep.subr.mxu0 0.0
        %1197 = vmatpush2.msra.mxu0 0.0
        %1198 = vmatprep.subr.mxu0 0.0
        %1199 = vmatpush2.msra.mxu0 0.0
        %1200 = vmatprep.subr.mxu0 0.0
        %1201 = vmatpush2.msra.mxu0 0.0
        %1202 = vmatprep.mubr.f32.mxu0 0.0
        %v1203 = vand.u32 %v213, 4294901760
        %1204 = vmatmul.mubr.f32.gmra.mxu0 %v1203
        %v1205 = vpop.f32.mrf.mxu0
        %v1206 = vadd.f32 %v987, %v1205
        %v1207 = vpop.f32.mrf.mxu0
        %v1208 = vadd.f32 %v989, %v1207
        %1209 = vmatprep.mubr.f32.mxu0 0.0
        %v1210 = vand.u32 %v216, 4294901760
        %1211 = vmatmul.mubr.f32.gmra.mxu0 %v1210
        %v1212 = vpop.f32.mrf.mxu0
        %v1213 = vadd.f32 %v996, %v1212
        %v1214 = vpop.f32.mrf.mxu0
        %v1215 = vadd.f32 %v998, %v1214
        %1216 = vmatprep.mubr.f32.mxu0 0.0
        %v1217 = vand.u32 %v219, 4294901760
        %1218 = vmatmul.mubr.f32.gmra.mxu0 %v1217
        %v1219 = vpop.f32.mrf.mxu0
        %v1220 = vadd.f32 %v1005, %v1219
        %v1221 = vpop.f32.mrf.mxu0
        %v1222 = vadd.f32 %v1007, %v1221
        %1223 = vmatprep.mubr.f32.mxu0 0.0
        %v1224 = vand.u32 %v222, 4294901760
        %1225 = vmatmul.mubr.f32.gmra.mxu0 %v1224
        %v1226 = vpop.f32.mrf.mxu0
        %v1227 = vadd.f32 %v1014, %v1226
        %v1228 = vpop.f32.mrf.mxu0
        %v1229 = vadd.f32 %v1016, %v1228
        %1230 = vmatprep.mubr.f32.mxu0 0.0
        %v1231 = vand.u32 %v225, 4294901760
        %1232 = vmatmul.mubr.f32.gmra.mxu0 %v1231
        %v1233 = vpop.f32.mrf.mxu0
        %v1234 = vadd.f32 %v1023, %v1233
        %v1235 = vpop.f32.mrf.mxu0
        %v1236 = vadd.f32 %v1025, %v1235
        %1237 = vmatprep.mubr.f32.mxu0 0.0
        %v1238 = vand.u32 %v228, 4294901760
        %1239 = vmatmul.mubr.f32.gmra.mxu0 %v1238
        %v1240 = vpop.f32.mrf.mxu0
        %v1241 = vadd.f32 %v1032, %v1240
        %v1242 = vpop.f32.mrf.mxu0
        %v1243 = vadd.f32 %v1034, %v1242
        %1244 = vmatprep.mubr.f32.mxu0 0.0
        %v1245 = vand.u32 %v231, 4294901760
        %1246 = vmatmul.mubr.f32.gmra.mxu0 %v1245
        %v1247 = vpop.f32.mrf.mxu0
        %v1248 = vadd.f32 %v1041, %v1247
        %v1249 = vpop.f32.mrf.mxu0
        %v1250 = vadd.f32 %v1043, %v1249
        %1251 = vmatprep.mubr.f32.mxu0 0.0
        %v1252 = vand.u32 %v234, 4294901760
        %1253 = vmatmul.mubr.f32.gmra.mxu0 %v1252
        %v1254 = vpop.f32.mrf.mxu0
        %v1255 = vadd.f32 %v1050, %v1254
        %v1256 = vpop.f32.mrf.mxu0
        %v1257 = vadd.f32 %v1052, %v1256
        %1258 = vmatprep.mubr.f32.mxu0 0.0
        %v1259 = vand.u32 %v237, 4294901760
        %1260 = vmatmul.mubr.f32.gmra.mxu0 %v1259
        %v1261 = vpop.f32.mrf.mxu0
        %v1262 = vadd.f32 %v1059, %v1261
        %v1263 = vpop.f32.mrf.mxu0
        %v1264 = vadd.f32 %v1061, %v1263
        %1265 = vmatprep.mubr.f32.mxu0 0.0
        %v1266 = vand.u32 %v240, 4294901760
        %1267 = vmatmul.mubr.f32.gmra.mxu0 %v1266
        %v1268 = vpop.f32.mrf.mxu0
        %v1269 = vadd.f32 %v1068, %v1268
        %v1270 = vpop.f32.mrf.mxu0
        %v1271 = vadd.f32 %v1070, %v1270
        %1272 = vmatprep.mubr.f32.mxu0 0.0
        %v1273 = vand.u32 %v243, 4294901760
        %1274 = vmatmul.mubr.f32.gmra.mxu0 %v1273
        %v1275 = vpop.f32.mrf.mxu0
        %v1276 = vadd.f32 %v1077, %v1275
        %v1277 = vpop.f32.mrf.mxu0
        %v1278 = vadd.f32 %v1079, %v1277
        %1279 = vmatprep.mubr.f32.mxu0 0.0
        %v1280 = vand.u32 %v246, 4294901760
        %1281 = vmatmul.mubr.f32.gmra.mxu0 %v1280
        %v1282 = vpop.f32.mrf.mxu0
        %v1283 = vadd.f32 %v1086, %v1282
        %v1284 = vpop.f32.mrf.mxu0
        %v1285 = vadd.f32 %v1088, %v1284
        %1286 = vmatprep.mubr.f32.mxu0 0.0
        %v1287 = vand.u32 %v249, 4294901760
        %1288 = vmatmul.mubr.f32.gmra.mxu0 %v1287
        %v1289 = vpop.f32.mrf.mxu0
        %v1290 = vadd.f32 %v1095, %v1289
        %v1291 = vpop.f32.mrf.mxu0
        %v1292 = vadd.f32 %v1097, %v1291
        %1293 = vmatprep.mubr.f32.mxu0 0.0
        %v1294 = vand.u32 %v252, 4294901760
        %1295 = vmatmul.mubr.f32.gmra.mxu0 %v1294
        %v1296 = vpop.f32.mrf.mxu0
        %v1297 = vadd.f32 %v1104, %v1296
        %v1298 = vpop.f32.mrf.mxu0
        %v1299 = vadd.f32 %v1106, %v1298
        %1300 = vmatprep.mubr.f32.mxu0 0.0
        %v1301 = vand.u32 %v255, 4294901760
        %1302 = vmatmul.mubr.f32.gmra.mxu0 %v1301
        %v1303 = vpop.f32.mrf.mxu0
        %v1304 = vadd.f32 %v1113, %v1303
        %v1305 = vpop.f32.mrf.mxu0
        %v1306 = vadd.f32 %v1115, %v1305
        %1307 = vmatprep.mubr.f32.mxu0 0.0
        %v1308 = vand.u32 %v258, 4294901760
        %1309 = vmatmul.mubr.f32.gmra.mxu0 %v1308
        %v1310 = vpop.f32.mrf.mxu0
        %v1311 = vadd.f32 %v1122, %v1310
        %v1312 = vpop.f32.mrf.mxu0
        %v1313 = vadd.f32 %v1124, %v1312
        %1314 = vdwg.mxu0
        %1315 = vmatprep.subr.mxu0 0.0
        %1316 = vmatpush1.msra.mxu0 0.0
        %1317 = vmatprep.subr.mxu0 0.0
        %1318 = vmatpush1.msra.mxu0 0.0
        %1319 = vmatprep.subr.mxu0 0.0
        %1320 = vmatpush1.msra.mxu0 0.0
        %1321 = vmatprep.subr.mxu0 0.0
        %1322 = vmatpush1.msra.mxu0 0.0
        %1323 = vmatprep.subr.mxu0 0.0
        %1324 = vmatpush1.msra.mxu0 0.0
        %1325 = vmatprep.subr.mxu0 0.0
        %1326 = vmatpush1.msra.mxu0 0.0
        %1327 = vmatprep.subr.mxu0 0.0
        %1328 = vmatpush1.msra.mxu0 0.0
        %1329 = vmatprep.subr.mxu0 0.0
        %1330 = vmatpush1.msra.mxu0 0.0
        %1331 = vmatprep.subr.mxu0 0.0
        %1332 = vmatpush1.msra.mxu0 0.0
        %1333 = vmatprep.subr.mxu0 0.0
        %1334 = vmatpush1.msra.mxu0 0.0
        %1335 = vmatprep.subr.mxu0 0.0
        %1336 = vmatpush1.msra.mxu0 0.0
        %1337 = vmatprep.subr.mxu0 0.0
        %1338 = vmatpush1.msra.mxu0 0.0
        %1339 = vmatprep.subr.mxu0 0.0
        %1340 = vmatpush1.msra.mxu0 0.0
        %1341 = vmatprep.subr.mxu0 0.0
        %1342 = vmatpush1.msra.mxu0 0.0
        %v1343 = vand.u32 %v265, 4294901760
        %1344 = vmatprep.subr.mxu0 %v1343
        %v1345 = vand.u32 %v262, 4294901760
        %1346 = vmatpush1.msra.mxu0 %v1345
        %v1347 = vand.u32 %v189, 4294901760
        %1348 = vmatprep.subr.mxu0 %v1347
        %v1349 = vand.u32 %v188, 4294901760
        %1350 = vmatpush1.msra.mxu0 %v1349
        %1351 = vmatprep.subr.mxu0 0.0
        %1352 = vmatpush2.msra.mxu0 0.0
        %1353 = vmatprep.subr.mxu0 0.0
        %1354 = vmatpush2.msra.mxu0 0.0
        %1355 = vmatprep.subr.mxu0 0.0
        %1356 = vmatpush2.msra.mxu0 0.0
        %1357 = vmatprep.subr.mxu0 0.0
        %1358 = vmatpush2.msra.mxu0 0.0
        %1359 = vmatprep.subr.mxu0 0.0
        %1360 = vmatpush2.msra.mxu0 0.0
        %1361 = vmatprep.subr.mxu0 0.0
        %1362 = vmatpush2.msra.mxu0 0.0
        %1363 = vmatprep.subr.mxu0 0.0
        %1364 = vmatpush2.msra.mxu0 0.0
        %1365 = vmatprep.subr.mxu0 0.0
        %1366 = vmatpush2.msra.mxu0 0.0
        %1367 = vmatprep.subr.mxu0 0.0
        %1368 = vmatpush2.msra.mxu0 0.0
        %1369 = vmatprep.subr.mxu0 0.0
        %1370 = vmatpush2.msra.mxu0 0.0
        %1371 = vmatprep.subr.mxu0 0.0
        %1372 = vmatpush2.msra.mxu0 0.0
        %1373 = vmatprep.subr.mxu0 0.0
        %1374 = vmatpush2.msra.mxu0 0.0
        %1375 = vmatprep.subr.mxu0 0.0
        %1376 = vmatpush2.msra.mxu0 0.0
        %1377 = vmatprep.subr.mxu0 0.0
        %1378 = vmatpush2.msra.mxu0 0.0
        %1379 = vmatprep.subr.mxu0 0.0
        %1380 = vmatpush2.msra.mxu0 0.0
        %1381 = vmatprep.subr.mxu0 0.0
        %1382 = vmatpush2.msra.mxu0 0.0
        %1383 = vmatprep.mubr.f32.mxu0 0.0
        %v1384 = vand.u32 %v213, 4294901760
        %1385 = vmatmul.mubr.f32.gmra.mxu0 %v1384
        %v1386 = vpop.f32.mrf.mxu0
        %v1387 = vadd.f32 %v1206, %v1386
        %v1388 = vpop.f32.mrf.mxu0
        %v1389 = vadd.f32 %v1208, %v1388
        %1390 = vmatprep.mubr.f32.mxu0 0.0
        %v1391 = vand.u32 %v216, 4294901760
        %1392 = vmatmul.mubr.f32.gmra.mxu0 %v1391
        %v1393 = vpop.f32.mrf.mxu0
        %v1394 = vadd.f32 %v1213, %v1393
        %v1395 = vpop.f32.mrf.mxu0
        %v1396 = vadd.f32 %v1215, %v1395
        %1397 = vmatprep.mubr.f32.mxu0 0.0
        %v1398 = vand.u32 %v219, 4294901760
        %1399 = vmatmul.mubr.f32.gmra.mxu0 %v1398
        %v1400 = vpop.f32.mrf.mxu0
        %v1401 = vadd.f32 %v1220, %v1400
        %v1402 = vpop.f32.mrf.mxu0
        %v1403 = vadd.f32 %v1222, %v1402
        %1404 = vmatprep.mubr.f32.mxu0 0.0
        %v1405 = vand.u32 %v222, 4294901760
        %1406 = vmatmul.mubr.f32.gmra.mxu0 %v1405
        %v1407 = vpop.f32.mrf.mxu0
        %v1408 = vadd.f32 %v1227, %v1407
        %v1409 = vpop.f32.mrf.mxu0
        %v1410 = vadd.f32 %v1229, %v1409
        %1411 = vmatprep.mubr.f32.mxu0 0.0
        %v1412 = vand.u32 %v225, 4294901760
        %1413 = vmatmul.mubr.f32.gmra.mxu0 %v1412
        %v1414 = vpop.f32.mrf.mxu0
        %v1415 = vadd.f32 %v1234, %v1414
        %v1416 = vpop.f32.mrf.mxu0
        %v1417 = vadd.f32 %v1236, %v1416
        %1418 = vmatprep.mubr.f32.mxu0 0.0
        %v1419 = vand.u32 %v228, 4294901760
        %1420 = vmatmul.mubr.f32.gmra.mxu0 %v1419
        %v1421 = vpop.f32.mrf.mxu0
        %v1422 = vadd.f32 %v1241, %v1421
        %v1423 = vpop.f32.mrf.mxu0
        %v1424 = vadd.f32 %v1243, %v1423
        %1425 = vmatprep.mubr.f32.mxu0 0.0
        %v1426 = vand.u32 %v231, 4294901760
        %1427 = vmatmul.mubr.f32.gmra.mxu0 %v1426
        %v1428 = vpop.f32.mrf.mxu0
        %v1429 = vadd.f32 %v1248, %v1428
        %v1430 = vpop.f32.mrf.mxu0
        %v1431 = vadd.f32 %v1250, %v1430
        %1432 = vmatprep.mubr.f32.mxu0 0.0
        %v1433 = vand.u32 %v234, 4294901760
        %1434 = vmatmul.mubr.f32.gmra.mxu0 %v1433
        %v1435 = vpop.f32.mrf.mxu0
        %v1436 = vadd.f32 %v1255, %v1435
        %v1437 = vpop.f32.mrf.mxu0
        %v1438 = vadd.f32 %v1257, %v1437
        %1439 = vmatprep.mubr.f32.mxu0 0.0
        %v1440 = vand.u32 %v237, 4294901760
        %1441 = vmatmul.mubr.f32.gmra.mxu0 %v1440
        %v1442 = vpop.f32.mrf.mxu0
        %v1443 = vadd.f32 %v1262, %v1442
        %v1444 = vpop.f32.mrf.mxu0
        %v1445 = vadd.f32 %v1264, %v1444
        %1446 = vmatprep.mubr.f32.mxu0 0.0
        %v1447 = vand.u32 %v240, 4294901760
        %1448 = vmatmul.mubr.f32.gmra.mxu0 %v1447
        %v1449 = vpop.f32.mrf.mxu0
        %v1450 = vadd.f32 %v1269, %v1449
        %v1451 = vpop.f32.mrf.mxu0
        %v1452 = vadd.f32 %v1271, %v1451
        %1453 = vmatprep.mubr.f32.mxu0 0.0
        %v1454 = vand.u32 %v243, 4294901760
        %1455 = vmatmul.mubr.f32.gmra.mxu0 %v1454
        %v1456 = vpop.f32.mrf.mxu0
        %v1457 = vadd.f32 %v1276, %v1456
        %v1458 = vpop.f32.mrf.mxu0
        %v1459 = vadd.f32 %v1278, %v1458
        %1460 = vmatprep.mubr.f32.mxu0 0.0
        %v1461 = vand.u32 %v246, 4294901760
        %1462 = vmatmul.mubr.f32.gmra.mxu0 %v1461
        %v1463 = vpop.f32.mrf.mxu0
        %v1464 = vadd.f32 %v1283, %v1463
        %v1465 = vpop.f32.mrf.mxu0
        %v1466 = vadd.f32 %v1285, %v1465
        %1467 = vmatprep.mubr.f32.mxu0 0.0
        %v1468 = vand.u32 %v249, 4294901760
        %1469 = vmatmul.mubr.f32.gmra.mxu0 %v1468
        %v1470 = vpop.f32.mrf.mxu0
        %v1471 = vadd.f32 %v1290, %v1470
        %v1472 = vpop.f32.mrf.mxu0
        %v1473 = vadd.f32 %v1292, %v1472
        %1474 = vmatprep.mubr.f32.mxu0 0.0
        %v1475 = vand.u32 %v252, 4294901760
        %1476 = vmatmul.mubr.f32.gmra.mxu0 %v1475
        %v1477 = vpop.f32.mrf.mxu0
        %v1478 = vadd.f32 %v1297, %v1477
        %v1479 = vpop.f32.mrf.mxu0
        %v1480 = vadd.f32 %v1299, %v1479
        %1481 = vmatprep.mubr.f32.mxu0 0.0
        %v1482 = vand.u32 %v255, 4294901760
        %1483 = vmatmul.mubr.f32.gmra.mxu0 %v1482
        %v1484 = vpop.f32.mrf.mxu0
        %v1485 = vadd.f32 %v1304, %v1484
        %v1486 = vpop.f32.mrf.mxu0
        %v1487 = vadd.f32 %v1306, %v1486
        %1488 = vmatprep.mubr.f32.mxu0 0.0
        %v1489 = vand.u32 %v258, 4294901760
        %1490 = vmatmul.mubr.f32.gmra.mxu0 %v1489
        %v1491 = vpop.f32.mrf.mxu0
        %v1492 = vadd.f32 %v1311, %v1491
        %v1493 = vpop.f32.mrf.mxu0
        %v1494 = vadd.f32 %v1313, %v1493
        %1495 = vdwg.mxu0
        %1496 = vmatprep.subr.mxu0 0.0
        %1497 = vmatpush1.msra.mxu0 0.0
        %1498 = vmatprep.subr.mxu0 0.0
        %1499 = vmatpush1.msra.mxu0 0.0
        %1500 = vmatprep.subr.mxu0 0.0
        %1501 = vmatpush1.msra.mxu0 0.0
        %1502 = vmatprep.subr.mxu0 0.0
        %1503 = vmatpush1.msra.mxu0 0.0
        %1504 = vmatprep.subr.mxu0 0.0
        %1505 = vmatpush1.msra.mxu0 0.0
        %1506 = vmatprep.subr.mxu0 0.0
        %1507 = vmatpush1.msra.mxu0 0.0
        %1508 = vmatprep.subr.mxu0 0.0
        %1509 = vmatpush1.msra.mxu0 0.0
        %1510 = vmatprep.subr.mxu0 0.0
        %1511 = vmatpush1.msra.mxu0 0.0
        %1512 = vmatprep.subr.mxu0 0.0
        %1513 = vmatpush1.msra.mxu0 0.0
        %1514 = vmatprep.subr.mxu0 0.0
        %1515 = vmatpush1.msra.mxu0 0.0
        %1516 = vmatprep.subr.mxu0 0.0
        %1517 = vmatpush1.msra.mxu0 0.0
        %1518 = vmatprep.subr.mxu0 0.0
        %1519 = vmatpush1.msra.mxu0 0.0
        %1520 = vmatprep.subr.mxu0 0.0
        %1521 = vmatpush1.msra.mxu0 0.0
        %1522 = vmatprep.subr.mxu0 0.0
        %1523 = vmatpush1.msra.mxu0 0.0
        %1524 = vmatprep.subr.mxu0 0.0
        %v1525 = vand.u32 %v268, 4294901760
        %1526 = vmatpush1.msra.mxu0 %v1525
        %1527 = vmatprep.subr.mxu0 0.0
        %v1528 = vand.u32 %v190, 4294901760
        %1529 = vmatpush1.msra.mxu0 %v1528
        %1530 = vmatprep.subr.mxu0 0.0
        %1531 = vmatpush2.msra.mxu0 0.0
        %1532 = vmatprep.subr.mxu0 0.0
        %1533 = vmatpush2.msra.mxu0 0.0
        %1534 = vmatprep.subr.mxu0 0.0
        %1535 = vmatpush2.msra.mxu0 0.0
        %1536 = vmatprep.subr.mxu0 0.0
        %1537 = vmatpush2.msra.mxu0 0.0
        %1538 = vmatprep.subr.mxu0 0.0
        %1539 = vmatpush2.msra.mxu0 0.0
        %1540 = vmatprep.subr.mxu0 0.0
        %1541 = vmatpush2.msra.mxu0 0.0
        %1542 = vmatprep.subr.mxu0 0.0
        %1543 = vmatpush2.msra.mxu0 0.0
        %1544 = vmatprep.subr.mxu0 0.0
        %1545 = vmatpush2.msra.mxu0 0.0
        %1546 = vmatprep.subr.mxu0 0.0
        %1547 = vmatpush2.msra.mxu0 0.0
        %1548 = vmatprep.subr.mxu0 0.0
        %1549 = vmatpush2.msra.mxu0 0.0
        %1550 = vmatprep.subr.mxu0 0.0
        %1551 = vmatpush2.msra.mxu0 0.0
        %1552 = vmatprep.subr.mxu0 0.0
        %1553 = vmatpush2.msra.mxu0 0.0
        %1554 = vmatprep.subr.mxu0 0.0
        %1555 = vmatpush2.msra.mxu0 0.0
        %1556 = vmatprep.subr.mxu0 0.0
        %1557 = vmatpush2.msra.mxu0 0.0
        %1558 = vmatprep.subr.mxu0 0.0
        %1559 = vmatpush2.msra.mxu0 0.0
        %1560 = vmatprep.subr.mxu0 0.0
        %1561 = vmatpush2.msra.mxu0 0.0
        %1562 = vmatprep.mubr.f32.mxu0 0.0
        %v1563 = vand.u32 %v213, 4294901760
        %v1564 = vsub.f32 %v213, %v1563
        %v1565 = vand.u32 %v1564, 4294901760
        %v1566 = vsub.f32 %v1564, %v1565
        %v1567 = vand.u32 %v1566, 4294901760
        %1568 = vmatmul.mubr.f32.gmra.mxu0 %v1567
        %v1569 = vpop.f32.mrf.mxu0
        %v1570 = vadd.f32 %v207, %v1569
        %v1571 = vpop.f32.mrf.mxu0
        %1572 = vmatprep.mubr.f32.mxu0 0.0
        %v1573 = vand.u32 %v216, 4294901760
        %v1574 = vsub.f32 %v216, %v1573
        %v1575 = vand.u32 %v1574, 4294901760
        %v1576 = vsub.f32 %v1574, %v1575
        %v1577 = vand.u32 %v1576, 4294901760
        %1578 = vmatmul.mubr.f32.gmra.mxu0 %v1577
        %v1579 = vpop.f32.mrf.mxu0
        %v1580 = vadd.f32 %v207, %v1579
        %v1581 = vpop.f32.mrf.mxu0
        %1582 = vmatprep.mubr.f32.mxu0 0.0
        %v1583 = vand.u32 %v219, 4294901760
        %v1584 = vsub.f32 %v219, %v1583
        %v1585 = vand.u32 %v1584, 4294901760
        %v1586 = vsub.f32 %v1584, %v1585
        %v1587 = vand.u32 %v1586, 4294901760
        %1588 = vmatmul.mubr.f32.gmra.mxu0 %v1587
        %v1589 = vpop.f32.mrf.mxu0
        %v1590 = vadd.f32 %v207, %v1589
        %v1591 = vpop.f32.mrf.mxu0
        %1592 = vmatprep.mubr.f32.mxu0 0.0
        %v1593 = vand.u32 %v222, 4294901760
        %v1594 = vsub.f32 %v222, %v1593
        %v1595 = vand.u32 %v1594, 4294901760
        %v1596 = vsub.f32 %v1594, %v1595
        %v1597 = vand.u32 %v1596, 4294901760
        %1598 = vmatmul.mubr.f32.gmra.mxu0 %v1597
        %v1599 = vpop.f32.mrf.mxu0
        %v1600 = vadd.f32 %v207, %v1599
        %v1601 = vpop.f32.mrf.mxu0
        %1602 = vmatprep.mubr.f32.mxu0 0.0
        %v1603 = vand.u32 %v225, 4294901760
        %v1604 = vsub.f32 %v225, %v1603
        %v1605 = vand.u32 %v1604, 4294901760
        %v1606 = vsub.f32 %v1604, %v1605
        %v1607 = vand.u32 %v1606, 4294901760
        %1608 = vmatmul.mubr.f32.gmra.mxu0 %v1607
        %v1609 = vpop.f32.mrf.mxu0
        %v1610 = vadd.f32 %v207, %v1609
        %v1611 = vpop.f32.mrf.mxu0
        %1612 = vmatprep.mubr.f32.mxu0 0.0
        %v1613 = vand.u32 %v228, 4294901760
        %v1614 = vsub.f32 %v228, %v1613
        %v1615 = vand.u32 %v1614, 4294901760
        %v1616 = vsub.f32 %v1614, %v1615
        %v1617 = vand.u32 %v1616, 4294901760
        %1618 = vmatmul.mubr.f32.gmra.mxu0 %v1617
        %v1619 = vpop.f32.mrf.mxu0
        %v1620 = vadd.f32 %v207, %v1619
        %v1621 = vpop.f32.mrf.mxu0
        %1622 = vmatprep.mubr.f32.mxu0 0.0
        %v1623 = vand.u32 %v231, 4294901760
        %v1624 = vsub.f32 %v231, %v1623
        %v1625 = vand.u32 %v1624, 4294901760
        %v1626 = vsub.f32 %v1624, %v1625
        %v1627 = vand.u32 %v1626, 4294901760
        %1628 = vmatmul.mubr.f32.gmra.mxu0 %v1627
        %v1629 = vpop.f32.mrf.mxu0
        %v1630 = vadd.f32 %v207, %v1629
        %v1631 = vpop.f32.mrf.mxu0
        %1632 = vmatprep.mubr.f32.mxu0 0.0
        %v1633 = vand.u32 %v234, 4294901760
        %v1634 = vsub.f32 %v234, %v1633
        %v1635 = vand.u32 %v1634, 4294901760
        %v1636 = vsub.f32 %v1634, %v1635
        %v1637 = vand.u32 %v1636, 4294901760
        %1638 = vmatmul.mubr.f32.gmra.mxu0 %v1637
        %v1639 = vpop.f32.mrf.mxu0
        %v1640 = vadd.f32 %v207, %v1639
        %v1641 = vpop.f32.mrf.mxu0
        %1642 = vmatprep.mubr.f32.mxu0 0.0
        %v1643 = vand.u32 %v237, 4294901760
        %v1644 = vsub.f32 %v237, %v1643
        %v1645 = vand.u32 %v1644, 4294901760
        %v1646 = vsub.f32 %v1644, %v1645
        %v1647 = vand.u32 %v1646, 4294901760
        %1648 = vmatmul.mubr.f32.gmra.mxu0 %v1647
        %v1649 = vpop.f32.mrf.mxu0
        %v1650 = vadd.f32 %v207, %v1649
        %v1651 = vpop.f32.mrf.mxu0
        %1652 = vmatprep.mubr.f32.mxu0 0.0
        %v1653 = vand.u32 %v240, 4294901760
        %v1654 = vsub.f32 %v240, %v1653
        %v1655 = vand.u32 %v1654, 4294901760
        %v1656 = vsub.f32 %v1654, %v1655
        %v1657 = vand.u32 %v1656, 4294901760
        %1658 = vmatmul.mubr.f32.gmra.mxu0 %v1657
        %v1659 = vpop.f32.mrf.mxu0
        %v1660 = vadd.f32 %v207, %v1659
        %v1661 = vpop.f32.mrf.mxu0
        %1662 = vmatprep.mubr.f32.mxu0 0.0
        %v1663 = vand.u32 %v243, 4294901760
        %v1664 = vsub.f32 %v243, %v1663
        %v1665 = vand.u32 %v1664, 4294901760
        %v1666 = vsub.f32 %v1664, %v1665
        %v1667 = vand.u32 %v1666, 4294901760
        %1668 = vmatmul.mubr.f32.gmra.mxu0 %v1667
        %v1669 = vpop.f32.mrf.mxu0
        %v1670 = vadd.f32 %v207, %v1669
        %v1671 = vpop.f32.mrf.mxu0
        %1672 = vmatprep.mubr.f32.mxu0 0.0
        %v1673 = vand.u32 %v246, 4294901760
        %v1674 = vsub.f32 %v246, %v1673
        %v1675 = vand.u32 %v1674, 4294901760
        %v1676 = vsub.f32 %v1674, %v1675
        %v1677 = vand.u32 %v1676, 4294901760
        %1678 = vmatmul.mubr.f32.gmra.mxu0 %v1677
        %v1679 = vpop.f32.mrf.mxu0
        %v1680 = vadd.f32 %v207, %v1679
        %v1681 = vpop.f32.mrf.mxu0
        %1682 = vmatprep.mubr.f32.mxu0 0.0
        %v1683 = vand.u32 %v249, 4294901760
        %v1684 = vsub.f32 %v249, %v1683
        %v1685 = vand.u32 %v1684, 4294901760
        %v1686 = vsub.f32 %v1684, %v1685
        %v1687 = vand.u32 %v1686, 4294901760
        %1688 = vmatmul.mubr.f32.gmra.mxu0 %v1687
        %v1689 = vpop.f32.mrf.mxu0
        %v1690 = vadd.f32 %v207, %v1689
        %v1691 = vpop.f32.mrf.mxu0
        %1692 = vmatprep.mubr.f32.mxu0 0.0
        %v1693 = vand.u32 %v252, 4294901760
        %v1694 = vsub.f32 %v252, %v1693
        %v1695 = vand.u32 %v1694, 4294901760
        %v1696 = vsub.f32 %v1694, %v1695
        %v1697 = vand.u32 %v1696, 4294901760
        %1698 = vmatmul.mubr.f32.gmra.mxu0 %v1697
        %v1699 = vpop.f32.mrf.mxu0
        %v1700 = vadd.f32 %v207, %v1699
        %v1701 = vpop.f32.mrf.mxu0
        %1702 = vmatprep.mubr.f32.mxu0 0.0
        %v1703 = vand.u32 %v255, 4294901760
        %v1704 = vsub.f32 %v255, %v1703
        %v1705 = vand.u32 %v1704, 4294901760
        %v1706 = vsub.f32 %v1704, %v1705
        %v1707 = vand.u32 %v1706, 4294901760
        %1708 = vmatmul.mubr.f32.gmra.mxu0 %v1707
        %v1709 = vpop.f32.mrf.mxu0
        %v1710 = vadd.f32 %v207, %v1709
        %v1711 = vpop.f32.mrf.mxu0
        %1712 = vmatprep.mubr.f32.mxu0 0.0
        %v1713 = vand.u32 %v258, 4294901760
        %v1714 = vsub.f32 %v258, %v1713
        %v1715 = vand.u32 %v1714, 4294901760
        %v1716 = vsub.f32 %v1714, %v1715
        %v1717 = vand.u32 %v1716, 4294901760
        %1718 = vmatmul.mubr.f32.gmra.mxu0 %v1717
        %v1719 = vpop.f32.mrf.mxu0
        %v1720 = vadd.f32 %v207, %v1719
        %v1721 = vpop.f32.mrf.mxu0
        %1722 = vdwg.mxu0
        %1723 = vmatprep.subr.mxu0 0.0
        %1724 = vmatpush1.msra.mxu0 0.0
        %1725 = vmatprep.subr.mxu0 0.0
        %1726 = vmatpush1.msra.mxu0 0.0
        %1727 = vmatprep.subr.mxu0 0.0
        %1728 = vmatpush1.msra.mxu0 0.0
        %1729 = vmatprep.subr.mxu0 0.0
        %1730 = vmatpush1.msra.mxu0 0.0
        %1731 = vmatprep.subr.mxu0 0.0
        %1732 = vmatpush1.msra.mxu0 0.0
        %1733 = vmatprep.subr.mxu0 0.0
        %1734 = vmatpush1.msra.mxu0 0.0
        %1735 = vmatprep.subr.mxu0 0.0
        %1736 = vmatpush1.msra.mxu0 0.0
        %1737 = vmatprep.subr.mxu0 0.0
        %1738 = vmatpush1.msra.mxu0 0.0
        %1739 = vmatprep.subr.mxu0 0.0
        %1740 = vmatpush1.msra.mxu0 0.0
        %1741 = vmatprep.subr.mxu0 0.0
        %1742 = vmatpush1.msra.mxu0 0.0
        %1743 = vmatprep.subr.mxu0 0.0
        %1744 = vmatpush1.msra.mxu0 0.0
        %1745 = vmatprep.subr.mxu0 0.0
        %1746 = vmatpush1.msra.mxu0 0.0
        %1747 = vmatprep.subr.mxu0 0.0
        %1748 = vmatpush1.msra.mxu0 0.0
        %1749 = vmatprep.subr.mxu0 0.0
        %1750 = vmatpush1.msra.mxu0 0.0
        %1751 = vmatprep.subr.mxu0 0.0
        %v1752 = vand.u32 %v268, 4294901760
        %v1753 = vsub.f32 %v268, %v1752
        %v1754 = vand.u32 %v1753, 4294901760
        %v1755 = vsub.f32 %v1753, %v1754
        %v1756 = vand.u32 %v1755, 4294901760
        %1757 = vmatpush1.msra.mxu0 %v1756
        %1758 = vmatprep.subr.mxu0 0.0
        %v1759 = vand.u32 %v190, 4294901760
        %v1760 = vsub.f32 %v190, %v1759
        %v1761 = vand.u32 %v1760, 4294901760
        %v1762 = vsub.f32 %v1760, %v1761
        %v1763 = vand.u32 %v1762, 4294901760
        %1764 = vmatpush1.msra.mxu0 %v1763
        %1765 = vmatprep.subr.mxu0 0.0
        %1766 = vmatpush2.msra.mxu0 0.0
        %1767 = vmatprep.subr.mxu0 0.0
        %1768 = vmatpush2.msra.mxu0 0.0
        %1769 = vmatprep.subr.mxu0 0.0
        %1770 = vmatpush2.msra.mxu0 0.0
        %1771 = vmatprep.subr.mxu0 0.0
        %1772 = vmatpush2.msra.mxu0 0.0
        %1773 = vmatprep.subr.mxu0 0.0
        %1774 = vmatpush2.msra.mxu0 0.0
        %1775 = vmatprep.subr.mxu0 0.0
        %1776 = vmatpush2.msra.mxu0 0.0
        %1777 = vmatprep.subr.mxu0 0.0
        %1778 = vmatpush2.msra.mxu0 0.0
        %1779 = vmatprep.subr.mxu0 0.0
        %1780 = vmatpush2.msra.mxu0 0.0
        %1781 = vmatprep.subr.mxu0 0.0
        %1782 = vmatpush2.msra.mxu0 0.0
        %1783 = vmatprep.subr.mxu0 0.0
        %1784 = vmatpush2.msra.mxu0 0.0
        %1785 = vmatprep.subr.mxu0 0.0
        %1786 = vmatpush2.msra.mxu0 0.0
        %1787 = vmatprep.subr.mxu0 0.0
        %1788 = vmatpush2.msra.mxu0 0.0
        %1789 = vmatprep.subr.mxu0 0.0
        %1790 = vmatpush2.msra.mxu0 0.0
        %1791 = vmatprep.subr.mxu0 0.0
        %1792 = vmatpush2.msra.mxu0 0.0
        %1793 = vmatprep.subr.mxu0 0.0
        %1794 = vmatpush2.msra.mxu0 0.0
        %1795 = vmatprep.subr.mxu0 0.0
        %1796 = vmatpush2.msra.mxu0 0.0
        %1797 = vmatprep.mubr.f32.mxu0 0.0
        %v1798 = vand.u32 %v213, 4294901760
        %1799 = vmatmul.mubr.f32.gmra.mxu0 %v1798
        %v1800 = vpop.f32.mrf.mxu0
        %v1801 = vadd.f32 %v1570, %v1800
        %v1802 = vpop.f32.mrf.mxu0
        %1803 = vmatprep.mubr.f32.mxu0 0.0
        %v1804 = vand.u32 %v216, 4294901760
        %1805 = vmatmul.mubr.f32.gmra.mxu0 %v1804
        %v1806 = vpop.f32.mrf.mxu0
        %v1807 = vadd.f32 %v1580, %v1806
        %v1808 = vpop.f32.mrf.mxu0
        %1809 = vmatprep.mubr.f32.mxu0 0.0
        %v1810 = vand.u32 %v219, 4294901760
        %1811 = vmatmul.mubr.f32.gmra.mxu0 %v1810
        %v1812 = vpop.f32.mrf.mxu0
        %v1813 = vadd.f32 %v1590, %v1812
        %v1814 = vpop.f32.mrf.mxu0
        %1815 = vmatprep.mubr.f32.mxu0 0.0
        %v1816 = vand.u32 %v222, 4294901760
        %1817 = vmatmul.mubr.f32.gmra.mxu0 %v1816
        %v1818 = vpop.f32.mrf.mxu0
        %v1819 = vadd.f32 %v1600, %v1818
        %v1820 = vpop.f32.mrf.mxu0
        %1821 = vmatprep.mubr.f32.mxu0 0.0
        %v1822 = vand.u32 %v225, 4294901760
        %1823 = vmatmul.mubr.f32.gmra.mxu0 %v1822
        %v1824 = vpop.f32.mrf.mxu0
        %v1825 = vadd.f32 %v1610, %v1824
        %v1826 = vpop.f32.mrf.mxu0
        %1827 = vmatprep.mubr.f32.mxu0 0.0
        %v1828 = vand.u32 %v228, 4294901760
        %1829 = vmatmul.mubr.f32.gmra.mxu0 %v1828
        %v1830 = vpop.f32.mrf.mxu0
        %v1831 = vadd.f32 %v1620, %v1830
        %v1832 = vpop.f32.mrf.mxu0
        %1833 = vmatprep.mubr.f32.mxu0 0.0
        %v1834 = vand.u32 %v231, 4294901760
        %1835 = vmatmul.mubr.f32.gmra.mxu0 %v1834
        %v1836 = vpop.f32.mrf.mxu0
        %v1837 = vadd.f32 %v1630, %v1836
        %v1838 = vpop.f32.mrf.mxu0
        %1839 = vmatprep.mubr.f32.mxu0 0.0
        %v1840 = vand.u32 %v234, 4294901760
        %1841 = vmatmul.mubr.f32.gmra.mxu0 %v1840
        %v1842 = vpop.f32.mrf.mxu0
        %v1843 = vadd.f32 %v1640, %v1842
        %v1844 = vpop.f32.mrf.mxu0
        %1845 = vmatprep.mubr.f32.mxu0 0.0
        %v1846 = vand.u32 %v237, 4294901760
        %1847 = vmatmul.mubr.f32.gmra.mxu0 %v1846
        %v1848 = vpop.f32.mrf.mxu0
        %v1849 = vadd.f32 %v1650, %v1848
        %v1850 = vpop.f32.mrf.mxu0
        %1851 = vmatprep.mubr.f32.mxu0 0.0
        %v1852 = vand.u32 %v240, 4294901760
        %1853 = vmatmul.mubr.f32.gmra.mxu0 %v1852
        %v1854 = vpop.f32.mrf.mxu0
        %v1855 = vadd.f32 %v1660, %v1854
        %v1856 = vpop.f32.mrf.mxu0
        %1857 = vmatprep.mubr.f32.mxu0 0.0
        %v1858 = vand.u32 %v243, 4294901760
        %1859 = vmatmul.mubr.f32.gmra.mxu0 %v1858
        %v1860 = vpop.f32.mrf.mxu0
        %v1861 = vadd.f32 %v1670, %v1860
        %v1862 = vpop.f32.mrf.mxu0
        %1863 = vmatprep.mubr.f32.mxu0 0.0
        %v1864 = vand.u32 %v246, 4294901760
        %1865 = vmatmul.mubr.f32.gmra.mxu0 %v1864
        %v1866 = vpop.f32.mrf.mxu0
        %v1867 = vadd.f32 %v1680, %v1866
        %v1868 = vpop.f32.mrf.mxu0
        %1869 = vmatprep.mubr.f32.mxu0 0.0
        %v1870 = vand.u32 %v249, 4294901760
        %1871 = vmatmul.mubr.f32.gmra.mxu0 %v1870
        %v1872 = vpop.f32.mrf.mxu0
        %v1873 = vadd.f32 %v1690, %v1872
        %v1874 = vpop.f32.mrf.mxu0
        %1875 = vmatprep.mubr.f32.mxu0 0.0
        %v1876 = vand.u32 %v252, 4294901760
        %1877 = vmatmul.mubr.f32.gmra.mxu0 %v1876
        %v1878 = vpop.f32.mrf.mxu0
        %v1879 = vadd.f32 %v1700, %v1878
        %v1880 = vpop.f32.mrf.mxu0
        %1881 = vmatprep.mubr.f32.mxu0 0.0
        %v1882 = vand.u32 %v255, 4294901760
        %1883 = vmatmul.mubr.f32.gmra.mxu0 %v1882
        %v1884 = vpop.f32.mrf.mxu0
        %v1885 = vadd.f32 %v1710, %v1884
        %v1886 = vpop.f32.mrf.mxu0
        %1887 = vmatprep.mubr.f32.mxu0 0.0
        %v1888 = vand.u32 %v258, 4294901760
        %1889 = vmatmul.mubr.f32.gmra.mxu0 %v1888
        %v1890 = vpop.f32.mrf.mxu0
        %v1891 = vadd.f32 %v1720, %v1890
        %v1892 = vpop.f32.mrf.mxu0
        %1893 = vdwg.mxu0
        %1894 = vmatprep.subr.mxu0 0.0
        %1895 = vmatpush1.msra.mxu0 0.0
        %1896 = vmatprep.subr.mxu0 0.0
        %1897 = vmatpush1.msra.mxu0 0.0
        %1898 = vmatprep.subr.mxu0 0.0
        %1899 = vmatpush1.msra.mxu0 0.0
        %1900 = vmatprep.subr.mxu0 0.0
        %1901 = vmatpush1.msra.mxu0 0.0
        %1902 = vmatprep.subr.mxu0 0.0
        %1903 = vmatpush1.msra.mxu0 0.0
        %1904 = vmatprep.subr.mxu0 0.0
        %1905 = vmatpush1.msra.mxu0 0.0
        %1906 = vmatprep.subr.mxu0 0.0
        %1907 = vmatpush1.msra.mxu0 0.0
        %1908 = vmatprep.subr.mxu0 0.0
        %1909 = vmatpush1.msra.mxu0 0.0
        %1910 = vmatprep.subr.mxu0 0.0
        %1911 = vmatpush1.msra.mxu0 0.0
        %1912 = vmatprep.subr.mxu0 0.0
        %1913 = vmatpush1.msra.mxu0 0.0
        %1914 = vmatprep.subr.mxu0 0.0
        %1915 = vmatpush1.msra.mxu0 0.0
        %1916 = vmatprep.subr.mxu0 0.0
        %1917 = vmatpush1.msra.mxu0 0.0
        %1918 = vmatprep.subr.mxu0 0.0
        %1919 = vmatpush1.msra.mxu0 0.0
        %1920 = vmatprep.subr.mxu0 0.0
        %1921 = vmatpush1.msra.mxu0 0.0
        %1922 = vmatprep.subr.mxu0 0.0
        %v1923 = vand.u32 %v268, 4294901760
        %v1924 = vsub.f32 %v268, %v1923
        %1925 = vmatpush1.msra.mxu0 %v1924
        %1926 = vmatprep.subr.mxu0 0.0
        %v1927 = vand.u32 %v190, 4294901760
        %v1928 = vsub.f32 %v190, %v1927
        %1929 = vmatpush1.msra.mxu0 %v1928
        %1930 = vmatprep.subr.mxu0 0.0
        %1931 = vmatpush2.msra.mxu0 0.0
        %1932 = vmatprep.subr.mxu0 0.0
        %1933 = vmatpush2.msra.mxu0 0.0
        %1934 = vmatprep.subr.mxu0 0.0
        %1935 = vmatpush2.msra.mxu0 0.0
        %1936 = vmatprep.subr.mxu0 0.0
        %1937 = vmatpush2.msra.mxu0 0.0
        %1938 = vmatprep.subr.mxu0 0.0
        %1939 = vmatpush2.msra.mxu0 0.0
        %1940 = vmatprep.subr.mxu0 0.0
        %1941 = vmatpush2.msra.mxu0 0.0
        %1942 = vmatprep.subr.mxu0 0.0
        %1943 = vmatpush2.msra.mxu0 0.0
        %1944 = vmatprep.subr.mxu0 0.0
        %1945 = vmatpush2.msra.mxu0 0.0
        %1946 = vmatprep.subr.mxu0 0.0
        %1947 = vmatpush2.msra.mxu0 0.0
        %1948 = vmatprep.subr.mxu0 0.0
        %1949 = vmatpush2.msra.mxu0 0.0
        %1950 = vmatprep.subr.mxu0 0.0
        %1951 = vmatpush2.msra.mxu0 0.0
        %1952 = vmatprep.subr.mxu0 0.0
        %1953 = vmatpush2.msra.mxu0 0.0
        %1954 = vmatprep.subr.mxu0 0.0
        %1955 = vmatpush2.msra.mxu0 0.0
        %1956 = vmatprep.subr.mxu0 0.0
        %1957 = vmatpush2.msra.mxu0 0.0
        %1958 = vmatprep.subr.mxu0 0.0
        %1959 = vmatpush2.msra.mxu0 0.0
        %1960 = vmatprep.subr.mxu0 0.0
        %1961 = vmatpush2.msra.mxu0 0.0
        %1962 = vmatprep.mubr.f32.mxu0 0.0
        %v1963 = vand.u32 %v213, 4294901760
        %v1964 = vsub.f32 %v213, %v1963
        %1965 = vmatmul.mubr.f32.gmra.mxu0 %v1964
        %v1966 = vpop.f32.mrf.mxu0
        %v1967 = vadd.f32 %v1801, %v1966
        %v1968 = vpop.f32.mrf.mxu0
        %1969 = vmatprep.mubr.f32.mxu0 0.0
        %v1970 = vand.u32 %v216, 4294901760
        %v1971 = vsub.f32 %v216, %v1970
        %1972 = vmatmul.mubr.f32.gmra.mxu0 %v1971
        %v1973 = vpop.f32.mrf.mxu0
        %v1974 = vadd.f32 %v1807, %v1973
        %v1975 = vpop.f32.mrf.mxu0
        %1976 = vmatprep.mubr.f32.mxu0 0.0
        %v1977 = vand.u32 %v219, 4294901760
        %v1978 = vsub.f32 %v219, %v1977
        %1979 = vmatmul.mubr.f32.gmra.mxu0 %v1978
        %v1980 = vpop.f32.mrf.mxu0
        %v1981 = vadd.f32 %v1813, %v1980
        %v1982 = vpop.f32.mrf.mxu0
        %1983 = vmatprep.mubr.f32.mxu0 0.0
        %v1984 = vand.u32 %v222, 4294901760
        %v1985 = vsub.f32 %v222, %v1984
        %1986 = vmatmul.mubr.f32.gmra.mxu0 %v1985
        %v1987 = vpop.f32.mrf.mxu0
        %v1988 = vadd.f32 %v1819, %v1987
        %v1989 = vpop.f32.mrf.mxu0
        %1990 = vmatprep.mubr.f32.mxu0 0.0
        %v1991 = vand.u32 %v225, 4294901760
        %v1992 = vsub.f32 %v225, %v1991
        %1993 = vmatmul.mubr.f32.gmra.mxu0 %v1992
        %v1994 = vpop.f32.mrf.mxu0
        %v1995 = vadd.f32 %v1825, %v1994
        %v1996 = vpop.f32.mrf.mxu0
        %1997 = vmatprep.mubr.f32.mxu0 0.0
        %v1998 = vand.u32 %v228, 4294901760
        %v1999 = vsub.f32 %v228, %v1998
        %2000 = vmatmul.mubr.f32.gmra.mxu0 %v1999
        %v2001 = vpop.f32.mrf.mxu0
        %v2002 = vadd.f32 %v1831, %v2001
        %v2003 = vpop.f32.mrf.mxu0
        %2004 = vmatprep.mubr.f32.mxu0 0.0
        %v2005 = vand.u32 %v231, 4294901760
        %v2006 = vsub.f32 %v231, %v2005
        %2007 = vmatmul.mubr.f32.gmra.mxu0 %v2006
        %v2008 = vpop.f32.mrf.mxu0
        %v2009 = vadd.f32 %v1837, %v2008
        %v2010 = vpop.f32.mrf.mxu0
        %2011 = vmatprep.mubr.f32.mxu0 0.0
        %v2012 = vand.u32 %v234, 4294901760
        %v2013 = vsub.f32 %v234, %v2012
        %2014 = vmatmul.mubr.f32.gmra.mxu0 %v2013
        %v2015 = vpop.f32.mrf.mxu0
        %v2016 = vadd.f32 %v1843, %v2015
        %v2017 = vpop.f32.mrf.mxu0
        %2018 = vmatprep.mubr.f32.mxu0 0.0
        %v2019 = vand.u32 %v237, 4294901760
        %v2020 = vsub.f32 %v237, %v2019
        %2021 = vmatmul.mubr.f32.gmra.mxu0 %v2020
        %v2022 = vpop.f32.mrf.mxu0
        %v2023 = vadd.f32 %v1849, %v2022
        %v2024 = vpop.f32.mrf.mxu0
        %2025 = vmatprep.mubr.f32.mxu0 0.0
        %v2026 = vand.u32 %v240, 4294901760
        %v2027 = vsub.f32 %v240, %v2026
        %2028 = vmatmul.mubr.f32.gmra.mxu0 %v2027
        %v2029 = vpop.f32.mrf.mxu0
        %v2030 = vadd.f32 %v1855, %v2029
        %v2031 = vpop.f32.mrf.mxu0
        %2032 = vmatprep.mubr.f32.mxu0 0.0
        %v2033 = vand.u32 %v243, 4294901760
        %v2034 = vsub.f32 %v243, %v2033
        %2035 = vmatmul.mubr.f32.gmra.mxu0 %v2034
        %v2036 = vpop.f32.mrf.mxu0
        %v2037 = vadd.f32 %v1861, %v2036
        %v2038 = vpop.f32.mrf.mxu0
        %2039 = vmatprep.mubr.f32.mxu0 0.0
        %v2040 = vand.u32 %v246, 4294901760
        %v2041 = vsub.f32 %v246, %v2040
        %2042 = vmatmul.mubr.f32.gmra.mxu0 %v2041
        %v2043 = vpop.f32.mrf.mxu0
        %v2044 = vadd.f32 %v1867, %v2043
        %v2045 = vpop.f32.mrf.mxu0
        %2046 = vmatprep.mubr.f32.mxu0 0.0
        %v2047 = vand.u32 %v249, 4294901760
        %v2048 = vsub.f32 %v249, %v2047
        %2049 = vmatmul.mubr.f32.gmra.mxu0 %v2048
        %v2050 = vpop.f32.mrf.mxu0
        %v2051 = vadd.f32 %v1873, %v2050
        %v2052 = vpop.f32.mrf.mxu0
        %2053 = vmatprep.mubr.f32.mxu0 0.0
        %v2054 = vand.u32 %v252, 4294901760
        %v2055 = vsub.f32 %v252, %v2054
        %2056 = vmatmul.mubr.f32.gmra.mxu0 %v2055
        %v2057 = vpop.f32.mrf.mxu0
        %v2058 = vadd.f32 %v1879, %v2057
        %v2059 = vpop.f32.mrf.mxu0
        %2060 = vmatprep.mubr.f32.mxu0 0.0
        %v2061 = vand.u32 %v255, 4294901760
        %v2062 = vsub.f32 %v255, %v2061
        %2063 = vmatmul.mubr.f32.gmra.mxu0 %v2062
        %v2064 = vpop.f32.mrf.mxu0
        %v2065 = vadd.f32 %v1885, %v2064
        %v2066 = vpop.f32.mrf.mxu0
        %2067 = vmatprep.mubr.f32.mxu0 0.0
        %v2068 = vand.u32 %v258, 4294901760
        %v2069 = vsub.f32 %v258, %v2068
        %2070 = vmatmul.mubr.f32.gmra.mxu0 %v2069
        %v2071 = vpop.f32.mrf.mxu0
        %v2072 = vadd.f32 %v1891, %v2071
        %v2073 = vpop.f32.mrf.mxu0
        %2074 = vdwg.mxu0
        %2075 = vmatprep.subr.mxu0 0.0
        %2076 = vmatpush1.msra.mxu0 0.0
        %2077 = vmatprep.subr.mxu0 0.0
        %2078 = vmatpush1.msra.mxu0 0.0
        %2079 = vmatprep.subr.mxu0 0.0
        %2080 = vmatpush1.msra.mxu0 0.0
        %2081 = vmatprep.subr.mxu0 0.0
        %2082 = vmatpush1.msra.mxu0 0.0
        %2083 = vmatprep.subr.mxu0 0.0
        %2084 = vmatpush1.msra.mxu0 0.0
        %2085 = vmatprep.subr.mxu0 0.0
        %2086 = vmatpush1.msra.mxu0 0.0
        %2087 = vmatprep.subr.mxu0 0.0
        %2088 = vmatpush1.msra.mxu0 0.0
        %2089 = vmatprep.subr.mxu0 0.0
        %2090 = vmatpush1.msra.mxu0 0.0
        %2091 = vmatprep.subr.mxu0 0.0
        %2092 = vmatpush1.msra.mxu0 0.0
        %2093 = vmatprep.subr.mxu0 0.0
        %2094 = vmatpush1.msra.mxu0 0.0
        %2095 = vmatprep.subr.mxu0 0.0
        %2096 = vmatpush1.msra.mxu0 0.0
        %2097 = vmatprep.subr.mxu0 0.0
        %2098 = vmatpush1.msra.mxu0 0.0
        %2099 = vmatprep.subr.mxu0 0.0
        %2100 = vmatpush1.msra.mxu0 0.0
        %2101 = vmatprep.subr.mxu0 0.0
        %2102 = vmatpush1.msra.mxu0 0.0
        %2103 = vmatprep.subr.mxu0 0.0
        %v2104 = vand.u32 %v268, 4294901760
        %2105 = vmatpush1.msra.mxu0 %v2104
        %2106 = vmatprep.subr.mxu0 0.0
        %v2107 = vand.u32 %v190, 4294901760
        %2108 = vmatpush1.msra.mxu0 %v2107
        %2109 = vmatprep.subr.mxu0 0.0
        %2110 = vmatpush2.msra.mxu0 0.0
        %2111 = vmatprep.subr.mxu0 0.0
        %2112 = vmatpush2.msra.mxu0 0.0
        %2113 = vmatprep.subr.mxu0 0.0
        %2114 = vmatpush2.msra.mxu0 0.0
        %2115 = vmatprep.subr.mxu0 0.0
        %2116 = vmatpush2.msra.mxu0 0.0
        %2117 = vmatprep.subr.mxu0 0.0
        %2118 = vmatpush2.msra.mxu0 0.0
        %2119 = vmatprep.subr.mxu0 0.0
        %2120 = vmatpush2.msra.mxu0 0.0
        %2121 = vmatprep.subr.mxu0 0.0
        %2122 = vmatpush2.msra.mxu0 0.0
        %2123 = vmatprep.subr.mxu0 0.0
        %2124 = vmatpush2.msra.mxu0 0.0
        %2125 = vmatprep.subr.mxu0 0.0
        %2126 = vmatpush2.msra.mxu0 0.0
        %2127 = vmatprep.subr.mxu0 0.0
        %2128 = vmatpush2.msra.mxu0 0.0
        %2129 = vmatprep.subr.mxu0 0.0
        %2130 = vmatpush2.msra.mxu0 0.0
        %2131 = vmatprep.subr.mxu0 0.0
        %2132 = vmatpush2.msra.mxu0 0.0
        %2133 = vmatprep.subr.mxu0 0.0
        %2134 = vmatpush2.msra.mxu0 0.0
        %2135 = vmatprep.subr.mxu0 0.0
        %2136 = vmatpush2.msra.mxu0 0.0
        %2137 = vmatprep.subr.mxu0 0.0
        %2138 = vmatpush2.msra.mxu0 0.0
        %2139 = vmatprep.subr.mxu0 0.0
        %2140 = vmatpush2.msra.mxu0 0.0
        %2141 = vmatprep.mubr.f32.mxu0 0.0
        %v2142 = vand.u32 %v213, 4294901760
        %v2143 = vsub.f32 %v213, %v2142
        %v2144 = vand.u32 %v2143, 4294901760
        %2145 = vmatmul.mubr.f32.gmra.mxu0 %v2144
        %v2146 = vpop.f32.mrf.mxu0
        %v2147 = vadd.f32 %v1967, %v2146
        %v2148 = vpop.f32.mrf.mxu0
        %2149 = vmatprep.mubr.f32.mxu0 0.0
        %v2150 = vand.u32 %v216, 4294901760
        %v2151 = vsub.f32 %v216, %v2150
        %v2152 = vand.u32 %v2151, 4294901760
        %2153 = vmatmul.mubr.f32.gmra.mxu0 %v2152
        %v2154 = vpop.f32.mrf.mxu0
        %v2155 = vadd.f32 %v1974, %v2154
        %v2156 = vpop.f32.mrf.mxu0
        %2157 = vmatprep.mubr.f32.mxu0 0.0
        %v2158 = vand.u32 %v219, 4294901760
        %v2159 = vsub.f32 %v219, %v2158
        %v2160 = vand.u32 %v2159, 4294901760
        %2161 = vmatmul.mubr.f32.gmra.mxu0 %v2160
        %v2162 = vpop.f32.mrf.mxu0
        %v2163 = vadd.f32 %v1981, %v2162
        %v2164 = vpop.f32.mrf.mxu0
        %2165 = vmatprep.mubr.f32.mxu0 0.0
        %v2166 = vand.u32 %v222, 4294901760
        %v2167 = vsub.f32 %v222, %v2166
        %v2168 = vand.u32 %v2167, 4294901760
        %2169 = vmatmul.mubr.f32.gmra.mxu0 %v2168
        %v2170 = vpop.f32.mrf.mxu0
        %v2171 = vadd.f32 %v1988, %v2170
        %v2172 = vpop.f32.mrf.mxu0
        %2173 = vmatprep.mubr.f32.mxu0 0.0
        %v2174 = vand.u32 %v225, 4294901760
        %v2175 = vsub.f32 %v225, %v2174
        %v2176 = vand.u32 %v2175, 4294901760
        %2177 = vmatmul.mubr.f32.gmra.mxu0 %v2176
        %v2178 = vpop.f32.mrf.mxu0
        %v2179 = vadd.f32 %v1995, %v2178
        %v2180 = vpop.f32.mrf.mxu0
        %2181 = vmatprep.mubr.f32.mxu0 0.0
        %v2182 = vand.u32 %v228, 4294901760
        %v2183 = vsub.f32 %v228, %v2182
        %v2184 = vand.u32 %v2183, 4294901760
        %2185 = vmatmul.mubr.f32.gmra.mxu0 %v2184
        %v2186 = vpop.f32.mrf.mxu0
        %v2187 = vadd.f32 %v2002, %v2186
        %v2188 = vpop.f32.mrf.mxu0
        %2189 = vmatprep.mubr.f32.mxu0 0.0
        %v2190 = vand.u32 %v231, 4294901760
        %v2191 = vsub.f32 %v231, %v2190
        %v2192 = vand.u32 %v2191, 4294901760
        %2193 = vmatmul.mubr.f32.gmra.mxu0 %v2192
        %v2194 = vpop.f32.mrf.mxu0
        %v2195 = vadd.f32 %v2009, %v2194
        %v2196 = vpop.f32.mrf.mxu0
        %2197 = vmatprep.mubr.f32.mxu0 0.0
        %v2198 = vand.u32 %v234, 4294901760
        %v2199 = vsub.f32 %v234, %v2198
        %v2200 = vand.u32 %v2199, 4294901760
        %2201 = vmatmul.mubr.f32.gmra.mxu0 %v2200
        %v2202 = vpop.f32.mrf.mxu0
        %v2203 = vadd.f32 %v2016, %v2202
        %v2204 = vpop.f32.mrf.mxu0
        %2205 = vmatprep.mubr.f32.mxu0 0.0
        %v2206 = vand.u32 %v237, 4294901760
        %v2207 = vsub.f32 %v237, %v2206
        %v2208 = vand.u32 %v2207, 4294901760
        %2209 = vmatmul.mubr.f32.gmra.mxu0 %v2208
        %v2210 = vpop.f32.mrf.mxu0
        %v2211 = vadd.f32 %v2023, %v2210
        %v2212 = vpop.f32.mrf.mxu0
        %2213 = vmatprep.mubr.f32.mxu0 0.0
        %v2214 = vand.u32 %v240, 4294901760
        %v2215 = vsub.f32 %v240, %v2214
        %v2216 = vand.u32 %v2215, 4294901760
        %2217 = vmatmul.mubr.f32.gmra.mxu0 %v2216
        %v2218 = vpop.f32.mrf.mxu0
        %v2219 = vadd.f32 %v2030, %v2218
        %v2220 = vpop.f32.mrf.mxu0
        %2221 = vmatprep.mubr.f32.mxu0 0.0
        %v2222 = vand.u32 %v243, 4294901760
        %v2223 = vsub.f32 %v243, %v2222
        %v2224 = vand.u32 %v2223, 4294901760
        %2225 = vmatmul.mubr.f32.gmra.mxu0 %v2224
        %v2226 = vpop.f32.mrf.mxu0
        %v2227 = vadd.f32 %v2037, %v2226
        %v2228 = vpop.f32.mrf.mxu0
        %2229 = vmatprep.mubr.f32.mxu0 0.0
        %v2230 = vand.u32 %v246, 4294901760
        %v2231 = vsub.f32 %v246, %v2230
        %v2232 = vand.u32 %v2231, 4294901760
        %2233 = vmatmul.mubr.f32.gmra.mxu0 %v2232
        %v2234 = vpop.f32.mrf.mxu0
        %v2235 = vadd.f32 %v2044, %v2234
        %v2236 = vpop.f32.mrf.mxu0
        %2237 = vmatprep.mubr.f32.mxu0 0.0
        %v2238 = vand.u32 %v249, 4294901760
        %v2239 = vsub.f32 %v249, %v2238
        %v2240 = vand.u32 %v2239, 4294901760
        %2241 = vmatmul.mubr.f32.gmra.mxu0 %v2240
        %v2242 = vpop.f32.mrf.mxu0
        %v2243 = vadd.f32 %v2051, %v2242
        %v2244 = vpop.f32.mrf.mxu0
        %2245 = vmatprep.mubr.f32.mxu0 0.0
        %v2246 = vand.u32 %v252, 4294901760
        %v2247 = vsub.f32 %v252, %v2246
        %v2248 = vand.u32 %v2247, 4294901760
        %2249 = vmatmul.mubr.f32.gmra.mxu0 %v2248
        %v2250 = vpop.f32.mrf.mxu0
        %v2251 = vadd.f32 %v2058, %v2250
        %v2252 = vpop.f32.mrf.mxu0
        %2253 = vmatprep.mubr.f32.mxu0 0.0
        %v2254 = vand.u32 %v255, 4294901760
        %v2255 = vsub.f32 %v255, %v2254
        %v2256 = vand.u32 %v2255, 4294901760
        %2257 = vmatmul.mubr.f32.gmra.mxu0 %v2256
        %v2258 = vpop.f32.mrf.mxu0
        %v2259 = vadd.f32 %v2065, %v2258
        %v2260 = vpop.f32.mrf.mxu0
        %2261 = vmatprep.mubr.f32.mxu0 0.0
        %v2262 = vand.u32 %v258, 4294901760
        %v2263 = vsub.f32 %v258, %v2262
        %v2264 = vand.u32 %v2263, 4294901760
        %2265 = vmatmul.mubr.f32.gmra.mxu0 %v2264
        %v2266 = vpop.f32.mrf.mxu0
        %v2267 = vadd.f32 %v2072, %v2266
        %v2268 = vpop.f32.mrf.mxu0
        %2269 = vdwg.mxu0
        %2270 = vmatprep.subr.mxu0 0.0
        %2271 = vmatpush1.msra.mxu0 0.0
        %2272 = vmatprep.subr.mxu0 0.0
        %2273 = vmatpush1.msra.mxu0 0.0
        %2274 = vmatprep.subr.mxu0 0.0
        %2275 = vmatpush1.msra.mxu0 0.0
        %2276 = vmatprep.subr.mxu0 0.0
        %2277 = vmatpush1.msra.mxu0 0.0
        %2278 = vmatprep.subr.mxu0 0.0
        %2279 = vmatpush1.msra.mxu0 0.0
        %2280 = vmatprep.subr.mxu0 0.0
        %2281 = vmatpush1.msra.mxu0 0.0
        %2282 = vmatprep.subr.mxu0 0.0
        %2283 = vmatpush1.msra.mxu0 0.0
        %2284 = vmatprep.subr.mxu0 0.0
        %2285 = vmatpush1.msra.mxu0 0.0
        %2286 = vmatprep.subr.mxu0 0.0
        %2287 = vmatpush1.msra.mxu0 0.0
        %2288 = vmatprep.subr.mxu0 0.0
        %2289 = vmatpush1.msra.mxu0 0.0
        %2290 = vmatprep.subr.mxu0 0.0
        %2291 = vmatpush1.msra.mxu0 0.0
        %2292 = vmatprep.subr.mxu0 0.0
        %2293 = vmatpush1.msra.mxu0 0.0
        %2294 = vmatprep.subr.mxu0 0.0
        %2295 = vmatpush1.msra.mxu0 0.0
        %2296 = vmatprep.subr.mxu0 0.0
        %2297 = vmatpush1.msra.mxu0 0.0
        %2298 = vmatprep.subr.mxu0 0.0
        %v2299 = vand.u32 %v268, 4294901760
        %v2300 = vsub.f32 %v268, %v2299
        %v2301 = vand.u32 %v2300, 4294901760
        %2302 = vmatpush1.msra.mxu0 %v2301
        %2303 = vmatprep.subr.mxu0 0.0
        %v2304 = vand.u32 %v190, 4294901760
        %v2305 = vsub.f32 %v190, %v2304
        %v2306 = vand.u32 %v2305, 4294901760
        %2307 = vmatpush1.msra.mxu0 %v2306
        %2308 = vmatprep.subr.mxu0 0.0
        %2309 = vmatpush2.msra.mxu0 0.0
        %2310 = vmatprep.subr.mxu0 0.0
        %2311 = vmatpush2.msra.mxu0 0.0
        %2312 = vmatprep.subr.mxu0 0.0
        %2313 = vmatpush2.msra.mxu0 0.0
        %2314 = vmatprep.subr.mxu0 0.0
        %2315 = vmatpush2.msra.mxu0 0.0
        %2316 = vmatprep.subr.mxu0 0.0
        %2317 = vmatpush2.msra.mxu0 0.0
        %2318 = vmatprep.subr.mxu0 0.0
        %2319 = vmatpush2.msra.mxu0 0.0
        %2320 = vmatprep.subr.mxu0 0.0
        %2321 = vmatpush2.msra.mxu0 0.0
        %2322 = vmatprep.subr.mxu0 0.0
        %2323 = vmatpush2.msra.mxu0 0.0
        %2324 = vmatprep.subr.mxu0 0.0
        %2325 = vmatpush2.msra.mxu0 0.0
        %2326 = vmatprep.subr.mxu0 0.0
        %2327 = vmatpush2.msra.mxu0 0.0
        %2328 = vmatprep.subr.mxu0 0.0
        %2329 = vmatpush2.msra.mxu0 0.0
        %2330 = vmatprep.subr.mxu0 0.0
        %2331 = vmatpush2.msra.mxu0 0.0
        %2332 = vmatprep.subr.mxu0 0.0
        %2333 = vmatpush2.msra.mxu0 0.0
        %2334 = vmatprep.subr.mxu0 0.0
        %2335 = vmatpush2.msra.mxu0 0.0
        %2336 = vmatprep.subr.mxu0 0.0
        %2337 = vmatpush2.msra.mxu0 0.0
        %2338 = vmatprep.subr.mxu0 0.0
        %2339 = vmatpush2.msra.mxu0 0.0
        %2340 = vmatprep.mubr.f32.mxu0 0.0
        %v2341 = vand.u32 %v213, 4294901760
        %2342 = vmatmul.mubr.f32.gmra.mxu0 %v2341
        %v2343 = vpop.f32.mrf.mxu0
        %v2344 = vadd.f32 %v2147, %v2343
        %v2345 = vpop.f32.mrf.mxu0
        %2346 = vmatprep.mubr.f32.mxu0 0.0
        %v2347 = vand.u32 %v216, 4294901760
        %2348 = vmatmul.mubr.f32.gmra.mxu0 %v2347
        %v2349 = vpop.f32.mrf.mxu0
        %v2350 = vadd.f32 %v2155, %v2349
        %v2351 = vpop.f32.mrf.mxu0
        %2352 = vmatprep.mubr.f32.mxu0 0.0
        %v2353 = vand.u32 %v219, 4294901760
        %2354 = vmatmul.mubr.f32.gmra.mxu0 %v2353
        %v2355 = vpop.f32.mrf.mxu0
        %v2356 = vadd.f32 %v2163, %v2355
        %v2357 = vpop.f32.mrf.mxu0
        %2358 = vmatprep.mubr.f32.mxu0 0.0
        %v2359 = vand.u32 %v222, 4294901760
        %2360 = vmatmul.mubr.f32.gmra.mxu0 %v2359
        %v2361 = vpop.f32.mrf.mxu0
        %v2362 = vadd.f32 %v2171, %v2361
        %v2363 = vpop.f32.mrf.mxu0
        %2364 = vmatprep.mubr.f32.mxu0 0.0
        %v2365 = vand.u32 %v225, 4294901760
        %2366 = vmatmul.mubr.f32.gmra.mxu0 %v2365
        %v2367 = vpop.f32.mrf.mxu0
        %v2368 = vadd.f32 %v2179, %v2367
        %v2369 = vpop.f32.mrf.mxu0
        %2370 = vmatprep.mubr.f32.mxu0 0.0
        %v2371 = vand.u32 %v228, 4294901760
        %2372 = vmatmul.mubr.f32.gmra.mxu0 %v2371
        %v2373 = vpop.f32.mrf.mxu0
        %v2374 = vadd.f32 %v2187, %v2373
        %v2375 = vpop.f32.mrf.mxu0
        %2376 = vmatprep.mubr.f32.mxu0 0.0
        %v2377 = vand.u32 %v231, 4294901760
        %2378 = vmatmul.mubr.f32.gmra.mxu0 %v2377
        %v2379 = vpop.f32.mrf.mxu0
        %v2380 = vadd.f32 %v2195, %v2379
        %v2381 = vpop.f32.mrf.mxu0
        %2382 = vmatprep.mubr.f32.mxu0 0.0
        %v2383 = vand.u32 %v234, 4294901760
        %2384 = vmatmul.mubr.f32.gmra.mxu0 %v2383
        %v2385 = vpop.f32.mrf.mxu0
        %v2386 = vadd.f32 %v2203, %v2385
        %v2387 = vpop.f32.mrf.mxu0
        %2388 = vmatprep.mubr.f32.mxu0 0.0
        %v2389 = vand.u32 %v237, 4294901760
        %2390 = vmatmul.mubr.f32.gmra.mxu0 %v2389
        %v2391 = vpop.f32.mrf.mxu0
        %v2392 = vadd.f32 %v2211, %v2391
        %v2393 = vpop.f32.mrf.mxu0
        %2394 = vmatprep.mubr.f32.mxu0 0.0
        %v2395 = vand.u32 %v240, 4294901760
        %2396 = vmatmul.mubr.f32.gmra.mxu0 %v2395
        %v2397 = vpop.f32.mrf.mxu0
        %v2398 = vadd.f32 %v2219, %v2397
        %v2399 = vpop.f32.mrf.mxu0
        %2400 = vmatprep.mubr.f32.mxu0 0.0
        %v2401 = vand.u32 %v243, 4294901760
        %2402 = vmatmul.mubr.f32.gmra.mxu0 %v2401
        %v2403 = vpop.f32.mrf.mxu0
        %v2404 = vadd.f32 %v2227, %v2403
        %v2405 = vpop.f32.mrf.mxu0
        %2406 = vmatprep.mubr.f32.mxu0 0.0
        %v2407 = vand.u32 %v246, 4294901760
        %2408 = vmatmul.mubr.f32.gmra.mxu0 %v2407
        %v2409 = vpop.f32.mrf.mxu0
        %v2410 = vadd.f32 %v2235, %v2409
        %v2411 = vpop.f32.mrf.mxu0
        %2412 = vmatprep.mubr.f32.mxu0 0.0
        %v2413 = vand.u32 %v249, 4294901760
        %2414 = vmatmul.mubr.f32.gmra.mxu0 %v2413
        %v2415 = vpop.f32.mrf.mxu0
        %v2416 = vadd.f32 %v2243, %v2415
        %v2417 = vpop.f32.mrf.mxu0
        %2418 = vmatprep.mubr.f32.mxu0 0.0
        %v2419 = vand.u32 %v252, 4294901760
        %2420 = vmatmul.mubr.f32.gmra.mxu0 %v2419
        %v2421 = vpop.f32.mrf.mxu0
        %v2422 = vadd.f32 %v2251, %v2421
        %v2423 = vpop.f32.mrf.mxu0
        %2424 = vmatprep.mubr.f32.mxu0 0.0
        %v2425 = vand.u32 %v255, 4294901760
        %2426 = vmatmul.mubr.f32.gmra.mxu0 %v2425
        %v2427 = vpop.f32.mrf.mxu0
        %v2428 = vadd.f32 %v2259, %v2427
        %v2429 = vpop.f32.mrf.mxu0
        %2430 = vmatprep.mubr.f32.mxu0 0.0
        %v2431 = vand.u32 %v258, 4294901760
        %2432 = vmatmul.mubr.f32.gmra.mxu0 %v2431
        %v2433 = vpop.f32.mrf.mxu0
        %v2434 = vadd.f32 %v2267, %v2433
        %v2435 = vpop.f32.mrf.mxu0
        %2436 = vdwg.mxu0
        %2437 = vmatprep.subr.mxu0 0.0
        %2438 = vmatpush1.msra.mxu0 0.0
        %2439 = vmatprep.subr.mxu0 0.0
        %2440 = vmatpush1.msra.mxu0 0.0
        %2441 = vmatprep.subr.mxu0 0.0
        %2442 = vmatpush1.msra.mxu0 0.0
        %2443 = vmatprep.subr.mxu0 0.0
        %2444 = vmatpush1.msra.mxu0 0.0
        %2445 = vmatprep.subr.mxu0 0.0
        %2446 = vmatpush1.msra.mxu0 0.0
        %2447 = vmatprep.subr.mxu0 0.0
        %2448 = vmatpush1.msra.mxu0 0.0
        %2449 = vmatprep.subr.mxu0 0.0
        %2450 = vmatpush1.msra.mxu0 0.0
        %2451 = vmatprep.subr.mxu0 0.0
        %2452 = vmatpush1.msra.mxu0 0.0
        %2453 = vmatprep.subr.mxu0 0.0
        %2454 = vmatpush1.msra.mxu0 0.0
        %2455 = vmatprep.subr.mxu0 0.0
        %2456 = vmatpush1.msra.mxu0 0.0
        %2457 = vmatprep.subr.mxu0 0.0
        %2458 = vmatpush1.msra.mxu0 0.0
        %2459 = vmatprep.subr.mxu0 0.0
        %2460 = vmatpush1.msra.mxu0 0.0
        %2461 = vmatprep.subr.mxu0 0.0
        %2462 = vmatpush1.msra.mxu0 0.0
        %2463 = vmatprep.subr.mxu0 0.0
        %2464 = vmatpush1.msra.mxu0 0.0
        %2465 = vmatprep.subr.mxu0 0.0
        %v2466 = vand.u32 %v268, 4294901760
        %2467 = vmatpush1.msra.mxu0 %v2466
        %2468 = vmatprep.subr.mxu0 0.0
        %v2469 = vand.u32 %v190, 4294901760
        %2470 = vmatpush1.msra.mxu0 %v2469
        %2471 = vmatprep.subr.mxu0 0.0
        %2472 = vmatpush2.msra.mxu0 0.0
        %2473 = vmatprep.subr.mxu0 0.0
        %2474 = vmatpush2.msra.mxu0 0.0
        %2475 = vmatprep.subr.mxu0 0.0
        %2476 = vmatpush2.msra.mxu0 0.0
        %2477 = vmatprep.subr.mxu0 0.0
        %2478 = vmatpush2.msra.mxu0 0.0
        %2479 = vmatprep.subr.mxu0 0.0
        %2480 = vmatpush2.msra.mxu0 0.0
        %2481 = vmatprep.subr.mxu0 0.0
        %2482 = vmatpush2.msra.mxu0 0.0
        %2483 = vmatprep.subr.mxu0 0.0
        %2484 = vmatpush2.msra.mxu0 0.0
        %2485 = vmatprep.subr.mxu0 0.0
        %2486 = vmatpush2.msra.mxu0 0.0
        %2487 = vmatprep.subr.mxu0 0.0
        %2488 = vmatpush2.msra.mxu0 0.0
        %2489 = vmatprep.subr.mxu0 0.0
        %2490 = vmatpush2.msra.mxu0 0.0
        %2491 = vmatprep.subr.mxu0 0.0
        %2492 = vmatpush2.msra.mxu0 0.0
        %2493 = vmatprep.subr.mxu0 0.0
        %2494 = vmatpush2.msra.mxu0 0.0
        %2495 = vmatprep.subr.mxu0 0.0
        %2496 = vmatpush2.msra.mxu0 0.0
        %2497 = vmatprep.subr.mxu0 0.0
        %2498 = vmatpush2.msra.mxu0 0.0
        %2499 = vmatprep.subr.mxu0 0.0
        %2500 = vmatpush2.msra.mxu0 0.0
        %2501 = vmatprep.subr.mxu0 0.0
        %2502 = vmatpush2.msra.mxu0 0.0
        %2503 = vmatprep.mubr.f32.mxu0 0.0
        %v2504 = vand.u32 %v213, 4294901760
        %2505 = vmatmul.mubr.f32.gmra.mxu0 %v2504
        %v2506 = vpop.f32.mrf.mxu0
        %v2507 = vadd.f32 %v2344, %v2506
        %v2508 = vpop.f32.mrf.mxu0
        %2509 = vmatprep.mubr.f32.mxu0 0.0
        %v2510 = vand.u32 %v216, 4294901760
        %2511 = vmatmul.mubr.f32.gmra.mxu0 %v2510
        %v2512 = vpop.f32.mrf.mxu0
        %v2513 = vadd.f32 %v2350, %v2512
        %v2514 = vpop.f32.mrf.mxu0
        %2515 = vmatprep.mubr.f32.mxu0 0.0
        %v2516 = vand.u32 %v219, 4294901760
        %2517 = vmatmul.mubr.f32.gmra.mxu0 %v2516
        %v2518 = vpop.f32.mrf.mxu0
        %v2519 = vadd.f32 %v2356, %v2518
        %v2520 = vpop.f32.mrf.mxu0
        %2521 = vmatprep.mubr.f32.mxu0 0.0
        %v2522 = vand.u32 %v222, 4294901760
        %2523 = vmatmul.mubr.f32.gmra.mxu0 %v2522
        %v2524 = vpop.f32.mrf.mxu0
        %v2525 = vadd.f32 %v2362, %v2524
        %v2526 = vpop.f32.mrf.mxu0
        %2527 = vmatprep.mubr.f32.mxu0 0.0
        %v2528 = vand.u32 %v225, 4294901760
        %2529 = vmatmul.mubr.f32.gmra.mxu0 %v2528
        %v2530 = vpop.f32.mrf.mxu0
        %v2531 = vadd.f32 %v2368, %v2530
        %v2532 = vpop.f32.mrf.mxu0
        %2533 = vmatprep.mubr.f32.mxu0 0.0
        %v2534 = vand.u32 %v228, 4294901760
        %2535 = vmatmul.mubr.f32.gmra.mxu0 %v2534
        %v2536 = vpop.f32.mrf.mxu0
        %v2537 = vadd.f32 %v2374, %v2536
        %v2538 = vpop.f32.mrf.mxu0
        %2539 = vmatprep.mubr.f32.mxu0 0.0
        %v2540 = vand.u32 %v231, 4294901760
        %2541 = vmatmul.mubr.f32.gmra.mxu0 %v2540
        %v2542 = vpop.f32.mrf.mxu0
        %v2543 = vadd.f32 %v2380, %v2542
        %v2544 = vpop.f32.mrf.mxu0
        %2545 = vmatprep.mubr.f32.mxu0 0.0
        %v2546 = vand.u32 %v234, 4294901760
        %2547 = vmatmul.mubr.f32.gmra.mxu0 %v2546
        %v2548 = vpop.f32.mrf.mxu0
        %v2549 = vadd.f32 %v2386, %v2548
        %v2550 = vpop.f32.mrf.mxu0
        %2551 = vmatprep.mubr.f32.mxu0 0.0
        %v2552 = vand.u32 %v237, 4294901760
        %2553 = vmatmul.mubr.f32.gmra.mxu0 %v2552
        %v2554 = vpop.f32.mrf.mxu0
        %v2555 = vadd.f32 %v2392, %v2554
        %v2556 = vpop.f32.mrf.mxu0
        %2557 = vmatprep.mubr.f32.mxu0 0.0
        %v2558 = vand.u32 %v240, 4294901760
        %2559 = vmatmul.mubr.f32.gmra.mxu0 %v2558
        %v2560 = vpop.f32.mrf.mxu0
        %v2561 = vadd.f32 %v2398, %v2560
        %v2562 = vpop.f32.mrf.mxu0
        %2563 = vmatprep.mubr.f32.mxu0 0.0
        %v2564 = vand.u32 %v243, 4294901760
        %2565 = vmatmul.mubr.f32.gmra.mxu0 %v2564
        %v2566 = vpop.f32.mrf.mxu0
        %v2567 = vadd.f32 %v2404, %v2566
        %v2568 = vpop.f32.mrf.mxu0
        %2569 = vmatprep.mubr.f32.mxu0 0.0
        %v2570 = vand.u32 %v246, 4294901760
        %2571 = vmatmul.mubr.f32.gmra.mxu0 %v2570
        %v2572 = vpop.f32.mrf.mxu0
        %v2573 = vadd.f32 %v2410, %v2572
        %v2574 = vpop.f32.mrf.mxu0
        %2575 = vmatprep.mubr.f32.mxu0 0.0
        %v2576 = vand.u32 %v249, 4294901760
        %2577 = vmatmul.mubr.f32.gmra.mxu0 %v2576
        %v2578 = vpop.f32.mrf.mxu0
        %v2579 = vadd.f32 %v2416, %v2578
        %v2580 = vpop.f32.mrf.mxu0
        %2581 = vmatprep.mubr.f32.mxu0 0.0
        %v2582 = vand.u32 %v252, 4294901760
        %2583 = vmatmul.mubr.f32.gmra.mxu0 %v2582
        %v2584 = vpop.f32.mrf.mxu0
        %v2585 = vadd.f32 %v2422, %v2584
        %v2586 = vpop.f32.mrf.mxu0
        %2587 = vmatprep.mubr.f32.mxu0 0.0
        %v2588 = vand.u32 %v255, 4294901760
        %2589 = vmatmul.mubr.f32.gmra.mxu0 %v2588
        %v2590 = vpop.f32.mrf.mxu0
        %v2591 = vadd.f32 %v2428, %v2590
        %v2592 = vpop.f32.mrf.mxu0
        %2593 = vmatprep.mubr.f32.mxu0 0.0
        %v2594 = vand.u32 %v258, 4294901760
        %2595 = vmatmul.mubr.f32.gmra.mxu0 %v2594
        %v2596 = vpop.f32.mrf.mxu0
        %v2597 = vadd.f32 %v2434, %v2596
        %v2598 = vpop.f32.mrf.mxu0
        %2599 = vdwg.mxu0
        %v2600 = vand.u32 2147483647, %v1387
        %vm2601 = vcmp.le.f32.partialorder %v2600, 0.7853982
        %vm2602 = vcmp.lt.s32.totalorder %v1387, 0
        %v2603 = vand.u32 %v1387, 2139095040
        %v2604 = vshrl.u32 %v2603, 23
        %v2605 = vsub.s32 %v2604, 127
        %v2606 = vand.u32 2147483647, %v1387
        %v2607 = vand.u32 %v2606, 8388607
        %v2608 = vor.u32 %v2607, 8388608
        %v2609 = vsub.s32 0, %v2608
        %v2610 = vadd.s32 %v2605, 1
        %vm2611 = vcmp.gt.s32.totalorder %v2610, 0
        %v2612 = vsel %vm2611, %v2610, 0
        %v2613 = vshrl.u32 %v2612, 5
        %v2614 = vand.u32 %v2612, 31
        %v2615 = vsub.s32 32, %v2614
        %v2616 = vshrl.u32 683565275, %v2615
        %v2617 = vshll.u32 683565275, %v2614
        %v2618 = vshrl.u32 2475754826, %v2615
        %v2619 = vor.u32 %v2617, %v2618
        %v2620 = vshll.u32 2475754826, %v2614
        %v2621 = vshrl.u32 2131351028, %v2615
        %v2622 = vor.u32 %v2620, %v2621
        %v2623 = vshll.u32 2131351028, %v2614
        %v2624 = vshrl.u32 2102212464, %v2615
        %v2625 = vor.u32 %v2623, %v2624
        %v2626 = vshll.u32 2102212464, %v2614
        %v2627 = vshrl.u32 920167782, %v2615
        %v2628 = vor.u32 %v2626, %v2627
        %v2629 = vshll.u32 920167782, %v2614
        %v2630 = vshrl.u32 1326507024, %v2615
        %v2631 = vor.u32 %v2629, %v2630
        %vm2632 = vcmp.lt.s32.totalorder %v2613, 1
        %vm2633 = vcmp.lt.s32.totalorder %v2613, 2
        %vm2634 = vcmp.lt.s32.totalorder %v2613, 3
        %vm2635 = vcmp.lt.s32.totalorder %v2613, 4
        %v2636 = vsel %vm2632, %v2616, %v2619
        %v2637 = vsel %vm2635, %v2625, 2102212464
        %v2638 = vsel %vm2634, %v2622, %v2637
        %v2639 = vsel %vm2633, %v2636, %v2638
        %v2640 = vsel %vm2632, %v2619, %v2622
        %v2641 = vsel %vm2635, %v2628, 920167782
        %v2642 = vsel %vm2634, %v2625, %v2641
        %v2643 = vsel %vm2633, %v2640, %v2642
        %v2644 = vsel %vm2632, %v2622, %v2625
        %v2645 = vsel %vm2635, %v2631, 1326507024
        %v2646 = vsel %vm2634, %v2628, %v2645
        %v2647 = vsel %vm2633, %v2644, %v2646
        %v2648 = vshll.u32 %v2608, 8
        %v2649 = vmul.u32.u64.compose %v2648, %v2647
        %v2650 = vextract.low.u32 %v2649
        %v2651 = vextract.high.u32 %v2649
        %v2652 = vmul.u32.u64.compose %v2648, %v2643
        %v2653 = vextract.low.u32 %v2652
        %v2654 = vextract.high.u32 %v2652
        %v2655 = vmul.u32 %v2648, %v2639
        %v2656 = vadd.s32 %v2651, %v2653
        %vm2657 = vc.u32 %v2651, %v2653
        %v2658 = vadd.s32 %v2654, 1
        %v2659 = vsel %vm2657, %v2658, %v2654
        %v2660 = vadd.s32 %v2655, %v2659
        %v2661 = vadd.s32 %v2660, 536870912
        %v2662 = vshrl.u32 %v2661, 30
        %v2663 = vshll.u32 %v2662, 30
        %v2664 = vsub.s32 %v2660, %v2663
        %vm2665 = vcmp.lt.s32.totalorder %v2664, 0
        %v2666 = vsub.s32 0, %v2664
        %v2667 = vsel %vm2665, %v2666, %v2664
        %v2668 = vclz %v2667
        %v2669 = vsub.s32 %v2668, 2
        %vm2670 = vcmp.gt.s32.totalorder 0, %v2669
        %v2671 = vsel %vm2670, 0, %v2669
        %v2672 = vsub.s32 32, %v2671
        %v2673 = vshll.u32 %v2664, %v2671
        %v2674 = vshrl.u32 %v2656, %v2672
        %v2675 = vor.u32 %v2673, %v2674
        %v2676 = vsub.s32 4294967266, %v2671
        %v2677 = vadd.s32 %v2676, 127
        %v2678 = vshll.u32 %v2677, 23
        %v2679 = vor.u32 4788187, %v2678
        %v2680 = vand.u32 2147483647, %v2679
        %v2682 = vcvt.s32.f32 %v2675
        %v2683 = vmul.f32 %v2682, %v2680
        %v2684 = vxor.u32 %v2683, 2147483648
        %v2685 = vsel %vm2602, %v2684, %v2683
        %v2686 = vsub.s32 4, %v2662
        %v2687 = vsel %vm2602, %v2686, %v2662
        %v2688 = vsel %vm2601, %v1387, %v2685
        %v2689 = vsel %vm2601, 0, %v2687
        %v2690 = vcosq.f32.pop %v2688
        %v2691 = vsinq.f32.pop %v2688
        %vm2692 = vweird.f32 %v1387
        %v2693 = vadd.s32 %v2689, 3
        %v2694 = vand.u32 %v2693, 3
        %vm2695 = vcmp.lt.s32.totalorder %v2694, 2
        %vm2696 = vcmp.eq.s32.totalorder %v2694, 0
        %v2697 = vxor.u32 %v2691, 2147483648
        %v2698 = vsel %vm2696, %v2690, %v2697
        %vm2699 = vcmp.eq.s32.totalorder %v2694, 2
        %v2700 = vxor.u32 %v2690, 2147483648
        %v2701 = vsel %vm2699, %v2700, %v2691
        %v2702 = vsel %vm2695, %v2698, %v2701
        %v2703 = vsel %vm2692, nan, %v2702
        %v2704 = vand.u32 2147483647, %v1389
        %vm2705 = vcmp.le.f32.partialorder %v2704, 0.7853982
        %vm2706 = vcmp.lt.s32.totalorder %v1389, 0
        %v2707 = vand.u32 %v1389, 2139095040
        %v2708 = vshrl.u32 %v2707, 23
        %v2709 = vsub.s32 %v2708, 127
        %v2710 = vand.u32 2147483647, %v1389
        %v2711 = vand.u32 %v2710, 8388607
        %v2712 = vor.u32 %v2711, 8388608
        %v2713 = vsub.s32 0, %v2712
        %v2714 = vadd.s32 %v2709, 1
        %vm2715 = vcmp.gt.s32.totalorder %v2714, 0
        %v2716 = vsel %vm2715, %v2714, 0
        %v2717 = vshrl.u32 %v2716, 5
        %v2718 = vand.u32 %v2716, 31
        %v2719 = vsub.s32 32, %v2718
        %v2720 = vshrl.u32 683565275, %v2719
        %v2721 = vshll.u32 683565275, %v2718
        %v2722 = vshrl.u32 2475754826, %v2719
        %v2723 = vor.u32 %v2721, %v2722
        %v2724 = vshll.u32 2475754826, %v2718
        %v2725 = vshrl.u32 2131351028, %v2719
        %v2726 = vor.u32 %v2724, %v2725
        %v2727 = vshll.u32 2131351028, %v2718
        %v2728 = vshrl.u32 2102212464, %v2719
        %v2729 = vor.u32 %v2727, %v2728
        %v2730 = vshll.u32 2102212464, %v2718
        %v2731 = vshrl.u32 920167782, %v2719
        %v2732 = vor.u32 %v2730, %v2731
        %v2733 = vshll.u32 920167782, %v2718
        %v2734 = vshrl.u32 1326507024, %v2719
        %v2735 = vor.u32 %v2733, %v2734
        %vm2736 = vcmp.lt.s32.totalorder %v2717, 1
        %vm2737 = vcmp.lt.s32.totalorder %v2717, 2
        %vm2738 = vcmp.lt.s32.totalorder %v2717, 3
        %vm2739 = vcmp.lt.s32.totalorder %v2717, 4
        %v2740 = vsel %vm2736, %v2720, %v2723
        %v2741 = vsel %vm2739, %v2729, 2102212464
        %v2742 = vsel %vm2738, %v2726, %v2741
        %v2743 = vsel %vm2737, %v2740, %v2742
        %v2744 = vsel %vm2736, %v2723, %v2726
        %v2745 = vsel %vm2739, %v2732, 920167782
        %v2746 = vsel %vm2738, %v2729, %v2745
        %v2747 = vsel %vm2737, %v2744, %v2746
        %v2748 = vsel %vm2736, %v2726, %v2729
        %v2749 = vsel %vm2739, %v2735, 1326507024
        %v2750 = vsel %vm2738, %v2732, %v2749
        %v2751 = vsel %vm2737, %v2748, %v2750
        %v2752 = vshll.u32 %v2712, 8
        %v2753 = vmul.u32.u64.compose %v2752, %v2751
        %v2754 = vextract.low.u32 %v2753
        %v2755 = vextract.high.u32 %v2753
        %v2756 = vmul.u32.u64.compose %v2752, %v2747
        %v2757 = vextract.low.u32 %v2756
        %v2758 = vextract.high.u32 %v2756
        %v2759 = vmul.u32 %v2752, %v2743
        %v2760 = vadd.s32 %v2755, %v2757
        %vm2761 = vc.u32 %v2755, %v2757
        %v2762 = vadd.s32 %v2758, 1
        %v2763 = vsel %vm2761, %v2762, %v2758
        %v2764 = vadd.s32 %v2759, %v2763
        %v2765 = vadd.s32 %v2764, 536870912
        %v2766 = vshrl.u32 %v2765, 30
        %v2767 = vshll.u32 %v2766, 30
        %v2768 = vsub.s32 %v2764, %v2767
        %vm2769 = vcmp.lt.s32.totalorder %v2768, 0
        %v2770 = vsub.s32 0, %v2768
        %v2771 = vsel %vm2769, %v2770, %v2768
        %v2772 = vclz %v2771
        %v2773 = vsub.s32 %v2772, 2
        %vm2774 = vcmp.gt.s32.totalorder 0, %v2773
        %v2775 = vsel %vm2774, 0, %v2773
        %v2776 = vsub.s32 32, %v2775
        %v2777 = vshll.u32 %v2768, %v2775
        %v2778 = vshrl.u32 %v2760, %v2776
        %v2779 = vor.u32 %v2777, %v2778
        %v2780 = vsub.s32 4294967266, %v2775
        %v2781 = vadd.s32 %v2780, 127
        %v2782 = vshll.u32 %v2781, 23
        %v2783 = vor.u32 4788187, %v2782
        %v2784 = vand.u32 2147483647, %v2783
        %v2786 = vcvt.s32.f32 %v2779
        %v2787 = vmul.f32 %v2786, %v2784
        %v2788 = vxor.u32 %v2787, 2147483648
        %v2789 = vsel %vm2706, %v2788, %v2787
        %v2790 = vsub.s32 4, %v2766
        %v2791 = vsel %vm2706, %v2790, %v2766
        %v2792 = vsel %vm2705, %v1389, %v2789
        %v2793 = vsel %vm2705, 0, %v2791
        %v2794 = vcosq.f32.pop %v2792
        %v2795 = vsinq.f32.pop %v2792
        %vm2796 = vweird.f32 %v1389
        %v2797 = vadd.s32 %v2793, 3
        %v2798 = vand.u32 %v2797, 3
        %vm2799 = vcmp.lt.s32.totalorder %v2798, 2
        %vm2800 = vcmp.eq.s32.totalorder %v2798, 0
        %v2801 = vxor.u32 %v2795, 2147483648
        %v2802 = vsel %vm2800, %v2794, %v2801
        %vm2803 = vcmp.eq.s32.totalorder %v2798, 2
        %v2804 = vxor.u32 %v2794, 2147483648
        %v2805 = vsel %vm2803, %v2804, %v2795
        %v2806 = vsel %vm2799, %v2802, %v2805
        %v2807 = vsel %vm2796, nan, %v2806
        %v2808 = vand.u32 2147483647, %v2507
        %vm2809 = vcmp.le.f32.partialorder %v2808, 0.7853982
        %vm2810 = vcmp.lt.s32.totalorder %v2507, 0
        %v2811 = vand.u32 %v2507, 2139095040
        %v2812 = vshrl.u32 %v2811, 23
        %v2813 = vsub.s32 %v2812, 127
        %v2814 = vand.u32 2147483647, %v2507
        %v2815 = vand.u32 %v2814, 8388607
        %v2816 = vor.u32 %v2815, 8388608
        %v2817 = vsub.s32 0, %v2816
        %v2818 = vadd.s32 %v2813, 1
        %vm2819 = vcmp.gt.s32.totalorder %v2818, 0
        %v2820 = vsel %vm2819, %v2818, 0
        %v2821 = vshrl.u32 %v2820, 5
        %v2822 = vand.u32 %v2820, 31
        %v2823 = vsub.s32 32, %v2822
        %v2824 = vshrl.u32 683565275, %v2823
        %v2825 = vshll.u32 683565275, %v2822
        %v2826 = vshrl.u32 2475754826, %v2823
        %v2827 = vor.u32 %v2825, %v2826
        %v2828 = vshll.u32 2475754826, %v2822
        %v2829 = vshrl.u32 2131351028, %v2823
        %v2830 = vor.u32 %v2828, %v2829
        %v2831 = vshll.u32 2131351028, %v2822
        %v2832 = vshrl.u32 2102212464, %v2823
        %v2833 = vor.u32 %v2831, %v2832
        %v2834 = vshll.u32 2102212464, %v2822
        %v2835 = vshrl.u32 920167782, %v2823
        %v2836 = vor.u32 %v2834, %v2835
        %v2837 = vshll.u32 920167782, %v2822
        %v2838 = vshrl.u32 1326507024, %v2823
        %v2839 = vor.u32 %v2837, %v2838
        %vm2840 = vcmp.lt.s32.totalorder %v2821, 1
        %vm2841 = vcmp.lt.s32.totalorder %v2821, 2
        %vm2842 = vcmp.lt.s32.totalorder %v2821, 3
        %vm2843 = vcmp.lt.s32.totalorder %v2821, 4
        %v2844 = vsel %vm2840, %v2824, %v2827
        %v2845 = vsel %vm2843, %v2833, 2102212464
        %v2846 = vsel %vm2842, %v2830, %v2845
        %v2847 = vsel %vm2841, %v2844, %v2846
        %v2848 = vsel %vm2840, %v2827, %v2830
        %v2849 = vsel %vm2843, %v2836, 920167782
        %v2850 = vsel %vm2842, %v2833, %v2849
        %v2851 = vsel %vm2841, %v2848, %v2850
        %v2852 = vsel %vm2840, %v2830, %v2833
        %v2853 = vsel %vm2843, %v2839, 1326507024
        %v2854 = vsel %vm2842, %v2836, %v2853
        %v2855 = vsel %vm2841, %v2852, %v2854
        %v2856 = vshll.u32 %v2816, 8
        %v2857 = vmul.u32.u64.compose %v2856, %v2855
        %v2858 = vextract.low.u32 %v2857
        %v2859 = vextract.high.u32 %v2857
        %v2860 = vmul.u32.u64.compose %v2856, %v2851
        %v2861 = vextract.low.u32 %v2860
        %v2862 = vextract.high.u32 %v2860
        %v2863 = vmul.u32 %v2856, %v2847
        %v2864 = vadd.s32 %v2859, %v2861
        %vm2865 = vc.u32 %v2859, %v2861
        %v2866 = vadd.s32 %v2862, 1
        %v2867 = vsel %vm2865, %v2866, %v2862
        %v2868 = vadd.s32 %v2863, %v2867
        %v2869 = vadd.s32 %v2868, 536870912
        %v2870 = vshrl.u32 %v2869, 30
        %v2871 = vshll.u32 %v2870, 30
        %v2872 = vsub.s32 %v2868, %v2871
        %vm2873 = vcmp.lt.s32.totalorder %v2872, 0
        %v2874 = vsub.s32 0, %v2872
        %v2875 = vsel %vm2873, %v2874, %v2872
        %v2876 = vclz %v2875
        %v2877 = vsub.s32 %v2876, 2
        %vm2878 = vcmp.gt.s32.totalorder 0, %v2877
        %v2879 = vsel %vm2878, 0, %v2877
        %v2880 = vsub.s32 32, %v2879
        %v2881 = vshll.u32 %v2872, %v2879
        %v2882 = vshrl.u32 %v2864, %v2880
        %v2883 = vor.u32 %v2881, %v2882
        %v2884 = vsub.s32 4294967266, %v2879
        %v2885 = vadd.s32 %v2884, 127
        %v2886 = vshll.u32 %v2885, 23
        %v2887 = vor.u32 4788187, %v2886
        %v2888 = vand.u32 2147483647, %v2887
        %v2890 = vcvt.s32.f32 %v2883
        %v2891 = vmul.f32 %v2890, %v2888
        %v2892 = vxor.u32 %v2891, 2147483648
        %v2893 = vsel %vm2810, %v2892, %v2891
        %v2894 = vsub.s32 4, %v2870
        %v2895 = vsel %vm2810, %v2894, %v2870
        %v2896 = vsel %vm2809, %v2507, %v2893
        %v2897 = vsel %vm2809, 0, %v2895
        %v2898 = vcosq.f32.pop %v2896
        %v2899 = vsinq.f32.pop %v2896
        %vm2900 = vweird.f32 %v2507
        %v2901 = vadd.s32 %v2897, 3
        %v2902 = vand.u32 %v2901, 3
        %vm2903 = vcmp.lt.s32.totalorder %v2902, 2
        %vm2904 = vcmp.eq.s32.totalorder %v2902, 0
        %v2905 = vxor.u32 %v2899, 2147483648
        %v2906 = vsel %vm2904, %v2898, %v2905
        %vm2907 = vcmp.eq.s32.totalorder %v2902, 2
        %v2908 = vxor.u32 %v2898, 2147483648
        %v2909 = vsel %vm2907, %v2908, %v2899
        %v2910 = vsel %vm2903, %v2906, %v2909
        %v2911 = vsel %vm2900, nan, %v2910
        %v2912 = vand.u32 2147483647, %v1394
        %vm2913 = vcmp.le.f32.partialorder %v2912, 0.7853982
        %vm2914 = vcmp.lt.s32.totalorder %v1394, 0
        %v2915 = vand.u32 %v1394, 2139095040
        %v2916 = vshrl.u32 %v2915, 23
        %v2917 = vsub.s32 %v2916, 127
        %v2918 = vand.u32 2147483647, %v1394
        %v2919 = vand.u32 %v2918, 8388607
        %v2920 = vor.u32 %v2919, 8388608
        %v2921 = vsub.s32 0, %v2920
        %v2922 = vadd.s32 %v2917, 1
        %vm2923 = vcmp.gt.s32.totalorder %v2922, 0
        %v2924 = vsel %vm2923, %v2922, 0
        %v2925 = vshrl.u32 %v2924, 5
        %v2926 = vand.u32 %v2924, 31
        %v2927 = vsub.s32 32, %v2926
        %v2928 = vshrl.u32 683565275, %v2927
        %v2929 = vshll.u32 683565275, %v2926
        %v2930 = vshrl.u32 2475754826, %v2927
        %v2931 = vor.u32 %v2929, %v2930
        %v2932 = vshll.u32 2475754826, %v2926
        %v2933 = vshrl.u32 2131351028, %v2927
        %v2934 = vor.u32 %v2932, %v2933
        %v2935 = vshll.u32 2131351028, %v2926
        %v2936 = vshrl.u32 2102212464, %v2927
        %v2937 = vor.u32 %v2935, %v2936
        %v2938 = vshll.u32 2102212464, %v2926
        %v2939 = vshrl.u32 920167782, %v2927
        %v2940 = vor.u32 %v2938, %v2939
        %v2941 = vshll.u32 920167782, %v2926
        %v2942 = vshrl.u32 1326507024, %v2927
        %v2943 = vor.u32 %v2941, %v2942
        %vm2944 = vcmp.lt.s32.totalorder %v2925, 1
        %vm2945 = vcmp.lt.s32.totalorder %v2925, 2
        %vm2946 = vcmp.lt.s32.totalorder %v2925, 3
        %vm2947 = vcmp.lt.s32.totalorder %v2925, 4
        %v2948 = vsel %vm2944, %v2928, %v2931
        %v2949 = vsel %vm2947, %v2937, 2102212464
        %v2950 = vsel %vm2946, %v2934, %v2949
        %v2951 = vsel %vm2945, %v2948, %v2950
        %v2952 = vsel %vm2944, %v2931, %v2934
        %v2953 = vsel %vm2947, %v2940, 920167782
        %v2954 = vsel %vm2946, %v2937, %v2953
        %v2955 = vsel %vm2945, %v2952, %v2954
        %v2956 = vsel %vm2944, %v2934, %v2937
        %v2957 = vsel %vm2947, %v2943, 1326507024
        %v2958 = vsel %vm2946, %v2940, %v2957
        %v2959 = vsel %vm2945, %v2956, %v2958
        %v2960 = vshll.u32 %v2920, 8
        %v2961 = vmul.u32.u64.compose %v2960, %v2959
        %v2962 = vextract.low.u32 %v2961
        %v2963 = vextract.high.u32 %v2961
        %v2964 = vmul.u32.u64.compose %v2960, %v2955
        %v2965 = vextract.low.u32 %v2964
        %v2966 = vextract.high.u32 %v2964
        %v2967 = vmul.u32 %v2960, %v2951
        %v2968 = vadd.s32 %v2963, %v2965
        %vm2969 = vc.u32 %v2963, %v2965
        %v2970 = vadd.s32 %v2966, 1
        %v2971 = vsel %vm2969, %v2970, %v2966
        %v2972 = vadd.s32 %v2967, %v2971
        %v2973 = vadd.s32 %v2972, 536870912
        %v2974 = vshrl.u32 %v2973, 30
        %v2975 = vshll.u32 %v2974, 30
        %v2976 = vsub.s32 %v2972, %v2975
        %vm2977 = vcmp.lt.s32.totalorder %v2976, 0
        %v2978 = vsub.s32 0, %v2976
        %v2979 = vsel %vm2977, %v2978, %v2976
        %v2980 = vclz %v2979
        %v2981 = vsub.s32 %v2980, 2
        %vm2982 = vcmp.gt.s32.totalorder 0, %v2981
        %v2983 = vsel %vm2982, 0, %v2981
        %v2984 = vsub.s32 32, %v2983
        %v2985 = vshll.u32 %v2976, %v2983
        %v2986 = vshrl.u32 %v2968, %v2984
        %v2987 = vor.u32 %v2985, %v2986
        %v2988 = vsub.s32 4294967266, %v2983
        %v2989 = vadd.s32 %v2988, 127
        %v2990 = vshll.u32 %v2989, 23
        %v2991 = vor.u32 4788187, %v2990
        %v2992 = vand.u32 2147483647, %v2991
        %v2994 = vcvt.s32.f32 %v2987
        %v2995 = vmul.f32 %v2994, %v2992
        %v2996 = vxor.u32 %v2995, 2147483648
        %v2997 = vsel %vm2914, %v2996, %v2995
        %v2998 = vsub.s32 4, %v2974
        %v2999 = vsel %vm2914, %v2998, %v2974
        %v3000 = vsel %vm2913, %v1394, %v2997
        %v3001 = vsel %vm2913, 0, %v2999
        %v3002 = vcosq.f32.pop %v3000
        %v3003 = vsinq.f32.pop %v3000
        %vm3004 = vweird.f32 %v1394
        %v3005 = vadd.s32 %v3001, 3
        %v3006 = vand.u32 %v3005, 3
        %vm3007 = vcmp.lt.s32.totalorder %v3006, 2
        %vm3008 = vcmp.eq.s32.totalorder %v3006, 0
        %v3009 = vxor.u32 %v3003, 2147483648
        %v3010 = vsel %vm3008, %v3002, %v3009
        %vm3011 = vcmp.eq.s32.totalorder %v3006, 2
        %v3012 = vxor.u32 %v3002, 2147483648
        %v3013 = vsel %vm3011, %v3012, %v3003
        %v3014 = vsel %vm3007, %v3010, %v3013
        %v3015 = vsel %vm3004, nan, %v3014
        %v3016 = vand.u32 2147483647, %v1396
        %vm3017 = vcmp.le.f32.partialorder %v3016, 0.7853982
        %vm3018 = vcmp.lt.s32.totalorder %v1396, 0
        %v3019 = vand.u32 %v1396, 2139095040
        %v3020 = vshrl.u32 %v3019, 23
        %v3021 = vsub.s32 %v3020, 127
        %v3022 = vand.u32 2147483647, %v1396
        %v3023 = vand.u32 %v3022, 8388607
        %v3024 = vor.u32 %v3023, 8388608
        %v3025 = vsub.s32 0, %v3024
        %v3026 = vadd.s32 %v3021, 1
        %vm3027 = vcmp.gt.s32.totalorder %v3026, 0
        %v3028 = vsel %vm3027, %v3026, 0
        %v3029 = vshrl.u32 %v3028, 5
        %v3030 = vand.u32 %v3028, 31
        %v3031 = vsub.s32 32, %v3030
        %v3032 = vshrl.u32 683565275, %v3031
        %v3033 = vshll.u32 683565275, %v3030
        %v3034 = vshrl.u32 2475754826, %v3031
        %v3035 = vor.u32 %v3033, %v3034
        %v3036 = vshll.u32 2475754826, %v3030
        %v3037 = vshrl.u32 2131351028, %v3031
        %v3038 = vor.u32 %v3036, %v3037
        %v3039 = vshll.u32 2131351028, %v3030
        %v3040 = vshrl.u32 2102212464, %v3031
        %v3041 = vor.u32 %v3039, %v3040
        %v3042 = vshll.u32 2102212464, %v3030
        %v3043 = vshrl.u32 920167782, %v3031
        %v3044 = vor.u32 %v3042, %v3043
        %v3045 = vshll.u32 920167782, %v3030
        %v3046 = vshrl.u32 1326507024, %v3031
        %v3047 = vor.u32 %v3045, %v3046
        %vm3048 = vcmp.lt.s32.totalorder %v3029, 1
        %vm3049 = vcmp.lt.s32.totalorder %v3029, 2
        %vm3050 = vcmp.lt.s32.totalorder %v3029, 3
        %vm3051 = vcmp.lt.s32.totalorder %v3029, 4
        %v3052 = vsel %vm3048, %v3032, %v3035
        %v3053 = vsel %vm3051, %v3041, 2102212464
        %v3054 = vsel %vm3050, %v3038, %v3053
        %v3055 = vsel %vm3049, %v3052, %v3054
        %v3056 = vsel %vm3048, %v3035, %v3038
        %v3057 = vsel %vm3051, %v3044, 920167782
        %v3058 = vsel %vm3050, %v3041, %v3057
        %v3059 = vsel %vm3049, %v3056, %v3058
        %v3060 = vsel %vm3048, %v3038, %v3041
        %v3061 = vsel %vm3051, %v3047, 1326507024
        %v3062 = vsel %vm3050, %v3044, %v3061
        %v3063 = vsel %vm3049, %v3060, %v3062
        %v3064 = vshll.u32 %v3024, 8
        %v3065 = vmul.u32.u64.compose %v3064, %v3063
        %v3066 = vextract.low.u32 %v3065
        %v3067 = vextract.high.u32 %v3065
        %v3068 = vmul.u32.u64.compose %v3064, %v3059
        %v3069 = vextract.low.u32 %v3068
        %v3070 = vextract.high.u32 %v3068
        %v3071 = vmul.u32 %v3064, %v3055
        %v3072 = vadd.s32 %v3067, %v3069
        %vm3073 = vc.u32 %v3067, %v3069
        %v3074 = vadd.s32 %v3070, 1
        %v3075 = vsel %vm3073, %v3074, %v3070
        %v3076 = vadd.s32 %v3071, %v3075
        %v3077 = vadd.s32 %v3076, 536870912
        %v3078 = vshrl.u32 %v3077, 30
        %v3079 = vshll.u32 %v3078, 30
        %v3080 = vsub.s32 %v3076, %v3079
        %vm3081 = vcmp.lt.s32.totalorder %v3080, 0
        %v3082 = vsub.s32 0, %v3080
        %v3083 = vsel %vm3081, %v3082, %v3080
        %v3084 = vclz %v3083
        %v3085 = vsub.s32 %v3084, 2
        %vm3086 = vcmp.gt.s32.totalorder 0, %v3085
        %v3087 = vsel %vm3086, 0, %v3085
        %v3088 = vsub.s32 32, %v3087
        %v3089 = vshll.u32 %v3080, %v3087
        %v3090 = vshrl.u32 %v3072, %v3088
        %v3091 = vor.u32 %v3089, %v3090
        %v3092 = vsub.s32 4294967266, %v3087
        %v3093 = vadd.s32 %v3092, 127
        %v3094 = vshll.u32 %v3093, 23
        %v3095 = vor.u32 4788187, %v3094
        %v3096 = vand.u32 2147483647, %v3095
        %v3098 = vcvt.s32.f32 %v3091
        %v3099 = vmul.f32 %v3098, %v3096
        %v3100 = vxor.u32 %v3099, 2147483648
        %v3101 = vsel %vm3018, %v3100, %v3099
        %v3102 = vsub.s32 4, %v3078
        %v3103 = vsel %vm3018, %v3102, %v3078
        %v3104 = vsel %vm3017, %v1396, %v3101
        %v3105 = vsel %vm3017, 0, %v3103
        %v3106 = vcosq.f32.pop %v3104
        %v3107 = vsinq.f32.pop %v3104
        %vm3108 = vweird.f32 %v1396
        %v3109 = vadd.s32 %v3105, 3
        %v3110 = vand.u32 %v3109, 3
        %vm3111 = vcmp.lt.s32.totalorder %v3110, 2
        %vm3112 = vcmp.eq.s32.totalorder %v3110, 0
        %v3113 = vxor.u32 %v3107, 2147483648
        %v3114 = vsel %vm3112, %v3106, %v3113
        %vm3115 = vcmp.eq.s32.totalorder %v3110, 2
        %v3116 = vxor.u32 %v3106, 2147483648
        %v3117 = vsel %vm3115, %v3116, %v3107
        %v3118 = vsel %vm3111, %v3114, %v3117
        %v3119 = vsel %vm3108, nan, %v3118
        %v3120 = vand.u32 2147483647, %v2513
        %vm3121 = vcmp.le.f32.partialorder %v3120, 0.7853982
        %vm3122 = vcmp.lt.s32.totalorder %v2513, 0
        %v3123 = vand.u32 %v2513, 2139095040
        %v3124 = vshrl.u32 %v3123, 23
        %v3125 = vsub.s32 %v3124, 127
        %v3126 = vand.u32 2147483647, %v2513
        %v3127 = vand.u32 %v3126, 8388607
        %v3128 = vor.u32 %v3127, 8388608
        %v3129 = vsub.s32 0, %v3128
        %v3130 = vadd.s32 %v3125, 1
        %vm3131 = vcmp.gt.s32.totalorder %v3130, 0
        %v3132 = vsel %vm3131, %v3130, 0
        %v3133 = vshrl.u32 %v3132, 5
        %v3134 = vand.u32 %v3132, 31
        %v3135 = vsub.s32 32, %v3134
        %v3136 = vshrl.u32 683565275, %v3135
        %v3137 = vshll.u32 683565275, %v3134
        %v3138 = vshrl.u32 2475754826, %v3135
        %v3139 = vor.u32 %v3137, %v3138
        %v3140 = vshll.u32 2475754826, %v3134
        %v3141 = vshrl.u32 2131351028, %v3135
        %v3142 = vor.u32 %v3140, %v3141
        %v3143 = vshll.u32 2131351028, %v3134
        %v3144 = vshrl.u32 2102212464, %v3135
        %v3145 = vor.u32 %v3143, %v3144
        %v3146 = vshll.u32 2102212464, %v3134
        %v3147 = vshrl.u32 920167782, %v3135
        %v3148 = vor.u32 %v3146, %v3147
        %v3149 = vshll.u32 920167782, %v3134
        %v3150 = vshrl.u32 1326507024, %v3135
        %v3151 = vor.u32 %v3149, %v3150
        %vm3152 = vcmp.lt.s32.totalorder %v3133, 1
        %vm3153 = vcmp.lt.s32.totalorder %v3133, 2
        %vm3154 = vcmp.lt.s32.totalorder %v3133, 3
        %vm3155 = vcmp.lt.s32.totalorder %v3133, 4
        %v3156 = vsel %vm3152, %v3136, %v3139
        %v3157 = vsel %vm3155, %v3145, 2102212464
        %v3158 = vsel %vm3154, %v3142, %v3157
        %v3159 = vsel %vm3153, %v3156, %v3158
        %v3160 = vsel %vm3152, %v3139, %v3142
        %v3161 = vsel %vm3155, %v3148, 920167782
        %v3162 = vsel %vm3154, %v3145, %v3161
        %v3163 = vsel %vm3153, %v3160, %v3162
        %v3164 = vsel %vm3152, %v3142, %v3145
        %v3165 = vsel %vm3155, %v3151, 1326507024
        %v3166 = vsel %vm3154, %v3148, %v3165
        %v3167 = vsel %vm3153, %v3164, %v3166
        %v3168 = vshll.u32 %v3128, 8
        %v3169 = vmul.u32.u64.compose %v3168, %v3167
        %v3170 = vextract.low.u32 %v3169
        %v3171 = vextract.high.u32 %v3169
        %v3172 = vmul.u32.u64.compose %v3168, %v3163
        %v3173 = vextract.low.u32 %v3172
        %v3174 = vextract.high.u32 %v3172
        %v3175 = vmul.u32 %v3168, %v3159
        %v3176 = vadd.s32 %v3171, %v3173
        %vm3177 = vc.u32 %v3171, %v3173
        %v3178 = vadd.s32 %v3174, 1
        %v3179 = vsel %vm3177, %v3178, %v3174
        %v3180 = vadd.s32 %v3175, %v3179
        %v3181 = vadd.s32 %v3180, 536870912
        %v3182 = vshrl.u32 %v3181, 30
        %v3183 = vshll.u32 %v3182, 30
        %v3184 = vsub.s32 %v3180, %v3183
        %vm3185 = vcmp.lt.s32.totalorder %v3184, 0
        %v3186 = vsub.s32 0, %v3184
        %v3187 = vsel %vm3185, %v3186, %v3184
        %v3188 = vclz %v3187
        %v3189 = vsub.s32 %v3188, 2
        %vm3190 = vcmp.gt.s32.totalorder 0, %v3189
        %v3191 = vsel %vm3190, 0, %v3189
        %v3192 = vsub.s32 32, %v3191
        %v3193 = vshll.u32 %v3184, %v3191
        %v3194 = vshrl.u32 %v3176, %v3192
        %v3195 = vor.u32 %v3193, %v3194
        %v3196 = vsub.s32 4294967266, %v3191
        %v3197 = vadd.s32 %v3196, 127
        %v3198 = vshll.u32 %v3197, 23
        %v3199 = vor.u32 4788187, %v3198
        %v3200 = vand.u32 2147483647, %v3199
        %v3202 = vcvt.s32.f32 %v3195
        %v3203 = vmul.f32 %v3202, %v3200
        %v3204 = vxor.u32 %v3203, 2147483648
        %v3205 = vsel %vm3122, %v3204, %v3203
        %v3206 = vsub.s32 4, %v3182
        %v3207 = vsel %vm3122, %v3206, %v3182
        %v3208 = vsel %vm3121, %v2513, %v3205
        %v3209 = vsel %vm3121, 0, %v3207
        %v3210 = vcosq.f32.pop %v3208
        %v3211 = vsinq.f32.pop %v3208
        %vm3212 = vweird.f32 %v2513
        %v3213 = vadd.s32 %v3209, 3
        %v3214 = vand.u32 %v3213, 3
        %vm3215 = vcmp.lt.s32.totalorder %v3214, 2
        %vm3216 = vcmp.eq.s32.totalorder %v3214, 0
        %v3217 = vxor.u32 %v3211, 2147483648
        %v3218 = vsel %vm3216, %v3210, %v3217
        %vm3219 = vcmp.eq.s32.totalorder %v3214, 2
        %v3220 = vxor.u32 %v3210, 2147483648
        %v3221 = vsel %vm3219, %v3220, %v3211
        %v3222 = vsel %vm3215, %v3218, %v3221
        %v3223 = vsel %vm3212, nan, %v3222
        %v3224 = vand.u32 2147483647, %v1401
        %vm3225 = vcmp.le.f32.partialorder %v3224, 0.7853982
        %vm3226 = vcmp.lt.s32.totalorder %v1401, 0
        %v3227 = vand.u32 %v1401, 2139095040
        %v3228 = vshrl.u32 %v3227, 23
        %v3229 = vsub.s32 %v3228, 127
        %v3230 = vand.u32 2147483647, %v1401
        %v3231 = vand.u32 %v3230, 8388607
        %v3232 = vor.u32 %v3231, 8388608
        %v3233 = vsub.s32 0, %v3232
        %v3234 = vadd.s32 %v3229, 1
        %vm3235 = vcmp.gt.s32.totalorder %v3234, 0
        %v3236 = vsel %vm3235, %v3234, 0
        %v3237 = vshrl.u32 %v3236, 5
        %v3238 = vand.u32 %v3236, 31
        %v3239 = vsub.s32 32, %v3238
        %v3240 = vshrl.u32 683565275, %v3239
        %v3241 = vshll.u32 683565275, %v3238
        %v3242 = vshrl.u32 2475754826, %v3239
        %v3243 = vor.u32 %v3241, %v3242
        %v3244 = vshll.u32 2475754826, %v3238
        %v3245 = vshrl.u32 2131351028, %v3239
        %v3246 = vor.u32 %v3244, %v3245
        %v3247 = vshll.u32 2131351028, %v3238
        %v3248 = vshrl.u32 2102212464, %v3239
        %v3249 = vor.u32 %v3247, %v3248
        %v3250 = vshll.u32 2102212464, %v3238
        %v3251 = vshrl.u32 920167782, %v3239
        %v3252 = vor.u32 %v3250, %v3251
        %v3253 = vshll.u32 920167782, %v3238
        %v3254 = vshrl.u32 1326507024, %v3239
        %v3255 = vor.u32 %v3253, %v3254
        %vm3256 = vcmp.lt.s32.totalorder %v3237, 1
        %vm3257 = vcmp.lt.s32.totalorder %v3237, 2
        %vm3258 = vcmp.lt.s32.totalorder %v3237, 3
        %vm3259 = vcmp.lt.s32.totalorder %v3237, 4
        %v3260 = vsel %vm3256, %v3240, %v3243
        %v3261 = vsel %vm3259, %v3249, 2102212464
        %v3262 = vsel %vm3258, %v3246, %v3261
        %v3263 = vsel %vm3257, %v3260, %v3262
        %v3264 = vsel %vm3256, %v3243, %v3246
        %v3265 = vsel %vm3259, %v3252, 920167782
        %v3266 = vsel %vm3258, %v3249, %v3265
        %v3267 = vsel %vm3257, %v3264, %v3266
        %v3268 = vsel %vm3256, %v3246, %v3249
        %v3269 = vsel %vm3259, %v3255, 1326507024
        %v3270 = vsel %vm3258, %v3252, %v3269
        %v3271 = vsel %vm3257, %v3268, %v3270
        %v3272 = vshll.u32 %v3232, 8
        %v3273 = vmul.u32.u64.compose %v3272, %v3271
        %v3274 = vextract.low.u32 %v3273
        %v3275 = vextract.high.u32 %v3273
        %v3276 = vmul.u32.u64.compose %v3272, %v3267
        %v3277 = vextract.low.u32 %v3276
        %v3278 = vextract.high.u32 %v3276
        %v3279 = vmul.u32 %v3272, %v3263
        %v3280 = vadd.s32 %v3275, %v3277
        %vm3281 = vc.u32 %v3275, %v3277
        %v3282 = vadd.s32 %v3278, 1
        %v3283 = vsel %vm3281, %v3282, %v3278
        %v3284 = vadd.s32 %v3279, %v3283
        %v3285 = vadd.s32 %v3284, 536870912
        %v3286 = vshrl.u32 %v3285, 30
        %v3287 = vshll.u32 %v3286, 30
        %v3288 = vsub.s32 %v3284, %v3287
        %vm3289 = vcmp.lt.s32.totalorder %v3288, 0
        %v3290 = vsub.s32 0, %v3288
        %v3291 = vsel %vm3289, %v3290, %v3288
        %v3292 = vclz %v3291
        %v3293 = vsub.s32 %v3292, 2
        %vm3294 = vcmp.gt.s32.totalorder 0, %v3293
        %v3295 = vsel %vm3294, 0, %v3293
        %v3296 = vsub.s32 32, %v3295
        %v3297 = vshll.u32 %v3288, %v3295
        %v3298 = vshrl.u32 %v3280, %v3296
        %v3299 = vor.u32 %v3297, %v3298
        %v3300 = vsub.s32 4294967266, %v3295
        %v3301 = vadd.s32 %v3300, 127
        %v3302 = vshll.u32 %v3301, 23
        %v3303 = vor.u32 4788187, %v3302
        %v3304 = vand.u32 2147483647, %v3303
        %v3306 = vcvt.s32.f32 %v3299
        %v3307 = vmul.f32 %v3306, %v3304
        %v3308 = vxor.u32 %v3307, 2147483648
        %v3309 = vsel %vm3226, %v3308, %v3307
        %v3310 = vsub.s32 4, %v3286
        %v3311 = vsel %vm3226, %v3310, %v3286
        %v3312 = vsel %vm3225, %v1401, %v3309
        %v3313 = vsel %vm3225, 0, %v3311
        %v3314 = vcosq.f32.pop %v3312
        %v3315 = vsinq.f32.pop %v3312
        %vm3316 = vweird.f32 %v1401
        %v3317 = vadd.s32 %v3313, 3
        %v3318 = vand.u32 %v3317, 3
        %vm3319 = vcmp.lt.s32.totalorder %v3318, 2
        %vm3320 = vcmp.eq.s32.totalorder %v3318, 0
        %v3321 = vxor.u32 %v3315, 2147483648
        %v3322 = vsel %vm3320, %v3314, %v3321
        %vm3323 = vcmp.eq.s32.totalorder %v3318, 2
        %v3324 = vxor.u32 %v3314, 2147483648
        %v3325 = vsel %vm3323, %v3324, %v3315
        %v3326 = vsel %vm3319, %v3322, %v3325
        %v3327 = vsel %vm3316, nan, %v3326
        %v3328 = vand.u32 2147483647, %v1403
        %vm3329 = vcmp.le.f32.partialorder %v3328, 0.7853982
        %vm3330 = vcmp.lt.s32.totalorder %v1403, 0
        %v3331 = vand.u32 %v1403, 2139095040
        %v3332 = vshrl.u32 %v3331, 23
        %v3333 = vsub.s32 %v3332, 127
        %v3334 = vand.u32 2147483647, %v1403
        %v3335 = vand.u32 %v3334, 8388607
        %v3336 = vor.u32 %v3335, 8388608
        %v3337 = vsub.s32 0, %v3336
        %v3338 = vadd.s32 %v3333, 1
        %vm3339 = vcmp.gt.s32.totalorder %v3338, 0
        %v3340 = vsel %vm3339, %v3338, 0
        %v3341 = vshrl.u32 %v3340, 5
        %v3342 = vand.u32 %v3340, 31
        %v3343 = vsub.s32 32, %v3342
        %v3344 = vshrl.u32 683565275, %v3343
        %v3345 = vshll.u32 683565275, %v3342
        %v3346 = vshrl.u32 2475754826, %v3343
        %v3347 = vor.u32 %v3345, %v3346
        %v3348 = vshll.u32 2475754826, %v3342
        %v3349 = vshrl.u32 2131351028, %v3343
        %v3350 = vor.u32 %v3348, %v3349
        %v3351 = vshll.u32 2131351028, %v3342
        %v3352 = vshrl.u32 2102212464, %v3343
        %v3353 = vor.u32 %v3351, %v3352
        %v3354 = vshll.u32 2102212464, %v3342
        %v3355 = vshrl.u32 920167782, %v3343
        %v3356 = vor.u32 %v3354, %v3355
        %v3357 = vshll.u32 920167782, %v3342
        %v3358 = vshrl.u32 1326507024, %v3343
        %v3359 = vor.u32 %v3357, %v3358
        %vm3360 = vcmp.lt.s32.totalorder %v3341, 1
        %vm3361 = vcmp.lt.s32.totalorder %v3341, 2
        %vm3362 = vcmp.lt.s32.totalorder %v3341, 3
        %vm3363 = vcmp.lt.s32.totalorder %v3341, 4
        %v3364 = vsel %vm3360, %v3344, %v3347
        %v3365 = vsel %vm3363, %v3353, 2102212464
        %v3366 = vsel %vm3362, %v3350, %v3365
        %v3367 = vsel %vm3361, %v3364, %v3366
        %v3368 = vsel %vm3360, %v3347, %v3350
        %v3369 = vsel %vm3363, %v3356, 920167782
        %v3370 = vsel %vm3362, %v3353, %v3369
        %v3371 = vsel %vm3361, %v3368, %v3370
        %v3372 = vsel %vm3360, %v3350, %v3353
        %v3373 = vsel %vm3363, %v3359, 1326507024
        %v3374 = vsel %vm3362, %v3356, %v3373
        %v3375 = vsel %vm3361, %v3372, %v3374
        %v3376 = vshll.u32 %v3336, 8
        %v3377 = vmul.u32.u64.compose %v3376, %v3375
        %v3378 = vextract.low.u32 %v3377
        %v3379 = vextract.high.u32 %v3377
        %v3380 = vmul.u32.u64.compose %v3376, %v3371
        %v3381 = vextract.low.u32 %v3380
        %v3382 = vextract.high.u32 %v3380
        %v3383 = vmul.u32 %v3376, %v3367
        %v3384 = vadd.s32 %v3379, %v3381
        %vm3385 = vc.u32 %v3379, %v3381
        %v3386 = vadd.s32 %v3382, 1
        %v3387 = vsel %vm3385, %v3386, %v3382
        %v3388 = vadd.s32 %v3383, %v3387
        %v3389 = vadd.s32 %v3388, 536870912
        %v3390 = vshrl.u32 %v3389, 30
        %v3391 = vshll.u32 %v3390, 30
        %v3392 = vsub.s32 %v3388, %v3391
        %vm3393 = vcmp.lt.s32.totalorder %v3392, 0
        %v3394 = vsub.s32 0, %v3392
        %v3395 = vsel %vm3393, %v3394, %v3392
        %v3396 = vclz %v3395
        %v3397 = vsub.s32 %v3396, 2
        %vm3398 = vcmp.gt.s32.totalorder 0, %v3397
        %v3399 = vsel %vm3398, 0, %v3397
        %v3400 = vsub.s32 32, %v3399
        %v3401 = vshll.u32 %v3392, %v3399
        %v3402 = vshrl.u32 %v3384, %v3400
        %v3403 = vor.u32 %v3401, %v3402
        %v3404 = vsub.s32 4294967266, %v3399
        %v3405 = vadd.s32 %v3404, 127
        %v3406 = vshll.u32 %v3405, 23
        %v3407 = vor.u32 4788187, %v3406
        %v3408 = vand.u32 2147483647, %v3407
        %v3410 = vcvt.s32.f32 %v3403
        %v3411 = vmul.f32 %v3410, %v3408
        %v3412 = vxor.u32 %v3411, 2147483648
        %v3413 = vsel %vm3330, %v3412, %v3411
        %v3414 = vsub.s32 4, %v3390
        %v3415 = vsel %vm3330, %v3414, %v3390
        %v3416 = vsel %vm3329, %v1403, %v3413
        %v3417 = vsel %vm3329, 0, %v3415
        %v3418 = vcosq.f32.pop %v3416
        %v3419 = vsinq.f32.pop %v3416
        %vm3420 = vweird.f32 %v1403
        %v3421 = vadd.s32 %v3417, 3
        %v3422 = vand.u32 %v3421, 3
        %vm3423 = vcmp.lt.s32.totalorder %v3422, 2
        %vm3424 = vcmp.eq.s32.totalorder %v3422, 0
        %v3425 = vxor.u32 %v3419, 2147483648
        %v3426 = vsel %vm3424, %v3418, %v3425
        %vm3427 = vcmp.eq.s32.totalorder %v3422, 2
        %v3428 = vxor.u32 %v3418, 2147483648
        %v3429 = vsel %vm3427, %v3428, %v3419
        %v3430 = vsel %vm3423, %v3426, %v3429
        %v3431 = vsel %vm3420, nan, %v3430
        %v3432 = vand.u32 2147483647, %v2519
        %vm3433 = vcmp.le.f32.partialorder %v3432, 0.7853982
        %vm3434 = vcmp.lt.s32.totalorder %v2519, 0
        %v3435 = vand.u32 %v2519, 2139095040
        %v3436 = vshrl.u32 %v3435, 23
        %v3437 = vsub.s32 %v3436, 127
        %v3438 = vand.u32 2147483647, %v2519
        %v3439 = vand.u32 %v3438, 8388607
        %v3440 = vor.u32 %v3439, 8388608
        %v3441 = vsub.s32 0, %v3440
        %v3442 = vadd.s32 %v3437, 1
        %vm3443 = vcmp.gt.s32.totalorder %v3442, 0
        %v3444 = vsel %vm3443, %v3442, 0
        %v3445 = vshrl.u32 %v3444, 5
        %v3446 = vand.u32 %v3444, 31
        %v3447 = vsub.s32 32, %v3446
        %v3448 = vshrl.u32 683565275, %v3447
        %v3449 = vshll.u32 683565275, %v3446
        %v3450 = vshrl.u32 2475754826, %v3447
        %v3451 = vor.u32 %v3449, %v3450
        %v3452 = vshll.u32 2475754826, %v3446
        %v3453 = vshrl.u32 2131351028, %v3447
        %v3454 = vor.u32 %v3452, %v3453
        %v3455 = vshll.u32 2131351028, %v3446
        %v3456 = vshrl.u32 2102212464, %v3447
        %v3457 = vor.u32 %v3455, %v3456
        %v3458 = vshll.u32 2102212464, %v3446
        %v3459 = vshrl.u32 920167782, %v3447
        %v3460 = vor.u32 %v3458, %v3459
        %v3461 = vshll.u32 920167782, %v3446
        %v3462 = vshrl.u32 1326507024, %v3447
        %v3463 = vor.u32 %v3461, %v3462
        %vm3464 = vcmp.lt.s32.totalorder %v3445, 1
        %vm3465 = vcmp.lt.s32.totalorder %v3445, 2
        %vm3466 = vcmp.lt.s32.totalorder %v3445, 3
        %vm3467 = vcmp.lt.s32.totalorder %v3445, 4
        %v3468 = vsel %vm3464, %v3448, %v3451
        %v3469 = vsel %vm3467, %v3457, 2102212464
        %v3470 = vsel %vm3466, %v3454, %v3469
        %v3471 = vsel %vm3465, %v3468, %v3470
        %v3472 = vsel %vm3464, %v3451, %v3454
        %v3473 = vsel %vm3467, %v3460, 920167782
        %v3474 = vsel %vm3466, %v3457, %v3473
        %v3475 = vsel %vm3465, %v3472, %v3474
        %v3476 = vsel %vm3464, %v3454, %v3457
        %v3477 = vsel %vm3467, %v3463, 1326507024
        %v3478 = vsel %vm3466, %v3460, %v3477
        %v3479 = vsel %vm3465, %v3476, %v3478
        %v3480 = vshll.u32 %v3440, 8
        %v3481 = vmul.u32.u64.compose %v3480, %v3479
        %v3482 = vextract.low.u32 %v3481
        %v3483 = vextract.high.u32 %v3481
        %v3484 = vmul.u32.u64.compose %v3480, %v3475
        %v3485 = vextract.low.u32 %v3484
        %v3486 = vextract.high.u32 %v3484
        %v3487 = vmul.u32 %v3480, %v3471
        %v3488 = vadd.s32 %v3483, %v3485
        %vm3489 = vc.u32 %v3483, %v3485
        %v3490 = vadd.s32 %v3486, 1
        %v3491 = vsel %vm3489, %v3490, %v3486
        %v3492 = vadd.s32 %v3487, %v3491
        %v3493 = vadd.s32 %v3492, 536870912
        %v3494 = vshrl.u32 %v3493, 30
        %v3495 = vshll.u32 %v3494, 30
        %v3496 = vsub.s32 %v3492, %v3495
        %vm3497 = vcmp.lt.s32.totalorder %v3496, 0
        %v3498 = vsub.s32 0, %v3496
        %v3499 = vsel %vm3497, %v3498, %v3496
        %v3500 = vclz %v3499
        %v3501 = vsub.s32 %v3500, 2
        %vm3502 = vcmp.gt.s32.totalorder 0, %v3501
        %v3503 = vsel %vm3502, 0, %v3501
        %v3504 = vsub.s32 32, %v3503
        %v3505 = vshll.u32 %v3496, %v3503
        %v3506 = vshrl.u32 %v3488, %v3504
        %v3507 = vor.u32 %v3505, %v3506
        %v3508 = vsub.s32 4294967266, %v3503
        %v3509 = vadd.s32 %v3508, 127
        %v3510 = vshll.u32 %v3509, 23
        %v3511 = vor.u32 4788187, %v3510
        %v3512 = vand.u32 2147483647, %v3511
        %v3514 = vcvt.s32.f32 %v3507
        %v3515 = vmul.f32 %v3514, %v3512
        %v3516 = vxor.u32 %v3515, 2147483648
        %v3517 = vsel %vm3434, %v3516, %v3515
        %v3518 = vsub.s32 4, %v3494
        %v3519 = vsel %vm3434, %v3518, %v3494
        %v3520 = vsel %vm3433, %v2519, %v3517
        %v3521 = vsel %vm3433, 0, %v3519
        %v3522 = vcosq.f32.pop %v3520
        %v3523 = vsinq.f32.pop %v3520
        %vm3524 = vweird.f32 %v2519
        %v3525 = vadd.s32 %v3521, 3
        %v3526 = vand.u32 %v3525, 3
        %vm3527 = vcmp.lt.s32.totalorder %v3526, 2
        %vm3528 = vcmp.eq.s32.totalorder %v3526, 0
        %v3529 = vxor.u32 %v3523, 2147483648
        %v3530 = vsel %vm3528, %v3522, %v3529
        %vm3531 = vcmp.eq.s32.totalorder %v3526, 2
        %v3532 = vxor.u32 %v3522, 2147483648
        %v3533 = vsel %vm3531, %v3532, %v3523
        %v3534 = vsel %vm3527, %v3530, %v3533
        %v3535 = vsel %vm3524, nan, %v3534
        %v3536 = vand.u32 2147483647, %v1408
        %vm3537 = vcmp.le.f32.partialorder %v3536, 0.7853982
        %vm3538 = vcmp.lt.s32.totalorder %v1408, 0
        %v3539 = vand.u32 %v1408, 2139095040
        %v3540 = vshrl.u32 %v3539, 23
        %v3541 = vsub.s32 %v3540, 127
        %v3542 = vand.u32 2147483647, %v1408
        %v3543 = vand.u32 %v3542, 8388607
        %v3544 = vor.u32 %v3543, 8388608
        %v3545 = vsub.s32 0, %v3544
        %v3546 = vadd.s32 %v3541, 1
        %vm3547 = vcmp.gt.s32.totalorder %v3546, 0
        %v3548 = vsel %vm3547, %v3546, 0
        %v3549 = vshrl.u32 %v3548, 5
        %v3550 = vand.u32 %v3548, 31
        %v3551 = vsub.s32 32, %v3550
        %v3552 = vshrl.u32 683565275, %v3551
        %v3553 = vshll.u32 683565275, %v3550
        %v3554 = vshrl.u32 2475754826, %v3551
        %v3555 = vor.u32 %v3553, %v3554
        %v3556 = vshll.u32 2475754826, %v3550
        %v3557 = vshrl.u32 2131351028, %v3551
        %v3558 = vor.u32 %v3556, %v3557
        %v3559 = vshll.u32 2131351028, %v3550
        %v3560 = vshrl.u32 2102212464, %v3551
        %v3561 = vor.u32 %v3559, %v3560
        %v3562 = vshll.u32 2102212464, %v3550
        %v3563 = vshrl.u32 920167782, %v3551
        %v3564 = vor.u32 %v3562, %v3563
        %v3565 = vshll.u32 920167782, %v3550
        %v3566 = vshrl.u32 1326507024, %v3551
        %v3567 = vor.u32 %v3565, %v3566
        %vm3568 = vcmp.lt.s32.totalorder %v3549, 1
        %vm3569 = vcmp.lt.s32.totalorder %v3549, 2
        %vm3570 = vcmp.lt.s32.totalorder %v3549, 3
        %vm3571 = vcmp.lt.s32.totalorder %v3549, 4
        %v3572 = vsel %vm3568, %v3552, %v3555
        %v3573 = vsel %vm3571, %v3561, 2102212464
        %v3574 = vsel %vm3570, %v3558, %v3573
        %v3575 = vsel %vm3569, %v3572, %v3574
        %v3576 = vsel %vm3568, %v3555, %v3558
        %v3577 = vsel %vm3571, %v3564, 920167782
        %v3578 = vsel %vm3570, %v3561, %v3577
        %v3579 = vsel %vm3569, %v3576, %v3578
        %v3580 = vsel %vm3568, %v3558, %v3561
        %v3581 = vsel %vm3571, %v3567, 1326507024
        %v3582 = vsel %vm3570, %v3564, %v3581
        %v3583 = vsel %vm3569, %v3580, %v3582
        %v3584 = vshll.u32 %v3544, 8
        %v3585 = vmul.u32.u64.compose %v3584, %v3583
        %v3586 = vextract.low.u32 %v3585
        %v3587 = vextract.high.u32 %v3585
        %v3588 = vmul.u32.u64.compose %v3584, %v3579
        %v3589 = vextract.low.u32 %v3588
        %v3590 = vextract.high.u32 %v3588
        %v3591 = vmul.u32 %v3584, %v3575
        %v3592 = vadd.s32 %v3587, %v3589
        %vm3593 = vc.u32 %v3587, %v3589
        %v3594 = vadd.s32 %v3590, 1
        %v3595 = vsel %vm3593, %v3594, %v3590
        %v3596 = vadd.s32 %v3591, %v3595
        %v3597 = vadd.s32 %v3596, 536870912
        %v3598 = vshrl.u32 %v3597, 30
        %v3599 = vshll.u32 %v3598, 30
        %v3600 = vsub.s32 %v3596, %v3599
        %vm3601 = vcmp.lt.s32.totalorder %v3600, 0
        %v3602 = vsub.s32 0, %v3600
        %v3603 = vsel %vm3601, %v3602, %v3600
        %v3604 = vclz %v3603
        %v3605 = vsub.s32 %v3604, 2
        %vm3606 = vcmp.gt.s32.totalorder 0, %v3605
        %v3607 = vsel %vm3606, 0, %v3605
        %v3608 = vsub.s32 32, %v3607
        %v3609 = vshll.u32 %v3600, %v3607
        %v3610 = vshrl.u32 %v3592, %v3608
        %v3611 = vor.u32 %v3609, %v3610
        %v3612 = vsub.s32 4294967266, %v3607
        %v3613 = vadd.s32 %v3612, 127
        %v3614 = vshll.u32 %v3613, 23
        %v3615 = vor.u32 4788187, %v3614
        %v3616 = vand.u32 2147483647, %v3615
        %v3618 = vcvt.s32.f32 %v3611
        %v3619 = vmul.f32 %v3618, %v3616
        %v3620 = vxor.u32 %v3619, 2147483648
        %v3621 = vsel %vm3538, %v3620, %v3619
        %v3622 = vsub.s32 4, %v3598
        %v3623 = vsel %vm3538, %v3622, %v3598
        %v3624 = vsel %vm3537, %v1408, %v3621
        %v3625 = vsel %vm3537, 0, %v3623
        %v3626 = vcosq.f32.pop %v3624
        %v3627 = vsinq.f32.pop %v3624
        %vm3628 = vweird.f32 %v1408
        %v3629 = vadd.s32 %v3625, 3
        %v3630 = vand.u32 %v3629, 3
        %vm3631 = vcmp.lt.s32.totalorder %v3630, 2
        %vm3632 = vcmp.eq.s32.totalorder %v3630, 0
        %v3633 = vxor.u32 %v3627, 2147483648
        %v3634 = vsel %vm3632, %v3626, %v3633
        %vm3635 = vcmp.eq.s32.totalorder %v3630, 2
        %v3636 = vxor.u32 %v3626, 2147483648
        %v3637 = vsel %vm3635, %v3636, %v3627
        %v3638 = vsel %vm3631, %v3634, %v3637
        %v3639 = vsel %vm3628, nan, %v3638
        %v3640 = vand.u32 2147483647, %v1410
        %vm3641 = vcmp.le.f32.partialorder %v3640, 0.7853982
        %vm3642 = vcmp.lt.s32.totalorder %v1410, 0
        %v3643 = vand.u32 %v1410, 2139095040
        %v3644 = vshrl.u32 %v3643, 23
        %v3645 = vsub.s32 %v3644, 127
        %v3646 = vand.u32 2147483647, %v1410
        %v3647 = vand.u32 %v3646, 8388607
        %v3648 = vor.u32 %v3647, 8388608
        %v3649 = vsub.s32 0, %v3648
        %v3650 = vadd.s32 %v3645, 1
        %vm3651 = vcmp.gt.s32.totalorder %v3650, 0
        %v3652 = vsel %vm3651, %v3650, 0
        %v3653 = vshrl.u32 %v3652, 5
        %v3654 = vand.u32 %v3652, 31
        %v3655 = vsub.s32 32, %v3654
        %v3656 = vshrl.u32 683565275, %v3655
        %v3657 = vshll.u32 683565275, %v3654
        %v3658 = vshrl.u32 2475754826, %v3655
        %v3659 = vor.u32 %v3657, %v3658
        %v3660 = vshll.u32 2475754826, %v3654
        %v3661 = vshrl.u32 2131351028, %v3655
        %v3662 = vor.u32 %v3660, %v3661
        %v3663 = vshll.u32 2131351028, %v3654
        %v3664 = vshrl.u32 2102212464, %v3655
        %v3665 = vor.u32 %v3663, %v3664
        %v3666 = vshll.u32 2102212464, %v3654
        %v3667 = vshrl.u32 920167782, %v3655
        %v3668 = vor.u32 %v3666, %v3667
        %v3669 = vshll.u32 920167782, %v3654
        %v3670 = vshrl.u32 1326507024, %v3655
        %v3671 = vor.u32 %v3669, %v3670
        %vm3672 = vcmp.lt.s32.totalorder %v3653, 1
        %vm3673 = vcmp.lt.s32.totalorder %v3653, 2
        %vm3674 = vcmp.lt.s32.totalorder %v3653, 3
        %vm3675 = vcmp.lt.s32.totalorder %v3653, 4
        %v3676 = vsel %vm3672, %v3656, %v3659
        %v3677 = vsel %vm3675, %v3665, 2102212464
        %v3678 = vsel %vm3674, %v3662, %v3677
        %v3679 = vsel %vm3673, %v3676, %v3678
        %v3680 = vsel %vm3672, %v3659, %v3662
        %v3681 = vsel %vm3675, %v3668, 920167782
        %v3682 = vsel %vm3674, %v3665, %v3681
        %v3683 = vsel %vm3673, %v3680, %v3682
        %v3684 = vsel %vm3672, %v3662, %v3665
        %v3685 = vsel %vm3675, %v3671, 1326507024
        %v3686 = vsel %vm3674, %v3668, %v3685
        %v3687 = vsel %vm3673, %v3684, %v3686
        %v3688 = vshll.u32 %v3648, 8
        %v3689 = vmul.u32.u64.compose %v3688, %v3687
        %v3690 = vextract.low.u32 %v3689
        %v3691 = vextract.high.u32 %v3689
        %v3692 = vmul.u32.u64.compose %v3688, %v3683
        %v3693 = vextract.low.u32 %v3692
        %v3694 = vextract.high.u32 %v3692
        %v3695 = vmul.u32 %v3688, %v3679
        %v3696 = vadd.s32 %v3691, %v3693
        %vm3697 = vc.u32 %v3691, %v3693
        %v3698 = vadd.s32 %v3694, 1
        %v3699 = vsel %vm3697, %v3698, %v3694
        %v3700 = vadd.s32 %v3695, %v3699
        %v3701 = vadd.s32 %v3700, 536870912
        %v3702 = vshrl.u32 %v3701, 30
        %v3703 = vshll.u32 %v3702, 30
        %v3704 = vsub.s32 %v3700, %v3703
        %vm3705 = vcmp.lt.s32.totalorder %v3704, 0
        %v3706 = vsub.s32 0, %v3704
        %v3707 = vsel %vm3705, %v3706, %v3704
        %v3708 = vclz %v3707
        %v3709 = vsub.s32 %v3708, 2
        %vm3710 = vcmp.gt.s32.totalorder 0, %v3709
        %v3711 = vsel %vm3710, 0, %v3709
        %v3712 = vsub.s32 32, %v3711
        %v3713 = vshll.u32 %v3704, %v3711
        %v3714 = vshrl.u32 %v3696, %v3712
        %v3715 = vor.u32 %v3713, %v3714
        %v3716 = vsub.s32 4294967266, %v3711
        %v3717 = vadd.s32 %v3716, 127
        %v3718 = vshll.u32 %v3717, 23
        %v3719 = vor.u32 4788187, %v3718
        %v3720 = vand.u32 2147483647, %v3719
        %v3722 = vcvt.s32.f32 %v3715
        %v3723 = vmul.f32 %v3722, %v3720
        %v3724 = vxor.u32 %v3723, 2147483648
        %v3725 = vsel %vm3642, %v3724, %v3723
        %v3726 = vsub.s32 4, %v3702
        %v3727 = vsel %vm3642, %v3726, %v3702
        %v3728 = vsel %vm3641, %v1410, %v3725
        %v3729 = vsel %vm3641, 0, %v3727
        %v3730 = vcosq.f32.pop %v3728
        %v3731 = vsinq.f32.pop %v3728
        %vm3732 = vweird.f32 %v1410
        %v3733 = vadd.s32 %v3729, 3
        %v3734 = vand.u32 %v3733, 3
        %vm3735 = vcmp.lt.s32.totalorder %v3734, 2
        %vm3736 = vcmp.eq.s32.totalorder %v3734, 0
        %v3737 = vxor.u32 %v3731, 2147483648
        %v3738 = vsel %vm3736, %v3730, %v3737
        %vm3739 = vcmp.eq.s32.totalorder %v3734, 2
        %v3740 = vxor.u32 %v3730, 2147483648
        %v3741 = vsel %vm3739, %v3740, %v3731
        %v3742 = vsel %vm3735, %v3738, %v3741
        %v3743 = vsel %vm3732, nan, %v3742
        %v3744 = vand.u32 2147483647, %v2525
        %vm3745 = vcmp.le.f32.partialorder %v3744, 0.7853982
        %vm3746 = vcmp.lt.s32.totalorder %v2525, 0
        %v3747 = vand.u32 %v2525, 2139095040
        %v3748 = vshrl.u32 %v3747, 23
        %v3749 = vsub.s32 %v3748, 127
        %v3750 = vand.u32 2147483647, %v2525
        %v3751 = vand.u32 %v3750, 8388607
        %v3752 = vor.u32 %v3751, 8388608
        %v3753 = vsub.s32 0, %v3752
        %v3754 = vadd.s32 %v3749, 1
        %vm3755 = vcmp.gt.s32.totalorder %v3754, 0
        %v3756 = vsel %vm3755, %v3754, 0
        %v3757 = vshrl.u32 %v3756, 5
        %v3758 = vand.u32 %v3756, 31
        %v3759 = vsub.s32 32, %v3758
        %v3760 = vshrl.u32 683565275, %v3759
        %v3761 = vshll.u32 683565275, %v3758
        %v3762 = vshrl.u32 2475754826, %v3759
        %v3763 = vor.u32 %v3761, %v3762
        %v3764 = vshll.u32 2475754826, %v3758
        %v3765 = vshrl.u32 2131351028, %v3759
        %v3766 = vor.u32 %v3764, %v3765
        %v3767 = vshll.u32 2131351028, %v3758
        %v3768 = vshrl.u32 2102212464, %v3759
        %v3769 = vor.u32 %v3767, %v3768
        %v3770 = vshll.u32 2102212464, %v3758
        %v3771 = vshrl.u32 920167782, %v3759
        %v3772 = vor.u32 %v3770, %v3771
        %v3773 = vshll.u32 920167782, %v3758
        %v3774 = vshrl.u32 1326507024, %v3759
        %v3775 = vor.u32 %v3773, %v3774
        %vm3776 = vcmp.lt.s32.totalorder %v3757, 1
        %vm3777 = vcmp.lt.s32.totalorder %v3757, 2
        %vm3778 = vcmp.lt.s32.totalorder %v3757, 3
        %vm3779 = vcmp.lt.s32.totalorder %v3757, 4
        %v3780 = vsel %vm3776, %v3760, %v3763
        %v3781 = vsel %vm3779, %v3769, 2102212464
        %v3782 = vsel %vm3778, %v3766, %v3781
        %v3783 = vsel %vm3777, %v3780, %v3782
        %v3784 = vsel %vm3776, %v3763, %v3766
        %v3785 = vsel %vm3779, %v3772, 920167782
        %v3786 = vsel %vm3778, %v3769, %v3785
        %v3787 = vsel %vm3777, %v3784, %v3786
        %v3788 = vsel %vm3776, %v3766, %v3769
        %v3789 = vsel %vm3779, %v3775, 1326507024
        %v3790 = vsel %vm3778, %v3772, %v3789
        %v3791 = vsel %vm3777, %v3788, %v3790
        %v3792 = vshll.u32 %v3752, 8
        %v3793 = vmul.u32.u64.compose %v3792, %v3791
        %v3794 = vextract.low.u32 %v3793
        %v3795 = vextract.high.u32 %v3793
        %v3796 = vmul.u32.u64.compose %v3792, %v3787
        %v3797 = vextract.low.u32 %v3796
        %v3798 = vextract.high.u32 %v3796
        %v3799 = vmul.u32 %v3792, %v3783
        %v3800 = vadd.s32 %v3795, %v3797
        %vm3801 = vc.u32 %v3795, %v3797
        %v3802 = vadd.s32 %v3798, 1
        %v3803 = vsel %vm3801, %v3802, %v3798
        %v3804 = vadd.s32 %v3799, %v3803
        %v3805 = vadd.s32 %v3804, 536870912
        %v3806 = vshrl.u32 %v3805, 30
        %v3807 = vshll.u32 %v3806, 30
        %v3808 = vsub.s32 %v3804, %v3807
        %vm3809 = vcmp.lt.s32.totalorder %v3808, 0
        %v3810 = vsub.s32 0, %v3808
        %v3811 = vsel %vm3809, %v3810, %v3808
        %v3812 = vclz %v3811
        %v3813 = vsub.s32 %v3812, 2
        %vm3814 = vcmp.gt.s32.totalorder 0, %v3813
        %v3815 = vsel %vm3814, 0, %v3813
        %v3816 = vsub.s32 32, %v3815
        %v3817 = vshll.u32 %v3808, %v3815
        %v3818 = vshrl.u32 %v3800, %v3816
        %v3819 = vor.u32 %v3817, %v3818
        %v3820 = vsub.s32 4294967266, %v3815
        %v3821 = vadd.s32 %v3820, 127
        %v3822 = vshll.u32 %v3821, 23
        %v3823 = vor.u32 4788187, %v3822
        %v3824 = vand.u32 2147483647, %v3823
        %v3826 = vcvt.s32.f32 %v3819
        %v3827 = vmul.f32 %v3826, %v3824
        %v3828 = vxor.u32 %v3827, 2147483648
        %v3829 = vsel %vm3746, %v3828, %v3827
        %v3830 = vsub.s32 4, %v3806
        %v3831 = vsel %vm3746, %v3830, %v3806
        %v3832 = vsel %vm3745, %v2525, %v3829
        %v3833 = vsel %vm3745, 0, %v3831
        %v3834 = vcosq.f32.pop %v3832
        %v3835 = vsinq.f32.pop %v3832
        %vm3836 = vweird.f32 %v2525
        %v3837 = vadd.s32 %v3833, 3
        %v3838 = vand.u32 %v3837, 3
        %vm3839 = vcmp.lt.s32.totalorder %v3838, 2
        %vm3840 = vcmp.eq.s32.totalorder %v3838, 0
        %v3841 = vxor.u32 %v3835, 2147483648
        %v3842 = vsel %vm3840, %v3834, %v3841
        %vm3843 = vcmp.eq.s32.totalorder %v3838, 2
        %v3844 = vxor.u32 %v3834, 2147483648
        %v3845 = vsel %vm3843, %v3844, %v3835
        %v3846 = vsel %vm3839, %v3842, %v3845
        %v3847 = vsel %vm3836, nan, %v3846
        %v3848 = vand.u32 2147483647, %v1415
        %vm3849 = vcmp.le.f32.partialorder %v3848, 0.7853982
        %vm3850 = vcmp.lt.s32.totalorder %v1415, 0
        %v3851 = vand.u32 %v1415, 2139095040
        %v3852 = vshrl.u32 %v3851, 23
        %v3853 = vsub.s32 %v3852, 127
        %v3854 = vand.u32 2147483647, %v1415
        %v3855 = vand.u32 %v3854, 8388607
        %v3856 = vor.u32 %v3855, 8388608
        %v3857 = vsub.s32 0, %v3856
        %v3858 = vadd.s32 %v3853, 1
        %vm3859 = vcmp.gt.s32.totalorder %v3858, 0
        %v3860 = vsel %vm3859, %v3858, 0
        %v3861 = vshrl.u32 %v3860, 5
        %v3862 = vand.u32 %v3860, 31
        %v3863 = vsub.s32 32, %v3862
        %v3864 = vshrl.u32 683565275, %v3863
        %v3865 = vshll.u32 683565275, %v3862
        %v3866 = vshrl.u32 2475754826, %v3863
        %v3867 = vor.u32 %v3865, %v3866
        %v3868 = vshll.u32 2475754826, %v3862
        %v3869 = vshrl.u32 2131351028, %v3863
        %v3870 = vor.u32 %v3868, %v3869
        %v3871 = vshll.u32 2131351028, %v3862
        %v3872 = vshrl.u32 2102212464, %v3863
        %v3873 = vor.u32 %v3871, %v3872
        %v3874 = vshll.u32 2102212464, %v3862
        %v3875 = vshrl.u32 920167782, %v3863
        %v3876 = vor.u32 %v3874, %v3875
        %v3877 = vshll.u32 920167782, %v3862
        %v3878 = vshrl.u32 1326507024, %v3863
        %v3879 = vor.u32 %v3877, %v3878
        %vm3880 = vcmp.lt.s32.totalorder %v3861, 1
        %vm3881 = vcmp.lt.s32.totalorder %v3861, 2
        %vm3882 = vcmp.lt.s32.totalorder %v3861, 3
        %vm3883 = vcmp.lt.s32.totalorder %v3861, 4
        %v3884 = vsel %vm3880, %v3864, %v3867
        %v3885 = vsel %vm3883, %v3873, 2102212464
        %v3886 = vsel %vm3882, %v3870, %v3885
        %v3887 = vsel %vm3881, %v3884, %v3886
        %v3888 = vsel %vm3880, %v3867, %v3870
        %v3889 = vsel %vm3883, %v3876, 920167782
        %v3890 = vsel %vm3882, %v3873, %v3889
        %v3891 = vsel %vm3881, %v3888, %v3890
        %v3892 = vsel %vm3880, %v3870, %v3873
        %v3893 = vsel %vm3883, %v3879, 1326507024
        %v3894 = vsel %vm3882, %v3876, %v3893
        %v3895 = vsel %vm3881, %v3892, %v3894
        %v3896 = vshll.u32 %v3856, 8
        %v3897 = vmul.u32.u64.compose %v3896, %v3895
        %v3898 = vextract.low.u32 %v3897
        %v3899 = vextract.high.u32 %v3897
        %v3900 = vmul.u32.u64.compose %v3896, %v3891
        %v3901 = vextract.low.u32 %v3900
        %v3902 = vextract.high.u32 %v3900
        %v3903 = vmul.u32 %v3896, %v3887
        %v3904 = vadd.s32 %v3899, %v3901
        %vm3905 = vc.u32 %v3899, %v3901
        %v3906 = vadd.s32 %v3902, 1
        %v3907 = vsel %vm3905, %v3906, %v3902
        %v3908 = vadd.s32 %v3903, %v3907
        %v3909 = vadd.s32 %v3908, 536870912
        %v3910 = vshrl.u32 %v3909, 30
        %v3911 = vshll.u32 %v3910, 30
        %v3912 = vsub.s32 %v3908, %v3911
        %vm3913 = vcmp.lt.s32.totalorder %v3912, 0
        %v3914 = vsub.s32 0, %v3912
        %v3915 = vsel %vm3913, %v3914, %v3912
        %v3916 = vclz %v3915
        %v3917 = vsub.s32 %v3916, 2
        %vm3918 = vcmp.gt.s32.totalorder 0, %v3917
        %v3919 = vsel %vm3918, 0, %v3917
        %v3920 = vsub.s32 32, %v3919
        %v3921 = vshll.u32 %v3912, %v3919
        %v3922 = vshrl.u32 %v3904, %v3920
        %v3923 = vor.u32 %v3921, %v3922
        %v3924 = vsub.s32 4294967266, %v3919
        %v3925 = vadd.s32 %v3924, 127
        %v3926 = vshll.u32 %v3925, 23
        %v3927 = vor.u32 4788187, %v3926
        %v3928 = vand.u32 2147483647, %v3927
        %v3930 = vcvt.s32.f32 %v3923
        %v3931 = vmul.f32 %v3930, %v3928
        %v3932 = vxor.u32 %v3931, 2147483648
        %v3933 = vsel %vm3850, %v3932, %v3931
        %v3934 = vsub.s32 4, %v3910
        %v3935 = vsel %vm3850, %v3934, %v3910
        %v3936 = vsel %vm3849, %v1415, %v3933
        %v3937 = vsel %vm3849, 0, %v3935
        %v3938 = vcosq.f32.pop %v3936
        %v3939 = vsinq.f32.pop %v3936
        %vm3940 = vweird.f32 %v1415
        %v3941 = vadd.s32 %v3937, 3
        %v3942 = vand.u32 %v3941, 3
        %vm3943 = vcmp.lt.s32.totalorder %v3942, 2
        %vm3944 = vcmp.eq.s32.totalorder %v3942, 0
        %v3945 = vxor.u32 %v3939, 2147483648
        %v3946 = vsel %vm3944, %v3938, %v3945
        %vm3947 = vcmp.eq.s32.totalorder %v3942, 2
        %v3948 = vxor.u32 %v3938, 2147483648
        %v3949 = vsel %vm3947, %v3948, %v3939
        %v3950 = vsel %vm3943, %v3946, %v3949
        %v3951 = vsel %vm3940, nan, %v3950
        %v3952 = vand.u32 2147483647, %v1417
        %vm3953 = vcmp.le.f32.partialorder %v3952, 0.7853982
        %vm3954 = vcmp.lt.s32.totalorder %v1417, 0
        %v3955 = vand.u32 %v1417, 2139095040
        %v3956 = vshrl.u32 %v3955, 23
        %v3957 = vsub.s32 %v3956, 127
        %v3958 = vand.u32 2147483647, %v1417
        %v3959 = vand.u32 %v3958, 8388607
        %v3960 = vor.u32 %v3959, 8388608
        %v3961 = vsub.s32 0, %v3960
        %v3962 = vadd.s32 %v3957, 1
        %vm3963 = vcmp.gt.s32.totalorder %v3962, 0
        %v3964 = vsel %vm3963, %v3962, 0
        %v3965 = vshrl.u32 %v3964, 5
        %v3966 = vand.u32 %v3964, 31
        %v3967 = vsub.s32 32, %v3966
        %v3968 = vshrl.u32 683565275, %v3967
        %v3969 = vshll.u32 683565275, %v3966
        %v3970 = vshrl.u32 2475754826, %v3967
        %v3971 = vor.u32 %v3969, %v3970
        %v3972 = vshll.u32 2475754826, %v3966
        %v3973 = vshrl.u32 2131351028, %v3967
        %v3974 = vor.u32 %v3972, %v3973
        %v3975 = vshll.u32 2131351028, %v3966
        %v3976 = vshrl.u32 2102212464, %v3967
        %v3977 = vor.u32 %v3975, %v3976
        %v3978 = vshll.u32 2102212464, %v3966
        %v3979 = vshrl.u32 920167782, %v3967
        %v3980 = vor.u32 %v3978, %v3979
        %v3981 = vshll.u32 920167782, %v3966
        %v3982 = vshrl.u32 1326507024, %v3967
        %v3983 = vor.u32 %v3981, %v3982
        %vm3984 = vcmp.lt.s32.totalorder %v3965, 1
        %vm3985 = vcmp.lt.s32.totalorder %v3965, 2
        %vm3986 = vcmp.lt.s32.totalorder %v3965, 3
        %vm3987 = vcmp.lt.s32.totalorder %v3965, 4
        %v3988 = vsel %vm3984, %v3968, %v3971
        %v3989 = vsel %vm3987, %v3977, 2102212464
        %v3990 = vsel %vm3986, %v3974, %v3989
        %v3991 = vsel %vm3985, %v3988, %v3990
        %v3992 = vsel %vm3984, %v3971, %v3974
        %v3993 = vsel %vm3987, %v3980, 920167782
        %v3994 = vsel %vm3986, %v3977, %v3993
        %v3995 = vsel %vm3985, %v3992, %v3994
        %v3996 = vsel %vm3984, %v3974, %v3977
        %v3997 = vsel %vm3987, %v3983, 1326507024
        %v3998 = vsel %vm3986, %v3980, %v3997
        %v3999 = vsel %vm3985, %v3996, %v3998
        %v4000 = vshll.u32 %v3960, 8
        %v4001 = vmul.u32.u64.compose %v4000, %v3999
        %v4002 = vextract.low.u32 %v4001
        %v4003 = vextract.high.u32 %v4001
        %v4004 = vmul.u32.u64.compose %v4000, %v3995
        %v4005 = vextract.low.u32 %v4004
        %v4006 = vextract.high.u32 %v4004
        %v4007 = vmul.u32 %v4000, %v3991
        %v4008 = vadd.s32 %v4003, %v4005
        %vm4009 = vc.u32 %v4003, %v4005
        %v4010 = vadd.s32 %v4006, 1
        %v4011 = vsel %vm4009, %v4010, %v4006
        %v4012 = vadd.s32 %v4007, %v4011
        %v4013 = vadd.s32 %v4012, 536870912
        %v4014 = vshrl.u32 %v4013, 30
        %v4015 = vshll.u32 %v4014, 30
        %v4016 = vsub.s32 %v4012, %v4015
        %vm4017 = vcmp.lt.s32.totalorder %v4016, 0
        %v4018 = vsub.s32 0, %v4016
        %v4019 = vsel %vm4017, %v4018, %v4016
        %v4020 = vclz %v4019
        %v4021 = vsub.s32 %v4020, 2
        %vm4022 = vcmp.gt.s32.totalorder 0, %v4021
        %v4023 = vsel %vm4022, 0, %v4021
        %v4024 = vsub.s32 32, %v4023
        %v4025 = vshll.u32 %v4016, %v4023
        %v4026 = vshrl.u32 %v4008, %v4024
        %v4027 = vor.u32 %v4025, %v4026
        %v4028 = vsub.s32 4294967266, %v4023
        %v4029 = vadd.s32 %v4028, 127
        %v4030 = vshll.u32 %v4029, 23
        %v4031 = vor.u32 4788187, %v4030
        %v4032 = vand.u32 2147483647, %v4031
        %v4034 = vcvt.s32.f32 %v4027
        %v4035 = vmul.f32 %v4034, %v4032
        %v4036 = vxor.u32 %v4035, 2147483648
        %v4037 = vsel %vm3954, %v4036, %v4035
        %v4038 = vsub.s32 4, %v4014
        %v4039 = vsel %vm3954, %v4038, %v4014
        %v4040 = vsel %vm3953, %v1417, %v4037
        %v4041 = vsel %vm3953, 0, %v4039
        %v4042 = vcosq.f32.pop %v4040
        %v4043 = vsinq.f32.pop %v4040
        %vm4044 = vweird.f32 %v1417
        %v4045 = vadd.s32 %v4041, 3
        %v4046 = vand.u32 %v4045, 3
        %vm4047 = vcmp.lt.s32.totalorder %v4046, 2
        %vm4048 = vcmp.eq.s32.totalorder %v4046, 0
        %v4049 = vxor.u32 %v4043, 2147483648
        %v4050 = vsel %vm4048, %v4042, %v4049
        %vm4051 = vcmp.eq.s32.totalorder %v4046, 2
        %v4052 = vxor.u32 %v4042, 2147483648
        %v4053 = vsel %vm4051, %v4052, %v4043
        %v4054 = vsel %vm4047, %v4050, %v4053
        %v4055 = vsel %vm4044, nan, %v4054
        %v4056 = vand.u32 2147483647, %v2531
        %vm4057 = vcmp.le.f32.partialorder %v4056, 0.7853982
        %vm4058 = vcmp.lt.s32.totalorder %v2531, 0
        %v4059 = vand.u32 %v2531, 2139095040
        %v4060 = vshrl.u32 %v4059, 23
        %v4061 = vsub.s32 %v4060, 127
        %v4062 = vand.u32 2147483647, %v2531
        %v4063 = vand.u32 %v4062, 8388607
        %v4064 = vor.u32 %v4063, 8388608
        %v4065 = vsub.s32 0, %v4064
        %v4066 = vadd.s32 %v4061, 1
        %vm4067 = vcmp.gt.s32.totalorder %v4066, 0
        %v4068 = vsel %vm4067, %v4066, 0
        %v4069 = vshrl.u32 %v4068, 5
        %v4070 = vand.u32 %v4068, 31
        %v4071 = vsub.s32 32, %v4070
        %v4072 = vshrl.u32 683565275, %v4071
        %v4073 = vshll.u32 683565275, %v4070
        %v4074 = vshrl.u32 2475754826, %v4071
        %v4075 = vor.u32 %v4073, %v4074
        %v4076 = vshll.u32 2475754826, %v4070
        %v4077 = vshrl.u32 2131351028, %v4071
        %v4078 = vor.u32 %v4076, %v4077
        %v4079 = vshll.u32 2131351028, %v4070
        %v4080 = vshrl.u32 2102212464, %v4071
        %v4081 = vor.u32 %v4079, %v4080
        %v4082 = vshll.u32 2102212464, %v4070
        %v4083 = vshrl.u32 920167782, %v4071
        %v4084 = vor.u32 %v4082, %v4083
        %v4085 = vshll.u32 920167782, %v4070
        %v4086 = vshrl.u32 1326507024, %v4071
        %v4087 = vor.u32 %v4085, %v4086
        %vm4088 = vcmp.lt.s32.totalorder %v4069, 1
        %vm4089 = vcmp.lt.s32.totalorder %v4069, 2
        %vm4090 = vcmp.lt.s32.totalorder %v4069, 3
        %vm4091 = vcmp.lt.s32.totalorder %v4069, 4
        %v4092 = vsel %vm4088, %v4072, %v4075
        %v4093 = vsel %vm4091, %v4081, 2102212464
        %v4094 = vsel %vm4090, %v4078, %v4093
        %v4095 = vsel %vm4089, %v4092, %v4094
        %v4096 = vsel %vm4088, %v4075, %v4078
        %v4097 = vsel %vm4091, %v4084, 920167782
        %v4098 = vsel %vm4090, %v4081, %v4097
        %v4099 = vsel %vm4089, %v4096, %v4098
        %v4100 = vsel %vm4088, %v4078, %v4081
        %v4101 = vsel %vm4091, %v4087, 1326507024
        %v4102 = vsel %vm4090, %v4084, %v4101
        %v4103 = vsel %vm4089, %v4100, %v4102
        %v4104 = vshll.u32 %v4064, 8
        %v4105 = vmul.u32.u64.compose %v4104, %v4103
        %v4106 = vextract.low.u32 %v4105
        %v4107 = vextract.high.u32 %v4105
        %v4108 = vmul.u32.u64.compose %v4104, %v4099
        %v4109 = vextract.low.u32 %v4108
        %v4110 = vextract.high.u32 %v4108
        %v4111 = vmul.u32 %v4104, %v4095
        %v4112 = vadd.s32 %v4107, %v4109
        %vm4113 = vc.u32 %v4107, %v4109
        %v4114 = vadd.s32 %v4110, 1
        %v4115 = vsel %vm4113, %v4114, %v4110
        %v4116 = vadd.s32 %v4111, %v4115
        %v4117 = vadd.s32 %v4116, 536870912
        %v4118 = vshrl.u32 %v4117, 30
        %v4119 = vshll.u32 %v4118, 30
        %v4120 = vsub.s32 %v4116, %v4119
        %vm4121 = vcmp.lt.s32.totalorder %v4120, 0
        %v4122 = vsub.s32 0, %v4120
        %v4123 = vsel %vm4121, %v4122, %v4120
        %v4124 = vclz %v4123
        %v4125 = vsub.s32 %v4124, 2
        %vm4126 = vcmp.gt.s32.totalorder 0, %v4125
        %v4127 = vsel %vm4126, 0, %v4125
        %v4128 = vsub.s32 32, %v4127
        %v4129 = vshll.u32 %v4120, %v4127
        %v4130 = vshrl.u32 %v4112, %v4128
        %v4131 = vor.u32 %v4129, %v4130
        %v4132 = vsub.s32 4294967266, %v4127
        %v4133 = vadd.s32 %v4132, 127
        %v4134 = vshll.u32 %v4133, 23
        %v4135 = vor.u32 4788187, %v4134
        %v4136 = vand.u32 2147483647, %v4135
        %v4138 = vcvt.s32.f32 %v4131
        %v4139 = vmul.f32 %v4138, %v4136
        %v4140 = vxor.u32 %v4139, 2147483648
        %v4141 = vsel %vm4058, %v4140, %v4139
        %v4142 = vsub.s32 4, %v4118
        %v4143 = vsel %vm4058, %v4142, %v4118
        %v4144 = vsel %vm4057, %v2531, %v4141
        %v4145 = vsel %vm4057, 0, %v4143
        %v4146 = vcosq.f32.pop %v4144
        %v4147 = vsinq.f32.pop %v4144
        %vm4148 = vweird.f32 %v2531
        %v4149 = vadd.s32 %v4145, 3
        %v4150 = vand.u32 %v4149, 3
        %vm4151 = vcmp.lt.s32.totalorder %v4150, 2
        %vm4152 = vcmp.eq.s32.totalorder %v4150, 0
        %v4153 = vxor.u32 %v4147, 2147483648
        %v4154 = vsel %vm4152, %v4146, %v4153
        %vm4155 = vcmp.eq.s32.totalorder %v4150, 2
        %v4156 = vxor.u32 %v4146, 2147483648
        %v4157 = vsel %vm4155, %v4156, %v4147
        %v4158 = vsel %vm4151, %v4154, %v4157
        %v4159 = vsel %vm4148, nan, %v4158
        %v4160 = vand.u32 2147483647, %v1422
        %vm4161 = vcmp.le.f32.partialorder %v4160, 0.7853982
        %vm4162 = vcmp.lt.s32.totalorder %v1422, 0
        %v4163 = vand.u32 %v1422, 2139095040
        %v4164 = vshrl.u32 %v4163, 23
        %v4165 = vsub.s32 %v4164, 127
        %v4166 = vand.u32 2147483647, %v1422
        %v4167 = vand.u32 %v4166, 8388607
        %v4168 = vor.u32 %v4167, 8388608
        %v4169 = vsub.s32 0, %v4168
        %v4170 = vadd.s32 %v4165, 1
        %vm4171 = vcmp.gt.s32.totalorder %v4170, 0
        %v4172 = vsel %vm4171, %v4170, 0
        %v4173 = vshrl.u32 %v4172, 5
        %v4174 = vand.u32 %v4172, 31
        %v4175 = vsub.s32 32, %v4174
        %v4176 = vshrl.u32 683565275, %v4175
        %v4177 = vshll.u32 683565275, %v4174
        %v4178 = vshrl.u32 2475754826, %v4175
        %v4179 = vor.u32 %v4177, %v4178
        %v4180 = vshll.u32 2475754826, %v4174
        %v4181 = vshrl.u32 2131351028, %v4175
        %v4182 = vor.u32 %v4180, %v4181
        %v4183 = vshll.u32 2131351028, %v4174
        %v4184 = vshrl.u32 2102212464, %v4175
        %v4185 = vor.u32 %v4183, %v4184
        %v4186 = vshll.u32 2102212464, %v4174
        %v4187 = vshrl.u32 920167782, %v4175
        %v4188 = vor.u32 %v4186, %v4187
        %v4189 = vshll.u32 920167782, %v4174
        %v4190 = vshrl.u32 1326507024, %v4175
        %v4191 = vor.u32 %v4189, %v4190
        %vm4192 = vcmp.lt.s32.totalorder %v4173, 1
        %vm4193 = vcmp.lt.s32.totalorder %v4173, 2
        %vm4194 = vcmp.lt.s32.totalorder %v4173, 3
        %vm4195 = vcmp.lt.s32.totalorder %v4173, 4
        %v4196 = vsel %vm4192, %v4176, %v4179
        %v4197 = vsel %vm4195, %v4185, 2102212464
        %v4198 = vsel %vm4194, %v4182, %v4197
        %v4199 = vsel %vm4193, %v4196, %v4198
        %v4200 = vsel %vm4192, %v4179, %v4182
        %v4201 = vsel %vm4195, %v4188, 920167782
        %v4202 = vsel %vm4194, %v4185, %v4201
        %v4203 = vsel %vm4193, %v4200, %v4202
        %v4204 = vsel %vm4192, %v4182, %v4185
        %v4205 = vsel %vm4195, %v4191, 1326507024
        %v4206 = vsel %vm4194, %v4188, %v4205
        %v4207 = vsel %vm4193, %v4204, %v4206
        %v4208 = vshll.u32 %v4168, 8
        %v4209 = vmul.u32.u64.compose %v4208, %v4207
        %v4210 = vextract.low.u32 %v4209
        %v4211 = vextract.high.u32 %v4209
        %v4212 = vmul.u32.u64.compose %v4208, %v4203
        %v4213 = vextract.low.u32 %v4212
        %v4214 = vextract.high.u32 %v4212
        %v4215 = vmul.u32 %v4208, %v4199
        %v4216 = vadd.s32 %v4211, %v4213
        %vm4217 = vc.u32 %v4211, %v4213
        %v4218 = vadd.s32 %v4214, 1
        %v4219 = vsel %vm4217, %v4218, %v4214
        %v4220 = vadd.s32 %v4215, %v4219
        %v4221 = vadd.s32 %v4220, 536870912
        %v4222 = vshrl.u32 %v4221, 30
        %v4223 = vshll.u32 %v4222, 30
        %v4224 = vsub.s32 %v4220, %v4223
        %vm4225 = vcmp.lt.s32.totalorder %v4224, 0
        %v4226 = vsub.s32 0, %v4224
        %v4227 = vsel %vm4225, %v4226, %v4224
        %v4228 = vclz %v4227
        %v4229 = vsub.s32 %v4228, 2
        %vm4230 = vcmp.gt.s32.totalorder 0, %v4229
        %v4231 = vsel %vm4230, 0, %v4229
        %v4232 = vsub.s32 32, %v4231
        %v4233 = vshll.u32 %v4224, %v4231
        %v4234 = vshrl.u32 %v4216, %v4232
        %v4235 = vor.u32 %v4233, %v4234
        %v4236 = vsub.s32 4294967266, %v4231
        %v4237 = vadd.s32 %v4236, 127
        %v4238 = vshll.u32 %v4237, 23
        %v4239 = vor.u32 4788187, %v4238
        %v4240 = vand.u32 2147483647, %v4239
        %v4242 = vcvt.s32.f32 %v4235
        %v4243 = vmul.f32 %v4242, %v4240
        %v4244 = vxor.u32 %v4243, 2147483648
        %v4245 = vsel %vm4162, %v4244, %v4243
        %v4246 = vsub.s32 4, %v4222
        %v4247 = vsel %vm4162, %v4246, %v4222
        %v4248 = vsel %vm4161, %v1422, %v4245
        %v4249 = vsel %vm4161, 0, %v4247
        %v4250 = vcosq.f32.pop %v4248
        %v4251 = vsinq.f32.pop %v4248
        %vm4252 = vweird.f32 %v1422
        %v4253 = vadd.s32 %v4249, 3
        %v4254 = vand.u32 %v4253, 3
        %vm4255 = vcmp.lt.s32.totalorder %v4254, 2
        %vm4256 = vcmp.eq.s32.totalorder %v4254, 0
        %v4257 = vxor.u32 %v4251, 2147483648
        %v4258 = vsel %vm4256, %v4250, %v4257
        %vm4259 = vcmp.eq.s32.totalorder %v4254, 2
        %v4260 = vxor.u32 %v4250, 2147483648
        %v4261 = vsel %vm4259, %v4260, %v4251
        %v4262 = vsel %vm4255, %v4258, %v4261
        %v4263 = vsel %vm4252, nan, %v4262
        %v4264 = vand.u32 2147483647, %v1424
        %vm4265 = vcmp.le.f32.partialorder %v4264, 0.7853982
        %vm4266 = vcmp.lt.s32.totalorder %v1424, 0
        %v4267 = vand.u32 %v1424, 2139095040
        %v4268 = vshrl.u32 %v4267, 23
        %v4269 = vsub.s32 %v4268, 127
        %v4270 = vand.u32 2147483647, %v1424
        %v4271 = vand.u32 %v4270, 8388607
        %v4272 = vor.u32 %v4271, 8388608
        %v4273 = vsub.s32 0, %v4272
        %v4274 = vadd.s32 %v4269, 1
        %vm4275 = vcmp.gt.s32.totalorder %v4274, 0
        %v4276 = vsel %vm4275, %v4274, 0
        %v4277 = vshrl.u32 %v4276, 5
        %v4278 = vand.u32 %v4276, 31
        %v4279 = vsub.s32 32, %v4278
        %v4280 = vshrl.u32 683565275, %v4279
        %v4281 = vshll.u32 683565275, %v4278
        %v4282 = vshrl.u32 2475754826, %v4279
        %v4283 = vor.u32 %v4281, %v4282
        %v4284 = vshll.u32 2475754826, %v4278
        %v4285 = vshrl.u32 2131351028, %v4279
        %v4286 = vor.u32 %v4284, %v4285
        %v4287 = vshll.u32 2131351028, %v4278
        %v4288 = vshrl.u32 2102212464, %v4279
        %v4289 = vor.u32 %v4287, %v4288
        %v4290 = vshll.u32 2102212464, %v4278
        %v4291 = vshrl.u32 920167782, %v4279
        %v4292 = vor.u32 %v4290, %v4291
        %v4293 = vshll.u32 920167782, %v4278
        %v4294 = vshrl.u32 1326507024, %v4279
        %v4295 = vor.u32 %v4293, %v4294
        %vm4296 = vcmp.lt.s32.totalorder %v4277, 1
        %vm4297 = vcmp.lt.s32.totalorder %v4277, 2
        %vm4298 = vcmp.lt.s32.totalorder %v4277, 3
        %vm4299 = vcmp.lt.s32.totalorder %v4277, 4
        %v4300 = vsel %vm4296, %v4280, %v4283
        %v4301 = vsel %vm4299, %v4289, 2102212464
        %v4302 = vsel %vm4298, %v4286, %v4301
        %v4303 = vsel %vm4297, %v4300, %v4302
        %v4304 = vsel %vm4296, %v4283, %v4286
        %v4305 = vsel %vm4299, %v4292, 920167782
        %v4306 = vsel %vm4298, %v4289, %v4305
        %v4307 = vsel %vm4297, %v4304, %v4306
        %v4308 = vsel %vm4296, %v4286, %v4289
        %v4309 = vsel %vm4299, %v4295, 1326507024
        %v4310 = vsel %vm4298, %v4292, %v4309
        %v4311 = vsel %vm4297, %v4308, %v4310
        %v4312 = vshll.u32 %v4272, 8
        %v4313 = vmul.u32.u64.compose %v4312, %v4311
        %v4314 = vextract.low.u32 %v4313
        %v4315 = vextract.high.u32 %v4313
        %v4316 = vmul.u32.u64.compose %v4312, %v4307
        %v4317 = vextract.low.u32 %v4316
        %v4318 = vextract.high.u32 %v4316
        %v4319 = vmul.u32 %v4312, %v4303
        %v4320 = vadd.s32 %v4315, %v4317
        %vm4321 = vc.u32 %v4315, %v4317
        %v4322 = vadd.s32 %v4318, 1
        %v4323 = vsel %vm4321, %v4322, %v4318
        %v4324 = vadd.s32 %v4319, %v4323
        %v4325 = vadd.s32 %v4324, 536870912
        %v4326 = vshrl.u32 %v4325, 30
        %v4327 = vshll.u32 %v4326, 30
        %v4328 = vsub.s32 %v4324, %v4327
        %vm4329 = vcmp.lt.s32.totalorder %v4328, 0
        %v4330 = vsub.s32 0, %v4328
        %v4331 = vsel %vm4329, %v4330, %v4328
        %v4332 = vclz %v4331
        %v4333 = vsub.s32 %v4332, 2
        %vm4334 = vcmp.gt.s32.totalorder 0, %v4333
        %v4335 = vsel %vm4334, 0, %v4333
        %v4336 = vsub.s32 32, %v4335
        %v4337 = vshll.u32 %v4328, %v4335
        %v4338 = vshrl.u32 %v4320, %v4336
        %v4339 = vor.u32 %v4337, %v4338
        %v4340 = vsub.s32 4294967266, %v4335
        %v4341 = vadd.s32 %v4340, 127
        %v4342 = vshll.u32 %v4341, 23
        %v4343 = vor.u32 4788187, %v4342
        %v4344 = vand.u32 2147483647, %v4343
        %v4346 = vcvt.s32.f32 %v4339
        %v4347 = vmul.f32 %v4346, %v4344
        %v4348 = vxor.u32 %v4347, 2147483648
        %v4349 = vsel %vm4266, %v4348, %v4347
        %v4350 = vsub.s32 4, %v4326
        %v4351 = vsel %vm4266, %v4350, %v4326
        %v4352 = vsel %vm4265, %v1424, %v4349
        %v4353 = vsel %vm4265, 0, %v4351
        %v4354 = vcosq.f32.pop %v4352
        %v4355 = vsinq.f32.pop %v4352
        %vm4356 = vweird.f32 %v1424
        %v4357 = vadd.s32 %v4353, 3
        %v4358 = vand.u32 %v4357, 3
        %vm4359 = vcmp.lt.s32.totalorder %v4358, 2
        %vm4360 = vcmp.eq.s32.totalorder %v4358, 0
        %v4361 = vxor.u32 %v4355, 2147483648
        %v4362 = vsel %vm4360, %v4354, %v4361
        %vm4363 = vcmp.eq.s32.totalorder %v4358, 2
        %v4364 = vxor.u32 %v4354, 2147483648
        %v4365 = vsel %vm4363, %v4364, %v4355
        %v4366 = vsel %vm4359, %v4362, %v4365
        %v4367 = vsel %vm4356, nan, %v4366
        %v4368 = vand.u32 2147483647, %v2537
        %vm4369 = vcmp.le.f32.partialorder %v4368, 0.7853982
        %vm4370 = vcmp.lt.s32.totalorder %v2537, 0
        %v4371 = vand.u32 %v2537, 2139095040
        %v4372 = vshrl.u32 %v4371, 23
        %v4373 = vsub.s32 %v4372, 127
        %v4374 = vand.u32 2147483647, %v2537
        %v4375 = vand.u32 %v4374, 8388607
        %v4376 = vor.u32 %v4375, 8388608
        %v4377 = vsub.s32 0, %v4376
        %v4378 = vadd.s32 %v4373, 1
        %vm4379 = vcmp.gt.s32.totalorder %v4378, 0
        %v4380 = vsel %vm4379, %v4378, 0
        %v4381 = vshrl.u32 %v4380, 5
        %v4382 = vand.u32 %v4380, 31
        %v4383 = vsub.s32 32, %v4382
        %v4384 = vshrl.u32 683565275, %v4383
        %v4385 = vshll.u32 683565275, %v4382
        %v4386 = vshrl.u32 2475754826, %v4383
        %v4387 = vor.u32 %v4385, %v4386
        %v4388 = vshll.u32 2475754826, %v4382
        %v4389 = vshrl.u32 2131351028, %v4383
        %v4390 = vor.u32 %v4388, %v4389
        %v4391 = vshll.u32 2131351028, %v4382
        %v4392 = vshrl.u32 2102212464, %v4383
        %v4393 = vor.u32 %v4391, %v4392
        %v4394 = vshll.u32 2102212464, %v4382
        %v4395 = vshrl.u32 920167782, %v4383
        %v4396 = vor.u32 %v4394, %v4395
        %v4397 = vshll.u32 920167782, %v4382
        %v4398 = vshrl.u32 1326507024, %v4383
        %v4399 = vor.u32 %v4397, %v4398
        %vm4400 = vcmp.lt.s32.totalorder %v4381, 1
        %vm4401 = vcmp.lt.s32.totalorder %v4381, 2
        %vm4402 = vcmp.lt.s32.totalorder %v4381, 3
        %vm4403 = vcmp.lt.s32.totalorder %v4381, 4
        %v4404 = vsel %vm4400, %v4384, %v4387
        %v4405 = vsel %vm4403, %v4393, 2102212464
        %v4406 = vsel %vm4402, %v4390, %v4405
        %v4407 = vsel %vm4401, %v4404, %v4406
        %v4408 = vsel %vm4400, %v4387, %v4390
        %v4409 = vsel %vm4403, %v4396, 920167782
        %v4410 = vsel %vm4402, %v4393, %v4409
        %v4411 = vsel %vm4401, %v4408, %v4410
        %v4412 = vsel %vm4400, %v4390, %v4393
        %v4413 = vsel %vm4403, %v4399, 1326507024
        %v4414 = vsel %vm4402, %v4396, %v4413
        %v4415 = vsel %vm4401, %v4412, %v4414
        %v4416 = vshll.u32 %v4376, 8
        %v4417 = vmul.u32.u64.compose %v4416, %v4415
        %v4418 = vextract.low.u32 %v4417
        %v4419 = vextract.high.u32 %v4417
        %v4420 = vmul.u32.u64.compose %v4416, %v4411
        %v4421 = vextract.low.u32 %v4420
        %v4422 = vextract.high.u32 %v4420
        %v4423 = vmul.u32 %v4416, %v4407
        %v4424 = vadd.s32 %v4419, %v4421
        %vm4425 = vc.u32 %v4419, %v4421
        %v4426 = vadd.s32 %v4422, 1
        %v4427 = vsel %vm4425, %v4426, %v4422
        %v4428 = vadd.s32 %v4423, %v4427
        %v4429 = vadd.s32 %v4428, 536870912
        %v4430 = vshrl.u32 %v4429, 30
        %v4431 = vshll.u32 %v4430, 30
        %v4432 = vsub.s32 %v4428, %v4431
        %vm4433 = vcmp.lt.s32.totalorder %v4432, 0
        %v4434 = vsub.s32 0, %v4432
        %v4435 = vsel %vm4433, %v4434, %v4432
        %v4436 = vclz %v4435
        %v4437 = vsub.s32 %v4436, 2
        %vm4438 = vcmp.gt.s32.totalorder 0, %v4437
        %v4439 = vsel %vm4438, 0, %v4437
        %v4440 = vsub.s32 32, %v4439
        %v4441 = vshll.u32 %v4432, %v4439
        %v4442 = vshrl.u32 %v4424, %v4440
        %v4443 = vor.u32 %v4441, %v4442
        %v4444 = vsub.s32 4294967266, %v4439
        %v4445 = vadd.s32 %v4444, 127
        %v4446 = vshll.u32 %v4445, 23
        %v4447 = vor.u32 4788187, %v4446
        %v4448 = vand.u32 2147483647, %v4447
        %v4450 = vcvt.s32.f32 %v4443
        %v4451 = vmul.f32 %v4450, %v4448
        %v4452 = vxor.u32 %v4451, 2147483648
        %v4453 = vsel %vm4370, %v4452, %v4451
        %v4454 = vsub.s32 4, %v4430
        %v4455 = vsel %vm4370, %v4454, %v4430
        %v4456 = vsel %vm4369, %v2537, %v4453
        %v4457 = vsel %vm4369, 0, %v4455
        %v4458 = vcosq.f32.pop %v4456
        %v4459 = vsinq.f32.pop %v4456
        %vm4460 = vweird.f32 %v2537
        %v4461 = vadd.s32 %v4457, 3
        %v4462 = vand.u32 %v4461, 3
        %vm4463 = vcmp.lt.s32.totalorder %v4462, 2
        %vm4464 = vcmp.eq.s32.totalorder %v4462, 0
        %v4465 = vxor.u32 %v4459, 2147483648
        %v4466 = vsel %vm4464, %v4458, %v4465
        %vm4467 = vcmp.eq.s32.totalorder %v4462, 2
        %v4468 = vxor.u32 %v4458, 2147483648
        %v4469 = vsel %vm4467, %v4468, %v4459
        %v4470 = vsel %vm4463, %v4466, %v4469
        %v4471 = vsel %vm4460, nan, %v4470
        %v4472 = vand.u32 2147483647, %v1429
        %vm4473 = vcmp.le.f32.partialorder %v4472, 0.7853982
        %vm4474 = vcmp.lt.s32.totalorder %v1429, 0
        %v4475 = vand.u32 %v1429, 2139095040
        %v4476 = vshrl.u32 %v4475, 23
        %v4477 = vsub.s32 %v4476, 127
        %v4478 = vand.u32 2147483647, %v1429
        %v4479 = vand.u32 %v4478, 8388607
        %v4480 = vor.u32 %v4479, 8388608
        %v4481 = vsub.s32 0, %v4480
        %v4482 = vadd.s32 %v4477, 1
        %vm4483 = vcmp.gt.s32.totalorder %v4482, 0
        %v4484 = vsel %vm4483, %v4482, 0
        %v4485 = vshrl.u32 %v4484, 5
        %v4486 = vand.u32 %v4484, 31
        %v4487 = vsub.s32 32, %v4486
        %v4488 = vshrl.u32 683565275, %v4487
        %v4489 = vshll.u32 683565275, %v4486
        %v4490 = vshrl.u32 2475754826, %v4487
        %v4491 = vor.u32 %v4489, %v4490
        %v4492 = vshll.u32 2475754826, %v4486
        %v4493 = vshrl.u32 2131351028, %v4487
        %v4494 = vor.u32 %v4492, %v4493
        %v4495 = vshll.u32 2131351028, %v4486
        %v4496 = vshrl.u32 2102212464, %v4487
        %v4497 = vor.u32 %v4495, %v4496
        %v4498 = vshll.u32 2102212464, %v4486
        %v4499 = vshrl.u32 920167782, %v4487
        %v4500 = vor.u32 %v4498, %v4499
        %v4501 = vshll.u32 920167782, %v4486
        %v4502 = vshrl.u32 1326507024, %v4487
        %v4503 = vor.u32 %v4501, %v4502
        %vm4504 = vcmp.lt.s32.totalorder %v4485, 1
        %vm4505 = vcmp.lt.s32.totalorder %v4485, 2
        %vm4506 = vcmp.lt.s32.totalorder %v4485, 3
        %vm4507 = vcmp.lt.s32.totalorder %v4485, 4
        %v4508 = vsel %vm4504, %v4488, %v4491
        %v4509 = vsel %vm4507, %v4497, 2102212464
        %v4510 = vsel %vm4506, %v4494, %v4509
        %v4511 = vsel %vm4505, %v4508, %v4510
        %v4512 = vsel %vm4504, %v4491, %v4494
        %v4513 = vsel %vm4507, %v4500, 920167782
        %v4514 = vsel %vm4506, %v4497, %v4513
        %v4515 = vsel %vm4505, %v4512, %v4514
        %v4516 = vsel %vm4504, %v4494, %v4497
        %v4517 = vsel %vm4507, %v4503, 1326507024
        %v4518 = vsel %vm4506, %v4500, %v4517
        %v4519 = vsel %vm4505, %v4516, %v4518
        %v4520 = vshll.u32 %v4480, 8
        %v4521 = vmul.u32.u64.compose %v4520, %v4519
        %v4522 = vextract.low.u32 %v4521
        %v4523 = vextract.high.u32 %v4521
        %v4524 = vmul.u32.u64.compose %v4520, %v4515
        %v4525 = vextract.low.u32 %v4524
        %v4526 = vextract.high.u32 %v4524
        %v4527 = vmul.u32 %v4520, %v4511
        %v4528 = vadd.s32 %v4523, %v4525
        %vm4529 = vc.u32 %v4523, %v4525
        %v4530 = vadd.s32 %v4526, 1
        %v4531 = vsel %vm4529, %v4530, %v4526
        %v4532 = vadd.s32 %v4527, %v4531
        %v4533 = vadd.s32 %v4532, 536870912
        %v4534 = vshrl.u32 %v4533, 30
        %v4535 = vshll.u32 %v4534, 30
        %v4536 = vsub.s32 %v4532, %v4535
        %vm4537 = vcmp.lt.s32.totalorder %v4536, 0
        %v4538 = vsub.s32 0, %v4536
        %v4539 = vsel %vm4537, %v4538, %v4536
        %v4540 = vclz %v4539
        %v4541 = vsub.s32 %v4540, 2
        %vm4542 = vcmp.gt.s32.totalorder 0, %v4541
        %v4543 = vsel %vm4542, 0, %v4541
        %v4544 = vsub.s32 32, %v4543
        %v4545 = vshll.u32 %v4536, %v4543
        %v4546 = vshrl.u32 %v4528, %v4544
        %v4547 = vor.u32 %v4545, %v4546
        %v4548 = vsub.s32 4294967266, %v4543
        %v4549 = vadd.s32 %v4548, 127
        %v4550 = vshll.u32 %v4549, 23
        %v4551 = vor.u32 4788187, %v4550
        %v4552 = vand.u32 2147483647, %v4551
        %v4554 = vcvt.s32.f32 %v4547
        %v4555 = vmul.f32 %v4554, %v4552
        %v4556 = vxor.u32 %v4555, 2147483648
        %v4557 = vsel %vm4474, %v4556, %v4555
        %v4558 = vsub.s32 4, %v4534
        %v4559 = vsel %vm4474, %v4558, %v4534
        %v4560 = vsel %vm4473, %v1429, %v4557
        %v4561 = vsel %vm4473, 0, %v4559
        %v4562 = vcosq.f32.pop %v4560
        %v4563 = vsinq.f32.pop %v4560
        %vm4564 = vweird.f32 %v1429
        %v4565 = vadd.s32 %v4561, 3
        %v4566 = vand.u32 %v4565, 3
        %vm4567 = vcmp.lt.s32.totalorder %v4566, 2
        %vm4568 = vcmp.eq.s32.totalorder %v4566, 0
        %v4569 = vxor.u32 %v4563, 2147483648
        %v4570 = vsel %vm4568, %v4562, %v4569
        %vm4571 = vcmp.eq.s32.totalorder %v4566, 2
        %v4572 = vxor.u32 %v4562, 2147483648
        %v4573 = vsel %vm4571, %v4572, %v4563
        %v4574 = vsel %vm4567, %v4570, %v4573
        %v4575 = vsel %vm4564, nan, %v4574
        %v4576 = vand.u32 2147483647, %v1431
        %vm4577 = vcmp.le.f32.partialorder %v4576, 0.7853982
        %vm4578 = vcmp.lt.s32.totalorder %v1431, 0
        %v4579 = vand.u32 %v1431, 2139095040
        %v4580 = vshrl.u32 %v4579, 23
        %v4581 = vsub.s32 %v4580, 127
        %v4582 = vand.u32 2147483647, %v1431
        %v4583 = vand.u32 %v4582, 8388607
        %v4584 = vor.u32 %v4583, 8388608
        %v4585 = vsub.s32 0, %v4584
        %v4586 = vadd.s32 %v4581, 1
        %vm4587 = vcmp.gt.s32.totalorder %v4586, 0
        %v4588 = vsel %vm4587, %v4586, 0
        %v4589 = vshrl.u32 %v4588, 5
        %v4590 = vand.u32 %v4588, 31
        %v4591 = vsub.s32 32, %v4590
        %v4592 = vshrl.u32 683565275, %v4591
        %v4593 = vshll.u32 683565275, %v4590
        %v4594 = vshrl.u32 2475754826, %v4591
        %v4595 = vor.u32 %v4593, %v4594
        %v4596 = vshll.u32 2475754826, %v4590
        %v4597 = vshrl.u32 2131351028, %v4591
        %v4598 = vor.u32 %v4596, %v4597
        %v4599 = vshll.u32 2131351028, %v4590
        %v4600 = vshrl.u32 2102212464, %v4591
        %v4601 = vor.u32 %v4599, %v4600
        %v4602 = vshll.u32 2102212464, %v4590
        %v4603 = vshrl.u32 920167782, %v4591
        %v4604 = vor.u32 %v4602, %v4603
        %v4605 = vshll.u32 920167782, %v4590
        %v4606 = vshrl.u32 1326507024, %v4591
        %v4607 = vor.u32 %v4605, %v4606
        %vm4608 = vcmp.lt.s32.totalorder %v4589, 1
        %vm4609 = vcmp.lt.s32.totalorder %v4589, 2
        %vm4610 = vcmp.lt.s32.totalorder %v4589, 3
        %vm4611 = vcmp.lt.s32.totalorder %v4589, 4
        %v4612 = vsel %vm4608, %v4592, %v4595
        %v4613 = vsel %vm4611, %v4601, 2102212464
        %v4614 = vsel %vm4610, %v4598, %v4613
        %v4615 = vsel %vm4609, %v4612, %v4614
        %v4616 = vsel %vm4608, %v4595, %v4598
        %v4617 = vsel %vm4611, %v4604, 920167782
        %v4618 = vsel %vm4610, %v4601, %v4617
        %v4619 = vsel %vm4609, %v4616, %v4618
        %v4620 = vsel %vm4608, %v4598, %v4601
        %v4621 = vsel %vm4611, %v4607, 1326507024
        %v4622 = vsel %vm4610, %v4604, %v4621
        %v4623 = vsel %vm4609, %v4620, %v4622
        %v4624 = vshll.u32 %v4584, 8
        %v4625 = vmul.u32.u64.compose %v4624, %v4623
        %v4626 = vextract.low.u32 %v4625
        %v4627 = vextract.high.u32 %v4625
        %v4628 = vmul.u32.u64.compose %v4624, %v4619
        %v4629 = vextract.low.u32 %v4628
        %v4630 = vextract.high.u32 %v4628
        %v4631 = vmul.u32 %v4624, %v4615
        %v4632 = vadd.s32 %v4627, %v4629
        %vm4633 = vc.u32 %v4627, %v4629
        %v4634 = vadd.s32 %v4630, 1
        %v4635 = vsel %vm4633, %v4634, %v4630
        %v4636 = vadd.s32 %v4631, %v4635
        %v4637 = vadd.s32 %v4636, 536870912
        %v4638 = vshrl.u32 %v4637, 30
        %v4639 = vshll.u32 %v4638, 30
        %v4640 = vsub.s32 %v4636, %v4639
        %vm4641 = vcmp.lt.s32.totalorder %v4640, 0
        %v4642 = vsub.s32 0, %v4640
        %v4643 = vsel %vm4641, %v4642, %v4640
        %v4644 = vclz %v4643
        %v4645 = vsub.s32 %v4644, 2
        %vm4646 = vcmp.gt.s32.totalorder 0, %v4645
        %v4647 = vsel %vm4646, 0, %v4645
        %v4648 = vsub.s32 32, %v4647
        %v4649 = vshll.u32 %v4640, %v4647
        %v4650 = vshrl.u32 %v4632, %v4648
        %v4651 = vor.u32 %v4649, %v4650
        %v4652 = vsub.s32 4294967266, %v4647
        %v4653 = vadd.s32 %v4652, 127
        %v4654 = vshll.u32 %v4653, 23
        %v4655 = vor.u32 4788187, %v4654
        %v4656 = vand.u32 2147483647, %v4655
        %v4658 = vcvt.s32.f32 %v4651
        %v4659 = vmul.f32 %v4658, %v4656
        %v4660 = vxor.u32 %v4659, 2147483648
        %v4661 = vsel %vm4578, %v4660, %v4659
        %v4662 = vsub.s32 4, %v4638
        %v4663 = vsel %vm4578, %v4662, %v4638
        %v4664 = vsel %vm4577, %v1431, %v4661
        %v4665 = vsel %vm4577, 0, %v4663
        %v4666 = vcosq.f32.pop %v4664
        %v4667 = vsinq.f32.pop %v4664
        %vm4668 = vweird.f32 %v1431
        %v4669 = vadd.s32 %v4665, 3
        %v4670 = vand.u32 %v4669, 3
        %vm4671 = vcmp.lt.s32.totalorder %v4670, 2
        %vm4672 = vcmp.eq.s32.totalorder %v4670, 0
        %v4673 = vxor.u32 %v4667, 2147483648
        %v4674 = vsel %vm4672, %v4666, %v4673
        %vm4675 = vcmp.eq.s32.totalorder %v4670, 2
        %v4676 = vxor.u32 %v4666, 2147483648
        %v4677 = vsel %vm4675, %v4676, %v4667
        %v4678 = vsel %vm4671, %v4674, %v4677
        %v4679 = vsel %vm4668, nan, %v4678
        %v4680 = vand.u32 2147483647, %v2543
        %vm4681 = vcmp.le.f32.partialorder %v4680, 0.7853982
        %vm4682 = vcmp.lt.s32.totalorder %v2543, 0
        %v4683 = vand.u32 %v2543, 2139095040
        %v4684 = vshrl.u32 %v4683, 23
        %v4685 = vsub.s32 %v4684, 127
        %v4686 = vand.u32 2147483647, %v2543
        %v4687 = vand.u32 %v4686, 8388607
        %v4688 = vor.u32 %v4687, 8388608
        %v4689 = vsub.s32 0, %v4688
        %v4690 = vadd.s32 %v4685, 1
        %vm4691 = vcmp.gt.s32.totalorder %v4690, 0
        %v4692 = vsel %vm4691, %v4690, 0
        %v4693 = vshrl.u32 %v4692, 5
        %v4694 = vand.u32 %v4692, 31
        %v4695 = vsub.s32 32, %v4694
        %v4696 = vshrl.u32 683565275, %v4695
        %v4697 = vshll.u32 683565275, %v4694
        %v4698 = vshrl.u32 2475754826, %v4695
        %v4699 = vor.u32 %v4697, %v4698
        %v4700 = vshll.u32 2475754826, %v4694
        %v4701 = vshrl.u32 2131351028, %v4695
        %v4702 = vor.u32 %v4700, %v4701
        %v4703 = vshll.u32 2131351028, %v4694
        %v4704 = vshrl.u32 2102212464, %v4695
        %v4705 = vor.u32 %v4703, %v4704
        %v4706 = vshll.u32 2102212464, %v4694
        %v4707 = vshrl.u32 920167782, %v4695
        %v4708 = vor.u32 %v4706, %v4707
        %v4709 = vshll.u32 920167782, %v4694
        %v4710 = vshrl.u32 1326507024, %v4695
        %v4711 = vor.u32 %v4709, %v4710
        %vm4712 = vcmp.lt.s32.totalorder %v4693, 1
        %vm4713 = vcmp.lt.s32.totalorder %v4693, 2
        %vm4714 = vcmp.lt.s32.totalorder %v4693, 3
        %vm4715 = vcmp.lt.s32.totalorder %v4693, 4
        %v4716 = vsel %vm4712, %v4696, %v4699
        %v4717 = vsel %vm4715, %v4705, 2102212464
        %v4718 = vsel %vm4714, %v4702, %v4717
        %v4719 = vsel %vm4713, %v4716, %v4718
        %v4720 = vsel %vm4712, %v4699, %v4702
        %v4721 = vsel %vm4715, %v4708, 920167782
        %v4722 = vsel %vm4714, %v4705, %v4721
        %v4723 = vsel %vm4713, %v4720, %v4722
        %v4724 = vsel %vm4712, %v4702, %v4705
        %v4725 = vsel %vm4715, %v4711, 1326507024
        %v4726 = vsel %vm4714, %v4708, %v4725
        %v4727 = vsel %vm4713, %v4724, %v4726
        %v4728 = vshll.u32 %v4688, 8
        %v4729 = vmul.u32.u64.compose %v4728, %v4727
        %v4730 = vextract.low.u32 %v4729
        %v4731 = vextract.high.u32 %v4729
        %v4732 = vmul.u32.u64.compose %v4728, %v4723
        %v4733 = vextract.low.u32 %v4732
        %v4734 = vextract.high.u32 %v4732
        %v4735 = vmul.u32 %v4728, %v4719
        %v4736 = vadd.s32 %v4731, %v4733
        %vm4737 = vc.u32 %v4731, %v4733
        %v4738 = vadd.s32 %v4734, 1
        %v4739 = vsel %vm4737, %v4738, %v4734
        %v4740 = vadd.s32 %v4735, %v4739
        %v4741 = vadd.s32 %v4740, 536870912
        %v4742 = vshrl.u32 %v4741, 30
        %v4743 = vshll.u32 %v4742, 30
        %v4744 = vsub.s32 %v4740, %v4743
        %vm4745 = vcmp.lt.s32.totalorder %v4744, 0
        %v4746 = vsub.s32 0, %v4744
        %v4747 = vsel %vm4745, %v4746, %v4744
        %v4748 = vclz %v4747
        %v4749 = vsub.s32 %v4748, 2
        %vm4750 = vcmp.gt.s32.totalorder 0, %v4749
        %v4751 = vsel %vm4750, 0, %v4749
        %v4752 = vsub.s32 32, %v4751
        %v4753 = vshll.u32 %v4744, %v4751
        %v4754 = vshrl.u32 %v4736, %v4752
        %v4755 = vor.u32 %v4753, %v4754
        %v4756 = vsub.s32 4294967266, %v4751
        %v4757 = vadd.s32 %v4756, 127
        %v4758 = vshll.u32 %v4757, 23
        %v4759 = vor.u32 4788187, %v4758
        %v4760 = vand.u32 2147483647, %v4759
        %v4762 = vcvt.s32.f32 %v4755
        %v4763 = vmul.f32 %v4762, %v4760
        %v4764 = vxor.u32 %v4763, 2147483648
        %v4765 = vsel %vm4682, %v4764, %v4763
        %v4766 = vsub.s32 4, %v4742
        %v4767 = vsel %vm4682, %v4766, %v4742
        %v4768 = vsel %vm4681, %v2543, %v4765
        %v4769 = vsel %vm4681, 0, %v4767
        %v4770 = vcosq.f32.pop %v4768
        %v4771 = vsinq.f32.pop %v4768
        %vm4772 = vweird.f32 %v2543
        %v4773 = vadd.s32 %v4769, 3
        %v4774 = vand.u32 %v4773, 3
        %vm4775 = vcmp.lt.s32.totalorder %v4774, 2
        %vm4776 = vcmp.eq.s32.totalorder %v4774, 0
        %v4777 = vxor.u32 %v4771, 2147483648
        %v4778 = vsel %vm4776, %v4770, %v4777
        %vm4779 = vcmp.eq.s32.totalorder %v4774, 2
        %v4780 = vxor.u32 %v4770, 2147483648
        %v4781 = vsel %vm4779, %v4780, %v4771
        %v4782 = vsel %vm4775, %v4778, %v4781
        %v4783 = vsel %vm4772, nan, %v4782
        %v4784 = vand.u32 2147483647, %v1436
        %vm4785 = vcmp.le.f32.partialorder %v4784, 0.7853982
        %vm4786 = vcmp.lt.s32.totalorder %v1436, 0
        %v4787 = vand.u32 %v1436, 2139095040
        %v4788 = vshrl.u32 %v4787, 23
        %v4789 = vsub.s32 %v4788, 127
        %v4790 = vand.u32 2147483647, %v1436
        %v4791 = vand.u32 %v4790, 8388607
        %v4792 = vor.u32 %v4791, 8388608
        %v4793 = vsub.s32 0, %v4792
        %v4794 = vadd.s32 %v4789, 1
        %vm4795 = vcmp.gt.s32.totalorder %v4794, 0
        %v4796 = vsel %vm4795, %v4794, 0
        %v4797 = vshrl.u32 %v4796, 5
        %v4798 = vand.u32 %v4796, 31
        %v4799 = vsub.s32 32, %v4798
        %v4800 = vshrl.u32 683565275, %v4799
        %v4801 = vshll.u32 683565275, %v4798
        %v4802 = vshrl.u32 2475754826, %v4799
        %v4803 = vor.u32 %v4801, %v4802
        %v4804 = vshll.u32 2475754826, %v4798
        %v4805 = vshrl.u32 2131351028, %v4799
        %v4806 = vor.u32 %v4804, %v4805
        %v4807 = vshll.u32 2131351028, %v4798
        %v4808 = vshrl.u32 2102212464, %v4799
        %v4809 = vor.u32 %v4807, %v4808
        %v4810 = vshll.u32 2102212464, %v4798
        %v4811 = vshrl.u32 920167782, %v4799
        %v4812 = vor.u32 %v4810, %v4811
        %v4813 = vshll.u32 920167782, %v4798
        %v4814 = vshrl.u32 1326507024, %v4799
        %v4815 = vor.u32 %v4813, %v4814
        %vm4816 = vcmp.lt.s32.totalorder %v4797, 1
        %vm4817 = vcmp.lt.s32.totalorder %v4797, 2
        %vm4818 = vcmp.lt.s32.totalorder %v4797, 3
        %vm4819 = vcmp.lt.s32.totalorder %v4797, 4
        %v4820 = vsel %vm4816, %v4800, %v4803
        %v4821 = vsel %vm4819, %v4809, 2102212464
        %v4822 = vsel %vm4818, %v4806, %v4821
        %v4823 = vsel %vm4817, %v4820, %v4822
        %v4824 = vsel %vm4816, %v4803, %v4806
        %v4825 = vsel %vm4819, %v4812, 920167782
        %v4826 = vsel %vm4818, %v4809, %v4825
        %v4827 = vsel %vm4817, %v4824, %v4826
        %v4828 = vsel %vm4816, %v4806, %v4809
        %v4829 = vsel %vm4819, %v4815, 1326507024
        %v4830 = vsel %vm4818, %v4812, %v4829
        %v4831 = vsel %vm4817, %v4828, %v4830
        %v4832 = vshll.u32 %v4792, 8
        %v4833 = vmul.u32.u64.compose %v4832, %v4831
        %v4834 = vextract.low.u32 %v4833
        %v4835 = vextract.high.u32 %v4833
        %v4836 = vmul.u32.u64.compose %v4832, %v4827
        %v4837 = vextract.low.u32 %v4836
        %v4838 = vextract.high.u32 %v4836
        %v4839 = vmul.u32 %v4832, %v4823
        %v4840 = vadd.s32 %v4835, %v4837
        %vm4841 = vc.u32 %v4835, %v4837
        %v4842 = vadd.s32 %v4838, 1
        %v4843 = vsel %vm4841, %v4842, %v4838
        %v4844 = vadd.s32 %v4839, %v4843
        %v4845 = vadd.s32 %v4844, 536870912
        %v4846 = vshrl.u32 %v4845, 30
        %v4847 = vshll.u32 %v4846, 30
        %v4848 = vsub.s32 %v4844, %v4847
        %vm4849 = vcmp.lt.s32.totalorder %v4848, 0
        %v4850 = vsub.s32 0, %v4848
        %v4851 = vsel %vm4849, %v4850, %v4848
        %v4852 = vclz %v4851
        %v4853 = vsub.s32 %v4852, 2
        %vm4854 = vcmp.gt.s32.totalorder 0, %v4853
        %v4855 = vsel %vm4854, 0, %v4853
        %v4856 = vsub.s32 32, %v4855
        %v4857 = vshll.u32 %v4848, %v4855
        %v4858 = vshrl.u32 %v4840, %v4856
        %v4859 = vor.u32 %v4857, %v4858
        %v4860 = vsub.s32 4294967266, %v4855
        %v4861 = vadd.s32 %v4860, 127
        %v4862 = vshll.u32 %v4861, 23
        %v4863 = vor.u32 4788187, %v4862
        %v4864 = vand.u32 2147483647, %v4863
        %v4866 = vcvt.s32.f32 %v4859
        %v4867 = vmul.f32 %v4866, %v4864
        %v4868 = vxor.u32 %v4867, 2147483648
        %v4869 = vsel %vm4786, %v4868, %v4867
        %v4870 = vsub.s32 4, %v4846
        %v4871 = vsel %vm4786, %v4870, %v4846
        %v4872 = vsel %vm4785, %v1436, %v4869
        %v4873 = vsel %vm4785, 0, %v4871
        %v4874 = vcosq.f32.pop %v4872
        %v4875 = vsinq.f32.pop %v4872
        %vm4876 = vweird.f32 %v1436
        %v4877 = vadd.s32 %v4873, 3
        %v4878 = vand.u32 %v4877, 3
        %vm4879 = vcmp.lt.s32.totalorder %v4878, 2
        %vm4880 = vcmp.eq.s32.totalorder %v4878, 0
        %v4881 = vxor.u32 %v4875, 2147483648
        %v4882 = vsel %vm4880, %v4874, %v4881
        %vm4883 = vcmp.eq.s32.totalorder %v4878, 2
        %v4884 = vxor.u32 %v4874, 2147483648
        %v4885 = vsel %vm4883, %v4884, %v4875
        %v4886 = vsel %vm4879, %v4882, %v4885
        %v4887 = vsel %vm4876, nan, %v4886
        %v4888 = vand.u32 2147483647, %v1438
        %vm4889 = vcmp.le.f32.partialorder %v4888, 0.7853982
        %vm4890 = vcmp.lt.s32.totalorder %v1438, 0
        %v4891 = vand.u32 %v1438, 2139095040
        %v4892 = vshrl.u32 %v4891, 23
        %v4893 = vsub.s32 %v4892, 127
        %v4894 = vand.u32 2147483647, %v1438
        %v4895 = vand.u32 %v4894, 8388607
        %v4896 = vor.u32 %v4895, 8388608
        %v4897 = vsub.s32 0, %v4896
        %v4898 = vadd.s32 %v4893, 1
        %vm4899 = vcmp.gt.s32.totalorder %v4898, 0
        %v4900 = vsel %vm4899, %v4898, 0
        %v4901 = vshrl.u32 %v4900, 5
        %v4902 = vand.u32 %v4900, 31
        %v4903 = vsub.s32 32, %v4902
        %v4904 = vshrl.u32 683565275, %v4903
        %v4905 = vshll.u32 683565275, %v4902
        %v4906 = vshrl.u32 2475754826, %v4903
        %v4907 = vor.u32 %v4905, %v4906
        %v4908 = vshll.u32 2475754826, %v4902
        %v4909 = vshrl.u32 2131351028, %v4903
        %v4910 = vor.u32 %v4908, %v4909
        %v4911 = vshll.u32 2131351028, %v4902
        %v4912 = vshrl.u32 2102212464, %v4903
        %v4913 = vor.u32 %v4911, %v4912
        %v4914 = vshll.u32 2102212464, %v4902
        %v4915 = vshrl.u32 920167782, %v4903
        %v4916 = vor.u32 %v4914, %v4915
        %v4917 = vshll.u32 920167782, %v4902
        %v4918 = vshrl.u32 1326507024, %v4903
        %v4919 = vor.u32 %v4917, %v4918
        %vm4920 = vcmp.lt.s32.totalorder %v4901, 1
        %vm4921 = vcmp.lt.s32.totalorder %v4901, 2
        %vm4922 = vcmp.lt.s32.totalorder %v4901, 3
        %vm4923 = vcmp.lt.s32.totalorder %v4901, 4
        %v4924 = vsel %vm4920, %v4904, %v4907
        %v4925 = vsel %vm4923, %v4913, 2102212464
        %v4926 = vsel %vm4922, %v4910, %v4925
        %v4927 = vsel %vm4921, %v4924, %v4926
        %v4928 = vsel %vm4920, %v4907, %v4910
        %v4929 = vsel %vm4923, %v4916, 920167782
        %v4930 = vsel %vm4922, %v4913, %v4929
        %v4931 = vsel %vm4921, %v4928, %v4930
        %v4932 = vsel %vm4920, %v4910, %v4913
        %v4933 = vsel %vm4923, %v4919, 1326507024
        %v4934 = vsel %vm4922, %v4916, %v4933
        %v4935 = vsel %vm4921, %v4932, %v4934
        %v4936 = vshll.u32 %v4896, 8
        %v4937 = vmul.u32.u64.compose %v4936, %v4935
        %v4938 = vextract.low.u32 %v4937
        %v4939 = vextract.high.u32 %v4937
        %v4940 = vmul.u32.u64.compose %v4936, %v4931
        %v4941 = vextract.low.u32 %v4940
        %v4942 = vextract.high.u32 %v4940
        %v4943 = vmul.u32 %v4936, %v4927
        %v4944 = vadd.s32 %v4939, %v4941
        %vm4945 = vc.u32 %v4939, %v4941
        %v4946 = vadd.s32 %v4942, 1
        %v4947 = vsel %vm4945, %v4946, %v4942
        %v4948 = vadd.s32 %v4943, %v4947
        %v4949 = vadd.s32 %v4948, 536870912
        %v4950 = vshrl.u32 %v4949, 30
        %v4951 = vshll.u32 %v4950, 30
        %v4952 = vsub.s32 %v4948, %v4951
        %vm4953 = vcmp.lt.s32.totalorder %v4952, 0
        %v4954 = vsub.s32 0, %v4952
        %v4955 = vsel %vm4953, %v4954, %v4952
        %v4956 = vclz %v4955
        %v4957 = vsub.s32 %v4956, 2
        %vm4958 = vcmp.gt.s32.totalorder 0, %v4957
        %v4959 = vsel %vm4958, 0, %v4957
        %v4960 = vsub.s32 32, %v4959
        %v4961 = vshll.u32 %v4952, %v4959
        %v4962 = vshrl.u32 %v4944, %v4960
        %v4963 = vor.u32 %v4961, %v4962
        %v4964 = vsub.s32 4294967266, %v4959
        %v4965 = vadd.s32 %v4964, 127
        %v4966 = vshll.u32 %v4965, 23
        %v4967 = vor.u32 4788187, %v4966
        %v4968 = vand.u32 2147483647, %v4967
        %v4970 = vcvt.s32.f32 %v4963
        %v4971 = vmul.f32 %v4970, %v4968
        %v4972 = vxor.u32 %v4971, 2147483648
        %v4973 = vsel %vm4890, %v4972, %v4971
        %v4974 = vsub.s32 4, %v4950
        %v4975 = vsel %vm4890, %v4974, %v4950
        %v4976 = vsel %vm4889, %v1438, %v4973
        %v4977 = vsel %vm4889, 0, %v4975
        %v4978 = vcosq.f32.pop %v4976
        %v4979 = vsinq.f32.pop %v4976
        %vm4980 = vweird.f32 %v1438
        %v4981 = vadd.s32 %v4977, 3
        %v4982 = vand.u32 %v4981, 3
        %vm4983 = vcmp.lt.s32.totalorder %v4982, 2
        %vm4984 = vcmp.eq.s32.totalorder %v4982, 0
        %v4985 = vxor.u32 %v4979, 2147483648
        %v4986 = vsel %vm4984, %v4978, %v4985
        %vm4987 = vcmp.eq.s32.totalorder %v4982, 2
        %v4988 = vxor.u32 %v4978, 2147483648
        %v4989 = vsel %vm4987, %v4988, %v4979
        %v4990 = vsel %vm4983, %v4986, %v4989
        %v4991 = vsel %vm4980, nan, %v4990
        %v4992 = vand.u32 2147483647, %v2549
        %vm4993 = vcmp.le.f32.partialorder %v4992, 0.7853982
        %vm4994 = vcmp.lt.s32.totalorder %v2549, 0
        %v4995 = vand.u32 %v2549, 2139095040
        %v4996 = vshrl.u32 %v4995, 23
        %v4997 = vsub.s32 %v4996, 127
        %v4998 = vand.u32 2147483647, %v2549
        %v4999 = vand.u32 %v4998, 8388607
        %v5000 = vor.u32 %v4999, 8388608
        %v5001 = vsub.s32 0, %v5000
        %v5002 = vadd.s32 %v4997, 1
        %vm5003 = vcmp.gt.s32.totalorder %v5002, 0
        %v5004 = vsel %vm5003, %v5002, 0
        %v5005 = vshrl.u32 %v5004, 5
        %v5006 = vand.u32 %v5004, 31
        %v5007 = vsub.s32 32, %v5006
        %v5008 = vshrl.u32 683565275, %v5007
        %v5009 = vshll.u32 683565275, %v5006
        %v5010 = vshrl.u32 2475754826, %v5007
        %v5011 = vor.u32 %v5009, %v5010
        %v5012 = vshll.u32 2475754826, %v5006
        %v5013 = vshrl.u32 2131351028, %v5007
        %v5014 = vor.u32 %v5012, %v5013
        %v5015 = vshll.u32 2131351028, %v5006
        %v5016 = vshrl.u32 2102212464, %v5007
        %v5017 = vor.u32 %v5015, %v5016
        %v5018 = vshll.u32 2102212464, %v5006
        %v5019 = vshrl.u32 920167782, %v5007
        %v5020 = vor.u32 %v5018, %v5019
        %v5021 = vshll.u32 920167782, %v5006
        %v5022 = vshrl.u32 1326507024, %v5007
        %v5023 = vor.u32 %v5021, %v5022
        %vm5024 = vcmp.lt.s32.totalorder %v5005, 1
        %vm5025 = vcmp.lt.s32.totalorder %v5005, 2
        %vm5026 = vcmp.lt.s32.totalorder %v5005, 3
        %vm5027 = vcmp.lt.s32.totalorder %v5005, 4
        %v5028 = vsel %vm5024, %v5008, %v5011
        %v5029 = vsel %vm5027, %v5017, 2102212464
        %v5030 = vsel %vm5026, %v5014, %v5029
        %v5031 = vsel %vm5025, %v5028, %v5030
        %v5032 = vsel %vm5024, %v5011, %v5014
        %v5033 = vsel %vm5027, %v5020, 920167782
        %v5034 = vsel %vm5026, %v5017, %v5033
        %v5035 = vsel %vm5025, %v5032, %v5034
        %v5036 = vsel %vm5024, %v5014, %v5017
        %v5037 = vsel %vm5027, %v5023, 1326507024
        %v5038 = vsel %vm5026, %v5020, %v5037
        %v5039 = vsel %vm5025, %v5036, %v5038
        %v5040 = vshll.u32 %v5000, 8
        %v5041 = vmul.u32.u64.compose %v5040, %v5039
        %v5042 = vextract.low.u32 %v5041
        %v5043 = vextract.high.u32 %v5041
        %v5044 = vmul.u32.u64.compose %v5040, %v5035
        %v5045 = vextract.low.u32 %v5044
        %v5046 = vextract.high.u32 %v5044
        %v5047 = vmul.u32 %v5040, %v5031
        %v5048 = vadd.s32 %v5043, %v5045
        %vm5049 = vc.u32 %v5043, %v5045
        %v5050 = vadd.s32 %v5046, 1
        %v5051 = vsel %vm5049, %v5050, %v5046
        %v5052 = vadd.s32 %v5047, %v5051
        %v5053 = vadd.s32 %v5052, 536870912
        %v5054 = vshrl.u32 %v5053, 30
        %v5055 = vshll.u32 %v5054, 30
        %v5056 = vsub.s32 %v5052, %v5055
        %vm5057 = vcmp.lt.s32.totalorder %v5056, 0
        %v5058 = vsub.s32 0, %v5056
        %v5059 = vsel %vm5057, %v5058, %v5056
        %v5060 = vclz %v5059
        %v5061 = vsub.s32 %v5060, 2
        %vm5062 = vcmp.gt.s32.totalorder 0, %v5061
        %v5063 = vsel %vm5062, 0, %v5061
        %v5064 = vsub.s32 32, %v5063
        %v5065 = vshll.u32 %v5056, %v5063
        %v5066 = vshrl.u32 %v5048, %v5064
        %v5067 = vor.u32 %v5065, %v5066
        %v5068 = vsub.s32 4294967266, %v5063
        %v5069 = vadd.s32 %v5068, 127
        %v5070 = vshll.u32 %v5069, 23
        %v5071 = vor.u32 4788187, %v5070
        %v5072 = vand.u32 2147483647, %v5071
        %v5074 = vcvt.s32.f32 %v5067
        %v5075 = vmul.f32 %v5074, %v5072
        %v5076 = vxor.u32 %v5075, 2147483648
        %v5077 = vsel %vm4994, %v5076, %v5075
        %v5078 = vsub.s32 4, %v5054
        %v5079 = vsel %vm4994, %v5078, %v5054
        %v5080 = vsel %vm4993, %v2549, %v5077
        %v5081 = vsel %vm4993, 0, %v5079
        %v5082 = vcosq.f32.pop %v5080
        %v5083 = vsinq.f32.pop %v5080
        %vm5084 = vweird.f32 %v2549
        %v5085 = vadd.s32 %v5081, 3
        %v5086 = vand.u32 %v5085, 3
        %vm5087 = vcmp.lt.s32.totalorder %v5086, 2
        %vm5088 = vcmp.eq.s32.totalorder %v5086, 0
        %v5089 = vxor.u32 %v5083, 2147483648
        %v5090 = vsel %vm5088, %v5082, %v5089
        %vm5091 = vcmp.eq.s32.totalorder %v5086, 2
        %v5092 = vxor.u32 %v5082, 2147483648
        %v5093 = vsel %vm5091, %v5092, %v5083
        %v5094 = vsel %vm5087, %v5090, %v5093
        %v5095 = vsel %vm5084, nan, %v5094
        %v5096 = vand.u32 2147483647, %v1443
        %vm5097 = vcmp.le.f32.partialorder %v5096, 0.7853982
        %vm5098 = vcmp.lt.s32.totalorder %v1443, 0
        %v5099 = vand.u32 %v1443, 2139095040
        %v5100 = vshrl.u32 %v5099, 23
        %v5101 = vsub.s32 %v5100, 127
        %v5102 = vand.u32 2147483647, %v1443
        %v5103 = vand.u32 %v5102, 8388607
        %v5104 = vor.u32 %v5103, 8388608
        %v5105 = vsub.s32 0, %v5104
        %v5106 = vadd.s32 %v5101, 1
        %vm5107 = vcmp.gt.s32.totalorder %v5106, 0
        %v5108 = vsel %vm5107, %v5106, 0
        %v5109 = vshrl.u32 %v5108, 5
        %v5110 = vand.u32 %v5108, 31
        %v5111 = vsub.s32 32, %v5110
        %v5112 = vshrl.u32 683565275, %v5111
        %v5113 = vshll.u32 683565275, %v5110
        %v5114 = vshrl.u32 2475754826, %v5111
        %v5115 = vor.u32 %v5113, %v5114
        %v5116 = vshll.u32 2475754826, %v5110
        %v5117 = vshrl.u32 2131351028, %v5111
        %v5118 = vor.u32 %v5116, %v5117
        %v5119 = vshll.u32 2131351028, %v5110
        %v5120 = vshrl.u32 2102212464, %v5111
        %v5121 = vor.u32 %v5119, %v5120
        %v5122 = vshll.u32 2102212464, %v5110
        %v5123 = vshrl.u32 920167782, %v5111
        %v5124 = vor.u32 %v5122, %v5123
        %v5125 = vshll.u32 920167782, %v5110
        %v5126 = vshrl.u32 1326507024, %v5111
        %v5127 = vor.u32 %v5125, %v5126
        %vm5128 = vcmp.lt.s32.totalorder %v5109, 1
        %vm5129 = vcmp.lt.s32.totalorder %v5109, 2
        %vm5130 = vcmp.lt.s32.totalorder %v5109, 3
        %vm5131 = vcmp.lt.s32.totalorder %v5109, 4
        %v5132 = vsel %vm5128, %v5112, %v5115
        %v5133 = vsel %vm5131, %v5121, 2102212464
        %v5134 = vsel %vm5130, %v5118, %v5133
        %v5135 = vsel %vm5129, %v5132, %v5134
        %v5136 = vsel %vm5128, %v5115, %v5118
        %v5137 = vsel %vm5131, %v5124, 920167782
        %v5138 = vsel %vm5130, %v5121, %v5137
        %v5139 = vsel %vm5129, %v5136, %v5138
        %v5140 = vsel %vm5128, %v5118, %v5121
        %v5141 = vsel %vm5131, %v5127, 1326507024
        %v5142 = vsel %vm5130, %v5124, %v5141
        %v5143 = vsel %vm5129, %v5140, %v5142
        %v5144 = vshll.u32 %v5104, 8
        %v5145 = vmul.u32.u64.compose %v5144, %v5143
        %v5146 = vextract.low.u32 %v5145
        %v5147 = vextract.high.u32 %v5145
        %v5148 = vmul.u32.u64.compose %v5144, %v5139
        %v5149 = vextract.low.u32 %v5148
        %v5150 = vextract.high.u32 %v5148
        %v5151 = vmul.u32 %v5144, %v5135
        %v5152 = vadd.s32 %v5147, %v5149
        %vm5153 = vc.u32 %v5147, %v5149
        %v5154 = vadd.s32 %v5150, 1
        %v5155 = vsel %vm5153, %v5154, %v5150
        %v5156 = vadd.s32 %v5151, %v5155
        %v5157 = vadd.s32 %v5156, 536870912
        %v5158 = vshrl.u32 %v5157, 30
        %v5159 = vshll.u32 %v5158, 30
        %v5160 = vsub.s32 %v5156, %v5159
        %vm5161 = vcmp.lt.s32.totalorder %v5160, 0
        %v5162 = vsub.s32 0, %v5160
        %v5163 = vsel %vm5161, %v5162, %v5160
        %v5164 = vclz %v5163
        %v5165 = vsub.s32 %v5164, 2
        %vm5166 = vcmp.gt.s32.totalorder 0, %v5165
        %v5167 = vsel %vm5166, 0, %v5165
        %v5168 = vsub.s32 32, %v5167
        %v5169 = vshll.u32 %v5160, %v5167
        %v5170 = vshrl.u32 %v5152, %v5168
        %v5171 = vor.u32 %v5169, %v5170
        %v5172 = vsub.s32 4294967266, %v5167
        %v5173 = vadd.s32 %v5172, 127
        %v5174 = vshll.u32 %v5173, 23
        %v5175 = vor.u32 4788187, %v5174
        %v5176 = vand.u32 2147483647, %v5175
        %v5178 = vcvt.s32.f32 %v5171
        %v5179 = vmul.f32 %v5178, %v5176
        %v5180 = vxor.u32 %v5179, 2147483648
        %v5181 = vsel %vm5098, %v5180, %v5179
        %v5182 = vsub.s32 4, %v5158
        %v5183 = vsel %vm5098, %v5182, %v5158
        %v5184 = vsel %vm5097, %v1443, %v5181
        %v5185 = vsel %vm5097, 0, %v5183
        %v5186 = vcosq.f32.pop %v5184
        %v5187 = vsinq.f32.pop %v5184
        %vm5188 = vweird.f32 %v1443
        %v5189 = vadd.s32 %v5185, 3
        %v5190 = vand.u32 %v5189, 3
        %vm5191 = vcmp.lt.s32.totalorder %v5190, 2
        %vm5192 = vcmp.eq.s32.totalorder %v5190, 0
        %v5193 = vxor.u32 %v5187, 2147483648
        %v5194 = vsel %vm5192, %v5186, %v5193
        %vm5195 = vcmp.eq.s32.totalorder %v5190, 2
        %v5196 = vxor.u32 %v5186, 2147483648
        %v5197 = vsel %vm5195, %v5196, %v5187
        %v5198 = vsel %vm5191, %v5194, %v5197
        %v5199 = vsel %vm5188, nan, %v5198
        %v5200 = vand.u32 2147483647, %v1445
        %vm5201 = vcmp.le.f32.partialorder %v5200, 0.7853982
        %vm5202 = vcmp.lt.s32.totalorder %v1445, 0
        %v5203 = vand.u32 %v1445, 2139095040
        %v5204 = vshrl.u32 %v5203, 23
        %v5205 = vsub.s32 %v5204, 127
        %v5206 = vand.u32 2147483647, %v1445
        %v5207 = vand.u32 %v5206, 8388607
        %v5208 = vor.u32 %v5207, 8388608
        %v5209 = vsub.s32 0, %v5208
        %v5210 = vadd.s32 %v5205, 1
        %vm5211 = vcmp.gt.s32.totalorder %v5210, 0
        %v5212 = vsel %vm5211, %v5210, 0
        %v5213 = vshrl.u32 %v5212, 5
        %v5214 = vand.u32 %v5212, 31
        %v5215 = vsub.s32 32, %v5214
        %v5216 = vshrl.u32 683565275, %v5215
        %v5217 = vshll.u32 683565275, %v5214
        %v5218 = vshrl.u32 2475754826, %v5215
        %v5219 = vor.u32 %v5217, %v5218
        %v5220 = vshll.u32 2475754826, %v5214
        %v5221 = vshrl.u32 2131351028, %v5215
        %v5222 = vor.u32 %v5220, %v5221
        %v5223 = vshll.u32 2131351028, %v5214
        %v5224 = vshrl.u32 2102212464, %v5215
        %v5225 = vor.u32 %v5223, %v5224
        %v5226 = vshll.u32 2102212464, %v5214
        %v5227 = vshrl.u32 920167782, %v5215
        %v5228 = vor.u32 %v5226, %v5227
        %v5229 = vshll.u32 920167782, %v5214
        %v5230 = vshrl.u32 1326507024, %v5215
        %v5231 = vor.u32 %v5229, %v5230
        %vm5232 = vcmp.lt.s32.totalorder %v5213, 1
        %vm5233 = vcmp.lt.s32.totalorder %v5213, 2
        %vm5234 = vcmp.lt.s32.totalorder %v5213, 3
        %vm5235 = vcmp.lt.s32.totalorder %v5213, 4
        %v5236 = vsel %vm5232, %v5216, %v5219
        %v5237 = vsel %vm5235, %v5225, 2102212464
        %v5238 = vsel %vm5234, %v5222, %v5237
        %v5239 = vsel %vm5233, %v5236, %v5238
        %v5240 = vsel %vm5232, %v5219, %v5222
        %v5241 = vsel %vm5235, %v5228, 920167782
        %v5242 = vsel %vm5234, %v5225, %v5241
        %v5243 = vsel %vm5233, %v5240, %v5242
        %v5244 = vsel %vm5232, %v5222, %v5225
        %v5245 = vsel %vm5235, %v5231, 1326507024
        %v5246 = vsel %vm5234, %v5228, %v5245
        %v5247 = vsel %vm5233, %v5244, %v5246
        %v5248 = vshll.u32 %v5208, 8
        %v5249 = vmul.u32.u64.compose %v5248, %v5247
        %v5250 = vextract.low.u32 %v5249
        %v5251 = vextract.high.u32 %v5249
        %v5252 = vmul.u32.u64.compose %v5248, %v5243
        %v5253 = vextract.low.u32 %v5252
        %v5254 = vextract.high.u32 %v5252
        %v5255 = vmul.u32 %v5248, %v5239
        %v5256 = vadd.s32 %v5251, %v5253
        %vm5257 = vc.u32 %v5251, %v5253
        %v5258 = vadd.s32 %v5254, 1
        %v5259 = vsel %vm5257, %v5258, %v5254
        %v5260 = vadd.s32 %v5255, %v5259
        %v5261 = vadd.s32 %v5260, 536870912
        %v5262 = vshrl.u32 %v5261, 30
        %v5263 = vshll.u32 %v5262, 30
        %v5264 = vsub.s32 %v5260, %v5263
        %vm5265 = vcmp.lt.s32.totalorder %v5264, 0
        %v5266 = vsub.s32 0, %v5264
        %v5267 = vsel %vm5265, %v5266, %v5264
        %v5268 = vclz %v5267
        %v5269 = vsub.s32 %v5268, 2
        %vm5270 = vcmp.gt.s32.totalorder 0, %v5269
        %v5271 = vsel %vm5270, 0, %v5269
        %v5272 = vsub.s32 32, %v5271
        %v5273 = vshll.u32 %v5264, %v5271
        %v5274 = vshrl.u32 %v5256, %v5272
        %v5275 = vor.u32 %v5273, %v5274
        %v5276 = vsub.s32 4294967266, %v5271
        %v5277 = vadd.s32 %v5276, 127
        %v5278 = vshll.u32 %v5277, 23
        %v5279 = vor.u32 4788187, %v5278
        %v5280 = vand.u32 2147483647, %v5279
        %v5282 = vcvt.s32.f32 %v5275
        %v5283 = vmul.f32 %v5282, %v5280
        %v5284 = vxor.u32 %v5283, 2147483648
        %v5285 = vsel %vm5202, %v5284, %v5283
        %v5286 = vsub.s32 4, %v5262
        %v5287 = vsel %vm5202, %v5286, %v5262
        %v5288 = vsel %vm5201, %v1445, %v5285
        %v5289 = vsel %vm5201, 0, %v5287
        %v5290 = vcosq.f32.pop %v5288
        %v5291 = vsinq.f32.pop %v5288
        %vm5292 = vweird.f32 %v1445
        %v5293 = vadd.s32 %v5289, 3
        %v5294 = vand.u32 %v5293, 3
        %vm5295 = vcmp.lt.s32.totalorder %v5294, 2
        %vm5296 = vcmp.eq.s32.totalorder %v5294, 0
        %v5297 = vxor.u32 %v5291, 2147483648
        %v5298 = vsel %vm5296, %v5290, %v5297
        %vm5299 = vcmp.eq.s32.totalorder %v5294, 2
        %v5300 = vxor.u32 %v5290, 2147483648
        %v5301 = vsel %vm5299, %v5300, %v5291
        %v5302 = vsel %vm5295, %v5298, %v5301
        %v5303 = vsel %vm5292, nan, %v5302
        %v5304 = vand.u32 2147483647, %v2555
        %vm5305 = vcmp.le.f32.partialorder %v5304, 0.7853982
        %vm5306 = vcmp.lt.s32.totalorder %v2555, 0
        %v5307 = vand.u32 %v2555, 2139095040
        %v5308 = vshrl.u32 %v5307, 23
        %v5309 = vsub.s32 %v5308, 127
        %v5310 = vand.u32 2147483647, %v2555
        %v5311 = vand.u32 %v5310, 8388607
        %v5312 = vor.u32 %v5311, 8388608
        %v5313 = vsub.s32 0, %v5312
        %v5314 = vadd.s32 %v5309, 1
        %vm5315 = vcmp.gt.s32.totalorder %v5314, 0
        %v5316 = vsel %vm5315, %v5314, 0
        %v5317 = vshrl.u32 %v5316, 5
        %v5318 = vand.u32 %v5316, 31
        %v5319 = vsub.s32 32, %v5318
        %v5320 = vshrl.u32 683565275, %v5319
        %v5321 = vshll.u32 683565275, %v5318
        %v5322 = vshrl.u32 2475754826, %v5319
        %v5323 = vor.u32 %v5321, %v5322
        %v5324 = vshll.u32 2475754826, %v5318
        %v5325 = vshrl.u32 2131351028, %v5319
        %v5326 = vor.u32 %v5324, %v5325
        %v5327 = vshll.u32 2131351028, %v5318
        %v5328 = vshrl.u32 2102212464, %v5319
        %v5329 = vor.u32 %v5327, %v5328
        %v5330 = vshll.u32 2102212464, %v5318
        %v5331 = vshrl.u32 920167782, %v5319
        %v5332 = vor.u32 %v5330, %v5331
        %v5333 = vshll.u32 920167782, %v5318
        %v5334 = vshrl.u32 1326507024, %v5319
        %v5335 = vor.u32 %v5333, %v5334
        %vm5336 = vcmp.lt.s32.totalorder %v5317, 1
        %vm5337 = vcmp.lt.s32.totalorder %v5317, 2
        %vm5338 = vcmp.lt.s32.totalorder %v5317, 3
        %vm5339 = vcmp.lt.s32.totalorder %v5317, 4
        %v5340 = vsel %vm5336, %v5320, %v5323
        %v5341 = vsel %vm5339, %v5329, 2102212464
        %v5342 = vsel %vm5338, %v5326, %v5341
        %v5343 = vsel %vm5337, %v5340, %v5342
        %v5344 = vsel %vm5336, %v5323, %v5326
        %v5345 = vsel %vm5339, %v5332, 920167782
        %v5346 = vsel %vm5338, %v5329, %v5345
        %v5347 = vsel %vm5337, %v5344, %v5346
        %v5348 = vsel %vm5336, %v5326, %v5329
        %v5349 = vsel %vm5339, %v5335, 1326507024
        %v5350 = vsel %vm5338, %v5332, %v5349
        %v5351 = vsel %vm5337, %v5348, %v5350
        %v5352 = vshll.u32 %v5312, 8
        %v5353 = vmul.u32.u64.compose %v5352, %v5351
        %v5354 = vextract.low.u32 %v5353
        %v5355 = vextract.high.u32 %v5353
        %v5356 = vmul.u32.u64.compose %v5352, %v5347
        %v5357 = vextract.low.u32 %v5356
        %v5358 = vextract.high.u32 %v5356
        %v5359 = vmul.u32 %v5352, %v5343
        %v5360 = vadd.s32 %v5355, %v5357
        %vm5361 = vc.u32 %v5355, %v5357
        %v5362 = vadd.s32 %v5358, 1
        %v5363 = vsel %vm5361, %v5362, %v5358
        %v5364 = vadd.s32 %v5359, %v5363
        %v5365 = vadd.s32 %v5364, 536870912
        %v5366 = vshrl.u32 %v5365, 30
        %v5367 = vshll.u32 %v5366, 30
        %v5368 = vsub.s32 %v5364, %v5367
        %vm5369 = vcmp.lt.s32.totalorder %v5368, 0
        %v5370 = vsub.s32 0, %v5368
        %v5371 = vsel %vm5369, %v5370, %v5368
        %v5372 = vclz %v5371
        %v5373 = vsub.s32 %v5372, 2
        %vm5374 = vcmp.gt.s32.totalorder 0, %v5373
        %v5375 = vsel %vm5374, 0, %v5373
        %v5376 = vsub.s32 32, %v5375
        %v5377 = vshll.u32 %v5368, %v5375
        %v5378 = vshrl.u32 %v5360, %v5376
        %v5379 = vor.u32 %v5377, %v5378
        %v5380 = vsub.s32 4294967266, %v5375
        %v5381 = vadd.s32 %v5380, 127
        %v5382 = vshll.u32 %v5381, 23
        %v5383 = vor.u32 4788187, %v5382
        %v5384 = vand.u32 2147483647, %v5383
        %v5386 = vcvt.s32.f32 %v5379
        %v5387 = vmul.f32 %v5386, %v5384
        %v5388 = vxor.u32 %v5387, 2147483648
        %v5389 = vsel %vm5306, %v5388, %v5387
        %v5390 = vsub.s32 4, %v5366
        %v5391 = vsel %vm5306, %v5390, %v5366
        %v5392 = vsel %vm5305, %v2555, %v5389
        %v5393 = vsel %vm5305, 0, %v5391
        %v5394 = vcosq.f32.pop %v5392
        %v5395 = vsinq.f32.pop %v5392
        %vm5396 = vweird.f32 %v2555
        %v5397 = vadd.s32 %v5393, 3
        %v5398 = vand.u32 %v5397, 3
        %vm5399 = vcmp.lt.s32.totalorder %v5398, 2
        %vm5400 = vcmp.eq.s32.totalorder %v5398, 0
        %v5401 = vxor.u32 %v5395, 2147483648
        %v5402 = vsel %vm5400, %v5394, %v5401
        %vm5403 = vcmp.eq.s32.totalorder %v5398, 2
        %v5404 = vxor.u32 %v5394, 2147483648
        %v5405 = vsel %vm5403, %v5404, %v5395
        %v5406 = vsel %vm5399, %v5402, %v5405
        %v5407 = vsel %vm5396, nan, %v5406
        %v5408 = vand.u32 2147483647, %v1450
        %vm5409 = vcmp.le.f32.partialorder %v5408, 0.7853982
        %vm5410 = vcmp.lt.s32.totalorder %v1450, 0
        %v5411 = vand.u32 %v1450, 2139095040
        %v5412 = vshrl.u32 %v5411, 23
        %v5413 = vsub.s32 %v5412, 127
        %v5414 = vand.u32 2147483647, %v1450
        %v5415 = vand.u32 %v5414, 8388607
        %v5416 = vor.u32 %v5415, 8388608
        %v5417 = vsub.s32 0, %v5416
        %v5418 = vadd.s32 %v5413, 1
        %vm5419 = vcmp.gt.s32.totalorder %v5418, 0
        %v5420 = vsel %vm5419, %v5418, 0
        %v5421 = vshrl.u32 %v5420, 5
        %v5422 = vand.u32 %v5420, 31
        %v5423 = vsub.s32 32, %v5422
        %v5424 = vshrl.u32 683565275, %v5423
        %v5425 = vshll.u32 683565275, %v5422
        %v5426 = vshrl.u32 2475754826, %v5423
        %v5427 = vor.u32 %v5425, %v5426
        %v5428 = vshll.u32 2475754826, %v5422
        %v5429 = vshrl.u32 2131351028, %v5423
        %v5430 = vor.u32 %v5428, %v5429
        %v5431 = vshll.u32 2131351028, %v5422
        %v5432 = vshrl.u32 2102212464, %v5423
        %v5433 = vor.u32 %v5431, %v5432
        %v5434 = vshll.u32 2102212464, %v5422
        %v5435 = vshrl.u32 920167782, %v5423
        %v5436 = vor.u32 %v5434, %v5435
        %v5437 = vshll.u32 920167782, %v5422
        %v5438 = vshrl.u32 1326507024, %v5423
        %v5439 = vor.u32 %v5437, %v5438
        %vm5440 = vcmp.lt.s32.totalorder %v5421, 1
        %vm5441 = vcmp.lt.s32.totalorder %v5421, 2
        %vm5442 = vcmp.lt.s32.totalorder %v5421, 3
        %vm5443 = vcmp.lt.s32.totalorder %v5421, 4
        %v5444 = vsel %vm5440, %v5424, %v5427
        %v5445 = vsel %vm5443, %v5433, 2102212464
        %v5446 = vsel %vm5442, %v5430, %v5445
        %v5447 = vsel %vm5441, %v5444, %v5446
        %v5448 = vsel %vm5440, %v5427, %v5430
        %v5449 = vsel %vm5443, %v5436, 920167782
        %v5450 = vsel %vm5442, %v5433, %v5449
        %v5451 = vsel %vm5441, %v5448, %v5450
        %v5452 = vsel %vm5440, %v5430, %v5433
        %v5453 = vsel %vm5443, %v5439, 1326507024
        %v5454 = vsel %vm5442, %v5436, %v5453
        %v5455 = vsel %vm5441, %v5452, %v5454
        %v5456 = vshll.u32 %v5416, 8
        %v5457 = vmul.u32.u64.compose %v5456, %v5455
        %v5458 = vextract.low.u32 %v5457
        %v5459 = vextract.high.u32 %v5457
        %v5460 = vmul.u32.u64.compose %v5456, %v5451
        %v5461 = vextract.low.u32 %v5460
        %v5462 = vextract.high.u32 %v5460
        %v5463 = vmul.u32 %v5456, %v5447
        %v5464 = vadd.s32 %v5459, %v5461
        %vm5465 = vc.u32 %v5459, %v5461
        %v5466 = vadd.s32 %v5462, 1
        %v5467 = vsel %vm5465, %v5466, %v5462
        %v5468 = vadd.s32 %v5463, %v5467
        %v5469 = vadd.s32 %v5468, 536870912
        %v5470 = vshrl.u32 %v5469, 30
        %v5471 = vshll.u32 %v5470, 30
        %v5472 = vsub.s32 %v5468, %v5471
        %vm5473 = vcmp.lt.s32.totalorder %v5472, 0
        %v5474 = vsub.s32 0, %v5472
        %v5475 = vsel %vm5473, %v5474, %v5472
        %v5476 = vclz %v5475
        %v5477 = vsub.s32 %v5476, 2
        %vm5478 = vcmp.gt.s32.totalorder 0, %v5477
        %v5479 = vsel %vm5478, 0, %v5477
        %v5480 = vsub.s32 32, %v5479
        %v5481 = vshll.u32 %v5472, %v5479
        %v5482 = vshrl.u32 %v5464, %v5480
        %v5483 = vor.u32 %v5481, %v5482
        %v5484 = vsub.s32 4294967266, %v5479
        %v5485 = vadd.s32 %v5484, 127
        %v5486 = vshll.u32 %v5485, 23
        %v5487 = vor.u32 4788187, %v5486
        %v5488 = vand.u32 2147483647, %v5487
        %v5490 = vcvt.s32.f32 %v5483
        %v5491 = vmul.f32 %v5490, %v5488
        %v5492 = vxor.u32 %v5491, 2147483648
        %v5493 = vsel %vm5410, %v5492, %v5491
        %v5494 = vsub.s32 4, %v5470
        %v5495 = vsel %vm5410, %v5494, %v5470
        %v5496 = vsel %vm5409, %v1450, %v5493
        %v5497 = vsel %vm5409, 0, %v5495
        %v5498 = vcosq.f32.pop %v5496
        %v5499 = vsinq.f32.pop %v5496
        %vm5500 = vweird.f32 %v1450
        %v5501 = vadd.s32 %v5497, 3
        %v5502 = vand.u32 %v5501, 3
        %vm5503 = vcmp.lt.s32.totalorder %v5502, 2
        %vm5504 = vcmp.eq.s32.totalorder %v5502, 0
        %v5505 = vxor.u32 %v5499, 2147483648
        %v5506 = vsel %vm5504, %v5498, %v5505
        %vm5507 = vcmp.eq.s32.totalorder %v5502, 2
        %v5508 = vxor.u32 %v5498, 2147483648
        %v5509 = vsel %vm5507, %v5508, %v5499
        %v5510 = vsel %vm5503, %v5506, %v5509
        %v5511 = vsel %vm5500, nan, %v5510
        %v5512 = vand.u32 2147483647, %v1452
        %vm5513 = vcmp.le.f32.partialorder %v5512, 0.7853982
        %vm5514 = vcmp.lt.s32.totalorder %v1452, 0
        %v5515 = vand.u32 %v1452, 2139095040
        %v5516 = vshrl.u32 %v5515, 23
        %v5517 = vsub.s32 %v5516, 127
        %v5518 = vand.u32 2147483647, %v1452
        %v5519 = vand.u32 %v5518, 8388607
        %v5520 = vor.u32 %v5519, 8388608
        %v5521 = vsub.s32 0, %v5520
        %v5522 = vadd.s32 %v5517, 1
        %vm5523 = vcmp.gt.s32.totalorder %v5522, 0
        %v5524 = vsel %vm5523, %v5522, 0
        %v5525 = vshrl.u32 %v5524, 5
        %v5526 = vand.u32 %v5524, 31
        %v5527 = vsub.s32 32, %v5526
        %v5528 = vshrl.u32 683565275, %v5527
        %v5529 = vshll.u32 683565275, %v5526
        %v5530 = vshrl.u32 2475754826, %v5527
        %v5531 = vor.u32 %v5529, %v5530
        %v5532 = vshll.u32 2475754826, %v5526
        %v5533 = vshrl.u32 2131351028, %v5527
        %v5534 = vor.u32 %v5532, %v5533
        %v5535 = vshll.u32 2131351028, %v5526
        %v5536 = vshrl.u32 2102212464, %v5527
        %v5537 = vor.u32 %v5535, %v5536
        %v5538 = vshll.u32 2102212464, %v5526
        %v5539 = vshrl.u32 920167782, %v5527
        %v5540 = vor.u32 %v5538, %v5539
        %v5541 = vshll.u32 920167782, %v5526
        %v5542 = vshrl.u32 1326507024, %v5527
        %v5543 = vor.u32 %v5541, %v5542
        %vm5544 = vcmp.lt.s32.totalorder %v5525, 1
        %vm5545 = vcmp.lt.s32.totalorder %v5525, 2
        %vm5546 = vcmp.lt.s32.totalorder %v5525, 3
        %vm5547 = vcmp.lt.s32.totalorder %v5525, 4
        %v5548 = vsel %vm5544, %v5528, %v5531
        %v5549 = vsel %vm5547, %v5537, 2102212464
        %v5550 = vsel %vm5546, %v5534, %v5549
        %v5551 = vsel %vm5545, %v5548, %v5550
        %v5552 = vsel %vm5544, %v5531, %v5534
        %v5553 = vsel %vm5547, %v5540, 920167782
        %v5554 = vsel %vm5546, %v5537, %v5553
        %v5555 = vsel %vm5545, %v5552, %v5554
        %v5556 = vsel %vm5544, %v5534, %v5537
        %v5557 = vsel %vm5547, %v5543, 1326507024
        %v5558 = vsel %vm5546, %v5540, %v5557
        %v5559 = vsel %vm5545, %v5556, %v5558
        %v5560 = vshll.u32 %v5520, 8
        %v5561 = vmul.u32.u64.compose %v5560, %v5559
        %v5562 = vextract.low.u32 %v5561
        %v5563 = vextract.high.u32 %v5561
        %v5564 = vmul.u32.u64.compose %v5560, %v5555
        %v5565 = vextract.low.u32 %v5564
        %v5566 = vextract.high.u32 %v5564
        %v5567 = vmul.u32 %v5560, %v5551
        %v5568 = vadd.s32 %v5563, %v5565
        %vm5569 = vc.u32 %v5563, %v5565
        %v5570 = vadd.s32 %v5566, 1
        %v5571 = vsel %vm5569, %v5570, %v5566
        %v5572 = vadd.s32 %v5567, %v5571
        %v5573 = vadd.s32 %v5572, 536870912
        %v5574 = vshrl.u32 %v5573, 30
        %v5575 = vshll.u32 %v5574, 30
        %v5576 = vsub.s32 %v5572, %v5575
        %vm5577 = vcmp.lt.s32.totalorder %v5576, 0
        %v5578 = vsub.s32 0, %v5576
        %v5579 = vsel %vm5577, %v5578, %v5576
        %v5580 = vclz %v5579
        %v5581 = vsub.s32 %v5580, 2
        %vm5582 = vcmp.gt.s32.totalorder 0, %v5581
        %v5583 = vsel %vm5582, 0, %v5581
        %v5584 = vsub.s32 32, %v5583
        %v5585 = vshll.u32 %v5576, %v5583
        %v5586 = vshrl.u32 %v5568, %v5584
        %v5587 = vor.u32 %v5585, %v5586
        %v5588 = vsub.s32 4294967266, %v5583
        %v5589 = vadd.s32 %v5588, 127
        %v5590 = vshll.u32 %v5589, 23
        %v5591 = vor.u32 4788187, %v5590
        %v5592 = vand.u32 2147483647, %v5591
        %v5594 = vcvt.s32.f32 %v5587
        %v5595 = vmul.f32 %v5594, %v5592
        %v5596 = vxor.u32 %v5595, 2147483648
        %v5597 = vsel %vm5514, %v5596, %v5595
        %v5598 = vsub.s32 4, %v5574
        %v5599 = vsel %vm5514, %v5598, %v5574
        %v5600 = vsel %vm5513, %v1452, %v5597
        %v5601 = vsel %vm5513, 0, %v5599
        %v5602 = vcosq.f32.pop %v5600
        %v5603 = vsinq.f32.pop %v5600
        %vm5604 = vweird.f32 %v1452
        %v5605 = vadd.s32 %v5601, 3
        %v5606 = vand.u32 %v5605, 3
        %vm5607 = vcmp.lt.s32.totalorder %v5606, 2
        %vm5608 = vcmp.eq.s32.totalorder %v5606, 0
        %v5609 = vxor.u32 %v5603, 2147483648
        %v5610 = vsel %vm5608, %v5602, %v5609
        %vm5611 = vcmp.eq.s32.totalorder %v5606, 2
        %v5612 = vxor.u32 %v5602, 2147483648
        %v5613 = vsel %vm5611, %v5612, %v5603
        %v5614 = vsel %vm5607, %v5610, %v5613
        %v5615 = vsel %vm5604, nan, %v5614
        %v5616 = vand.u32 2147483647, %v2561
        %vm5617 = vcmp.le.f32.partialorder %v5616, 0.7853982
        %vm5618 = vcmp.lt.s32.totalorder %v2561, 0
        %v5619 = vand.u32 %v2561, 2139095040
        %v5620 = vshrl.u32 %v5619, 23
        %v5621 = vsub.s32 %v5620, 127
        %v5622 = vand.u32 2147483647, %v2561
        %v5623 = vand.u32 %v5622, 8388607
        %v5624 = vor.u32 %v5623, 8388608
        %v5625 = vsub.s32 0, %v5624
        %v5626 = vadd.s32 %v5621, 1
        %vm5627 = vcmp.gt.s32.totalorder %v5626, 0
        %v5628 = vsel %vm5627, %v5626, 0
        %v5629 = vshrl.u32 %v5628, 5
        %v5630 = vand.u32 %v5628, 31
        %v5631 = vsub.s32 32, %v5630
        %v5632 = vshrl.u32 683565275, %v5631
        %v5633 = vshll.u32 683565275, %v5630
        %v5634 = vshrl.u32 2475754826, %v5631
        %v5635 = vor.u32 %v5633, %v5634
        %v5636 = vshll.u32 2475754826, %v5630
        %v5637 = vshrl.u32 2131351028, %v5631
        %v5638 = vor.u32 %v5636, %v5637
        %v5639 = vshll.u32 2131351028, %v5630
        %v5640 = vshrl.u32 2102212464, %v5631
        %v5641 = vor.u32 %v5639, %v5640
        %v5642 = vshll.u32 2102212464, %v5630
        %v5643 = vshrl.u32 920167782, %v5631
        %v5644 = vor.u32 %v5642, %v5643
        %v5645 = vshll.u32 920167782, %v5630
        %v5646 = vshrl.u32 1326507024, %v5631
        %v5647 = vor.u32 %v5645, %v5646
        %vm5648 = vcmp.lt.s32.totalorder %v5629, 1
        %vm5649 = vcmp.lt.s32.totalorder %v5629, 2
        %vm5650 = vcmp.lt.s32.totalorder %v5629, 3
        %vm5651 = vcmp.lt.s32.totalorder %v5629, 4
        %v5652 = vsel %vm5648, %v5632, %v5635
        %v5653 = vsel %vm5651, %v5641, 2102212464
        %v5654 = vsel %vm5650, %v5638, %v5653
        %v5655 = vsel %vm5649, %v5652, %v5654
        %v5656 = vsel %vm5648, %v5635, %v5638
        %v5657 = vsel %vm5651, %v5644, 920167782
        %v5658 = vsel %vm5650, %v5641, %v5657
        %v5659 = vsel %vm5649, %v5656, %v5658
        %v5660 = vsel %vm5648, %v5638, %v5641
        %v5661 = vsel %vm5651, %v5647, 1326507024
        %v5662 = vsel %vm5650, %v5644, %v5661
        %v5663 = vsel %vm5649, %v5660, %v5662
        %v5664 = vshll.u32 %v5624, 8
        %v5665 = vmul.u32.u64.compose %v5664, %v5663
        %v5666 = vextract.low.u32 %v5665
        %v5667 = vextract.high.u32 %v5665
        %v5668 = vmul.u32.u64.compose %v5664, %v5659
        %v5669 = vextract.low.u32 %v5668
        %v5670 = vextract.high.u32 %v5668
        %v5671 = vmul.u32 %v5664, %v5655
        %v5672 = vadd.s32 %v5667, %v5669
        %vm5673 = vc.u32 %v5667, %v5669
        %v5674 = vadd.s32 %v5670, 1
        %v5675 = vsel %vm5673, %v5674, %v5670
        %v5676 = vadd.s32 %v5671, %v5675
        %v5677 = vadd.s32 %v5676, 536870912
        %v5678 = vshrl.u32 %v5677, 30
        %v5679 = vshll.u32 %v5678, 30
        %v5680 = vsub.s32 %v5676, %v5679
        %vm5681 = vcmp.lt.s32.totalorder %v5680, 0
        %v5682 = vsub.s32 0, %v5680
        %v5683 = vsel %vm5681, %v5682, %v5680
        %v5684 = vclz %v5683
        %v5685 = vsub.s32 %v5684, 2
        %vm5686 = vcmp.gt.s32.totalorder 0, %v5685
        %v5687 = vsel %vm5686, 0, %v5685
        %v5688 = vsub.s32 32, %v5687
        %v5689 = vshll.u32 %v5680, %v5687
        %v5690 = vshrl.u32 %v5672, %v5688
        %v5691 = vor.u32 %v5689, %v5690
        %v5692 = vsub.s32 4294967266, %v5687
        %v5693 = vadd.s32 %v5692, 127
        %v5694 = vshll.u32 %v5693, 23
        %v5695 = vor.u32 4788187, %v5694
        %v5696 = vand.u32 2147483647, %v5695
        %v5698 = vcvt.s32.f32 %v5691
        %v5699 = vmul.f32 %v5698, %v5696
        %v5700 = vxor.u32 %v5699, 2147483648
        %v5701 = vsel %vm5618, %v5700, %v5699
        %v5702 = vsub.s32 4, %v5678
        %v5703 = vsel %vm5618, %v5702, %v5678
        %v5704 = vsel %vm5617, %v2561, %v5701
        %v5705 = vsel %vm5617, 0, %v5703
        %v5706 = vcosq.f32.pop %v5704
        %v5707 = vsinq.f32.pop %v5704
        %vm5708 = vweird.f32 %v2561
        %v5709 = vadd.s32 %v5705, 3
        %v5710 = vand.u32 %v5709, 3
        %vm5711 = vcmp.lt.s32.totalorder %v5710, 2
        %vm5712 = vcmp.eq.s32.totalorder %v5710, 0
        %v5713 = vxor.u32 %v5707, 2147483648
        %v5714 = vsel %vm5712, %v5706, %v5713
        %vm5715 = vcmp.eq.s32.totalorder %v5710, 2
        %v5716 = vxor.u32 %v5706, 2147483648
        %v5717 = vsel %vm5715, %v5716, %v5707
        %v5718 = vsel %vm5711, %v5714, %v5717
        %v5719 = vsel %vm5708, nan, %v5718
        %v5720 = vand.u32 2147483647, %v1457
        %vm5721 = vcmp.le.f32.partialorder %v5720, 0.7853982
        %vm5722 = vcmp.lt.s32.totalorder %v1457, 0
        %v5723 = vand.u32 %v1457, 2139095040
        %v5724 = vshrl.u32 %v5723, 23
        %v5725 = vsub.s32 %v5724, 127
        %v5726 = vand.u32 2147483647, %v1457
        %v5727 = vand.u32 %v5726, 8388607
        %v5728 = vor.u32 %v5727, 8388608
        %v5729 = vsub.s32 0, %v5728
        %v5730 = vadd.s32 %v5725, 1
        %vm5731 = vcmp.gt.s32.totalorder %v5730, 0
        %v5732 = vsel %vm5731, %v5730, 0
        %v5733 = vshrl.u32 %v5732, 5
        %v5734 = vand.u32 %v5732, 31
        %v5735 = vsub.s32 32, %v5734
        %v5736 = vshrl.u32 683565275, %v5735
        %v5737 = vshll.u32 683565275, %v5734
        %v5738 = vshrl.u32 2475754826, %v5735
        %v5739 = vor.u32 %v5737, %v5738
        %v5740 = vshll.u32 2475754826, %v5734
        %v5741 = vshrl.u32 2131351028, %v5735
        %v5742 = vor.u32 %v5740, %v5741
        %v5743 = vshll.u32 2131351028, %v5734
        %v5744 = vshrl.u32 2102212464, %v5735
        %v5745 = vor.u32 %v5743, %v5744
        %v5746 = vshll.u32 2102212464, %v5734
        %v5747 = vshrl.u32 920167782, %v5735
        %v5748 = vor.u32 %v5746, %v5747
        %v5749 = vshll.u32 920167782, %v5734
        %v5750 = vshrl.u32 1326507024, %v5735
        %v5751 = vor.u32 %v5749, %v5750
        %vm5752 = vcmp.lt.s32.totalorder %v5733, 1
        %vm5753 = vcmp.lt.s32.totalorder %v5733, 2
        %vm5754 = vcmp.lt.s32.totalorder %v5733, 3
        %vm5755 = vcmp.lt.s32.totalorder %v5733, 4
        %v5756 = vsel %vm5752, %v5736, %v5739
        %v5757 = vsel %vm5755, %v5745, 2102212464
        %v5758 = vsel %vm5754, %v5742, %v5757
        %v5759 = vsel %vm5753, %v5756, %v5758
        %v5760 = vsel %vm5752, %v5739, %v5742
        %v5761 = vsel %vm5755, %v5748, 920167782
        %v5762 = vsel %vm5754, %v5745, %v5761
        %v5763 = vsel %vm5753, %v5760, %v5762
        %v5764 = vsel %vm5752, %v5742, %v5745
        %v5765 = vsel %vm5755, %v5751, 1326507024
        %v5766 = vsel %vm5754, %v5748, %v5765
        %v5767 = vsel %vm5753, %v5764, %v5766
        %v5768 = vshll.u32 %v5728, 8
        %v5769 = vmul.u32.u64.compose %v5768, %v5767
        %v5770 = vextract.low.u32 %v5769
        %v5771 = vextract.high.u32 %v5769
        %v5772 = vmul.u32.u64.compose %v5768, %v5763
        %v5773 = vextract.low.u32 %v5772
        %v5774 = vextract.high.u32 %v5772
        %v5775 = vmul.u32 %v5768, %v5759
        %v5776 = vadd.s32 %v5771, %v5773
        %vm5777 = vc.u32 %v5771, %v5773
        %v5778 = vadd.s32 %v5774, 1
        %v5779 = vsel %vm5777, %v5778, %v5774
        %v5780 = vadd.s32 %v5775, %v5779
        %v5781 = vadd.s32 %v5780, 536870912
        %v5782 = vshrl.u32 %v5781, 30
        %v5783 = vshll.u32 %v5782, 30
        %v5784 = vsub.s32 %v5780, %v5783
        %vm5785 = vcmp.lt.s32.totalorder %v5784, 0
        %v5786 = vsub.s32 0, %v5784
        %v5787 = vsel %vm5785, %v5786, %v5784
        %v5788 = vclz %v5787
        %v5789 = vsub.s32 %v5788, 2
        %vm5790 = vcmp.gt.s32.totalorder 0, %v5789
        %v5791 = vsel %vm5790, 0, %v5789
        %v5792 = vsub.s32 32, %v5791
        %v5793 = vshll.u32 %v5784, %v5791
        %v5794 = vshrl.u32 %v5776, %v5792
        %v5795 = vor.u32 %v5793, %v5794
        %v5796 = vsub.s32 4294967266, %v5791
        %v5797 = vadd.s32 %v5796, 127
        %v5798 = vshll.u32 %v5797, 23
        %v5799 = vor.u32 4788187, %v5798
        %v5800 = vand.u32 2147483647, %v5799
        %v5802 = vcvt.s32.f32 %v5795
        %v5803 = vmul.f32 %v5802, %v5800
        %v5804 = vxor.u32 %v5803, 2147483648
        %v5805 = vsel %vm5722, %v5804, %v5803
        %v5806 = vsub.s32 4, %v5782
        %v5807 = vsel %vm5722, %v5806, %v5782
        %v5808 = vsel %vm5721, %v1457, %v5805
        %v5809 = vsel %vm5721, 0, %v5807
        %v5810 = vcosq.f32.pop %v5808
        %v5811 = vsinq.f32.pop %v5808
        %vm5812 = vweird.f32 %v1457
        %v5813 = vadd.s32 %v5809, 3
        %v5814 = vand.u32 %v5813, 3
        %vm5815 = vcmp.lt.s32.totalorder %v5814, 2
        %vm5816 = vcmp.eq.s32.totalorder %v5814, 0
        %v5817 = vxor.u32 %v5811, 2147483648
        %v5818 = vsel %vm5816, %v5810, %v5817
        %vm5819 = vcmp.eq.s32.totalorder %v5814, 2
        %v5820 = vxor.u32 %v5810, 2147483648
        %v5821 = vsel %vm5819, %v5820, %v5811
        %v5822 = vsel %vm5815, %v5818, %v5821
        %v5823 = vsel %vm5812, nan, %v5822
        %v5824 = vand.u32 2147483647, %v1459
        %vm5825 = vcmp.le.f32.partialorder %v5824, 0.7853982
        %vm5826 = vcmp.lt.s32.totalorder %v1459, 0
        %v5827 = vand.u32 %v1459, 2139095040
        %v5828 = vshrl.u32 %v5827, 23
        %v5829 = vsub.s32 %v5828, 127
        %v5830 = vand.u32 2147483647, %v1459
        %v5831 = vand.u32 %v5830, 8388607
        %v5832 = vor.u32 %v5831, 8388608
        %v5833 = vsub.s32 0, %v5832
        %v5834 = vadd.s32 %v5829, 1
        %vm5835 = vcmp.gt.s32.totalorder %v5834, 0
        %v5836 = vsel %vm5835, %v5834, 0
        %v5837 = vshrl.u32 %v5836, 5
        %v5838 = vand.u32 %v5836, 31
        %v5839 = vsub.s32 32, %v5838
        %v5840 = vshrl.u32 683565275, %v5839
        %v5841 = vshll.u32 683565275, %v5838
        %v5842 = vshrl.u32 2475754826, %v5839
        %v5843 = vor.u32 %v5841, %v5842
        %v5844 = vshll.u32 2475754826, %v5838
        %v5845 = vshrl.u32 2131351028, %v5839
        %v5846 = vor.u32 %v5844, %v5845
        %v5847 = vshll.u32 2131351028, %v5838
        %v5848 = vshrl.u32 2102212464, %v5839
        %v5849 = vor.u32 %v5847, %v5848
        %v5850 = vshll.u32 2102212464, %v5838
        %v5851 = vshrl.u32 920167782, %v5839
        %v5852 = vor.u32 %v5850, %v5851
        %v5853 = vshll.u32 920167782, %v5838
        %v5854 = vshrl.u32 1326507024, %v5839
        %v5855 = vor.u32 %v5853, %v5854
        %vm5856 = vcmp.lt.s32.totalorder %v5837, 1
        %vm5857 = vcmp.lt.s32.totalorder %v5837, 2
        %vm5858 = vcmp.lt.s32.totalorder %v5837, 3
        %vm5859 = vcmp.lt.s32.totalorder %v5837, 4
        %v5860 = vsel %vm5856, %v5840, %v5843
        %v5861 = vsel %vm5859, %v5849, 2102212464
        %v5862 = vsel %vm5858, %v5846, %v5861
        %v5863 = vsel %vm5857, %v5860, %v5862
        %v5864 = vsel %vm5856, %v5843, %v5846
        %v5865 = vsel %vm5859, %v5852, 920167782
        %v5866 = vsel %vm5858, %v5849, %v5865
        %v5867 = vsel %vm5857, %v5864, %v5866
        %v5868 = vsel %vm5856, %v5846, %v5849
        %v5869 = vsel %vm5859, %v5855, 1326507024
        %v5870 = vsel %vm5858, %v5852, %v5869
        %v5871 = vsel %vm5857, %v5868, %v5870
        %v5872 = vshll.u32 %v5832, 8
        %v5873 = vmul.u32.u64.compose %v5872, %v5871
        %v5874 = vextract.low.u32 %v5873
        %v5875 = vextract.high.u32 %v5873
        %v5876 = vmul.u32.u64.compose %v5872, %v5867
        %v5877 = vextract.low.u32 %v5876
        %v5878 = vextract.high.u32 %v5876
        %v5879 = vmul.u32 %v5872, %v5863
        %v5880 = vadd.s32 %v5875, %v5877
        %vm5881 = vc.u32 %v5875, %v5877
        %v5882 = vadd.s32 %v5878, 1
        %v5883 = vsel %vm5881, %v5882, %v5878
        %v5884 = vadd.s32 %v5879, %v5883
        %v5885 = vadd.s32 %v5884, 536870912
        %v5886 = vshrl.u32 %v5885, 30
        %v5887 = vshll.u32 %v5886, 30
        %v5888 = vsub.s32 %v5884, %v5887
        %vm5889 = vcmp.lt.s32.totalorder %v5888, 0
        %v5890 = vsub.s32 0, %v5888
        %v5891 = vsel %vm5889, %v5890, %v5888
        %v5892 = vclz %v5891
        %v5893 = vsub.s32 %v5892, 2
        %vm5894 = vcmp.gt.s32.totalorder 0, %v5893
        %v5895 = vsel %vm5894, 0, %v5893
        %v5896 = vsub.s32 32, %v5895
        %v5897 = vshll.u32 %v5888, %v5895
        %v5898 = vshrl.u32 %v5880, %v5896
        %v5899 = vor.u32 %v5897, %v5898
        %v5900 = vsub.s32 4294967266, %v5895
        %v5901 = vadd.s32 %v5900, 127
        %v5902 = vshll.u32 %v5901, 23
        %v5903 = vor.u32 4788187, %v5902
        %v5904 = vand.u32 2147483647, %v5903
        %v5906 = vcvt.s32.f32 %v5899
        %v5907 = vmul.f32 %v5906, %v5904
        %v5908 = vxor.u32 %v5907, 2147483648
        %v5909 = vsel %vm5826, %v5908, %v5907
        %v5910 = vsub.s32 4, %v5886
        %v5911 = vsel %vm5826, %v5910, %v5886
        %v5912 = vsel %vm5825, %v1459, %v5909
        %v5913 = vsel %vm5825, 0, %v5911
        %v5914 = vcosq.f32.pop %v5912
        %v5915 = vsinq.f32.pop %v5912
        %vm5916 = vweird.f32 %v1459
        %v5917 = vadd.s32 %v5913, 3
        %v5918 = vand.u32 %v5917, 3
        %vm5919 = vcmp.lt.s32.totalorder %v5918, 2
        %vm5920 = vcmp.eq.s32.totalorder %v5918, 0
        %v5921 = vxor.u32 %v5915, 2147483648
        %v5922 = vsel %vm5920, %v5914, %v5921
        %vm5923 = vcmp.eq.s32.totalorder %v5918, 2
        %v5924 = vxor.u32 %v5914, 2147483648
        %v5925 = vsel %vm5923, %v5924, %v5915
        %v5926 = vsel %vm5919, %v5922, %v5925
        %v5927 = vsel %vm5916, nan, %v5926
        %v5928 = vand.u32 2147483647, %v2567
        %vm5929 = vcmp.le.f32.partialorder %v5928, 0.7853982
        %vm5930 = vcmp.lt.s32.totalorder %v2567, 0
        %v5931 = vand.u32 %v2567, 2139095040
        %v5932 = vshrl.u32 %v5931, 23
        %v5933 = vsub.s32 %v5932, 127
        %v5934 = vand.u32 2147483647, %v2567
        %v5935 = vand.u32 %v5934, 8388607
        %v5936 = vor.u32 %v5935, 8388608
        %v5937 = vsub.s32 0, %v5936
        %v5938 = vadd.s32 %v5933, 1
        %vm5939 = vcmp.gt.s32.totalorder %v5938, 0
        %v5940 = vsel %vm5939, %v5938, 0
        %v5941 = vshrl.u32 %v5940, 5
        %v5942 = vand.u32 %v5940, 31
        %v5943 = vsub.s32 32, %v5942
        %v5944 = vshrl.u32 683565275, %v5943
        %v5945 = vshll.u32 683565275, %v5942
        %v5946 = vshrl.u32 2475754826, %v5943
        %v5947 = vor.u32 %v5945, %v5946
        %v5948 = vshll.u32 2475754826, %v5942
        %v5949 = vshrl.u32 2131351028, %v5943
        %v5950 = vor.u32 %v5948, %v5949
        %v5951 = vshll.u32 2131351028, %v5942
        %v5952 = vshrl.u32 2102212464, %v5943
        %v5953 = vor.u32 %v5951, %v5952
        %v5954 = vshll.u32 2102212464, %v5942
        %v5955 = vshrl.u32 920167782, %v5943
        %v5956 = vor.u32 %v5954, %v5955
        %v5957 = vshll.u32 920167782, %v5942
        %v5958 = vshrl.u32 1326507024, %v5943
        %v5959 = vor.u32 %v5957, %v5958
        %vm5960 = vcmp.lt.s32.totalorder %v5941, 1
        %vm5961 = vcmp.lt.s32.totalorder %v5941, 2
        %vm5962 = vcmp.lt.s32.totalorder %v5941, 3
        %vm5963 = vcmp.lt.s32.totalorder %v5941, 4
        %v5964 = vsel %vm5960, %v5944, %v5947
        %v5965 = vsel %vm5963, %v5953, 2102212464
        %v5966 = vsel %vm5962, %v5950, %v5965
        %v5967 = vsel %vm5961, %v5964, %v5966
        %v5968 = vsel %vm5960, %v5947, %v5950
        %v5969 = vsel %vm5963, %v5956, 920167782
        %v5970 = vsel %vm5962, %v5953, %v5969
        %v5971 = vsel %vm5961, %v5968, %v5970
        %v5972 = vsel %vm5960, %v5950, %v5953
        %v5973 = vsel %vm5963, %v5959, 1326507024
        %v5974 = vsel %vm5962, %v5956, %v5973
        %v5975 = vsel %vm5961, %v5972, %v5974
        %v5976 = vshll.u32 %v5936, 8
        %v5977 = vmul.u32.u64.compose %v5976, %v5975
        %v5978 = vextract.low.u32 %v5977
        %v5979 = vextract.high.u32 %v5977
        %v5980 = vmul.u32.u64.compose %v5976, %v5971
        %v5981 = vextract.low.u32 %v5980
        %v5982 = vextract.high.u32 %v5980
        %v5983 = vmul.u32 %v5976, %v5967
        %v5984 = vadd.s32 %v5979, %v5981
        %vm5985 = vc.u32 %v5979, %v5981
        %v5986 = vadd.s32 %v5982, 1
        %v5987 = vsel %vm5985, %v5986, %v5982
        %v5988 = vadd.s32 %v5983, %v5987
        %v5989 = vadd.s32 %v5988, 536870912
        %v5990 = vshrl.u32 %v5989, 30
        %v5991 = vshll.u32 %v5990, 30
        %v5992 = vsub.s32 %v5988, %v5991
        %vm5993 = vcmp.lt.s32.totalorder %v5992, 0
        %v5994 = vsub.s32 0, %v5992
        %v5995 = vsel %vm5993, %v5994, %v5992
        %v5996 = vclz %v5995
        %v5997 = vsub.s32 %v5996, 2
        %vm5998 = vcmp.gt.s32.totalorder 0, %v5997
        %v5999 = vsel %vm5998, 0, %v5997
        %v6000 = vsub.s32 32, %v5999
        %v6001 = vshll.u32 %v5992, %v5999
        %v6002 = vshrl.u32 %v5984, %v6000
        %v6003 = vor.u32 %v6001, %v6002
        %v6004 = vsub.s32 4294967266, %v5999
        %v6005 = vadd.s32 %v6004, 127
        %v6006 = vshll.u32 %v6005, 23
        %v6007 = vor.u32 4788187, %v6006
        %v6008 = vand.u32 2147483647, %v6007
        %v6010 = vcvt.s32.f32 %v6003
        %v6011 = vmul.f32 %v6010, %v6008
        %v6012 = vxor.u32 %v6011, 2147483648
        %v6013 = vsel %vm5930, %v6012, %v6011
        %v6014 = vsub.s32 4, %v5990
        %v6015 = vsel %vm5930, %v6014, %v5990
        %v6016 = vsel %vm5929, %v2567, %v6013
        %v6017 = vsel %vm5929, 0, %v6015
        %v6018 = vcosq.f32.pop %v6016
        %v6019 = vsinq.f32.pop %v6016
        %vm6020 = vweird.f32 %v2567
        %v6021 = vadd.s32 %v6017, 3
        %v6022 = vand.u32 %v6021, 3
        %vm6023 = vcmp.lt.s32.totalorder %v6022, 2
        %vm6024 = vcmp.eq.s32.totalorder %v6022, 0
        %v6025 = vxor.u32 %v6019, 2147483648
        %v6026 = vsel %vm6024, %v6018, %v6025
        %vm6027 = vcmp.eq.s32.totalorder %v6022, 2
        %v6028 = vxor.u32 %v6018, 2147483648
        %v6029 = vsel %vm6027, %v6028, %v6019
        %v6030 = vsel %vm6023, %v6026, %v6029
        %v6031 = vsel %vm6020, nan, %v6030
        %v6032 = vand.u32 2147483647, %v1464
        %vm6033 = vcmp.le.f32.partialorder %v6032, 0.7853982
        %vm6034 = vcmp.lt.s32.totalorder %v1464, 0
        %v6035 = vand.u32 %v1464, 2139095040
        %v6036 = vshrl.u32 %v6035, 23
        %v6037 = vsub.s32 %v6036, 127
        %v6038 = vand.u32 2147483647, %v1464
        %v6039 = vand.u32 %v6038, 8388607
        %v6040 = vor.u32 %v6039, 8388608
        %v6041 = vsub.s32 0, %v6040
        %v6042 = vadd.s32 %v6037, 1
        %vm6043 = vcmp.gt.s32.totalorder %v6042, 0
        %v6044 = vsel %vm6043, %v6042, 0
        %v6045 = vshrl.u32 %v6044, 5
        %v6046 = vand.u32 %v6044, 31
        %v6047 = vsub.s32 32, %v6046
        %v6048 = vshrl.u32 683565275, %v6047
        %v6049 = vshll.u32 683565275, %v6046
        %v6050 = vshrl.u32 2475754826, %v6047
        %v6051 = vor.u32 %v6049, %v6050
        %v6052 = vshll.u32 2475754826, %v6046
        %v6053 = vshrl.u32 2131351028, %v6047
        %v6054 = vor.u32 %v6052, %v6053
        %v6055 = vshll.u32 2131351028, %v6046
        %v6056 = vshrl.u32 2102212464, %v6047
        %v6057 = vor.u32 %v6055, %v6056
        %v6058 = vshll.u32 2102212464, %v6046
        %v6059 = vshrl.u32 920167782, %v6047
        %v6060 = vor.u32 %v6058, %v6059
        %v6061 = vshll.u32 920167782, %v6046
        %v6062 = vshrl.u32 1326507024, %v6047
        %v6063 = vor.u32 %v6061, %v6062
        %vm6064 = vcmp.lt.s32.totalorder %v6045, 1
        %vm6065 = vcmp.lt.s32.totalorder %v6045, 2
        %vm6066 = vcmp.lt.s32.totalorder %v6045, 3
        %vm6067 = vcmp.lt.s32.totalorder %v6045, 4
        %v6068 = vsel %vm6064, %v6048, %v6051
        %v6069 = vsel %vm6067, %v6057, 2102212464
        %v6070 = vsel %vm6066, %v6054, %v6069
        %v6071 = vsel %vm6065, %v6068, %v6070
        %v6072 = vsel %vm6064, %v6051, %v6054
        %v6073 = vsel %vm6067, %v6060, 920167782
        %v6074 = vsel %vm6066, %v6057, %v6073
        %v6075 = vsel %vm6065, %v6072, %v6074
        %v6076 = vsel %vm6064, %v6054, %v6057
        %v6077 = vsel %vm6067, %v6063, 1326507024
        %v6078 = vsel %vm6066, %v6060, %v6077
        %v6079 = vsel %vm6065, %v6076, %v6078
        %v6080 = vshll.u32 %v6040, 8
        %v6081 = vmul.u32.u64.compose %v6080, %v6079
        %v6082 = vextract.low.u32 %v6081
        %v6083 = vextract.high.u32 %v6081
        %v6084 = vmul.u32.u64.compose %v6080, %v6075
        %v6085 = vextract.low.u32 %v6084
        %v6086 = vextract.high.u32 %v6084
        %v6087 = vmul.u32 %v6080, %v6071
        %v6088 = vadd.s32 %v6083, %v6085
        %vm6089 = vc.u32 %v6083, %v6085
        %v6090 = vadd.s32 %v6086, 1
        %v6091 = vsel %vm6089, %v6090, %v6086
        %v6092 = vadd.s32 %v6087, %v6091
        %v6093 = vadd.s32 %v6092, 536870912
        %v6094 = vshrl.u32 %v6093, 30
        %v6095 = vshll.u32 %v6094, 30
        %v6096 = vsub.s32 %v6092, %v6095
        %vm6097 = vcmp.lt.s32.totalorder %v6096, 0
        %v6098 = vsub.s32 0, %v6096
        %v6099 = vsel %vm6097, %v6098, %v6096
        %v6100 = vclz %v6099
        %v6101 = vsub.s32 %v6100, 2
        %vm6102 = vcmp.gt.s32.totalorder 0, %v6101
        %v6103 = vsel %vm6102, 0, %v6101
        %v6104 = vsub.s32 32, %v6103
        %v6105 = vshll.u32 %v6096, %v6103
        %v6106 = vshrl.u32 %v6088, %v6104
        %v6107 = vor.u32 %v6105, %v6106
        %v6108 = vsub.s32 4294967266, %v6103
        %v6109 = vadd.s32 %v6108, 127
        %v6110 = vshll.u32 %v6109, 23
        %v6111 = vor.u32 4788187, %v6110
        %v6112 = vand.u32 2147483647, %v6111
        %v6114 = vcvt.s32.f32 %v6107
        %v6115 = vmul.f32 %v6114, %v6112
        %v6116 = vxor.u32 %v6115, 2147483648
        %v6117 = vsel %vm6034, %v6116, %v6115
        %v6118 = vsub.s32 4, %v6094
        %v6119 = vsel %vm6034, %v6118, %v6094
        %v6120 = vsel %vm6033, %v1464, %v6117
        %v6121 = vsel %vm6033, 0, %v6119
        %v6122 = vcosq.f32.pop %v6120
        %v6123 = vsinq.f32.pop %v6120
        %vm6124 = vweird.f32 %v1464
        %v6125 = vadd.s32 %v6121, 3
        %v6126 = vand.u32 %v6125, 3
        %vm6127 = vcmp.lt.s32.totalorder %v6126, 2
        %vm6128 = vcmp.eq.s32.totalorder %v6126, 0
        %v6129 = vxor.u32 %v6123, 2147483648
        %v6130 = vsel %vm6128, %v6122, %v6129
        %vm6131 = vcmp.eq.s32.totalorder %v6126, 2
        %v6132 = vxor.u32 %v6122, 2147483648
        %v6133 = vsel %vm6131, %v6132, %v6123
        %v6134 = vsel %vm6127, %v6130, %v6133
        %v6135 = vsel %vm6124, nan, %v6134
        %v6136 = vand.u32 2147483647, %v1466
        %vm6137 = vcmp.le.f32.partialorder %v6136, 0.7853982
        %vm6138 = vcmp.lt.s32.totalorder %v1466, 0
        %v6139 = vand.u32 %v1466, 2139095040
        %v6140 = vshrl.u32 %v6139, 23
        %v6141 = vsub.s32 %v6140, 127
        %v6142 = vand.u32 2147483647, %v1466
        %v6143 = vand.u32 %v6142, 8388607
        %v6144 = vor.u32 %v6143, 8388608
        %v6145 = vsub.s32 0, %v6144
        %v6146 = vadd.s32 %v6141, 1
        %vm6147 = vcmp.gt.s32.totalorder %v6146, 0
        %v6148 = vsel %vm6147, %v6146, 0
        %v6149 = vshrl.u32 %v6148, 5
        %v6150 = vand.u32 %v6148, 31
        %v6151 = vsub.s32 32, %v6150
        %v6152 = vshrl.u32 683565275, %v6151
        %v6153 = vshll.u32 683565275, %v6150
        %v6154 = vshrl.u32 2475754826, %v6151
        %v6155 = vor.u32 %v6153, %v6154
        %v6156 = vshll.u32 2475754826, %v6150
        %v6157 = vshrl.u32 2131351028, %v6151
        %v6158 = vor.u32 %v6156, %v6157
        %v6159 = vshll.u32 2131351028, %v6150
        %v6160 = vshrl.u32 2102212464, %v6151
        %v6161 = vor.u32 %v6159, %v6160
        %v6162 = vshll.u32 2102212464, %v6150
        %v6163 = vshrl.u32 920167782, %v6151
        %v6164 = vor.u32 %v6162, %v6163
        %v6165 = vshll.u32 920167782, %v6150
        %v6166 = vshrl.u32 1326507024, %v6151
        %v6167 = vor.u32 %v6165, %v6166
        %vm6168 = vcmp.lt.s32.totalorder %v6149, 1
        %vm6169 = vcmp.lt.s32.totalorder %v6149, 2
        %vm6170 = vcmp.lt.s32.totalorder %v6149, 3
        %vm6171 = vcmp.lt.s32.totalorder %v6149, 4
        %v6172 = vsel %vm6168, %v6152, %v6155
        %v6173 = vsel %vm6171, %v6161, 2102212464
        %v6174 = vsel %vm6170, %v6158, %v6173
        %v6175 = vsel %vm6169, %v6172, %v6174
        %v6176 = vsel %vm6168, %v6155, %v6158
        %v6177 = vsel %vm6171, %v6164, 920167782
        %v6178 = vsel %vm6170, %v6161, %v6177
        %v6179 = vsel %vm6169, %v6176, %v6178
        %v6180 = vsel %vm6168, %v6158, %v6161
        %v6181 = vsel %vm6171, %v6167, 1326507024
        %v6182 = vsel %vm6170, %v6164, %v6181
        %v6183 = vsel %vm6169, %v6180, %v6182
        %v6184 = vshll.u32 %v6144, 8
        %v6185 = vmul.u32.u64.compose %v6184, %v6183
        %v6186 = vextract.low.u32 %v6185
        %v6187 = vextract.high.u32 %v6185
        %v6188 = vmul.u32.u64.compose %v6184, %v6179
        %v6189 = vextract.low.u32 %v6188
        %v6190 = vextract.high.u32 %v6188
        %v6191 = vmul.u32 %v6184, %v6175
        %v6192 = vadd.s32 %v6187, %v6189
        %vm6193 = vc.u32 %v6187, %v6189
        %v6194 = vadd.s32 %v6190, 1
        %v6195 = vsel %vm6193, %v6194, %v6190
        %v6196 = vadd.s32 %v6191, %v6195
        %v6197 = vadd.s32 %v6196, 536870912
        %v6198 = vshrl.u32 %v6197, 30
        %v6199 = vshll.u32 %v6198, 30
        %v6200 = vsub.s32 %v6196, %v6199
        %vm6201 = vcmp.lt.s32.totalorder %v6200, 0
        %v6202 = vsub.s32 0, %v6200
        %v6203 = vsel %vm6201, %v6202, %v6200
        %v6204 = vclz %v6203
        %v6205 = vsub.s32 %v6204, 2
        %vm6206 = vcmp.gt.s32.totalorder 0, %v6205
        %v6207 = vsel %vm6206, 0, %v6205
        %v6208 = vsub.s32 32, %v6207
        %v6209 = vshll.u32 %v6200, %v6207
        %v6210 = vshrl.u32 %v6192, %v6208
        %v6211 = vor.u32 %v6209, %v6210
        %v6212 = vsub.s32 4294967266, %v6207
        %v6213 = vadd.s32 %v6212, 127
        %v6214 = vshll.u32 %v6213, 23
        %v6215 = vor.u32 4788187, %v6214
        %v6216 = vand.u32 2147483647, %v6215
        %v6218 = vcvt.s32.f32 %v6211
        %v6219 = vmul.f32 %v6218, %v6216
        %v6220 = vxor.u32 %v6219, 2147483648
        %v6221 = vsel %vm6138, %v6220, %v6219
        %v6222 = vsub.s32 4, %v6198
        %v6223 = vsel %vm6138, %v6222, %v6198
        %v6224 = vsel %vm6137, %v1466, %v6221
        %v6225 = vsel %vm6137, 0, %v6223
        %v6226 = vcosq.f32.pop %v6224
        %v6227 = vsinq.f32.pop %v6224
        %vm6228 = vweird.f32 %v1466
        %v6229 = vadd.s32 %v6225, 3
        %v6230 = vand.u32 %v6229, 3
        %vm6231 = vcmp.lt.s32.totalorder %v6230, 2
        %vm6232 = vcmp.eq.s32.totalorder %v6230, 0
        %v6233 = vxor.u32 %v6227, 2147483648
        %v6234 = vsel %vm6232, %v6226, %v6233
        %vm6235 = vcmp.eq.s32.totalorder %v6230, 2
        %v6236 = vxor.u32 %v6226, 2147483648
        %v6237 = vsel %vm6235, %v6236, %v6227
        %v6238 = vsel %vm6231, %v6234, %v6237
        %v6239 = vsel %vm6228, nan, %v6238
        %v6240 = vand.u32 2147483647, %v2573
        %vm6241 = vcmp.le.f32.partialorder %v6240, 0.7853982
        %vm6242 = vcmp.lt.s32.totalorder %v2573, 0
        %v6243 = vand.u32 %v2573, 2139095040
        %v6244 = vshrl.u32 %v6243, 23
        %v6245 = vsub.s32 %v6244, 127
        %v6246 = vand.u32 2147483647, %v2573
        %v6247 = vand.u32 %v6246, 8388607
        %v6248 = vor.u32 %v6247, 8388608
        %v6249 = vsub.s32 0, %v6248
        %v6250 = vadd.s32 %v6245, 1
        %vm6251 = vcmp.gt.s32.totalorder %v6250, 0
        %v6252 = vsel %vm6251, %v6250, 0
        %v6253 = vshrl.u32 %v6252, 5
        %v6254 = vand.u32 %v6252, 31
        %v6255 = vsub.s32 32, %v6254
        %v6256 = vshrl.u32 683565275, %v6255
        %v6257 = vshll.u32 683565275, %v6254
        %v6258 = vshrl.u32 2475754826, %v6255
        %v6259 = vor.u32 %v6257, %v6258
        %v6260 = vshll.u32 2475754826, %v6254
        %v6261 = vshrl.u32 2131351028, %v6255
        %v6262 = vor.u32 %v6260, %v6261
        %v6263 = vshll.u32 2131351028, %v6254
        %v6264 = vshrl.u32 2102212464, %v6255
        %v6265 = vor.u32 %v6263, %v6264
        %v6266 = vshll.u32 2102212464, %v6254
        %v6267 = vshrl.u32 920167782, %v6255
        %v6268 = vor.u32 %v6266, %v6267
        %v6269 = vshll.u32 920167782, %v6254
        %v6270 = vshrl.u32 1326507024, %v6255
        %v6271 = vor.u32 %v6269, %v6270
        %vm6272 = vcmp.lt.s32.totalorder %v6253, 1
        %vm6273 = vcmp.lt.s32.totalorder %v6253, 2
        %vm6274 = vcmp.lt.s32.totalorder %v6253, 3
        %vm6275 = vcmp.lt.s32.totalorder %v6253, 4
        %v6276 = vsel %vm6272, %v6256, %v6259
        %v6277 = vsel %vm6275, %v6265, 2102212464
        %v6278 = vsel %vm6274, %v6262, %v6277
        %v6279 = vsel %vm6273, %v6276, %v6278
        %v6280 = vsel %vm6272, %v6259, %v6262
        %v6281 = vsel %vm6275, %v6268, 920167782
        %v6282 = vsel %vm6274, %v6265, %v6281
        %v6283 = vsel %vm6273, %v6280, %v6282
        %v6284 = vsel %vm6272, %v6262, %v6265
        %v6285 = vsel %vm6275, %v6271, 1326507024
        %v6286 = vsel %vm6274, %v6268, %v6285
        %v6287 = vsel %vm6273, %v6284, %v6286
        %v6288 = vshll.u32 %v6248, 8
        %v6289 = vmul.u32.u64.compose %v6288, %v6287
        %v6290 = vextract.low.u32 %v6289
        %v6291 = vextract.high.u32 %v6289
        %v6292 = vmul.u32.u64.compose %v6288, %v6283
        %v6293 = vextract.low.u32 %v6292
        %v6294 = vextract.high.u32 %v6292
        %v6295 = vmul.u32 %v6288, %v6279
        %v6296 = vadd.s32 %v6291, %v6293
        %vm6297 = vc.u32 %v6291, %v6293
        %v6298 = vadd.s32 %v6294, 1
        %v6299 = vsel %vm6297, %v6298, %v6294
        %v6300 = vadd.s32 %v6295, %v6299
        %v6301 = vadd.s32 %v6300, 536870912
        %v6302 = vshrl.u32 %v6301, 30
        %v6303 = vshll.u32 %v6302, 30
        %v6304 = vsub.s32 %v6300, %v6303
        %vm6305 = vcmp.lt.s32.totalorder %v6304, 0
        %v6306 = vsub.s32 0, %v6304
        %v6307 = vsel %vm6305, %v6306, %v6304
        %v6308 = vclz %v6307
        %v6309 = vsub.s32 %v6308, 2
        %vm6310 = vcmp.gt.s32.totalorder 0, %v6309
        %v6311 = vsel %vm6310, 0, %v6309
        %v6312 = vsub.s32 32, %v6311
        %v6313 = vshll.u32 %v6304, %v6311
        %v6314 = vshrl.u32 %v6296, %v6312
        %v6315 = vor.u32 %v6313, %v6314
        %v6316 = vsub.s32 4294967266, %v6311
        %v6317 = vadd.s32 %v6316, 127
        %v6318 = vshll.u32 %v6317, 23
        %v6319 = vor.u32 4788187, %v6318
        %v6320 = vand.u32 2147483647, %v6319
        %v6322 = vcvt.s32.f32 %v6315
        %v6323 = vmul.f32 %v6322, %v6320
        %v6324 = vxor.u32 %v6323, 2147483648
        %v6325 = vsel %vm6242, %v6324, %v6323
        %v6326 = vsub.s32 4, %v6302
        %v6327 = vsel %vm6242, %v6326, %v6302
        %v6328 = vsel %vm6241, %v2573, %v6325
        %v6329 = vsel %vm6241, 0, %v6327
        %v6330 = vcosq.f32.pop %v6328
        %v6331 = vsinq.f32.pop %v6328
        %vm6332 = vweird.f32 %v2573
        %v6333 = vadd.s32 %v6329, 3
        %v6334 = vand.u32 %v6333, 3
        %vm6335 = vcmp.lt.s32.totalorder %v6334, 2
        %vm6336 = vcmp.eq.s32.totalorder %v6334, 0
        %v6337 = vxor.u32 %v6331, 2147483648
        %v6338 = vsel %vm6336, %v6330, %v6337
        %vm6339 = vcmp.eq.s32.totalorder %v6334, 2
        %v6340 = vxor.u32 %v6330, 2147483648
        %v6341 = vsel %vm6339, %v6340, %v6331
        %v6342 = vsel %vm6335, %v6338, %v6341
        %v6343 = vsel %vm6332, nan, %v6342
        %v6344 = vand.u32 2147483647, %v1471
        %vm6345 = vcmp.le.f32.partialorder %v6344, 0.7853982
        %vm6346 = vcmp.lt.s32.totalorder %v1471, 0
        %v6347 = vand.u32 %v1471, 2139095040
        %v6348 = vshrl.u32 %v6347, 23
        %v6349 = vsub.s32 %v6348, 127
        %v6350 = vand.u32 2147483647, %v1471
        %v6351 = vand.u32 %v6350, 8388607
        %v6352 = vor.u32 %v6351, 8388608
        %v6353 = vsub.s32 0, %v6352
        %v6354 = vadd.s32 %v6349, 1
        %vm6355 = vcmp.gt.s32.totalorder %v6354, 0
        %v6356 = vsel %vm6355, %v6354, 0
        %v6357 = vshrl.u32 %v6356, 5
        %v6358 = vand.u32 %v6356, 31
        %v6359 = vsub.s32 32, %v6358
        %v6360 = vshrl.u32 683565275, %v6359
        %v6361 = vshll.u32 683565275, %v6358
        %v6362 = vshrl.u32 2475754826, %v6359
        %v6363 = vor.u32 %v6361, %v6362
        %v6364 = vshll.u32 2475754826, %v6358
        %v6365 = vshrl.u32 2131351028, %v6359
        %v6366 = vor.u32 %v6364, %v6365
        %v6367 = vshll.u32 2131351028, %v6358
        %v6368 = vshrl.u32 2102212464, %v6359
        %v6369 = vor.u32 %v6367, %v6368
        %v6370 = vshll.u32 2102212464, %v6358
        %v6371 = vshrl.u32 920167782, %v6359
        %v6372 = vor.u32 %v6370, %v6371
        %v6373 = vshll.u32 920167782, %v6358
        %v6374 = vshrl.u32 1326507024, %v6359
        %v6375 = vor.u32 %v6373, %v6374
        %vm6376 = vcmp.lt.s32.totalorder %v6357, 1
        %vm6377 = vcmp.lt.s32.totalorder %v6357, 2
        %vm6378 = vcmp.lt.s32.totalorder %v6357, 3
        %vm6379 = vcmp.lt.s32.totalorder %v6357, 4
        %v6380 = vsel %vm6376, %v6360, %v6363
        %v6381 = vsel %vm6379, %v6369, 2102212464
        %v6382 = vsel %vm6378, %v6366, %v6381
        %v6383 = vsel %vm6377, %v6380, %v6382
        %v6384 = vsel %vm6376, %v6363, %v6366
        %v6385 = vsel %vm6379, %v6372, 920167782
        %v6386 = vsel %vm6378, %v6369, %v6385
        %v6387 = vsel %vm6377, %v6384, %v6386
        %v6388 = vsel %vm6376, %v6366, %v6369
        %v6389 = vsel %vm6379, %v6375, 1326507024
        %v6390 = vsel %vm6378, %v6372, %v6389
        %v6391 = vsel %vm6377, %v6388, %v6390
        %v6392 = vshll.u32 %v6352, 8
        %v6393 = vmul.u32.u64.compose %v6392, %v6391
        %v6394 = vextract.low.u32 %v6393
        %v6395 = vextract.high.u32 %v6393
        %v6396 = vmul.u32.u64.compose %v6392, %v6387
        %v6397 = vextract.low.u32 %v6396
        %v6398 = vextract.high.u32 %v6396
        %v6399 = vmul.u32 %v6392, %v6383
        %v6400 = vadd.s32 %v6395, %v6397
        %vm6401 = vc.u32 %v6395, %v6397
        %v6402 = vadd.s32 %v6398, 1
        %v6403 = vsel %vm6401, %v6402, %v6398
        %v6404 = vadd.s32 %v6399, %v6403
        %v6405 = vadd.s32 %v6404, 536870912
        %v6406 = vshrl.u32 %v6405, 30
        %v6407 = vshll.u32 %v6406, 30
        %v6408 = vsub.s32 %v6404, %v6407
        %vm6409 = vcmp.lt.s32.totalorder %v6408, 0
        %v6410 = vsub.s32 0, %v6408
        %v6411 = vsel %vm6409, %v6410, %v6408
        %v6412 = vclz %v6411
        %v6413 = vsub.s32 %v6412, 2
        %vm6414 = vcmp.gt.s32.totalorder 0, %v6413
        %v6415 = vsel %vm6414, 0, %v6413
        %v6416 = vsub.s32 32, %v6415
        %v6417 = vshll.u32 %v6408, %v6415
        %v6418 = vshrl.u32 %v6400, %v6416
        %v6419 = vor.u32 %v6417, %v6418
        %v6420 = vsub.s32 4294967266, %v6415
        %v6421 = vadd.s32 %v6420, 127
        %v6422 = vshll.u32 %v6421, 23
        %v6423 = vor.u32 4788187, %v6422
        %v6424 = vand.u32 2147483647, %v6423
        %v6426 = vcvt.s32.f32 %v6419
        %v6427 = vmul.f32 %v6426, %v6424
        %v6428 = vxor.u32 %v6427, 2147483648
        %v6429 = vsel %vm6346, %v6428, %v6427
        %v6430 = vsub.s32 4, %v6406
        %v6431 = vsel %vm6346, %v6430, %v6406
        %v6432 = vsel %vm6345, %v1471, %v6429
        %v6433 = vsel %vm6345, 0, %v6431
        %v6434 = vcosq.f32.pop %v6432
        %v6435 = vsinq.f32.pop %v6432
        %vm6436 = vweird.f32 %v1471
        %v6437 = vadd.s32 %v6433, 3
        %v6438 = vand.u32 %v6437, 3
        %vm6439 = vcmp.lt.s32.totalorder %v6438, 2
        %vm6440 = vcmp.eq.s32.totalorder %v6438, 0
        %v6441 = vxor.u32 %v6435, 2147483648
        %v6442 = vsel %vm6440, %v6434, %v6441
        %vm6443 = vcmp.eq.s32.totalorder %v6438, 2
        %v6444 = vxor.u32 %v6434, 2147483648
        %v6445 = vsel %vm6443, %v6444, %v6435
        %v6446 = vsel %vm6439, %v6442, %v6445
        %v6447 = vsel %vm6436, nan, %v6446
        %v6448 = vand.u32 2147483647, %v1473
        %vm6449 = vcmp.le.f32.partialorder %v6448, 0.7853982
        %vm6450 = vcmp.lt.s32.totalorder %v1473, 0
        %v6451 = vand.u32 %v1473, 2139095040
        %v6452 = vshrl.u32 %v6451, 23
        %v6453 = vsub.s32 %v6452, 127
        %v6454 = vand.u32 2147483647, %v1473
        %v6455 = vand.u32 %v6454, 8388607
        %v6456 = vor.u32 %v6455, 8388608
        %v6457 = vsub.s32 0, %v6456
        %v6458 = vadd.s32 %v6453, 1
        %vm6459 = vcmp.gt.s32.totalorder %v6458, 0
        %v6460 = vsel %vm6459, %v6458, 0
        %v6461 = vshrl.u32 %v6460, 5
        %v6462 = vand.u32 %v6460, 31
        %v6463 = vsub.s32 32, %v6462
        %v6464 = vshrl.u32 683565275, %v6463
        %v6465 = vshll.u32 683565275, %v6462
        %v6466 = vshrl.u32 2475754826, %v6463
        %v6467 = vor.u32 %v6465, %v6466
        %v6468 = vshll.u32 2475754826, %v6462
        %v6469 = vshrl.u32 2131351028, %v6463
        %v6470 = vor.u32 %v6468, %v6469
        %v6471 = vshll.u32 2131351028, %v6462
        %v6472 = vshrl.u32 2102212464, %v6463
        %v6473 = vor.u32 %v6471, %v6472
        %v6474 = vshll.u32 2102212464, %v6462
        %v6475 = vshrl.u32 920167782, %v6463
        %v6476 = vor.u32 %v6474, %v6475
        %v6477 = vshll.u32 920167782, %v6462
        %v6478 = vshrl.u32 1326507024, %v6463
        %v6479 = vor.u32 %v6477, %v6478
        %vm6480 = vcmp.lt.s32.totalorder %v6461, 1
        %vm6481 = vcmp.lt.s32.totalorder %v6461, 2
        %vm6482 = vcmp.lt.s32.totalorder %v6461, 3
        %vm6483 = vcmp.lt.s32.totalorder %v6461, 4
        %v6484 = vsel %vm6480, %v6464, %v6467
        %v6485 = vsel %vm6483, %v6473, 2102212464
        %v6486 = vsel %vm6482, %v6470, %v6485
        %v6487 = vsel %vm6481, %v6484, %v6486
        %v6488 = vsel %vm6480, %v6467, %v6470
        %v6489 = vsel %vm6483, %v6476, 920167782
        %v6490 = vsel %vm6482, %v6473, %v6489
        %v6491 = vsel %vm6481, %v6488, %v6490
        %v6492 = vsel %vm6480, %v6470, %v6473
        %v6493 = vsel %vm6483, %v6479, 1326507024
        %v6494 = vsel %vm6482, %v6476, %v6493
        %v6495 = vsel %vm6481, %v6492, %v6494
        %v6496 = vshll.u32 %v6456, 8
        %v6497 = vmul.u32.u64.compose %v6496, %v6495
        %v6498 = vextract.low.u32 %v6497
        %v6499 = vextract.high.u32 %v6497
        %v6500 = vmul.u32.u64.compose %v6496, %v6491
        %v6501 = vextract.low.u32 %v6500
        %v6502 = vextract.high.u32 %v6500
        %v6503 = vmul.u32 %v6496, %v6487
        %v6504 = vadd.s32 %v6499, %v6501
        %vm6505 = vc.u32 %v6499, %v6501
        %v6506 = vadd.s32 %v6502, 1
        %v6507 = vsel %vm6505, %v6506, %v6502
        %v6508 = vadd.s32 %v6503, %v6507
        %v6509 = vadd.s32 %v6508, 536870912
        %v6510 = vshrl.u32 %v6509, 30
        %v6511 = vshll.u32 %v6510, 30
        %v6512 = vsub.s32 %v6508, %v6511
        %vm6513 = vcmp.lt.s32.totalorder %v6512, 0
        %v6514 = vsub.s32 0, %v6512
        %v6515 = vsel %vm6513, %v6514, %v6512
        %v6516 = vclz %v6515
        %v6517 = vsub.s32 %v6516, 2
        %vm6518 = vcmp.gt.s32.totalorder 0, %v6517
        %v6519 = vsel %vm6518, 0, %v6517
        %v6520 = vsub.s32 32, %v6519
        %v6521 = vshll.u32 %v6512, %v6519
        %v6522 = vshrl.u32 %v6504, %v6520
        %v6523 = vor.u32 %v6521, %v6522
        %v6524 = vsub.s32 4294967266, %v6519
        %v6525 = vadd.s32 %v6524, 127
        %v6526 = vshll.u32 %v6525, 23
        %v6527 = vor.u32 4788187, %v6526
        %v6528 = vand.u32 2147483647, %v6527
        %v6530 = vcvt.s32.f32 %v6523
        %v6531 = vmul.f32 %v6530, %v6528
        %v6532 = vxor.u32 %v6531, 2147483648
        %v6533 = vsel %vm6450, %v6532, %v6531
        %v6534 = vsub.s32 4, %v6510
        %v6535 = vsel %vm6450, %v6534, %v6510
        %v6536 = vsel %vm6449, %v1473, %v6533
        %v6537 = vsel %vm6449, 0, %v6535
        %v6538 = vcosq.f32.pop %v6536
        %v6539 = vsinq.f32.pop %v6536
        %vm6540 = vweird.f32 %v1473
        %v6541 = vadd.s32 %v6537, 3
        %v6542 = vand.u32 %v6541, 3
        %vm6543 = vcmp.lt.s32.totalorder %v6542, 2
        %vm6544 = vcmp.eq.s32.totalorder %v6542, 0
        %v6545 = vxor.u32 %v6539, 2147483648
        %v6546 = vsel %vm6544, %v6538, %v6545
        %vm6547 = vcmp.eq.s32.totalorder %v6542, 2
        %v6548 = vxor.u32 %v6538, 2147483648
        %v6549 = vsel %vm6547, %v6548, %v6539
        %v6550 = vsel %vm6543, %v6546, %v6549
        %v6551 = vsel %vm6540, nan, %v6550
        %v6552 = vand.u32 2147483647, %v2579
        %vm6553 = vcmp.le.f32.partialorder %v6552, 0.7853982
        %vm6554 = vcmp.lt.s32.totalorder %v2579, 0
        %v6555 = vand.u32 %v2579, 2139095040
        %v6556 = vshrl.u32 %v6555, 23
        %v6557 = vsub.s32 %v6556, 127
        %v6558 = vand.u32 2147483647, %v2579
        %v6559 = vand.u32 %v6558, 8388607
        %v6560 = vor.u32 %v6559, 8388608
        %v6561 = vsub.s32 0, %v6560
        %v6562 = vadd.s32 %v6557, 1
        %vm6563 = vcmp.gt.s32.totalorder %v6562, 0
        %v6564 = vsel %vm6563, %v6562, 0
        %v6565 = vshrl.u32 %v6564, 5
        %v6566 = vand.u32 %v6564, 31
        %v6567 = vsub.s32 32, %v6566
        %v6568 = vshrl.u32 683565275, %v6567
        %v6569 = vshll.u32 683565275, %v6566
        %v6570 = vshrl.u32 2475754826, %v6567
        %v6571 = vor.u32 %v6569, %v6570
        %v6572 = vshll.u32 2475754826, %v6566
        %v6573 = vshrl.u32 2131351028, %v6567
        %v6574 = vor.u32 %v6572, %v6573
        %v6575 = vshll.u32 2131351028, %v6566
        %v6576 = vshrl.u32 2102212464, %v6567
        %v6577 = vor.u32 %v6575, %v6576
        %v6578 = vshll.u32 2102212464, %v6566
        %v6579 = vshrl.u32 920167782, %v6567
        %v6580 = vor.u32 %v6578, %v6579
        %v6581 = vshll.u32 920167782, %v6566
        %v6582 = vshrl.u32 1326507024, %v6567
        %v6583 = vor.u32 %v6581, %v6582
        %vm6584 = vcmp.lt.s32.totalorder %v6565, 1
        %vm6585 = vcmp.lt.s32.totalorder %v6565, 2
        %vm6586 = vcmp.lt.s32.totalorder %v6565, 3
        %vm6587 = vcmp.lt.s32.totalorder %v6565, 4
        %v6588 = vsel %vm6584, %v6568, %v6571
        %v6589 = vsel %vm6587, %v6577, 2102212464
        %v6590 = vsel %vm6586, %v6574, %v6589
        %v6591 = vsel %vm6585, %v6588, %v6590
        %v6592 = vsel %vm6584, %v6571, %v6574
        %v6593 = vsel %vm6587, %v6580, 920167782
        %v6594 = vsel %vm6586, %v6577, %v6593
        %v6595 = vsel %vm6585, %v6592, %v6594
        %v6596 = vsel %vm6584, %v6574, %v6577
        %v6597 = vsel %vm6587, %v6583, 1326507024
        %v6598 = vsel %vm6586, %v6580, %v6597
        %v6599 = vsel %vm6585, %v6596, %v6598
        %v6600 = vshll.u32 %v6560, 8
        %v6601 = vmul.u32.u64.compose %v6600, %v6599
        %v6602 = vextract.low.u32 %v6601
        %v6603 = vextract.high.u32 %v6601
        %v6604 = vmul.u32.u64.compose %v6600, %v6595
        %v6605 = vextract.low.u32 %v6604
        %v6606 = vextract.high.u32 %v6604
        %v6607 = vmul.u32 %v6600, %v6591
        %v6608 = vadd.s32 %v6603, %v6605
        %vm6609 = vc.u32 %v6603, %v6605
        %v6610 = vadd.s32 %v6606, 1
        %v6611 = vsel %vm6609, %v6610, %v6606
        %v6612 = vadd.s32 %v6607, %v6611
        %v6613 = vadd.s32 %v6612, 536870912
        %v6614 = vshrl.u32 %v6613, 30
        %v6615 = vshll.u32 %v6614, 30
        %v6616 = vsub.s32 %v6612, %v6615
        %vm6617 = vcmp.lt.s32.totalorder %v6616, 0
        %v6618 = vsub.s32 0, %v6616
        %v6619 = vsel %vm6617, %v6618, %v6616
        %v6620 = vclz %v6619
        %v6621 = vsub.s32 %v6620, 2
        %vm6622 = vcmp.gt.s32.totalorder 0, %v6621
        %v6623 = vsel %vm6622, 0, %v6621
        %v6624 = vsub.s32 32, %v6623
        %v6625 = vshll.u32 %v6616, %v6623
        %v6626 = vshrl.u32 %v6608, %v6624
        %v6627 = vor.u32 %v6625, %v6626
        %v6628 = vsub.s32 4294967266, %v6623
        %v6629 = vadd.s32 %v6628, 127
        %v6630 = vshll.u32 %v6629, 23
        %v6631 = vor.u32 4788187, %v6630
        %v6632 = vand.u32 2147483647, %v6631
        %v6634 = vcvt.s32.f32 %v6627
        %v6635 = vmul.f32 %v6634, %v6632
        %v6636 = vxor.u32 %v6635, 2147483648
        %v6637 = vsel %vm6554, %v6636, %v6635
        %v6638 = vsub.s32 4, %v6614
        %v6639 = vsel %vm6554, %v6638, %v6614
        %v6640 = vsel %vm6553, %v2579, %v6637
        %v6641 = vsel %vm6553, 0, %v6639
        %v6642 = vcosq.f32.pop %v6640
        %v6643 = vsinq.f32.pop %v6640
        %vm6644 = vweird.f32 %v2579
        %v6645 = vadd.s32 %v6641, 3
        %v6646 = vand.u32 %v6645, 3
        %vm6647 = vcmp.lt.s32.totalorder %v6646, 2
        %vm6648 = vcmp.eq.s32.totalorder %v6646, 0
        %v6649 = vxor.u32 %v6643, 2147483648
        %v6650 = vsel %vm6648, %v6642, %v6649
        %vm6651 = vcmp.eq.s32.totalorder %v6646, 2
        %v6652 = vxor.u32 %v6642, 2147483648
        %v6653 = vsel %vm6651, %v6652, %v6643
        %v6654 = vsel %vm6647, %v6650, %v6653
        %v6655 = vsel %vm6644, nan, %v6654
        %v6656 = vand.u32 2147483647, %v1478
        %vm6657 = vcmp.le.f32.partialorder %v6656, 0.7853982
        %vm6658 = vcmp.lt.s32.totalorder %v1478, 0
        %v6659 = vand.u32 %v1478, 2139095040
        %v6660 = vshrl.u32 %v6659, 23
        %v6661 = vsub.s32 %v6660, 127
        %v6662 = vand.u32 2147483647, %v1478
        %v6663 = vand.u32 %v6662, 8388607
        %v6664 = vor.u32 %v6663, 8388608
        %v6665 = vsub.s32 0, %v6664
        %v6666 = vadd.s32 %v6661, 1
        %vm6667 = vcmp.gt.s32.totalorder %v6666, 0
        %v6668 = vsel %vm6667, %v6666, 0
        %v6669 = vshrl.u32 %v6668, 5
        %v6670 = vand.u32 %v6668, 31
        %v6671 = vsub.s32 32, %v6670
        %v6672 = vshrl.u32 683565275, %v6671
        %v6673 = vshll.u32 683565275, %v6670
        %v6674 = vshrl.u32 2475754826, %v6671
        %v6675 = vor.u32 %v6673, %v6674
        %v6676 = vshll.u32 2475754826, %v6670
        %v6677 = vshrl.u32 2131351028, %v6671
        %v6678 = vor.u32 %v6676, %v6677
        %v6679 = vshll.u32 2131351028, %v6670
        %v6680 = vshrl.u32 2102212464, %v6671
        %v6681 = vor.u32 %v6679, %v6680
        %v6682 = vshll.u32 2102212464, %v6670
        %v6683 = vshrl.u32 920167782, %v6671
        %v6684 = vor.u32 %v6682, %v6683
        %v6685 = vshll.u32 920167782, %v6670
        %v6686 = vshrl.u32 1326507024, %v6671
        %v6687 = vor.u32 %v6685, %v6686
        %vm6688 = vcmp.lt.s32.totalorder %v6669, 1
        %vm6689 = vcmp.lt.s32.totalorder %v6669, 2
        %vm6690 = vcmp.lt.s32.totalorder %v6669, 3
        %vm6691 = vcmp.lt.s32.totalorder %v6669, 4
        %v6692 = vsel %vm6688, %v6672, %v6675
        %v6693 = vsel %vm6691, %v6681, 2102212464
        %v6694 = vsel %vm6690, %v6678, %v6693
        %v6695 = vsel %vm6689, %v6692, %v6694
        %v6696 = vsel %vm6688, %v6675, %v6678
        %v6697 = vsel %vm6691, %v6684, 920167782
        %v6698 = vsel %vm6690, %v6681, %v6697
        %v6699 = vsel %vm6689, %v6696, %v6698
        %v6700 = vsel %vm6688, %v6678, %v6681
        %v6701 = vsel %vm6691, %v6687, 1326507024
        %v6702 = vsel %vm6690, %v6684, %v6701
        %v6703 = vsel %vm6689, %v6700, %v6702
        %v6704 = vshll.u32 %v6664, 8
        %v6705 = vmul.u32.u64.compose %v6704, %v6703
        %v6706 = vextract.low.u32 %v6705
        %v6707 = vextract.high.u32 %v6705
        %v6708 = vmul.u32.u64.compose %v6704, %v6699
        %v6709 = vextract.low.u32 %v6708
        %v6710 = vextract.high.u32 %v6708
        %v6711 = vmul.u32 %v6704, %v6695
        %v6712 = vadd.s32 %v6707, %v6709
        %vm6713 = vc.u32 %v6707, %v6709
        %v6714 = vadd.s32 %v6710, 1
        %v6715 = vsel %vm6713, %v6714, %v6710
        %v6716 = vadd.s32 %v6711, %v6715
        %v6717 = vadd.s32 %v6716, 536870912
        %v6718 = vshrl.u32 %v6717, 30
        %v6719 = vshll.u32 %v6718, 30
        %v6720 = vsub.s32 %v6716, %v6719
        %vm6721 = vcmp.lt.s32.totalorder %v6720, 0
        %v6722 = vsub.s32 0, %v6720
        %v6723 = vsel %vm6721, %v6722, %v6720
        %v6724 = vclz %v6723
        %v6725 = vsub.s32 %v6724, 2
        %vm6726 = vcmp.gt.s32.totalorder 0, %v6725
        %v6727 = vsel %vm6726, 0, %v6725
        %v6728 = vsub.s32 32, %v6727
        %v6729 = vshll.u32 %v6720, %v6727
        %v6730 = vshrl.u32 %v6712, %v6728
        %v6731 = vor.u32 %v6729, %v6730
        %v6732 = vsub.s32 4294967266, %v6727
        %v6733 = vadd.s32 %v6732, 127
        %v6734 = vshll.u32 %v6733, 23
        %v6735 = vor.u32 4788187, %v6734
        %v6736 = vand.u32 2147483647, %v6735
        %v6738 = vcvt.s32.f32 %v6731
        %v6739 = vmul.f32 %v6738, %v6736
        %v6740 = vxor.u32 %v6739, 2147483648
        %v6741 = vsel %vm6658, %v6740, %v6739
        %v6742 = vsub.s32 4, %v6718
        %v6743 = vsel %vm6658, %v6742, %v6718
        %v6744 = vsel %vm6657, %v1478, %v6741
        %v6745 = vsel %vm6657, 0, %v6743
        %v6746 = vcosq.f32.pop %v6744
        %v6747 = vsinq.f32.pop %v6744
        %vm6748 = vweird.f32 %v1478
        %v6749 = vadd.s32 %v6745, 3
        %v6750 = vand.u32 %v6749, 3
        %vm6751 = vcmp.lt.s32.totalorder %v6750, 2
        %vm6752 = vcmp.eq.s32.totalorder %v6750, 0
        %v6753 = vxor.u32 %v6747, 2147483648
        %v6754 = vsel %vm6752, %v6746, %v6753
        %vm6755 = vcmp.eq.s32.totalorder %v6750, 2
        %v6756 = vxor.u32 %v6746, 2147483648
        %v6757 = vsel %vm6755, %v6756, %v6747
        %v6758 = vsel %vm6751, %v6754, %v6757
        %v6759 = vsel %vm6748, nan, %v6758
        %v6760 = vand.u32 2147483647, %v1480
        %vm6761 = vcmp.le.f32.partialorder %v6760, 0.7853982
        %vm6762 = vcmp.lt.s32.totalorder %v1480, 0
        %v6763 = vand.u32 %v1480, 2139095040
        %v6764 = vshrl.u32 %v6763, 23
        %v6765 = vsub.s32 %v6764, 127
        %v6766 = vand.u32 2147483647, %v1480
        %v6767 = vand.u32 %v6766, 8388607
        %v6768 = vor.u32 %v6767, 8388608
        %v6769 = vsub.s32 0, %v6768
        %v6770 = vadd.s32 %v6765, 1
        %vm6771 = vcmp.gt.s32.totalorder %v6770, 0
        %v6772 = vsel %vm6771, %v6770, 0
        %v6773 = vshrl.u32 %v6772, 5
        %v6774 = vand.u32 %v6772, 31
        %v6775 = vsub.s32 32, %v6774
        %v6776 = vshrl.u32 683565275, %v6775
        %v6777 = vshll.u32 683565275, %v6774
        %v6778 = vshrl.u32 2475754826, %v6775
        %v6779 = vor.u32 %v6777, %v6778
        %v6780 = vshll.u32 2475754826, %v6774
        %v6781 = vshrl.u32 2131351028, %v6775
        %v6782 = vor.u32 %v6780, %v6781
        %v6783 = vshll.u32 2131351028, %v6774
        %v6784 = vshrl.u32 2102212464, %v6775
        %v6785 = vor.u32 %v6783, %v6784
        %v6786 = vshll.u32 2102212464, %v6774
        %v6787 = vshrl.u32 920167782, %v6775
        %v6788 = vor.u32 %v6786, %v6787
        %v6789 = vshll.u32 920167782, %v6774
        %v6790 = vshrl.u32 1326507024, %v6775
        %v6791 = vor.u32 %v6789, %v6790
        %vm6792 = vcmp.lt.s32.totalorder %v6773, 1
        %vm6793 = vcmp.lt.s32.totalorder %v6773, 2
        %vm6794 = vcmp.lt.s32.totalorder %v6773, 3
        %vm6795 = vcmp.lt.s32.totalorder %v6773, 4
        %v6796 = vsel %vm6792, %v6776, %v6779
        %v6797 = vsel %vm6795, %v6785, 2102212464
        %v6798 = vsel %vm6794, %v6782, %v6797
        %v6799 = vsel %vm6793, %v6796, %v6798
        %v6800 = vsel %vm6792, %v6779, %v6782
        %v6801 = vsel %vm6795, %v6788, 920167782
        %v6802 = vsel %vm6794, %v6785, %v6801
        %v6803 = vsel %vm6793, %v6800, %v6802
        %v6804 = vsel %vm6792, %v6782, %v6785
        %v6805 = vsel %vm6795, %v6791, 1326507024
        %v6806 = vsel %vm6794, %v6788, %v6805
        %v6807 = vsel %vm6793, %v6804, %v6806
        %v6808 = vshll.u32 %v6768, 8
        %v6809 = vmul.u32.u64.compose %v6808, %v6807
        %v6810 = vextract.low.u32 %v6809
        %v6811 = vextract.high.u32 %v6809
        %v6812 = vmul.u32.u64.compose %v6808, %v6803
        %v6813 = vextract.low.u32 %v6812
        %v6814 = vextract.high.u32 %v6812
        %v6815 = vmul.u32 %v6808, %v6799
        %v6816 = vadd.s32 %v6811, %v6813
        %vm6817 = vc.u32 %v6811, %v6813
        %v6818 = vadd.s32 %v6814, 1
        %v6819 = vsel %vm6817, %v6818, %v6814
        %v6820 = vadd.s32 %v6815, %v6819
        %v6821 = vadd.s32 %v6820, 536870912
        %v6822 = vshrl.u32 %v6821, 30
        %v6823 = vshll.u32 %v6822, 30
        %v6824 = vsub.s32 %v6820, %v6823
        %vm6825 = vcmp.lt.s32.totalorder %v6824, 0
        %v6826 = vsub.s32 0, %v6824
        %v6827 = vsel %vm6825, %v6826, %v6824
        %v6828 = vclz %v6827
        %v6829 = vsub.s32 %v6828, 2
        %vm6830 = vcmp.gt.s32.totalorder 0, %v6829
        %v6831 = vsel %vm6830, 0, %v6829
        %v6832 = vsub.s32 32, %v6831
        %v6833 = vshll.u32 %v6824, %v6831
        %v6834 = vshrl.u32 %v6816, %v6832
        %v6835 = vor.u32 %v6833, %v6834
        %v6836 = vsub.s32 4294967266, %v6831
        %v6837 = vadd.s32 %v6836, 127
        %v6838 = vshll.u32 %v6837, 23
        %v6839 = vor.u32 4788187, %v6838
        %v6840 = vand.u32 2147483647, %v6839
        %v6842 = vcvt.s32.f32 %v6835
        %v6843 = vmul.f32 %v6842, %v6840
        %v6844 = vxor.u32 %v6843, 2147483648
        %v6845 = vsel %vm6762, %v6844, %v6843
        %v6846 = vsub.s32 4, %v6822
        %v6847 = vsel %vm6762, %v6846, %v6822
        %v6848 = vsel %vm6761, %v1480, %v6845
        %v6849 = vsel %vm6761, 0, %v6847
        %v6850 = vcosq.f32.pop %v6848
        %v6851 = vsinq.f32.pop %v6848
        %vm6852 = vweird.f32 %v1480
        %v6853 = vadd.s32 %v6849, 3
        %v6854 = vand.u32 %v6853, 3
        %vm6855 = vcmp.lt.s32.totalorder %v6854, 2
        %vm6856 = vcmp.eq.s32.totalorder %v6854, 0
        %v6857 = vxor.u32 %v6851, 2147483648
        %v6858 = vsel %vm6856, %v6850, %v6857
        %vm6859 = vcmp.eq.s32.totalorder %v6854, 2
        %v6860 = vxor.u32 %v6850, 2147483648
        %v6861 = vsel %vm6859, %v6860, %v6851
        %v6862 = vsel %vm6855, %v6858, %v6861
        %v6863 = vsel %vm6852, nan, %v6862
        %v6864 = vand.u32 2147483647, %v2585
        %vm6865 = vcmp.le.f32.partialorder %v6864, 0.7853982
        %vm6866 = vcmp.lt.s32.totalorder %v2585, 0
        %v6867 = vand.u32 %v2585, 2139095040
        %v6868 = vshrl.u32 %v6867, 23
        %v6869 = vsub.s32 %v6868, 127
        %v6870 = vand.u32 2147483647, %v2585
        %v6871 = vand.u32 %v6870, 8388607
        %v6872 = vor.u32 %v6871, 8388608
        %v6873 = vsub.s32 0, %v6872
        %v6874 = vadd.s32 %v6869, 1
        %vm6875 = vcmp.gt.s32.totalorder %v6874, 0
        %v6876 = vsel %vm6875, %v6874, 0
        %v6877 = vshrl.u32 %v6876, 5
        %v6878 = vand.u32 %v6876, 31
        %v6879 = vsub.s32 32, %v6878
        %v6880 = vshrl.u32 683565275, %v6879
        %v6881 = vshll.u32 683565275, %v6878
        %v6882 = vshrl.u32 2475754826, %v6879
        %v6883 = vor.u32 %v6881, %v6882
        %v6884 = vshll.u32 2475754826, %v6878
        %v6885 = vshrl.u32 2131351028, %v6879
        %v6886 = vor.u32 %v6884, %v6885
        %v6887 = vshll.u32 2131351028, %v6878
        %v6888 = vshrl.u32 2102212464, %v6879
        %v6889 = vor.u32 %v6887, %v6888
        %v6890 = vshll.u32 2102212464, %v6878
        %v6891 = vshrl.u32 920167782, %v6879
        %v6892 = vor.u32 %v6890, %v6891
        %v6893 = vshll.u32 920167782, %v6878
        %v6894 = vshrl.u32 1326507024, %v6879
        %v6895 = vor.u32 %v6893, %v6894
        %vm6896 = vcmp.lt.s32.totalorder %v6877, 1
        %vm6897 = vcmp.lt.s32.totalorder %v6877, 2
        %vm6898 = vcmp.lt.s32.totalorder %v6877, 3
        %vm6899 = vcmp.lt.s32.totalorder %v6877, 4
        %v6900 = vsel %vm6896, %v6880, %v6883
        %v6901 = vsel %vm6899, %v6889, 2102212464
        %v6902 = vsel %vm6898, %v6886, %v6901
        %v6903 = vsel %vm6897, %v6900, %v6902
        %v6904 = vsel %vm6896, %v6883, %v6886
        %v6905 = vsel %vm6899, %v6892, 920167782
        %v6906 = vsel %vm6898, %v6889, %v6905
        %v6907 = vsel %vm6897, %v6904, %v6906
        %v6908 = vsel %vm6896, %v6886, %v6889
        %v6909 = vsel %vm6899, %v6895, 1326507024
        %v6910 = vsel %vm6898, %v6892, %v6909
        %v6911 = vsel %vm6897, %v6908, %v6910
        %v6912 = vshll.u32 %v6872, 8
        %v6913 = vmul.u32.u64.compose %v6912, %v6911
        %v6914 = vextract.low.u32 %v6913
        %v6915 = vextract.high.u32 %v6913
        %v6916 = vmul.u32.u64.compose %v6912, %v6907
        %v6917 = vextract.low.u32 %v6916
        %v6918 = vextract.high.u32 %v6916
        %v6919 = vmul.u32 %v6912, %v6903
        %v6920 = vadd.s32 %v6915, %v6917
        %vm6921 = vc.u32 %v6915, %v6917
        %v6922 = vadd.s32 %v6918, 1
        %v6923 = vsel %vm6921, %v6922, %v6918
        %v6924 = vadd.s32 %v6919, %v6923
        %v6925 = vadd.s32 %v6924, 536870912
        %v6926 = vshrl.u32 %v6925, 30
        %v6927 = vshll.u32 %v6926, 30
        %v6928 = vsub.s32 %v6924, %v6927
        %vm6929 = vcmp.lt.s32.totalorder %v6928, 0
        %v6930 = vsub.s32 0, %v6928
        %v6931 = vsel %vm6929, %v6930, %v6928
        %v6932 = vclz %v6931
        %v6933 = vsub.s32 %v6932, 2
        %vm6934 = vcmp.gt.s32.totalorder 0, %v6933
        %v6935 = vsel %vm6934, 0, %v6933
        %v6936 = vsub.s32 32, %v6935
        %v6937 = vshll.u32 %v6928, %v6935
        %v6938 = vshrl.u32 %v6920, %v6936
        %v6939 = vor.u32 %v6937, %v6938
        %v6940 = vsub.s32 4294967266, %v6935
        %v6941 = vadd.s32 %v6940, 127
        %v6942 = vshll.u32 %v6941, 23
        %v6943 = vor.u32 4788187, %v6942
        %v6944 = vand.u32 2147483647, %v6943
        %v6946 = vcvt.s32.f32 %v6939
        %v6947 = vmul.f32 %v6946, %v6944
        %v6948 = vxor.u32 %v6947, 2147483648
        %v6949 = vsel %vm6866, %v6948, %v6947
        %v6950 = vsub.s32 4, %v6926
        %v6951 = vsel %vm6866, %v6950, %v6926
        %v6952 = vsel %vm6865, %v2585, %v6949
        %v6953 = vsel %vm6865, 0, %v6951
        %v6954 = vcosq.f32.pop %v6952
        %v6955 = vsinq.f32.pop %v6952
        %vm6956 = vweird.f32 %v2585
        %v6957 = vadd.s32 %v6953, 3
        %v6958 = vand.u32 %v6957, 3
        %vm6959 = vcmp.lt.s32.totalorder %v6958, 2
        %vm6960 = vcmp.eq.s32.totalorder %v6958, 0
        %v6961 = vxor.u32 %v6955, 2147483648
        %v6962 = vsel %vm6960, %v6954, %v6961
        %vm6963 = vcmp.eq.s32.totalorder %v6958, 2
        %v6964 = vxor.u32 %v6954, 2147483648
        %v6965 = vsel %vm6963, %v6964, %v6955
        %v6966 = vsel %vm6959, %v6962, %v6965
        %v6967 = vsel %vm6956, nan, %v6966
        %v6968 = vand.u32 2147483647, %v1485
        %vm6969 = vcmp.le.f32.partialorder %v6968, 0.7853982
        %vm6970 = vcmp.lt.s32.totalorder %v1485, 0
        %v6971 = vand.u32 %v1485, 2139095040
        %v6972 = vshrl.u32 %v6971, 23
        %v6973 = vsub.s32 %v6972, 127
        %v6974 = vand.u32 2147483647, %v1485
        %v6975 = vand.u32 %v6974, 8388607
        %v6976 = vor.u32 %v6975, 8388608
        %v6977 = vsub.s32 0, %v6976
        %v6978 = vadd.s32 %v6973, 1
        %vm6979 = vcmp.gt.s32.totalorder %v6978, 0
        %v6980 = vsel %vm6979, %v6978, 0
        %v6981 = vshrl.u32 %v6980, 5
        %v6982 = vand.u32 %v6980, 31
        %v6983 = vsub.s32 32, %v6982
        %v6984 = vshrl.u32 683565275, %v6983
        %v6985 = vshll.u32 683565275, %v6982
        %v6986 = vshrl.u32 2475754826, %v6983
        %v6987 = vor.u32 %v6985, %v6986
        %v6988 = vshll.u32 2475754826, %v6982
        %v6989 = vshrl.u32 2131351028, %v6983
        %v6990 = vor.u32 %v6988, %v6989
        %v6991 = vshll.u32 2131351028, %v6982
        %v6992 = vshrl.u32 2102212464, %v6983
        %v6993 = vor.u32 %v6991, %v6992
        %v6994 = vshll.u32 2102212464, %v6982
        %v6995 = vshrl.u32 920167782, %v6983
        %v6996 = vor.u32 %v6994, %v6995
        %v6997 = vshll.u32 920167782, %v6982
        %v6998 = vshrl.u32 1326507024, %v6983
        %v6999 = vor.u32 %v6997, %v6998
        %vm7000 = vcmp.lt.s32.totalorder %v6981, 1
        %vm7001 = vcmp.lt.s32.totalorder %v6981, 2
        %vm7002 = vcmp.lt.s32.totalorder %v6981, 3
        %vm7003 = vcmp.lt.s32.totalorder %v6981, 4
        %v7004 = vsel %vm7000, %v6984, %v6987
        %v7005 = vsel %vm7003, %v6993, 2102212464
        %v7006 = vsel %vm7002, %v6990, %v7005
        %v7007 = vsel %vm7001, %v7004, %v7006
        %v7008 = vsel %vm7000, %v6987, %v6990
        %v7009 = vsel %vm7003, %v6996, 920167782
        %v7010 = vsel %vm7002, %v6993, %v7009
        %v7011 = vsel %vm7001, %v7008, %v7010
        %v7012 = vsel %vm7000, %v6990, %v6993
        %v7013 = vsel %vm7003, %v6999, 1326507024
        %v7014 = vsel %vm7002, %v6996, %v7013
        %v7015 = vsel %vm7001, %v7012, %v7014
        %v7016 = vshll.u32 %v6976, 8
        %v7017 = vmul.u32.u64.compose %v7016, %v7015
        %v7018 = vextract.low.u32 %v7017
        %v7019 = vextract.high.u32 %v7017
        %v7020 = vmul.u32.u64.compose %v7016, %v7011
        %v7021 = vextract.low.u32 %v7020
        %v7022 = vextract.high.u32 %v7020
        %v7023 = vmul.u32 %v7016, %v7007
        %v7024 = vadd.s32 %v7019, %v7021
        %vm7025 = vc.u32 %v7019, %v7021
        %v7026 = vadd.s32 %v7022, 1
        %v7027 = vsel %vm7025, %v7026, %v7022
        %v7028 = vadd.s32 %v7023, %v7027
        %v7029 = vadd.s32 %v7028, 536870912
        %v7030 = vshrl.u32 %v7029, 30
        %v7031 = vshll.u32 %v7030, 30
        %v7032 = vsub.s32 %v7028, %v7031
        %vm7033 = vcmp.lt.s32.totalorder %v7032, 0
        %v7034 = vsub.s32 0, %v7032
        %v7035 = vsel %vm7033, %v7034, %v7032
        %v7036 = vclz %v7035
        %v7037 = vsub.s32 %v7036, 2
        %vm7038 = vcmp.gt.s32.totalorder 0, %v7037
        %v7039 = vsel %vm7038, 0, %v7037
        %v7040 = vsub.s32 32, %v7039
        %v7041 = vshll.u32 %v7032, %v7039
        %v7042 = vshrl.u32 %v7024, %v7040
        %v7043 = vor.u32 %v7041, %v7042
        %v7044 = vsub.s32 4294967266, %v7039
        %v7045 = vadd.s32 %v7044, 127
        %v7046 = vshll.u32 %v7045, 23
        %v7047 = vor.u32 4788187, %v7046
        %v7048 = vand.u32 2147483647, %v7047
        %v7050 = vcvt.s32.f32 %v7043
        %v7051 = vmul.f32 %v7050, %v7048
        %v7052 = vxor.u32 %v7051, 2147483648
        %v7053 = vsel %vm6970, %v7052, %v7051
        %v7054 = vsub.s32 4, %v7030
        %v7055 = vsel %vm6970, %v7054, %v7030
        %v7056 = vsel %vm6969, %v1485, %v7053
        %v7057 = vsel %vm6969, 0, %v7055
        %v7058 = vcosq.f32.pop %v7056
        %v7059 = vsinq.f32.pop %v7056
        %vm7060 = vweird.f32 %v1485
        %v7061 = vadd.s32 %v7057, 3
        %v7062 = vand.u32 %v7061, 3
        %vm7063 = vcmp.lt.s32.totalorder %v7062, 2
        %vm7064 = vcmp.eq.s32.totalorder %v7062, 0
        %v7065 = vxor.u32 %v7059, 2147483648
        %v7066 = vsel %vm7064, %v7058, %v7065
        %vm7067 = vcmp.eq.s32.totalorder %v7062, 2
        %v7068 = vxor.u32 %v7058, 2147483648
        %v7069 = vsel %vm7067, %v7068, %v7059
        %v7070 = vsel %vm7063, %v7066, %v7069
        %v7071 = vsel %vm7060, nan, %v7070
        %v7072 = vand.u32 2147483647, %v1487
        %vm7073 = vcmp.le.f32.partialorder %v7072, 0.7853982
        %vm7074 = vcmp.lt.s32.totalorder %v1487, 0
        %v7075 = vand.u32 %v1487, 2139095040
        %v7076 = vshrl.u32 %v7075, 23
        %v7077 = vsub.s32 %v7076, 127
        %v7078 = vand.u32 2147483647, %v1487
        %v7079 = vand.u32 %v7078, 8388607
        %v7080 = vor.u32 %v7079, 8388608
        %v7081 = vsub.s32 0, %v7080
        %v7082 = vadd.s32 %v7077, 1
        %vm7083 = vcmp.gt.s32.totalorder %v7082, 0
        %v7084 = vsel %vm7083, %v7082, 0
        %v7085 = vshrl.u32 %v7084, 5
        %v7086 = vand.u32 %v7084, 31
        %v7087 = vsub.s32 32, %v7086
        %v7088 = vshrl.u32 683565275, %v7087
        %v7089 = vshll.u32 683565275, %v7086
        %v7090 = vshrl.u32 2475754826, %v7087
        %v7091 = vor.u32 %v7089, %v7090
        %v7092 = vshll.u32 2475754826, %v7086
        %v7093 = vshrl.u32 2131351028, %v7087
        %v7094 = vor.u32 %v7092, %v7093
        %v7095 = vshll.u32 2131351028, %v7086
        %v7096 = vshrl.u32 2102212464, %v7087
        %v7097 = vor.u32 %v7095, %v7096
        %v7098 = vshll.u32 2102212464, %v7086
        %v7099 = vshrl.u32 920167782, %v7087
        %v7100 = vor.u32 %v7098, %v7099
        %v7101 = vshll.u32 920167782, %v7086
        %v7102 = vshrl.u32 1326507024, %v7087
        %v7103 = vor.u32 %v7101, %v7102
        %vm7104 = vcmp.lt.s32.totalorder %v7085, 1
        %vm7105 = vcmp.lt.s32.totalorder %v7085, 2
        %vm7106 = vcmp.lt.s32.totalorder %v7085, 3
        %vm7107 = vcmp.lt.s32.totalorder %v7085, 4
        %v7108 = vsel %vm7104, %v7088, %v7091
        %v7109 = vsel %vm7107, %v7097, 2102212464
        %v7110 = vsel %vm7106, %v7094, %v7109
        %v7111 = vsel %vm7105, %v7108, %v7110
        %v7112 = vsel %vm7104, %v7091, %v7094
        %v7113 = vsel %vm7107, %v7100, 920167782
        %v7114 = vsel %vm7106, %v7097, %v7113
        %v7115 = vsel %vm7105, %v7112, %v7114
        %v7116 = vsel %vm7104, %v7094, %v7097
        %v7117 = vsel %vm7107, %v7103, 1326507024
        %v7118 = vsel %vm7106, %v7100, %v7117
        %v7119 = vsel %vm7105, %v7116, %v7118
        %v7120 = vshll.u32 %v7080, 8
        %v7121 = vmul.u32.u64.compose %v7120, %v7119
        %v7122 = vextract.low.u32 %v7121
        %v7123 = vextract.high.u32 %v7121
        %v7124 = vmul.u32.u64.compose %v7120, %v7115
        %v7125 = vextract.low.u32 %v7124
        %v7126 = vextract.high.u32 %v7124
        %v7127 = vmul.u32 %v7120, %v7111
        %v7128 = vadd.s32 %v7123, %v7125
        %vm7129 = vc.u32 %v7123, %v7125
        %v7130 = vadd.s32 %v7126, 1
        %v7131 = vsel %vm7129, %v7130, %v7126
        %v7132 = vadd.s32 %v7127, %v7131
        %v7133 = vadd.s32 %v7132, 536870912
        %v7134 = vshrl.u32 %v7133, 30
        %v7135 = vshll.u32 %v7134, 30
        %v7136 = vsub.s32 %v7132, %v7135
        %vm7137 = vcmp.lt.s32.totalorder %v7136, 0
        %v7138 = vsub.s32 0, %v7136
        %v7139 = vsel %vm7137, %v7138, %v7136
        %v7140 = vclz %v7139
        %v7141 = vsub.s32 %v7140, 2
        %vm7142 = vcmp.gt.s32.totalorder 0, %v7141
        %v7143 = vsel %vm7142, 0, %v7141
        %v7144 = vsub.s32 32, %v7143
        %v7145 = vshll.u32 %v7136, %v7143
        %v7146 = vshrl.u32 %v7128, %v7144
        %v7147 = vor.u32 %v7145, %v7146
        %v7148 = vsub.s32 4294967266, %v7143
        %v7149 = vadd.s32 %v7148, 127
        %v7150 = vshll.u32 %v7149, 23
        %v7151 = vor.u32 4788187, %v7150
        %v7152 = vand.u32 2147483647, %v7151
        %v7154 = vcvt.s32.f32 %v7147
        %v7155 = vmul.f32 %v7154, %v7152
        %v7156 = vxor.u32 %v7155, 2147483648
        %v7157 = vsel %vm7074, %v7156, %v7155
        %v7158 = vsub.s32 4, %v7134
        %v7159 = vsel %vm7074, %v7158, %v7134
        %v7160 = vsel %vm7073, %v1487, %v7157
        %v7161 = vsel %vm7073, 0, %v7159
        %v7162 = vcosq.f32.pop %v7160
        %v7163 = vsinq.f32.pop %v7160
        %vm7164 = vweird.f32 %v1487
        %v7165 = vadd.s32 %v7161, 3
        %v7166 = vand.u32 %v7165, 3
        %vm7167 = vcmp.lt.s32.totalorder %v7166, 2
        %vm7168 = vcmp.eq.s32.totalorder %v7166, 0
        %v7169 = vxor.u32 %v7163, 2147483648
        %v7170 = vsel %vm7168, %v7162, %v7169
        %vm7171 = vcmp.eq.s32.totalorder %v7166, 2
        %v7172 = vxor.u32 %v7162, 2147483648
        %v7173 = vsel %vm7171, %v7172, %v7163
        %v7174 = vsel %vm7167, %v7170, %v7173
        %v7175 = vsel %vm7164, nan, %v7174
        %v7176 = vand.u32 2147483647, %v2591
        %vm7177 = vcmp.le.f32.partialorder %v7176, 0.7853982
        %vm7178 = vcmp.lt.s32.totalorder %v2591, 0
        %v7179 = vand.u32 %v2591, 2139095040
        %v7180 = vshrl.u32 %v7179, 23
        %v7181 = vsub.s32 %v7180, 127
        %v7182 = vand.u32 2147483647, %v2591
        %v7183 = vand.u32 %v7182, 8388607
        %v7184 = vor.u32 %v7183, 8388608
        %v7185 = vsub.s32 0, %v7184
        %v7186 = vadd.s32 %v7181, 1
        %vm7187 = vcmp.gt.s32.totalorder %v7186, 0
        %v7188 = vsel %vm7187, %v7186, 0
        %v7189 = vshrl.u32 %v7188, 5
        %v7190 = vand.u32 %v7188, 31
        %v7191 = vsub.s32 32, %v7190
        %v7192 = vshrl.u32 683565275, %v7191
        %v7193 = vshll.u32 683565275, %v7190
        %v7194 = vshrl.u32 2475754826, %v7191
        %v7195 = vor.u32 %v7193, %v7194
        %v7196 = vshll.u32 2475754826, %v7190
        %v7197 = vshrl.u32 2131351028, %v7191
        %v7198 = vor.u32 %v7196, %v7197
        %v7199 = vshll.u32 2131351028, %v7190
        %v7200 = vshrl.u32 2102212464, %v7191
        %v7201 = vor.u32 %v7199, %v7200
        %v7202 = vshll.u32 2102212464, %v7190
        %v7203 = vshrl.u32 920167782, %v7191
        %v7204 = vor.u32 %v7202, %v7203
        %v7205 = vshll.u32 920167782, %v7190
        %v7206 = vshrl.u32 1326507024, %v7191
        %v7207 = vor.u32 %v7205, %v7206
        %vm7208 = vcmp.lt.s32.totalorder %v7189, 1
        %vm7209 = vcmp.lt.s32.totalorder %v7189, 2
        %vm7210 = vcmp.lt.s32.totalorder %v7189, 3
        %vm7211 = vcmp.lt.s32.totalorder %v7189, 4
        %v7212 = vsel %vm7208, %v7192, %v7195
        %v7213 = vsel %vm7211, %v7201, 2102212464
        %v7214 = vsel %vm7210, %v7198, %v7213
        %v7215 = vsel %vm7209, %v7212, %v7214
        %v7216 = vsel %vm7208, %v7195, %v7198
        %v7217 = vsel %vm7211, %v7204, 920167782
        %v7218 = vsel %vm7210, %v7201, %v7217
        %v7219 = vsel %vm7209, %v7216, %v7218
        %v7220 = vsel %vm7208, %v7198, %v7201
        %v7221 = vsel %vm7211, %v7207, 1326507024
        %v7222 = vsel %vm7210, %v7204, %v7221
        %v7223 = vsel %vm7209, %v7220, %v7222
        %v7224 = vshll.u32 %v7184, 8
        %v7225 = vmul.u32.u64.compose %v7224, %v7223
        %v7226 = vextract.low.u32 %v7225
        %v7227 = vextract.high.u32 %v7225
        %v7228 = vmul.u32.u64.compose %v7224, %v7219
        %v7229 = vextract.low.u32 %v7228
        %v7230 = vextract.high.u32 %v7228
        %v7231 = vmul.u32 %v7224, %v7215
        %v7232 = vadd.s32 %v7227, %v7229
        %vm7233 = vc.u32 %v7227, %v7229
        %v7234 = vadd.s32 %v7230, 1
        %v7235 = vsel %vm7233, %v7234, %v7230
        %v7236 = vadd.s32 %v7231, %v7235
        %v7237 = vadd.s32 %v7236, 536870912
        %v7238 = vshrl.u32 %v7237, 30
        %v7239 = vshll.u32 %v7238, 30
        %v7240 = vsub.s32 %v7236, %v7239
        %vm7241 = vcmp.lt.s32.totalorder %v7240, 0
        %v7242 = vsub.s32 0, %v7240
        %v7243 = vsel %vm7241, %v7242, %v7240
        %v7244 = vclz %v7243
        %v7245 = vsub.s32 %v7244, 2
        %vm7246 = vcmp.gt.s32.totalorder 0, %v7245
        %v7247 = vsel %vm7246, 0, %v7245
        %v7248 = vsub.s32 32, %v7247
        %v7249 = vshll.u32 %v7240, %v7247
        %v7250 = vshrl.u32 %v7232, %v7248
        %v7251 = vor.u32 %v7249, %v7250
        %v7252 = vsub.s32 4294967266, %v7247
        %v7253 = vadd.s32 %v7252, 127
        %v7254 = vshll.u32 %v7253, 23
        %v7255 = vor.u32 4788187, %v7254
        %v7256 = vand.u32 2147483647, %v7255
        %v7258 = vcvt.s32.f32 %v7251
        %v7259 = vmul.f32 %v7258, %v7256
        %v7260 = vxor.u32 %v7259, 2147483648
        %v7261 = vsel %vm7178, %v7260, %v7259
        %v7262 = vsub.s32 4, %v7238
        %v7263 = vsel %vm7178, %v7262, %v7238
        %v7264 = vsel %vm7177, %v2591, %v7261
        %v7265 = vsel %vm7177, 0, %v7263
        %v7266 = vcosq.f32.pop %v7264
        %v7267 = vsinq.f32.pop %v7264
        %vm7268 = vweird.f32 %v2591
        %v7269 = vadd.s32 %v7265, 3
        %v7270 = vand.u32 %v7269, 3
        %vm7271 = vcmp.lt.s32.totalorder %v7270, 2
        %vm7272 = vcmp.eq.s32.totalorder %v7270, 0
        %v7273 = vxor.u32 %v7267, 2147483648
        %v7274 = vsel %vm7272, %v7266, %v7273
        %vm7275 = vcmp.eq.s32.totalorder %v7270, 2
        %v7276 = vxor.u32 %v7266, 2147483648
        %v7277 = vsel %vm7275, %v7276, %v7267
        %v7278 = vsel %vm7271, %v7274, %v7277
        %v7279 = vsel %vm7268, nan, %v7278
        %v7280 = vand.u32 2147483647, %v1492
        %vm7281 = vcmp.le.f32.partialorder %v7280, 0.7853982
        %vm7282 = vcmp.lt.s32.totalorder %v1492, 0
        %v7283 = vand.u32 %v1492, 2139095040
        %v7284 = vshrl.u32 %v7283, 23
        %v7285 = vsub.s32 %v7284, 127
        %v7286 = vand.u32 2147483647, %v1492
        %v7287 = vand.u32 %v7286, 8388607
        %v7288 = vor.u32 %v7287, 8388608
        %v7289 = vsub.s32 0, %v7288
        %v7290 = vadd.s32 %v7285, 1
        %vm7291 = vcmp.gt.s32.totalorder %v7290, 0
        %v7292 = vsel %vm7291, %v7290, 0
        %v7293 = vshrl.u32 %v7292, 5
        %v7294 = vand.u32 %v7292, 31
        %v7295 = vsub.s32 32, %v7294
        %v7296 = vshrl.u32 683565275, %v7295
        %v7297 = vshll.u32 683565275, %v7294
        %v7298 = vshrl.u32 2475754826, %v7295
        %v7299 = vor.u32 %v7297, %v7298
        %v7300 = vshll.u32 2475754826, %v7294
        %v7301 = vshrl.u32 2131351028, %v7295
        %v7302 = vor.u32 %v7300, %v7301
        %v7303 = vshll.u32 2131351028, %v7294
        %v7304 = vshrl.u32 2102212464, %v7295
        %v7305 = vor.u32 %v7303, %v7304
        %v7306 = vshll.u32 2102212464, %v7294
        %v7307 = vshrl.u32 920167782, %v7295
        %v7308 = vor.u32 %v7306, %v7307
        %v7309 = vshll.u32 920167782, %v7294
        %v7310 = vshrl.u32 1326507024, %v7295
        %v7311 = vor.u32 %v7309, %v7310
        %vm7312 = vcmp.lt.s32.totalorder %v7293, 1
        %vm7313 = vcmp.lt.s32.totalorder %v7293, 2
        %vm7314 = vcmp.lt.s32.totalorder %v7293, 3
        %vm7315 = vcmp.lt.s32.totalorder %v7293, 4
        %v7316 = vsel %vm7312, %v7296, %v7299
        %v7317 = vsel %vm7315, %v7305, 2102212464
        %v7318 = vsel %vm7314, %v7302, %v7317
        %v7319 = vsel %vm7313, %v7316, %v7318
        %v7320 = vsel %vm7312, %v7299, %v7302
        %v7321 = vsel %vm7315, %v7308, 920167782
        %v7322 = vsel %vm7314, %v7305, %v7321
        %v7323 = vsel %vm7313, %v7320, %v7322
        %v7324 = vsel %vm7312, %v7302, %v7305
        %v7325 = vsel %vm7315, %v7311, 1326507024
        %v7326 = vsel %vm7314, %v7308, %v7325
        %v7327 = vsel %vm7313, %v7324, %v7326
        %v7328 = vshll.u32 %v7288, 8
        %v7329 = vmul.u32.u64.compose %v7328, %v7327
        %v7330 = vextract.low.u32 %v7329
        %v7331 = vextract.high.u32 %v7329
        %v7332 = vmul.u32.u64.compose %v7328, %v7323
        %v7333 = vextract.low.u32 %v7332
        %v7334 = vextract.high.u32 %v7332
        %v7335 = vmul.u32 %v7328, %v7319
        %v7336 = vadd.s32 %v7331, %v7333
        %vm7337 = vc.u32 %v7331, %v7333
        %v7338 = vadd.s32 %v7334, 1
        %v7339 = vsel %vm7337, %v7338, %v7334
        %v7340 = vadd.s32 %v7335, %v7339
        %v7341 = vadd.s32 %v7340, 536870912
        %v7342 = vshrl.u32 %v7341, 30
        %v7343 = vshll.u32 %v7342, 30
        %v7344 = vsub.s32 %v7340, %v7343
        %vm7345 = vcmp.lt.s32.totalorder %v7344, 0
        %v7346 = vsub.s32 0, %v7344
        %v7347 = vsel %vm7345, %v7346, %v7344
        %v7348 = vclz %v7347
        %v7349 = vsub.s32 %v7348, 2
        %vm7350 = vcmp.gt.s32.totalorder 0, %v7349
        %v7351 = vsel %vm7350, 0, %v7349
        %v7352 = vsub.s32 32, %v7351
        %v7353 = vshll.u32 %v7344, %v7351
        %v7354 = vshrl.u32 %v7336, %v7352
        %v7355 = vor.u32 %v7353, %v7354
        %v7356 = vsub.s32 4294967266, %v7351
        %v7357 = vadd.s32 %v7356, 127
        %v7358 = vshll.u32 %v7357, 23
        %v7359 = vor.u32 4788187, %v7358
        %v7360 = vand.u32 2147483647, %v7359
        %v7362 = vcvt.s32.f32 %v7355
        %v7363 = vmul.f32 %v7362, %v7360
        %v7364 = vxor.u32 %v7363, 2147483648
        %v7365 = vsel %vm7282, %v7364, %v7363
        %v7366 = vsub.s32 4, %v7342
        %v7367 = vsel %vm7282, %v7366, %v7342
        %v7368 = vsel %vm7281, %v1492, %v7365
        %v7369 = vsel %vm7281, 0, %v7367
        %v7370 = vcosq.f32.pop %v7368
        %v7371 = vsinq.f32.pop %v7368
        %vm7372 = vweird.f32 %v1492
        %v7373 = vadd.s32 %v7369, 3
        %v7374 = vand.u32 %v7373, 3
        %vm7375 = vcmp.lt.s32.totalorder %v7374, 2
        %vm7376 = vcmp.eq.s32.totalorder %v7374, 0
        %v7377 = vxor.u32 %v7371, 2147483648
        %v7378 = vsel %vm7376, %v7370, %v7377
        %vm7379 = vcmp.eq.s32.totalorder %v7374, 2
        %v7380 = vxor.u32 %v7370, 2147483648
        %v7381 = vsel %vm7379, %v7380, %v7371
        %v7382 = vsel %vm7375, %v7378, %v7381
        %v7383 = vsel %vm7372, nan, %v7382
        %v7384 = vand.u32 2147483647, %v1494
        %vm7385 = vcmp.le.f32.partialorder %v7384, 0.7853982
        %vm7386 = vcmp.lt.s32.totalorder %v1494, 0
        %v7387 = vand.u32 %v1494, 2139095040
        %v7388 = vshrl.u32 %v7387, 23
        %v7389 = vsub.s32 %v7388, 127
        %v7390 = vand.u32 2147483647, %v1494
        %v7391 = vand.u32 %v7390, 8388607
        %v7392 = vor.u32 %v7391, 8388608
        %v7393 = vsub.s32 0, %v7392
        %v7394 = vadd.s32 %v7389, 1
        %vm7395 = vcmp.gt.s32.totalorder %v7394, 0
        %v7396 = vsel %vm7395, %v7394, 0
        %v7397 = vshrl.u32 %v7396, 5
        %v7398 = vand.u32 %v7396, 31
        %v7399 = vsub.s32 32, %v7398
        %v7400 = vshrl.u32 683565275, %v7399
        %v7401 = vshll.u32 683565275, %v7398
        %v7402 = vshrl.u32 2475754826, %v7399
        %v7403 = vor.u32 %v7401, %v7402
        %v7404 = vshll.u32 2475754826, %v7398
        %v7405 = vshrl.u32 2131351028, %v7399
        %v7406 = vor.u32 %v7404, %v7405
        %v7407 = vshll.u32 2131351028, %v7398
        %v7408 = vshrl.u32 2102212464, %v7399
        %v7409 = vor.u32 %v7407, %v7408
        %v7410 = vshll.u32 2102212464, %v7398
        %v7411 = vshrl.u32 920167782, %v7399
        %v7412 = vor.u32 %v7410, %v7411
        %v7413 = vshll.u32 920167782, %v7398
        %v7414 = vshrl.u32 1326507024, %v7399
        %v7415 = vor.u32 %v7413, %v7414
        %vm7416 = vcmp.lt.s32.totalorder %v7397, 1
        %vm7417 = vcmp.lt.s32.totalorder %v7397, 2
        %vm7418 = vcmp.lt.s32.totalorder %v7397, 3
        %vm7419 = vcmp.lt.s32.totalorder %v7397, 4
        %v7420 = vsel %vm7416, %v7400, %v7403
        %v7421 = vsel %vm7419, %v7409, 2102212464
        %v7422 = vsel %vm7418, %v7406, %v7421
        %v7423 = vsel %vm7417, %v7420, %v7422
        %v7424 = vsel %vm7416, %v7403, %v7406
        %v7425 = vsel %vm7419, %v7412, 920167782
        %v7426 = vsel %vm7418, %v7409, %v7425
        %v7427 = vsel %vm7417, %v7424, %v7426
        %v7428 = vsel %vm7416, %v7406, %v7409
        %v7429 = vsel %vm7419, %v7415, 1326507024
        %v7430 = vsel %vm7418, %v7412, %v7429
        %v7431 = vsel %vm7417, %v7428, %v7430
        %v7432 = vshll.u32 %v7392, 8
        %v7433 = vmul.u32.u64.compose %v7432, %v7431
        %v7434 = vextract.low.u32 %v7433
        %v7435 = vextract.high.u32 %v7433
        %v7436 = vmul.u32.u64.compose %v7432, %v7427
        %v7437 = vextract.low.u32 %v7436
        %v7438 = vextract.high.u32 %v7436
        %v7439 = vmul.u32 %v7432, %v7423
        %v7440 = vadd.s32 %v7435, %v7437
        %vm7441 = vc.u32 %v7435, %v7437
        %v7442 = vadd.s32 %v7438, 1
        %v7443 = vsel %vm7441, %v7442, %v7438
        %v7444 = vadd.s32 %v7439, %v7443
        %v7445 = vadd.s32 %v7444, 536870912
        %v7446 = vshrl.u32 %v7445, 30
        %v7447 = vshll.u32 %v7446, 30
        %v7448 = vsub.s32 %v7444, %v7447
        %vm7449 = vcmp.lt.s32.totalorder %v7448, 0
        %v7450 = vsub.s32 0, %v7448
        %v7451 = vsel %vm7449, %v7450, %v7448
        %v7452 = vclz %v7451
        %v7453 = vsub.s32 %v7452, 2
        %vm7454 = vcmp.gt.s32.totalorder 0, %v7453
        %v7455 = vsel %vm7454, 0, %v7453
        %v7456 = vsub.s32 32, %v7455
        %v7457 = vshll.u32 %v7448, %v7455
        %v7458 = vshrl.u32 %v7440, %v7456
        %v7459 = vor.u32 %v7457, %v7458
        %v7460 = vsub.s32 4294967266, %v7455
        %v7461 = vadd.s32 %v7460, 127
        %v7462 = vshll.u32 %v7461, 23
        %v7463 = vor.u32 4788187, %v7462
        %v7464 = vand.u32 2147483647, %v7463
        %v7466 = vcvt.s32.f32 %v7459
        %v7467 = vmul.f32 %v7466, %v7464
        %v7468 = vxor.u32 %v7467, 2147483648
        %v7469 = vsel %vm7386, %v7468, %v7467
        %v7470 = vsub.s32 4, %v7446
        %v7471 = vsel %vm7386, %v7470, %v7446
        %v7472 = vsel %vm7385, %v1494, %v7469
        %v7473 = vsel %vm7385, 0, %v7471
        %v7474 = vcosq.f32.pop %v7472
        %v7475 = vsinq.f32.pop %v7472
        %vm7476 = vweird.f32 %v1494
        %v7477 = vadd.s32 %v7473, 3
        %v7478 = vand.u32 %v7477, 3
        %vm7479 = vcmp.lt.s32.totalorder %v7478, 2
        %vm7480 = vcmp.eq.s32.totalorder %v7478, 0
        %v7481 = vxor.u32 %v7475, 2147483648
        %v7482 = vsel %vm7480, %v7474, %v7481
        %vm7483 = vcmp.eq.s32.totalorder %v7478, 2
        %v7484 = vxor.u32 %v7474, 2147483648
        %v7485 = vsel %vm7483, %v7484, %v7475
        %v7486 = vsel %vm7479, %v7482, %v7485
        %v7487 = vsel %vm7476, nan, %v7486
        %v7488 = vand.u32 2147483647, %v2597
        %vm7489 = vcmp.le.f32.partialorder %v7488, 0.7853982
        %vm7490 = vcmp.lt.s32.totalorder %v2597, 0
        %v7491 = vand.u32 %v2597, 2139095040
        %v7492 = vshrl.u32 %v7491, 23
        %v7493 = vsub.s32 %v7492, 127
        %v7494 = vand.u32 2147483647, %v2597
        %v7495 = vand.u32 %v7494, 8388607
        %v7496 = vor.u32 %v7495, 8388608
        %v7497 = vsub.s32 0, %v7496
        %v7498 = vadd.s32 %v7493, 1
        %vm7499 = vcmp.gt.s32.totalorder %v7498, 0
        %v7500 = vsel %vm7499, %v7498, 0
        %v7501 = vshrl.u32 %v7500, 5
        %v7502 = vand.u32 %v7500, 31
        %v7503 = vsub.s32 32, %v7502
        %v7504 = vshrl.u32 683565275, %v7503
        %v7505 = vshll.u32 683565275, %v7502
        %v7506 = vshrl.u32 2475754826, %v7503
        %v7507 = vor.u32 %v7505, %v7506
        %v7508 = vshll.u32 2475754826, %v7502
        %v7509 = vshrl.u32 2131351028, %v7503
        %v7510 = vor.u32 %v7508, %v7509
        %v7511 = vshll.u32 2131351028, %v7502
        %v7512 = vshrl.u32 2102212464, %v7503
        %v7513 = vor.u32 %v7511, %v7512
        %v7514 = vshll.u32 2102212464, %v7502
        %v7515 = vshrl.u32 920167782, %v7503
        %v7516 = vor.u32 %v7514, %v7515
        %v7517 = vshll.u32 920167782, %v7502
        %v7518 = vshrl.u32 1326507024, %v7503
        %v7519 = vor.u32 %v7517, %v7518
        %vm7520 = vcmp.lt.s32.totalorder %v7501, 1
        %vm7521 = vcmp.lt.s32.totalorder %v7501, 2
        %vm7522 = vcmp.lt.s32.totalorder %v7501, 3
        %vm7523 = vcmp.lt.s32.totalorder %v7501, 4
        %v7524 = vsel %vm7520, %v7504, %v7507
        %v7525 = vsel %vm7523, %v7513, 2102212464
        %v7526 = vsel %vm7522, %v7510, %v7525
        %v7527 = vsel %vm7521, %v7524, %v7526
        %v7528 = vsel %vm7520, %v7507, %v7510
        %v7529 = vsel %vm7523, %v7516, 920167782
        %v7530 = vsel %vm7522, %v7513, %v7529
        %v7531 = vsel %vm7521, %v7528, %v7530
        %v7532 = vsel %vm7520, %v7510, %v7513
        %v7533 = vsel %vm7523, %v7519, 1326507024
        %v7534 = vsel %vm7522, %v7516, %v7533
        %v7535 = vsel %vm7521, %v7532, %v7534
        %v7536 = vshll.u32 %v7496, 8
        %v7537 = vmul.u32.u64.compose %v7536, %v7535
        %v7538 = vextract.low.u32 %v7537
        %v7539 = vextract.high.u32 %v7537
        %v7540 = vmul.u32.u64.compose %v7536, %v7531
        %v7541 = vextract.low.u32 %v7540
        %v7542 = vextract.high.u32 %v7540
        %v7543 = vmul.u32 %v7536, %v7527
        %v7544 = vadd.s32 %v7539, %v7541
        %vm7545 = vc.u32 %v7539, %v7541
        %v7546 = vadd.s32 %v7542, 1
        %v7547 = vsel %vm7545, %v7546, %v7542
        %v7548 = vadd.s32 %v7543, %v7547
        %v7549 = vadd.s32 %v7548, 536870912
        %v7550 = vshrl.u32 %v7549, 30
        %v7551 = vshll.u32 %v7550, 30
        %v7552 = vsub.s32 %v7548, %v7551
        %vm7553 = vcmp.lt.s32.totalorder %v7552, 0
        %v7554 = vsub.s32 0, %v7552
        %v7555 = vsel %vm7553, %v7554, %v7552
        %v7556 = vclz %v7555
        %v7557 = vsub.s32 %v7556, 2
        %vm7558 = vcmp.gt.s32.totalorder 0, %v7557
        %v7559 = vsel %vm7558, 0, %v7557
        %v7560 = vsub.s32 32, %v7559
        %v7561 = vshll.u32 %v7552, %v7559
        %v7562 = vshrl.u32 %v7544, %v7560
        %v7563 = vor.u32 %v7561, %v7562
        %v7564 = vsub.s32 4294967266, %v7559
        %v7565 = vadd.s32 %v7564, 127
        %v7566 = vshll.u32 %v7565, 23
        %v7567 = vor.u32 4788187, %v7566
        %v7568 = vand.u32 2147483647, %v7567
        %v7570 = vcvt.s32.f32 %v7563
        %v7571 = vmul.f32 %v7570, %v7568
        %v7572 = vxor.u32 %v7571, 2147483648
        %v7573 = vsel %vm7490, %v7572, %v7571
        %v7574 = vsub.s32 4, %v7550
        %v7575 = vsel %vm7490, %v7574, %v7550
        %v7576 = vsel %vm7489, %v2597, %v7573
        %v7577 = vsel %vm7489, 0, %v7575
        %v7578 = vcosq.f32.pop %v7576
        %v7579 = vsinq.f32.pop %v7576
        %vm7580 = vweird.f32 %v2597
        %v7581 = vadd.s32 %v7577, 3
        %v7582 = vand.u32 %v7581, 3
        %vm7583 = vcmp.lt.s32.totalorder %v7582, 2
        %vm7584 = vcmp.eq.s32.totalorder %v7582, 0
        %v7585 = vxor.u32 %v7579, 2147483648
        %v7586 = vsel %vm7584, %v7578, %v7585
        %vm7587 = vcmp.eq.s32.totalorder %v7582, 2
        %v7588 = vxor.u32 %v7578, 2147483648
        %v7589 = vsel %vm7587, %v7588, %v7579
        %v7590 = vsel %vm7583, %v7586, %v7589
        %v7591 = vsel %vm7580, nan, %v7590
        %7592 = vst [vmem:[%s164] sm:$0xff] %v2703
        %7593 = vst [vmem:[%s164 + $0x8] sm:$0xff] %v2807
        %7594 = vst [vmem:[%s164 + $0x10] sm:$0xff] %v2911
        %7595 = vst [vmem:[%s164 + $0x18] sm:$0xff] %v3015
        %7596 = vst [vmem:[%s164 + $0x20] sm:$0xff] %v3119
        %7597 = vst [vmem:[%s164 + $0x28] sm:$0xff] %v3223
        %7598 = vst [vmem:[%s164 + $0x30] sm:$0xff] %v3327
        %7599 = vst [vmem:[%s164 + $0x38] sm:$0xff] %v3431
        %7600 = vst [vmem:[%s164 + $0x40] sm:$0xff] %v3535
        %7601 = vst [vmem:[%s164 + $0x48] sm:$0xff] %v3639
        %7602 = vst [vmem:[%s164 + $0x50] sm:$0xff] %v3743
        %7603 = vst [vmem:[%s164 + $0x58] sm:$0xff] %v3847
        %7604 = vst [vmem:[%s164 + $0x60] sm:$0xff] %v3951
        %7605 = vst [vmem:[%s164 + $0x68] sm:$0xff] %v4055
        %7606 = vst [vmem:[%s164 + $0x70] sm:$0xff] %v4159
        %7607 = vst [vmem:[%s164 + $0x78] sm:$0xff] %v4263
        %7608 = vst [vmem:[%s164 + $0x80] sm:$0xff] %v4367
        %7609 = vst [vmem:[%s164 + $0x88] sm:$0xff] %v4471
        %7610 = vst [vmem:[%s164 + $0x90] sm:$0xff] %v4575
        %7611 = vst [vmem:[%s164 + $0x98] sm:$0xff] %v4679
        %7612 = vst [vmem:[%s164 + $0xa0] sm:$0xff] %v4783
        %7613 = vst [vmem:[%s164 + $0xa8] sm:$0xff] %v4887
        %7614 = vst [vmem:[%s164 + $0xb0] sm:$0xff] %v4991
        %7615 = vst [vmem:[%s164 + $0xb8] sm:$0xff] %v5095
        %7616 = vst [vmem:[%s164 + $0xc0] sm:$0xff] %v5199
        %7617 = vst [vmem:[%s164 + $0xc8] sm:$0xff] %v5303
        %7618 = vst [vmem:[%s164 + $0xd0] sm:$0xff] %v5407
        %7619 = vst [vmem:[%s164 + $0xd8] sm:$0xff] %v5511
        %7620 = vst [vmem:[%s164 + $0xe0] sm:$0xff] %v5615
        %7621 = vst [vmem:[%s164 + $0xe8] sm:$0xff] %v5719
        %7622 = vst [vmem:[%s164 + $0xf0] sm:$0xff] %v5823
        %7623 = vst [vmem:[%s164 + $0xf8] sm:$0xff] %v5927
        %7624 = vst [vmem:[%s164 + $0x100] sm:$0xff] %v6031
        %7625 = vst [vmem:[%s164 + $0x108] sm:$0xff] %v6135
        %7626 = vst [vmem:[%s164 + $0x110] sm:$0xff] %v6239
        %7627 = vst [vmem:[%s164 + $0x118] sm:$0xff] %v6343
        %7628 = vst [vmem:[%s164 + $0x120] sm:$0xff] %v6447
        %7629 = vst [vmem:[%s164 + $0x128] sm:$0xff] %v6551
        %7630 = vst [vmem:[%s164 + $0x130] sm:$0xff] %v6655
        %7631 = vst [vmem:[%s164 + $0x138] sm:$0xff] %v6759
        %7632 = vst [vmem:[%s164 + $0x140] sm:$0xff] %v6863
        %7633 = vst [vmem:[%s164 + $0x148] sm:$0xff] %v6967
        %7634 = vst [vmem:[%s164 + $0x150] sm:$0xff] %v7071
        %7635 = vst [vmem:[%s164 + $0x158] sm:$0xff] %v7175
        %7636 = vst [vmem:[%s164 + $0x160] sm:$0xff] %v7279
        %7637 = vst [vmem:[%s164 + $0x168] sm:$0xff] %v7383
        %7638 = vst [vmem:[%s164 + $0x170] sm:$0xff] %v7487
        %7639 = vst [vmem:[%s164 + $0x178] sm:$0xff] %v7591
        %s7640 = sand.u32 %s93, 1
        %s7641 = scalar_lea.sflag [#allocation3], %s7640
        %s7642 = sand.u32 %s93, 1
        %s7643 = smul.addr %s7642, 384
        %s7644 = scalar_lea.vmem [#allocation2], %s7643
        // Predicated region
        $region33: #{tpu_custom_call.1} parent=31 // pred_check
          %p7645 = pneg %p103
        $region34: #{tpu_custom_call.1} parent=31 // pred_check_branch
          %7647 = sbr.rel (%p7645) target = $region36
        $region35: #{tpu_custom_call.1} parent=31 // pred_region
          %s7648 = smul.u32 16, %s17
          %s7650 = ssub.s32 6144, 6144
          %7651 = vsyncadd %s7641, %s7650
          %s7652 = smul.addr %s7648, 3
          %s7653 = smul.addr %s7652, 128
          %s7654 = scalar_lea.hbm %s3, %s7653
          %s7655 = sshll.u32 %s7644, 4
          %s7656 = int_to_ptr.vmem [resolvable:$true] %s7655
          %7661 = dma.vmem_to_hbm [thread:$0]  %s7656, 6144, %s7654, %s7641, 384, 384, 24
        $region36: #{tpu_custom_call.1} parent=31 // pred_fallthru
          _
      $region32: #{tpu_custom_call.1} parent=5 // pred_fallthru
        _
      %p7662 = scmp.le.s32.totalorder 2, %s12
      // Predicated region
      $region37: #{tpu_custom_call.1} parent=5 // pred_check
        %p7663 = pneg %p7662
      $region38: #{tpu_custom_call.1} parent=5 // pred_check_branch
        %7665 = sbr.rel (%p7663) target = $region40
      $region39: #{tpu_custom_call.1} parent=5 // pred_region
        %s7666 = ssub.s32 %s12, 2
        // Predicated region
        $region41: #{tpu_custom_call.1} parent=39 // pred_check
          %p7667 = pneg %p109
        $region42: #{tpu_custom_call.1} parent=39 // pred_check_branch
          %7669 = sbr.rel (%p7667) target = $region44
        $region43: #{tpu_custom_call.1} parent=39 // pred_region
          %s7670 = sand.u32 %s94, 1
          %s7671 = scalar_lea.sflag [#allocation3], %s7670
          %s7672 = sand.u32 %s94, 1
          %s7673 = smul.addr %s7672, 384
          %s7674 = scalar_lea.vmem [#allocation2], %s7673
          %7675 = dma.done %s7671, 6144
        $region44: #{tpu_custom_call.1} parent=39 // pred_fallthru
          _
      $region40: #{tpu_custom_call.1} parent=5 // pred_fallthru
        _
    $region6: #{tpu_custom_call.1} parent=1 // loop_footer
      %s16 = sadd.s32 1, %s12
    $region7: #{tpu_custom_call.1} parent=1 // loop_footer_branch
      %11 = sbr.rel target = $region3
    $region8: #{tpu_custom_call.1} parent=1 // loop_exit
      _
    %7676 = vsyncpa [#allocation3], 1
    %s7677 = scalar_lea.sflag [#allocation3], 1
    %7678 = vsyncpa %s7677, 1

</llo_original>
